<compile_context>
chip_gen: v6e
topology: v6e:2x2x1
jax: 0.10.0
libtpu: 0.0.40
codegen_flags: <defaults>
</compile_context>

<pallas_src>
import jax
import jax.numpy as jnp
from jax.experimental import pallas as pl
from jax.experimental.pallas import tpu as pltpu


# ----------------------------------------------------------------------------
# Fused kernel: BB images per grid step, everything resident in VMEM.
# ----------------------------------------------------------------------------
def make_fused_kernel(BB, H, W):
    H1, W1 = H // 2, W // 2
    H2, W2 = H // 4, W // 4
    Hf, Wf = H // 8, W // 8
    P = Hf * Wf

    def zero_halo(ref, Hp, Wp, C):
        # Border-only zeroing (interior is fully overwritten every step).
        z_row = jnp.zeros((BB, 1, Wp, C), jnp.bfloat16)
        z_col = jnp.zeros((BB, Hp - 2, 1, C), jnp.bfloat16)
        ref[:, 0:1, :, :] = z_row
        ref[:, Hp - 1:Hp, :, :] = z_row
        ref[:, 1:Hp - 1, 0:1, :] = z_col
        ref[:, 1:Hp - 1, Wp - 1:Wp, :] = z_col

    def pool2x2(acc_b, Hc, Wc, Cout):
        # MaxPool2d(2,2) via reshape + static-index max (known-good lowering at these sizes).
        y = acc_b.reshape(Hc // 2, 2, Wc // 2, 2, Cout)
        y = jnp.maximum(y[:, 0], y[:, 1])
        y = jnp.maximum(y[:, :, 0], y[:, :, 1])
        return y                                           # (Hc//2, Wc//2, Cout) f32

    def conv_block(pad_ref, w_ref, s_ref, t_ref, Hc, Wc, Cin):
        # im2col: 9 shifted views concatenated along K, all BB images stacked along M.
        pieces = []
        for b in range(BB):
            xp = pad_ref[b]                                # (Hc+2, Wc+2, Cin) bf16, zero halo
            cols = [xp[dy:dy + Hc, dx:dx + Wc, :].reshape(Hc * Wc, Cin)
                    for dy in range(3) for dx in range(3)]
            pieces.append(jnp.concatenate(cols, axis=-1))  # (Hc*Wc, 9*Cin) bf16
        patches = jnp.concatenate(pieces, axis=0)          # (BB*Hc*Wc, 9*Cin) bf16
        acc = jnp.dot(patches, w_ref[...], preferred_element_type=jnp.float32)
        # BatchNorm2d (eval) with conv bias folded into the shift; ReLU; Dropout2d = identity.
        return jnp.maximum(acc * s_ref[...] + t_ref[...], 0.0)   # (BB*Hc*Wc, Cout) f32

    def kernel(p0_ref,
               w0, s0, t0,
               w1, s1, t1,
               w2, s2, t2,
               fw1, sfc, tfc, fw2, fb2,
               o_ref,
               pad1, pad2):
        zero_halo(pad1, H1 + 2, W1 + 2, 32)
        zero_halo(pad2, H2 + 2, W2 + 2, 64)

        # ---- layer 0: host-built im2col patches (K=27), one matmul for the whole block ----
        a0 = jnp.dot(p0_ref[...].reshape(BB * H * W, 27), w0[...],
                     preferred_element_type=jnp.float32)
        a0 = jnp.maximum(a0 * s0[...] + t0[...], 0.0)
        for b in range(BB):
            yb = pool2x2(a0[b * H * W:(b + 1) * H * W], H, W, 32)
            pad1[b, 1:H1 + 1, 1:W1 + 1, :] = yb.astype(jnp.bfloat16)

        # ---- layer 1 ----
        a1 = conv_block(pad1, w1, s1, t1, H1, W1, 32)
        for b in range(BB):
            yb = pool2x2(a1[b * H1 * W1:(b + 1) * H1 * W1], H1, W1, 64)
            pad2[b, 1:H2 + 1, 1:W2 + 1, :] = yb.astype(jnp.bfloat16)

        # ---- layer 2 + flatten (NHWC order; fc1_w rows were pre-permuted to match PyTorch's
        #      NCHW Flatten).  Lane-dense (BB, flat_dim) operand assembled with 128-aligned
        #      concatenation; no VMEM flat scratch / per-row masked stores. ----
        a2 = conv_block(pad2, w2, s2, t2, H2, W2, 64)
        rows = []
        for b in range(BB):
            yb = pool2x2(a2[b * H2 * W2:(b + 1) * H2 * W2], H2, W2, 128)   # (Hf, Wf, 128)
            fb_ = yb.reshape(P, 128).astype(jnp.bfloat16)
            rows.append(jnp.concatenate([fb_[k:k + 1, :] for k in range(P)], axis=1))  # (1, P*128)
        flat_v = jnp.concatenate(rows, axis=0)             # (BB, flat_dim) bf16

        # ---- classifier: Linear -> BN1d (folded, bias folded) -> ReLU -> (Dropout=id) -> Linear ----
        h = jnp.dot(flat_v, fw1[...], preferred_element_type=jnp.float32)
        h = jnp.maximum(h * sfc[...] + tfc[...], 0.0)
        out = jnp.dot(h.astype(jnp.bfloat16), fw2[...],
                      preferred_element_type=jnp.float32) + fb2[...]
        o_ref[...] = out                                   # (BB, 128) lane-dense store

    return kernel


def cnn_forward_impl(x_nchw, kp, num_classes):
    B, Cin, H, W = x_nchw.shape
    assert Cin == 3 and H % 8 == 0 and W % 8 == 0, "expects 3 channels and H, W divisible by 8"
    H1, W1 = H // 2, W // 2
    H2, W2 = H // 4, W // 4
    flat_dim = (H // 8) * (W // 8) * 128
    ncp = kp["fw2"].shape[-1]                              # fc2 outputs padded to 128 lanes

    # NCHW -> NHWC, then host-side (trace-time) im2col for layer 0: (B, H*W, 27) bf16.
    x = jnp.transpose(x_nchw, (0, 2, 3, 1)).astype(jnp.float32)
    xp = jnp.pad(x, ((0, 0), (1, 1), (1, 1), (0, 0)))
    cols = [xp[:, dy:dy + H, dx:dx + W, :] for dy in range(3) for dx in range(3)]
    patches0 = jnp.concatenate(cols, axis=-1).reshape(B, H * W, 27).astype(jnp.bfloat16)

    # BB images per grid step.  Cap per image size so the per-step VMEM footprint stays within
    # v7x's 64 MiB (v5e/v6e have 128 MiB); pad B up to a multiple of BB and slice the output.
    bb_cap = 8 if (H * W) <= 32 * 32 else 4
    BB = B if B <= bb_cap else bb_cap
    Bp = ((B + BB - 1) // BB) * BB
    if Bp != B:
        patches0 = jnp.pad(patches0, ((0, Bp - B), (0, 0), (0, 0)))

    def const(shape):                                      # whole-array block, constant across grid
        return pl.BlockSpec(shape, lambda g, _n=len(shape): (0,) * _n)

    out = pl.pallas_call(
        make_fused_kernel(BB, H, W),
        out_shape=jax.ShapeDtypeStruct((Bp, ncp), jnp.float32),
        grid=(Bp // BB,),
        in_specs=[
            pl.BlockSpec((BB, H * W, 27), lambda g: (g, 0, 0)),
            const((27, 32)), const((1, 32)), const((1, 32)),
            const((288, 64)), const((1, 64)), const((1, 64)),
            const((576, 128)), const((1, 128)), const((1, 128)),
            const((flat_dim, 128)), const((1, 128)), const((1, 128)),
            const((128, ncp)), const((1, ncp)),
        ],
        out_specs=pl.BlockSpec((BB, ncp), lambda g: (g, 0)),
        scratch_shapes=[
            pltpu.VMEM((BB, H1 + 2, W1 + 2, 32), jnp.bfloat16),   # padded layer-1 input (bf16)
            pltpu.VMEM((BB, H2 + 2, W2 + 2, 64), jnp.bfloat16),   # padded layer-2 input (bf16)
        ],
        compiler_params=pltpu.CompilerParams(
            dimension_semantics=("parallel",),             # batch blocks independent -> megacore on v7x
            vmem_limit_bytes=48 * 1024 * 1024,
        ),
    )(
        patches0,
        kp["w0"], kp["s0"], kp["t0"],
        kp["w1"], kp["s1"], kp["t1"],
        kp["w2"], kp["s2"], kp["t2"],
        kp["fw1"], kp["sfc"], kp["tfc"],
        kp["fw2"], kp["fb2"],
    )
    return out[:B, :num_classes]


cnn_forward = jax.jit(cnn_forward_impl, static_argnames=("num_classes",))


# ----------------------------------------------------------------------------
# Parameters: PyTorch-faithful init + a one-time "prepare" step for the kernel
# (pack conv weights to (9*Cin, Cout) bf16, fold conv/FC1 bias into BN shift,
#  permute fc1_w rows NCHW->NHWC, pad fc2 to 128 output lanes).
# BatchNorm uses PyTorch defaults: gamma=1, beta=0, running_mean=0, running_var=1, eps=1e-5.
# ----------------------------------------------------------------------------
def bn_fold(cout, eps=1e-5):
    gamma = jnp.ones((cout,), jnp.float32)
    beta = jnp.zeros((cout,), jnp.float32)
    mean = jnp.zeros((cout,), jnp.float32)
    var = jnp.ones((cout,), jnp.float32)
    scale = gamma / jnp.sqrt(var + eps)
    shift = beta - mean * scale
    return scale, shift


def init_params(key, num_classes, flattened_size):
    ks = jax.random.split(key, 10)
    p = {}
    conv_dims = [(3, 32), (32, 64), (64, 128)]
    for i, (cin, cout) in enumerate(conv_dims):
        fan_in = cin * 9
        p[f"conv{i}_w"] = jax.random.normal(ks[2 * i], (3, 3, cin, cout), jnp.float32) / jnp.sqrt(fan_in)
        p[f"conv{i}_b"] = 0.01 * jax.random.normal(ks[2 * i + 1], (cout,), jnp.float32)
        p[f"bn{i}_scale"], p[f"bn{i}_shift"] = bn_fold(cout)
    p["fc1_w"] = jax.random.normal(ks[6], (flattened_size, 128), jnp.float32) / jnp.sqrt(flattened_size)
    p["fc1_b"] = 0.01 * jax.random.normal(ks[7], (128,), jnp.float32)
    p["bn_fc_scale"], p["bn_fc_shift"] = bn_fold(128)
    p["fc2_w"] = jax.random.normal(ks[8], (128, num_classes), jnp.float32) / jnp.sqrt(128.0)
    p["fc2_b"] = 0.01 * jax.random.normal(ks[9], (num_classes,), jnp.float32)
    return p


def prepare_params(params, H, W):
    kp = {}
    for i in range(3):
        w = params[f"conv{i}_w"]                                   # (3, 3, Cin, Cout) HWIO
        cin, cout = w.shape[2], w.shape[3]
        s = params[f"bn{i}_scale"]
        kp[f"w{i}"] = w.reshape(9 * cin, cout).astype(jnp.bfloat16)  # tap-major packing for im2col
        kp[f"s{i}"] = s.reshape(1, -1)
        # conv bias folded into the BN shift: (x + b)*s + t == x*s + (b*s + t)
        kp[f"t{i}"] = (params[f"conv{i}_b"] * s + params[f"bn{i}_shift"]).reshape(1, -1)
    Hf, Wf, C = H // 8, W // 8, 128
    # Row-permute fc1_w so the kernel's NHWC flatten matches PyTorch's NCHW nn.Flatten().
    perm = jnp.arange(C * Hf * Wf).reshape(C, Hf, Wf).transpose(1, 2, 0).reshape(-1)
    kp["fw1"] = params["fc1_w"][perm].astype(jnp.bfloat16)
    s = params["bn_fc_scale"]
    kp["sfc"] = s.reshape(1, -1)
    kp["tfc"] = (params["fc1_b"] * s + params["bn_fc_shift"]).reshape(1, -1)
    # Pad fc2 to 128 output lanes for an unmasked lane-dense output store.
    nc = params["fc2_w"].shape[-1]
    ncp = max(128, ((nc + 127) // 128) * 128)
    kp["fw2"] = jnp.zeros((128, ncp), jnp.bfloat16).at[:, :nc].set(params["fc2_w"].astype(jnp.bfloat16))
    kp["fb2"] = jnp.zeros((1, ncp), jnp.float32).at[:, :nc].set(params["fc2_b"])
    return kp


# ----------------------------------------------------------------------------
# Pure-JAX f32 reference (eval-mode semantics) for a sanity check.
# ----------------------------------------------------------------------------
def reference_forward(x_nchw, params):
    x = jnp.transpose(x_nchw, (0, 2, 3, 1)).astype(jnp.float32)
    for i in range(3):
        w = params[f"conv{i}_w"]
        B, Hc, Wc, _ = x.shape
        xp = jnp.pad(x, ((0, 0), (1, 1), (1, 1), (0, 0)))
        acc = jnp.zeros((B, Hc, Wc, w.shape[-1]), jnp.float32)
        for dy in range(3):
            for dx in range(3):
                acc = acc + jnp.einsum("bhwc,cd->bhwd", xp[:, dy:dy + Hc, dx:dx + Wc, :], w[dy, dx])
        acc = acc + params[f"conv{i}_b"]
        acc = acc * params[f"bn{i}_scale"] + params[f"bn{i}_shift"]
        acc = jnp.maximum(acc, 0.0)
        acc = acc.reshape(B, Hc // 2, 2, Wc // 2, 2, -1)
        x = jnp.max(jnp.max(acc, axis=2), axis=3)
    B = x.shape[0]
    flat = jnp.transpose(x, (0, 3, 1, 2)).reshape(B, -1)   # PyTorch NCHW flatten order
    h = flat @ params["fc1_w"] + params["fc1_b"]
    h = h * params["bn_fc_scale"] + params["bn_fc_shift"]
    h = jnp.maximum(h, 0.0)
    return h @ params["fc2_w"] + params["fc2_b"]


# TODO(synk): training-mode Dropout / batch-stat BatchNorm are not implemented; this is eval-mode forward.
if __name__ == "__main__":
    num_classes = 10
    B, C, H, W = 2, 3, 16, 16            # small spatial size (module default is 64x64)
    # After three 2x2 max-pools: 16 -> 8 -> 4 -> 2, so flattened_size = 128 * 2 * 2
    flattened_size = 128 * (H // 8) * (W // 8)

    key = jax.random.PRNGKey(0)
    k_x, k_p = jax.random.split(key)
    x = jax.random.normal(k_x, (B, C, H, W), jnp.float32)
    params = init_params(k_p, num_classes, flattened_size)
    kparams = prepare_params(params, H, W)

    out = cnn_forward(x, kparams, num_classes=num_classes)
    jax.block_until_ready(out)
    assert out.shape == (B, num_classes), out.shape

    ref = reference_forward(x, params)
    max_err = float(jnp.max(jnp.abs(out - ref)))
    assert max_err < 0.15, f"max abs err vs f32 reference: {max_err}"

    print("KERNEL_OK")
</pallas_src>

<mosaic_0001>
module attributes {stable_mosaic.version = 11 : i64} {
  func.func @kernel(%arg0: i32, %arg1: memref<2x256x27xbf16, #tpu.memory_space<vmem>>, %arg2: memref<27x32xbf16, #tpu.memory_space<vmem>>, %arg3: memref<1x32xf32, #tpu.memory_space<vmem>>, %arg4: memref<1x32xf32, #tpu.memory_space<vmem>>, %arg5: memref<288x64xbf16, #tpu.memory_space<vmem>>, %arg6: memref<1x64xf32, #tpu.memory_space<vmem>>, %arg7: memref<1x64xf32, #tpu.memory_space<vmem>>, %arg8: memref<576x128xbf16, #tpu.memory_space<vmem>>, %arg9: memref<1x128xf32, #tpu.memory_space<vmem>>, %arg10: memref<1x128xf32, #tpu.memory_space<vmem>>, %arg11: memref<512x128xbf16, #tpu.memory_space<vmem>>, %arg12: memref<1x128xf32, #tpu.memory_space<vmem>>, %arg13: memref<1x128xf32, #tpu.memory_space<vmem>>, %arg14: memref<128x128xbf16, #tpu.memory_space<vmem>>, %arg15: memref<1x128xf32, #tpu.memory_space<vmem>>, %arg16: memref<2x128xf32, #tpu.memory_space<vmem>>, %arg17: memref<2x10x10x32xbf16, #tpu.memory_space<vmem>>, %arg18: memref<2x6x6x64xbf16, #tpu.memory_space<vmem>>) attributes {dimension_semantics = [#tpu.dimension_semantics<parallel>], iteration_bounds = array<i64: 1>, scalar_prefetch = 0 : i64, scratch_operands = 2 : i64, tpu.core_type = #tpu.core_type<tc>, window_params = [{transform_indices = @transform_0, window_bounds = array<i64: 2, 256, 27>}, {pipeline_mode = #tpu.pipeline_mode<synchronous>, transform_indices = @transform_1, window_bounds = array<i64: 27, 32>}, {pipeline_mode = #tpu.pipeline_mode<synchronous>, transform_indices = @transform_2, window_bounds = array<i64: 1, 32>}, {pipeline_mode = #tpu.pipeline_mode<synchronous>, transform_indices = @transform_3, window_bounds = array<i64: 1, 32>}, {pipeline_mode = #tpu.pipeline_mode<synchronous>, transform_indices = @transform_4, window_bounds = array<i64: 288, 64>}, {pipeline_mode = #tpu.pipeline_mode<synchronous>, transform_indices = @transform_5, window_bounds = array<i64: 1, 64>}, {pipeline_mode = #tpu.pipeline_mode<synchronous>, transform_indices = @transform_6, window_bounds = array<i64: 1, 64>}, {pipeline_mode = #tpu.pipeline_mode<synchronous>, transform_indices = @transform_7, window_bounds = array<i64: 576, 128>}, {pipeline_mode = #tpu.pipeline_mode<synchronous>, transform_indices = @transform_8, window_bounds = array<i64: 1, 128>}, {pipeline_mode = #tpu.pipeline_mode<synchronous>, transform_indices = @transform_9, window_bounds = array<i64: 1, 128>}, {pipeline_mode = #tpu.pipeline_mode<synchronous>, transform_indices = @transform_10, window_bounds = array<i64: 512, 128>}, {pipeline_mode = #tpu.pipeline_mode<synchronous>, transform_indices = @transform_11, window_bounds = array<i64: 1, 128>}, {pipeline_mode = #tpu.pipeline_mode<synchronous>, transform_indices = @transform_12, window_bounds = array<i64: 1, 128>}, {pipeline_mode = #tpu.pipeline_mode<synchronous>, transform_indices = @transform_13, window_bounds = array<i64: 128, 128>}, {pipeline_mode = #tpu.pipeline_mode<synchronous>, transform_indices = @transform_14, window_bounds = array<i64: 1, 128>}, {transform_indices = @transform_15, window_bounds = array<i64: 2, 128>}]} {
    %cst = arith.constant 0.000000e+00 : bf16
    %0 = vector.broadcast %cst : bf16 to vector<2x1x10x32xbf16>
    %cst_0 = arith.constant 0.000000e+00 : bf16
    %1 = vector.broadcast %cst_0 : bf16 to vector<2x8x1x32xbf16>
    %c0 = arith.constant 0 : index
    %c0_1 = arith.constant 0 : index
    %c0_2 = arith.constant 0 : index
    %c0_3 = arith.constant 0 : index
    %2 = vector.load %arg17[%c0, %c0_1, %c0_2, %c0_3] : memref<2x10x10x32xbf16, #tpu.memory_space<vmem>>, vector<2x1x10x32xbf16>
    tpu.vector_store %arg17[%c0, %c0_1, %c0_2, %c0_3], %0 {strides = array<i32>} : memref<2x10x10x32xbf16, #tpu.memory_space<vmem>>, vector<2x1x10x32xbf16>,
    %c0_4 = arith.constant 0 : index
    %c9 = arith.constant 9 : index
    %c0_5 = arith.constant 0 : index
    %c0_6 = arith.constant 0 : index
    %3 = vector.load %arg17[%c0_4, %c9, %c0_5, %c0_6] : memref<2x10x10x32xbf16, #tpu.memory_space<vmem>>, vector<2x1x10x32xbf16>
    tpu.vector_store %arg17[%c0_4, %c9, %c0_5, %c0_6], %0 {strides = array<i32>} : memref<2x10x10x32xbf16, #tpu.memory_space<vmem>>, vector<2x1x10x32xbf16>,
    %c0_7 = arith.constant 0 : index
    %c1 = arith.constant 1 : index
    %c0_8 = arith.constant 0 : index
    %c0_9 = arith.constant 0 : index
    %4 = vector.load %arg17[%c0_7, %c1, %c0_8, %c0_9] : memref<2x10x10x32xbf16, #tpu.memory_space<vmem>>, vector<2x8x1x32xbf16>
    tpu.vector_store %arg17[%c0_7, %c1, %c0_8, %c0_9], %1 {strides = array<i32>} : memref<2x10x10x32xbf16, #tpu.memory_space<vmem>>, vector<2x8x1x32xbf16>,
    %c0_10 = arith.constant 0 : index
    %c1_11 = arith.constant 1 : index
    %c9_12 = arith.constant 9 : index
    %c0_13 = arith.constant 0 : index
    %5 = vector.load %arg17[%c0_10, %c1_11, %c9_12, %c0_13] : memref<2x10x10x32xbf16, #tpu.memory_space<vmem>>, vector<2x8x1x32xbf16>
    tpu.vector_store %arg17[%c0_10, %c1_11, %c9_12, %c0_13], %1 {strides = array<i32>} : memref<2x10x10x32xbf16, #tpu.memory_space<vmem>>, vector<2x8x1x32xbf16>,
    %cst_14 = arith.constant 0.000000e+00 : bf16
    %6 = vector.broadcast %cst_14 : bf16 to vector<2x1x6x64xbf16>
    %cst_15 = arith.constant 0.000000e+00 : bf16
    %7 = vector.broadcast %cst_15 : bf16 to vector<2x4x1x64xbf16>
    %c0_16 = arith.constant 0 : index
    %c0_17 = arith.constant 0 : index
    %c0_18 = arith.constant 0 : index
    %c0_19 = arith.constant 0 : index
    %8 = vector.load %arg18[%c0_16, %c0_17, %c0_18, %c0_19] : memref<2x6x6x64xbf16, #tpu.memory_space<vmem>>, vector<2x1x6x64xbf16>
    tpu.vector_store %arg18[%c0_16, %c0_17, %c0_18, %c0_19], %6 {strides = array<i32>} : memref<2x6x6x64xbf16, #tpu.memory_space<vmem>>, vector<2x1x6x64xbf16>,
    %c0_20 = arith.constant 0 : index
    %c5 = arith.constant 5 : index
    %c0_21 = arith.constant 0 : index
    %c0_22 = arith.constant 0 : index
    %9 = vector.load %arg18[%c0_20, %c5, %c0_21, %c0_22] : memref<2x6x6x64xbf16, #tpu.memory_space<vmem>>, vector<2x1x6x64xbf16>
    tpu.vector_store %arg18[%c0_20, %c5, %c0_21, %c0_22], %6 {strides = array<i32>} : memref<2x6x6x64xbf16, #tpu.memory_space<vmem>>, vector<2x1x6x64xbf16>,
    %c0_23 = arith.constant 0 : index
    %c1_24 = arith.constant 1 : index
    %c0_25 = arith.constant 0 : index
    %c0_26 = arith.constant 0 : index
    %10 = vector.load %arg18[%c0_23, %c1_24, %c0_25, %c0_26] : memref<2x6x6x64xbf16, #tpu.memory_space<vmem>>, vector<2x4x1x64xbf16>
    tpu.vector_store %arg18[%c0_23, %c1_24, %c0_25, %c0_26], %7 {strides = array<i32>} : memref<2x6x6x64xbf16, #tpu.memory_space<vmem>>, vector<2x4x1x64xbf16>,
    %c0_27 = arith.constant 0 : index
    %c1_28 = arith.constant 1 : index
    %c5_29 = arith.constant 5 : index
    %c0_30 = arith.constant 0 : index
    %11 = vector.load %arg18[%c0_27, %c1_28, %c5_29, %c0_30] : memref<2x6x6x64xbf16, #tpu.memory_space<vmem>>, vector<2x4x1x64xbf16>
    tpu.vector_store %arg18[%c0_27, %c1_28, %c5_29, %c0_30], %7 {strides = array<i32>} : memref<2x6x6x64xbf16, #tpu.memory_space<vmem>>, vector<2x4x1x64xbf16>,
    %c0_31 = arith.constant 0 : index
    %c0_32 = arith.constant 0 : index
    %c0_33 = arith.constant 0 : index
    %12 = vector.load %arg1[%c0_31, %c0_32, %c0_33] : memref<2x256x27xbf16, #tpu.memory_space<vmem>>, vector<2x256x27xbf16>
    %13 = vector.shape_cast %12 : vector<2x256x27xbf16> to vector<512x27xbf16>
    %c0_34 = arith.constant 0 : index
    %c0_35 = arith.constant 0 : index
    %14 = vector.load %arg2[%c0_34, %c0_35] : memref<27x32xbf16, #tpu.memory_space<vmem>>, vector<27x32xbf16>
    %cst_36 = arith.constant dense<0.000000e+00> : vector<512x32xf32>
    %15 = tpu.matmul %13, %14, %cst_36 {dimension_numbers = #tpu.dot_dimension_numbers<[1], [0], [0], [1], [0, 0, 1, 1], [], []>} : vector<512x27xbf16>, vector<27x32xbf16>, vector<512x32xf32> -> vector<512x32xf32>
    %c0_37 = arith.constant 0 : index
    %c0_38 = arith.constant 0 : index
    %16 = vector.load %arg3[%c0_37, %c0_38] : memref<1x32xf32, #tpu.memory_space<vmem>>, vector<1x32xf32>
    %17 = vector.broadcast %16 : vector<1x32xf32> to vector<512x32xf32>
    %18 = arith.mulf %15, %17 : vector<512x32xf32>
    %c0_39 = arith.constant 0 : index
    %c0_40 = arith.constant 0 : index
    %19 = vector.load %arg4[%c0_39, %c0_40] : memref<1x32xf32, #tpu.memory_space<vmem>>, vector<1x32xf32>
    %20 = vector.broadcast %19 : vector<1x32xf32> to vector<512x32xf32>
    %21 = arith.addf %18, %20 : vector<512x32xf32>
    %cst_41 = arith.constant 0.000000e+00 : f32
    %22 = vector.broadcast %cst_41 : f32 to vector<512x32xf32>
    %23 = arith.maximumf %21, %22 : vector<512x32xf32>
    %24 = vector.extract_strided_slice %23 {offsets = [0, 0], sizes = [256, 32], strides = [1, 1]} : vector<512x32xf32> to vector<256x32xf32>
    %25 = vector.shape_cast %24 : vector<256x32xf32> to vector<8x2x8x2x32xf32>
    %26 = vector.extract_strided_slice %25 {offsets = [0, 0, 0, 0, 0], sizes = [8, 1, 8, 2, 32], strides = [1, 1, 1, 1, 1]} : vector<8x2x8x2x32xf32> to vector<8x1x8x2x32xf32>
    %27 = vector.shape_cast %26 : vector<8x1x8x2x32xf32> to vector<8x8x2x32xf32>
    %28 = vector.extract_strided_slice %25 {offsets = [0, 1, 0, 0, 0], sizes = [8, 1, 8, 2, 32], strides = [1, 1, 1, 1, 1]} : vector<8x2x8x2x32xf32> to vector<8x1x8x2x32xf32>
    %29 = vector.shape_cast %28 : vector<8x1x8x2x32xf32> to vector<8x8x2x32xf32>
    %30 = arith.maximumf %27, %29 : vector<8x8x2x32xf32>
    %31 = vector.extract_strided_slice %30 {offsets = [0, 0, 0, 0], sizes = [8, 8, 1, 32], strides = [1, 1, 1, 1]} : vector<8x8x2x32xf32> to vector<8x8x1x32xf32>
    %32 = vector.shape_cast %31 : vector<8x8x1x32xf32> to vector<8x8x32xf32>
    %33 = vector.extract_strided_slice %30 {offsets = [0, 0, 1, 0], sizes = [8, 8, 1, 32], strides = [1, 1, 1, 1]} : vector<8x8x2x32xf32> to vector<8x8x1x32xf32>
    %34 = vector.shape_cast %33 : vector<8x8x1x32xf32> to vector<8x8x32xf32>
    %35 = arith.maximumf %32, %34 : vector<8x8x32xf32>
    %36 = arith.truncf %35 : vector<8x8x32xf32> to vector<8x8x32xbf16>
    %c0_42 = arith.constant 0 : index
    %c1_43 = arith.constant 1 : index
    %c1_44 = arith.constant 1 : index
    %c0_45 = arith.constant 0 : index
    %37 = vector.load %arg17[%c0_42, %c1_43, %c1_44, %c0_45] : memref<2x10x10x32xbf16, #tpu.memory_space<vmem>>, vector<1x8x8x32xbf16>
    %38 = vector.shape_cast %37 : vector<1x8x8x32xbf16> to vector<8x8x32xbf16>
    %39 = vector.shape_cast %36 : vector<8x8x32xbf16> to vector<1x8x8x32xbf16>
    tpu.vector_store %arg17[%c0_42, %c1_43, %c1_44, %c0_45], %39 {strides = array<i32>} : memref<2x10x10x32xbf16, #tpu.memory_space<vmem>>, vector<1x8x8x32xbf16>,
    %40 = vector.extract_strided_slice %23 {offsets = [256, 0], sizes = [256, 32], strides = [1, 1]} : vector<512x32xf32> to vector<256x32xf32>
    %41 = vector.shape_cast %40 : vector<256x32xf32> to vector<8x2x8x2x32xf32>
    %42 = vector.extract_strided_slice %41 {offsets = [0, 0, 0, 0, 0], sizes = [8, 1, 8, 2, 32], strides = [1, 1, 1, 1, 1]} : vector<8x2x8x2x32xf32> to vector<8x1x8x2x32xf32>
    %43 = vector.shape_cast %42 : vector<8x1x8x2x32xf32> to vector<8x8x2x32xf32>
    %44 = vector.extract_strided_slice %41 {offsets = [0, 1, 0, 0, 0], sizes = [8, 1, 8, 2, 32], strides = [1, 1, 1, 1, 1]} : vector<8x2x8x2x32xf32> to vector<8x1x8x2x32xf32>
    %45 = vector.shape_cast %44 : vector<8x1x8x2x32xf32> to vector<8x8x2x32xf32>
    %46 = arith.maximumf %43, %45 : vector<8x8x2x32xf32>
    %47 = vector.extract_strided_slice %46 {offsets = [0, 0, 0, 0], sizes = [8, 8, 1, 32], strides = [1, 1, 1, 1]} : vector<8x8x2x32xf32> to vector<8x8x1x32xf32>
    %48 = vector.shape_cast %47 : vector<8x8x1x32xf32> to vector<8x8x32xf32>
    %49 = vector.extract_strided_slice %46 {offsets = [0, 0, 1, 0], sizes = [8, 8, 1, 32], strides = [1, 1, 1, 1]} : vector<8x8x2x32xf32> to vector<8x8x1x32xf32>
    %50 = vector.shape_cast %49 : vector<8x8x1x32xf32> to vector<8x8x32xf32>
    %51 = arith.maximumf %48, %50 : vector<8x8x32xf32>
    %52 = arith.truncf %51 : vector<8x8x32xf32> to vector<8x8x32xbf16>
    %c1_46 = arith.constant 1 : index
    %c1_47 = arith.constant 1 : index
    %c1_48 = arith.constant 1 : index
    %c0_49 = arith.constant 0 : index
    %53 = vector.load %arg17[%c1_46, %c1_47, %c1_48, %c0_49] : memref<2x10x10x32xbf16, #tpu.memory_space<vmem>>, vector<1x8x8x32xbf16>
    %54 = vector.shape_cast %53 : vector<1x8x8x32xbf16> to vector<8x8x32xbf16>
    %55 = vector.shape_cast %52 : vector<8x8x32xbf16> to vector<1x8x8x32xbf16>
    tpu.vector_store %arg17[%c1_46, %c1_47, %c1_48, %c0_49], %55 {strides = array<i32>} : memref<2x10x10x32xbf16, #tpu.memory_space<vmem>>, vector<1x8x8x32xbf16>,
    %c0_50 = arith.constant 0 : index
    %c0_51 = arith.constant 0 : index
    %c0_52 = arith.constant 0 : index
    %c0_53 = arith.constant 0 : index
    %56 = vector.load %arg17[%c0_50, %c0_51, %c0_52, %c0_53] : memref<2x10x10x32xbf16, #tpu.memory_space<vmem>>, vector<1x10x10x32xbf16>
    %57 = vector.shape_cast %56 : vector<1x10x10x32xbf16> to vector<10x10x32xbf16>
    %58 = vector.extract_strided_slice %57 {offsets = [0, 0, 0], sizes = [8, 8, 32], strides = [1, 1, 1]} : vector<10x10x32xbf16> to vector<8x8x32xbf16>
    %59 = vector.shape_cast %58 : vector<8x8x32xbf16> to vector<64x32xbf16>
    %60 = vector.extract_strided_slice %57 {offsets = [0, 1, 0], sizes = [8, 8, 32], strides = [1, 1, 1]} : vector<10x10x32xbf16> to vector<8x8x32xbf16>
    %61 = vector.shape_cast %60 : vector<8x8x32xbf16> to vector<64x32xbf16>
    %62 = vector.extract_strided_slice %57 {offsets = [0, 2, 0], sizes = [8, 8, 32], strides = [1, 1, 1]} : vector<10x10x32xbf16> to vector<8x8x32xbf16>
    %63 = vector.shape_cast %62 : vector<8x8x32xbf16> to vector<64x32xbf16>
    %64 = vector.extract_strided_slice %57 {offsets = [1, 0, 0], sizes = [8, 8, 32], strides = [1, 1, 1]} : vector<10x10x32xbf16> to vector<8x8x32xbf16>
    %65 = vector.shape_cast %64 : vector<8x8x32xbf16> to vector<64x32xbf16>
    %66 = vector.extract_strided_slice %57 {offsets = [1, 1, 0], sizes = [8, 8, 32], strides = [1, 1, 1]} : vector<10x10x32xbf16> to vector<8x8x32xbf16>
    %67 = vector.shape_cast %66 : vector<8x8x32xbf16> to vector<64x32xbf16>
    %68 = vector.extract_strided_slice %57 {offsets = [1, 2, 0], sizes = [8, 8, 32], strides = [1, 1, 1]} : vector<10x10x32xbf16> to vector<8x8x32xbf16>
    %69 = vector.shape_cast %68 : vector<8x8x32xbf16> to vector<64x32xbf16>
    %70 = vector.extract_strided_slice %57 {offsets = [2, 0, 0], sizes = [8, 8, 32], strides = [1, 1, 1]} : vector<10x10x32xbf16> to vector<8x8x32xbf16>
    %71 = vector.shape_cast %70 : vector<8x8x32xbf16> to vector<64x32xbf16>
    %72 = vector.extract_strided_slice %57 {offsets = [2, 1, 0], sizes = [8, 8, 32], strides = [1, 1, 1]} : vector<10x10x32xbf16> to vector<8x8x32xbf16>
    %73 = vector.shape_cast %72 : vector<8x8x32xbf16> to vector<64x32xbf16>
    %74 = vector.extract_strided_slice %57 {offsets = [2, 2, 0], sizes = [8, 8, 32], strides = [1, 1, 1]} : vector<10x10x32xbf16> to vector<8x8x32xbf16>
    %75 = vector.shape_cast %74 : vector<8x8x32xbf16> to vector<64x32xbf16>
    %76 = tpu.concatenate %59, %61, %63, %65, %67, %69, %71, %73, %75 in 1 : vector<64x32xbf16>, vector<64x32xbf16>, vector<64x32xbf16>, vector<64x32xbf16>, vector<64x32xbf16>, vector<64x32xbf16>, vector<64x32xbf16>, vector<64x32xbf16>, vector<64x32xbf16> -> vector<64x288xbf16>
    %c1_54 = arith.constant 1 : index
    %c0_55 = arith.constant 0 : index
    %c0_56 = arith.constant 0 : index
    %c0_57 = arith.constant 0 : index
    %77 = vector.load %arg17[%c1_54, %c0_55, %c0_56, %c0_57] : memref<2x10x10x32xbf16, #tpu.memory_space<vmem>>, vector<1x10x10x32xbf16>
    %78 = vector.shape_cast %77 : vector<1x10x10x32xbf16> to vector<10x10x32xbf16>
    %79 = vector.extract_strided_slice %78 {offsets = [0, 0, 0], sizes = [8, 8, 32], strides = [1, 1, 1]} : vector<10x10x32xbf16> to vector<8x8x32xbf16>
    %80 = vector.shape_cast %79 : vector<8x8x32xbf16> to vector<64x32xbf16>
    %81 = vector.extract_strided_slice %78 {offsets = [0, 1, 0], sizes = [8, 8, 32], strides = [1, 1, 1]} : vector<10x10x32xbf16> to vector<8x8x32xbf16>
    %82 = vector.shape_cast %81 : vector<8x8x32xbf16> to vector<64x32xbf16>
    %83 = vector.extract_strided_slice %78 {offsets = [0, 2, 0], sizes = [8, 8, 32], strides = [1, 1, 1]} : vector<10x10x32xbf16> to vector<8x8x32xbf16>
    %84 = vector.shape_cast %83 : vector<8x8x32xbf16> to vector<64x32xbf16>
    %85 = vector.extract_strided_slice %78 {offsets = [1, 0, 0], sizes = [8, 8, 32], strides = [1, 1, 1]} : vector<10x10x32xbf16> to vector<8x8x32xbf16>
    %86 = vector.shape_cast %85 : vector<8x8x32xbf16> to vector<64x32xbf16>
    %87 = vector.extract_strided_slice %78 {offsets = [1, 1, 0], sizes = [8, 8, 32], strides = [1, 1, 1]} : vector<10x10x32xbf16> to vector<8x8x32xbf16>
    %88 = vector.shape_cast %87 : vector<8x8x32xbf16> to vector<64x32xbf16>
    %89 = vector.extract_strided_slice %78 {offsets = [1, 2, 0], sizes = [8, 8, 32], strides = [1, 1, 1]} : vector<10x10x32xbf16> to vector<8x8x32xbf16>
    %90 = vector.shape_cast %89 : vector<8x8x32xbf16> to vector<64x32xbf16>
    %91 = vector.extract_strided_slice %78 {offsets = [2, 0, 0], sizes = [8, 8, 32], strides = [1, 1, 1]} : vector<10x10x32xbf16> to vector<8x8x32xbf16>
    %92 = vector.shape_cast %91 : vector<8x8x32xbf16> to vector<64x32xbf16>
    %93 = vector.extract_strided_slice %78 {offsets = [2, 1, 0], sizes = [8, 8, 32], strides = [1, 1, 1]} : vector<10x10x32xbf16> to vector<8x8x32xbf16>
    %94 = vector.shape_cast %93 : vector<8x8x32xbf16> to vector<64x32xbf16>
    %95 = vector.extract_strided_slice %78 {offsets = [2, 2, 0], sizes = [8, 8, 32], strides = [1, 1, 1]} : vector<10x10x32xbf16> to vector<8x8x32xbf16>
    %96 = vector.shape_cast %95 : vector<8x8x32xbf16> to vector<64x32xbf16>
    %97 = tpu.concatenate %80, %82, %84, %86, %88, %90, %92, %94, %96 in 1 : vector<64x32xbf16>, vector<64x32xbf16>, vector<64x32xbf16>, vector<64x32xbf16>, vector<64x32xbf16>, vector<64x32xbf16>, vector<64x32xbf16>, vector<64x32xbf16>, vector<64x32xbf16> -> vector<64x288xbf16>
    %98 = tpu.concatenate %76, %97 in 0 : vector<64x288xbf16>, vector<64x288xbf16> -> vector<128x288xbf16>
    %c0_58 = arith.constant 0 : index
    %c0_59 = arith.constant 0 : index
    %99 = vector.load %arg5[%c0_58, %c0_59] : memref<288x64xbf16, #tpu.memory_space<vmem>>, vector<288x64xbf16>
    %cst_60 = arith.constant dense<0.000000e+00> : vector<128x64xf32>
    %100 = tpu.matmul %98, %99, %cst_60 {dimension_numbers = #tpu.dot_dimension_numbers<[1], [0], [0], [1], [0, 0, 1, 1], [], []>} : vector<128x288xbf16>, vector<288x64xbf16>, vector<128x64xf32> -> vector<128x64xf32>
    %c0_61 = arith.constant 0 : index
    %c0_62 = arith.constant 0 : index
    %101 = vector.load %arg6[%c0_61, %c0_62] : memref<1x64xf32, #tpu.memory_space<vmem>>, vector<1x64xf32>
    %102 = vector.broadcast %101 : vector<1x64xf32> to vector<128x64xf32>
    %103 = arith.mulf %100, %102 : vector<128x64xf32>
    %c0_63 = arith.constant 0 : index
    %c0_64 = arith.constant 0 : index
    %104 = vector.load %arg7[%c0_63, %c0_64] : memref<1x64xf32, #tpu.memory_space<vmem>>, vector<1x64xf32>
    %105 = vector.broadcast %104 : vector<1x64xf32> to vector<128x64xf32>
    %106 = arith.addf %103, %105 : vector<128x64xf32>
    %cst_65 = arith.constant 0.000000e+00 : f32
    %107 = vector.broadcast %cst_65 : f32 to vector<128x64xf32>
    %108 = arith.maximumf %106, %107 : vector<128x64xf32>
    %109 = vector.extract_strided_slice %108 {offsets = [0, 0], sizes = [64, 64], strides = [1, 1]} : vector<128x64xf32> to vector<64x64xf32>
    %110 = vector.shape_cast %109 : vector<64x64xf32> to vector<4x2x4x2x64xf32>
    %111 = vector.extract_strided_slice %110 {offsets = [0, 0, 0, 0, 0], sizes = [4, 1, 4, 2, 64], strides = [1, 1, 1, 1, 1]} : vector<4x2x4x2x64xf32> to vector<4x1x4x2x64xf32>
    %112 = vector.shape_cast %111 : vector<4x1x4x2x64xf32> to vector<4x4x2x64xf32>
    %113 = vector.extract_strided_slice %110 {offsets = [0, 1, 0, 0, 0], sizes = [4, 1, 4, 2, 64], strides = [1, 1, 1, 1, 1]} : vector<4x2x4x2x64xf32> to vector<4x1x4x2x64xf32>
    %114 = vector.shape_cast %113 : vector<4x1x4x2x64xf32> to vector<4x4x2x64xf32>
    %115 = arith.maximumf %112, %114 : vector<4x4x2x64xf32>
    %116 = vector.extract_strided_slice %115 {offsets = [0, 0, 0, 0], sizes = [4, 4, 1, 64], strides = [1, 1, 1, 1]} : vector<4x4x2x64xf32> to vector<4x4x1x64xf32>
    %117 = vector.shape_cast %116 : vector<4x4x1x64xf32> to vector<4x4x64xf32>
    %118 = vector.extract_strided_slice %115 {offsets = [0, 0, 1, 0], sizes = [4, 4, 1, 64], strides = [1, 1, 1, 1]} : vector<4x4x2x64xf32> to vector<4x4x1x64xf32>
    %119 = vector.shape_cast %118 : vector<4x4x1x64xf32> to vector<4x4x64xf32>
    %120 = arith.maximumf %117, %119 : vector<4x4x64xf32>
    %121 = arith.truncf %120 : vector<4x4x64xf32> to vector<4x4x64xbf16>
    %c0_66 = arith.constant 0 : index
    %c1_67 = arith.constant 1 : index
    %c1_68 = arith.constant 1 : index
    %c0_69 = arith.constant 0 : index
    %122 = vector.load %arg18[%c0_66, %c1_67, %c1_68, %c0_69] : memref<2x6x6x64xbf16, #tpu.memory_space<vmem>>, vector<1x4x4x64xbf16>
    %123 = vector.shape_cast %122 : vector<1x4x4x64xbf16> to vector<4x4x64xbf16>
    %124 = vector.shape_cast %121 : vector<4x4x64xbf16> to vector<1x4x4x64xbf16>
    tpu.vector_store %arg18[%c0_66, %c1_67, %c1_68, %c0_69], %124 {strides = array<i32>} : memref<2x6x6x64xbf16, #tpu.memory_space<vmem>>, vector<1x4x4x64xbf16>,
    %125 = vector.extract_strided_slice %108 {offsets = [64, 0], sizes = [64, 64], strides = [1, 1]} : vector<128x64xf32> to vector<64x64xf32>
    %126 = vector.shape_cast %125 : vector<64x64xf32> to vector<4x2x4x2x64xf32>
    %127 = vector.extract_strided_slice %126 {offsets = [0, 0, 0, 0, 0], sizes = [4, 1, 4, 2, 64], strides = [1, 1, 1, 1, 1]} : vector<4x2x4x2x64xf32> to vector<4x1x4x2x64xf32>
    %128 = vector.shape_cast %127 : vector<4x1x4x2x64xf32> to vector<4x4x2x64xf32>
    %129 = vector.extract_strided_slice %126 {offsets = [0, 1, 0, 0, 0], sizes = [4, 1, 4, 2, 64], strides = [1, 1, 1, 1, 1]} : vector<4x2x4x2x64xf32> to vector<4x1x4x2x64xf32>
    %130 = vector.shape_cast %129 : vector<4x1x4x2x64xf32> to vector<4x4x2x64xf32>
    %131 = arith.maximumf %128, %130 : vector<4x4x2x64xf32>
    %132 = vector.extract_strided_slice %131 {offsets = [0, 0, 0, 0], sizes = [4, 4, 1, 64], strides = [1, 1, 1, 1]} : vector<4x4x2x64xf32> to vector<4x4x1x64xf32>
    %133 = vector.shape_cast %132 : vector<4x4x1x64xf32> to vector<4x4x64xf32>
    %134 = vector.extract_strided_slice %131 {offsets = [0, 0, 1, 0], sizes = [4, 4, 1, 64], strides = [1, 1, 1, 1]} : vector<4x4x2x64xf32> to vector<4x4x1x64xf32>
    %135 = vector.shape_cast %134 : vector<4x4x1x64xf32> to vector<4x4x64xf32>
    %136 = arith.maximumf %133, %135 : vector<4x4x64xf32>
    %137 = arith.truncf %136 : vector<4x4x64xf32> to vector<4x4x64xbf16>
    %c1_70 = arith.constant 1 : index
    %c1_71 = arith.constant 1 : index
    %c1_72 = arith.constant 1 : index
    %c0_73 = arith.constant 0 : index
    %138 = vector.load %arg18[%c1_70, %c1_71, %c1_72, %c0_73] : memref<2x6x6x64xbf16, #tpu.memory_space<vmem>>, vector<1x4x4x64xbf16>
    %139 = vector.shape_cast %138 : vector<1x4x4x64xbf16> to vector<4x4x64xbf16>
    %140 = vector.shape_cast %137 : vector<4x4x64xbf16> to vector<1x4x4x64xbf16>
    tpu.vector_store %arg18[%c1_70, %c1_71, %c1_72, %c0_73], %140 {strides = array<i32>} : memref<2x6x6x64xbf16, #tpu.memory_space<vmem>>, vector<1x4x4x64xbf16>,
    %c0_74 = arith.constant 0 : index
    %c0_75 = arith.constant 0 : index
    %c0_76 = arith.constant 0 : index
    %c0_77 = arith.constant 0 : index
    %141 = vector.load %arg18[%c0_74, %c0_75, %c0_76, %c0_77] : memref<2x6x6x64xbf16, #tpu.memory_space<vmem>>, vector<1x6x6x64xbf16>
    %142 = vector.shape_cast %141 : vector<1x6x6x64xbf16> to vector<6x6x64xbf16>
    %143 = vector.extract_strided_slice %142 {offsets = [0, 0, 0], sizes = [4, 4, 64], strides = [1, 1, 1]} : vector<6x6x64xbf16> to vector<4x4x64xbf16>
    %144 = vector.shape_cast %143 : vector<4x4x64xbf16> to vector<16x64xbf16>
    %145 = vector.extract_strided_slice %142 {offsets = [0, 1, 0], sizes = [4, 4, 64], strides = [1, 1, 1]} : vector<6x6x64xbf16> to vector<4x4x64xbf16>
    %146 = vector.shape_cast %145 : vector<4x4x64xbf16> to vector<16x64xbf16>
    %147 = vector.extract_strided_slice %142 {offsets = [0, 2, 0], sizes = [4, 4, 64], strides = [1, 1, 1]} : vector<6x6x64xbf16> to vector<4x4x64xbf16>
    %148 = vector.shape_cast %147 : vector<4x4x64xbf16> to vector<16x64xbf16>
    %149 = vector.extract_strided_slice %142 {offsets = [1, 0, 0], sizes = [4, 4, 64], strides = [1, 1, 1]} : vector<6x6x64xbf16> to vector<4x4x64xbf16>
    %150 = vector.shape_cast %149 : vector<4x4x64xbf16> to vector<16x64xbf16>
    %151 = vector.extract_strided_slice %142 {offsets = [1, 1, 0], sizes = [4, 4, 64], strides = [1, 1, 1]} : vector<6x6x64xbf16> to vector<4x4x64xbf16>
    %152 = vector.shape_cast %151 : vector<4x4x64xbf16> to vector<16x64xbf16>
    %153 = vector.extract_strided_slice %142 {offsets = [1, 2, 0], sizes = [4, 4, 64], strides = [1, 1, 1]} : vector<6x6x64xbf16> to vector<4x4x64xbf16>
    %154 = vector.shape_cast %153 : vector<4x4x64xbf16> to vector<16x64xbf16>
    %155 = vector.extract_strided_slice %142 {offsets = [2, 0, 0], sizes = [4, 4, 64], strides = [1, 1, 1]} : vector<6x6x64xbf16> to vector<4x4x64xbf16>
    %156 = vector.shape_cast %155 : vector<4x4x64xbf16> to vector<16x64xbf16>
    %157 = vector.extract_strided_slice %142 {offsets = [2, 1, 0], sizes = [4, 4, 64], strides = [1, 1, 1]} : vector<6x6x64xbf16> to vector<4x4x64xbf16>
    %158 = vector.shape_cast %157 : vector<4x4x64xbf16> to vector<16x64xbf16>
    %159 = vector.extract_strided_slice %142 {offsets = [2, 2, 0], sizes = [4, 4, 64], strides = [1, 1, 1]} : vector<6x6x64xbf16> to vector<4x4x64xbf16>
    %160 = vector.shape_cast %159 : vector<4x4x64xbf16> to vector<16x64xbf16>
    %161 = tpu.concatenate %144, %146, %148, %150, %152, %154, %156, %158, %160 in 1 : vector<16x64xbf16>, vector<16x64xbf16>, vector<16x64xbf16>, vector<16x64xbf16>, vector<16x64xbf16>, vector<16x64xbf16>, vector<16x64xbf16>, vector<16x64xbf16>, vector<16x64xbf16> -> vector<16x576xbf16>
    %c1_78 = arith.constant 1 : index
    %c0_79 = arith.constant 0 : index
    %c0_80 = arith.constant 0 : index
    %c0_81 = arith.constant 0 : index
    %162 = vector.load %arg18[%c1_78, %c0_79, %c0_80, %c0_81] : memref<2x6x6x64xbf16, #tpu.memory_space<vmem>>, vector<1x6x6x64xbf16>
    %163 = vector.shape_cast %162 : vector<1x6x6x64xbf16> to vector<6x6x64xbf16>
    %164 = vector.extract_strided_slice %163 {offsets = [0, 0, 0], sizes = [4, 4, 64], strides = [1, 1, 1]} : vector<6x6x64xbf16> to vector<4x4x64xbf16>
    %165 = vector.shape_cast %164 : vector<4x4x64xbf16> to vector<16x64xbf16>
    %166 = vector.extract_strided_slice %163 {offsets = [0, 1, 0], sizes = [4, 4, 64], strides = [1, 1, 1]} : vector<6x6x64xbf16> to vector<4x4x64xbf16>
    %167 = vector.shape_cast %166 : vector<4x4x64xbf16> to vector<16x64xbf16>
    %168 = vector.extract_strided_slice %163 {offsets = [0, 2, 0], sizes = [4, 4, 64], strides = [1, 1, 1]} : vector<6x6x64xbf16> to vector<4x4x64xbf16>
    %169 = vector.shape_cast %168 : vector<4x4x64xbf16> to vector<16x64xbf16>
    %170 = vector.extract_strided_slice %163 {offsets = [1, 0, 0], sizes = [4, 4, 64], strides = [1, 1, 1]} : vector<6x6x64xbf16> to vector<4x4x64xbf16>
    %171 = vector.shape_cast %170 : vector<4x4x64xbf16> to vector<16x64xbf16>
    %172 = vector.extract_strided_slice %163 {offsets = [1, 1, 0], sizes = [4, 4, 64], strides = [1, 1, 1]} : vector<6x6x64xbf16> to vector<4x4x64xbf16>
    %173 = vector.shape_cast %172 : vector<4x4x64xbf16> to vector<16x64xbf16>
    %174 = vector.extract_strided_slice %163 {offsets = [1, 2, 0], sizes = [4, 4, 64], strides = [1, 1, 1]} : vector<6x6x64xbf16> to vector<4x4x64xbf16>
    %175 = vector.shape_cast %174 : vector<4x4x64xbf16> to vector<16x64xbf16>
    %176 = vector.extract_strided_slice %163 {offsets = [2, 0, 0], sizes = [4, 4, 64], strides = [1, 1, 1]} : vector<6x6x64xbf16> to vector<4x4x64xbf16>
    %177 = vector.shape_cast %176 : vector<4x4x64xbf16> to vector<16x64xbf16>
    %178 = vector.extract_strided_slice %163 {offsets = [2, 1, 0], sizes = [4, 4, 64], strides = [1, 1, 1]} : vector<6x6x64xbf16> to vector<4x4x64xbf16>
    %179 = vector.shape_cast %178 : vector<4x4x64xbf16> to vector<16x64xbf16>
    %180 = vector.extract_strided_slice %163 {offsets = [2, 2, 0], sizes = [4, 4, 64], strides = [1, 1, 1]} : vector<6x6x64xbf16> to vector<4x4x64xbf16>
    %181 = vector.shape_cast %180 : vector<4x4x64xbf16> to vector<16x64xbf16>
    %182 = tpu.concatenate %165, %167, %169, %171, %173, %175, %177, %179, %181 in 1 : vector<16x64xbf16>, vector<16x64xbf16>, vector<16x64xbf16>, vector<16x64xbf16>, vector<16x64xbf16>, vector<16x64xbf16>, vector<16x64xbf16>, vector<16x64xbf16>, vector<16x64xbf16> -> vector<16x576xbf16>
    %183 = tpu.concatenate %161, %182 in 0 : vector<16x576xbf16>, vector<16x576xbf16> -> vector<32x576xbf16>
    %c0_82 = arith.constant 0 : index
    %c0_83 = arith.constant 0 : index
    %184 = vector.load %arg8[%c0_82, %c0_83] : memref<576x128xbf16, #tpu.memory_space<vmem>>, vector<576x128xbf16>
    %cst_84 = arith.constant dense<0.000000e+00> : vector<32x128xf32>
    %185 = tpu.matmul %183, %184, %cst_84 {dimension_numbers = #tpu.dot_dimension_numbers<[1], [0], [0], [1], [0, 0, 1, 1], [], []>} : vector<32x576xbf16>, vector<576x128xbf16>, vector<32x128xf32> -> vector<32x128xf32>
    %c0_85 = arith.constant 0 : index
    %c0_86 = arith.constant 0 : index
    %186 = vector.load %arg9[%c0_85, %c0_86] : memref<1x128xf32, #tpu.memory_space<vmem>>, vector<1x128xf32>
    %187 = vector.broadcast %186 : vector<1x128xf32> to vector<32x128xf32>
    %188 = arith.mulf %185, %187 : vector<32x128xf32>
    %c0_87 = arith.constant 0 : index
    %c0_88 = arith.constant 0 : index
    %189 = vector.load %arg10[%c0_87, %c0_88] : memref<1x128xf32, #tpu.memory_space<vmem>>, vector<1x128xf32>
    %190 = vector.broadcast %189 : vector<1x128xf32> to vector<32x128xf32>
    %191 = arith.addf %188, %190 : vector<32x128xf32>
    %cst_89 = arith.constant 0.000000e+00 : f32
    %192 = vector.broadcast %cst_89 : f32 to vector<32x128xf32>
    %193 = arith.maximumf %191, %192 : vector<32x128xf32>
    %194 = vector.extract_strided_slice %193 {offsets = [0, 0], sizes = [16, 128], strides = [1, 1]} : vector<32x128xf32> to vector<16x128xf32>
    %195 = vector.shape_cast %194 : vector<16x128xf32> to vector<2x2x2x2x128xf32>
    %196 = vector.extract_strided_slice %195 {offsets = [0, 0, 0, 0, 0], sizes = [2, 1, 2, 2, 128], strides = [1, 1, 1, 1, 1]} : vector<2x2x2x2x128xf32> to vector<2x1x2x2x128xf32>
    %197 = vector.shape_cast %196 : vector<2x1x2x2x128xf32> to vector<2x2x2x128xf32>
    %198 = vector.extract_strided_slice %195 {offsets = [0, 1, 0, 0, 0], sizes = [2, 1, 2, 2, 128], strides = [1, 1, 1, 1, 1]} : vector<2x2x2x2x128xf32> to vector<2x1x2x2x128xf32>
    %199 = vector.shape_cast %198 : vector<2x1x2x2x128xf32> to vector<2x2x2x128xf32>
    %200 = arith.maximumf %197, %199 : vector<2x2x2x128xf32>
    %201 = vector.extract_strided_slice %200 {offsets = [0, 0, 0, 0], sizes = [2, 2, 1, 128], strides = [1, 1, 1, 1]} : vector<2x2x2x128xf32> to vector<2x2x1x128xf32>
    %202 = vector.shape_cast %201 : vector<2x2x1x128xf32> to vector<2x2x128xf32>
    %203 = vector.extract_strided_slice %200 {offsets = [0, 0, 1, 0], sizes = [2, 2, 1, 128], strides = [1, 1, 1, 1]} : vector<2x2x2x128xf32> to vector<2x2x1x128xf32>
    %204 = vector.shape_cast %203 : vector<2x2x1x128xf32> to vector<2x2x128xf32>
    %205 = arith.maximumf %202, %204 : vector<2x2x128xf32>
    %206 = vector.shape_cast %205 : vector<2x2x128xf32> to vector<4x128xf32>
    %207 = arith.truncf %206 : vector<4x128xf32> to vector<4x128xbf16>
    %208 = vector.extract_strided_slice %207 {offsets = [0, 0], sizes = [1, 128], strides = [1, 1]} : vector<4x128xbf16> to vector<1x128xbf16>
    %209 = vector.extract_strided_slice %207 {offsets = [1, 0], sizes = [1, 128], strides = [1, 1]} : vector<4x128xbf16> to vector<1x128xbf16>
    %210 = vector.extract_strided_slice %207 {offsets = [2, 0], sizes = [1, 128], strides = [1, 1]} : vector<4x128xbf16> to vector<1x128xbf16>
    %211 = vector.extract_strided_slice %207 {offsets = [3, 0], sizes = [1, 128], strides = [1, 1]} : vector<4x128xbf16> to vector<1x128xbf16>
    %212 = tpu.concatenate %208, %209, %210, %211 in 1 : vector<1x128xbf16>, vector<1x128xbf16>, vector<1x128xbf16>, vector<1x128xbf16> -> vector<1x512xbf16>
    %213 = vector.extract_strided_slice %193 {offsets = [16, 0], sizes = [16, 128], strides = [1, 1]} : vector<32x128xf32> to vector<16x128xf32>
    %214 = vector.shape_cast %213 : vector<16x128xf32> to vector<2x2x2x2x128xf32>
    %215 = vector.extract_strided_slice %214 {offsets = [0, 0, 0, 0, 0], sizes = [2, 1, 2, 2, 128], strides = [1, 1, 1, 1, 1]} : vector<2x2x2x2x128xf32> to vector<2x1x2x2x128xf32>
    %216 = vector.shape_cast %215 : vector<2x1x2x2x128xf32> to vector<2x2x2x128xf32>
    %217 = vector.extract_strided_slice %214 {offsets = [0, 1, 0, 0, 0], sizes = [2, 1, 2, 2, 128], strides = [1, 1, 1, 1, 1]} : vector<2x2x2x2x128xf32> to vector<2x1x2x2x128xf32>
    %218 = vector.shape_cast %217 : vector<2x1x2x2x128xf32> to vector<2x2x2x128xf32>
    %219 = arith.maximumf %216, %218 : vector<2x2x2x128xf32>
    %220 = vector.extract_strided_slice %219 {offsets = [0, 0, 0, 0], sizes = [2, 2, 1, 128], strides = [1, 1, 1, 1]} : vector<2x2x2x128xf32> to vector<2x2x1x128xf32>
    %221 = vector.shape_cast %220 : vector<2x2x1x128xf32> to vector<2x2x128xf32>
    %222 = vector.extract_strided_slice %219 {offsets = [0, 0, 1, 0], sizes = [2, 2, 1, 128], strides = [1, 1, 1, 1]} : vector<2x2x2x128xf32> to vector<2x2x1x128xf32>
    %223 = vector.shape_cast %222 : vector<2x2x1x128xf32> to vector<2x2x128xf32>
    %224 = arith.maximumf %221, %223 : vector<2x2x128xf32>
    %225 = vector.shape_cast %224 : vector<2x2x128xf32> to vector<4x128xf32>
    %226 = arith.truncf %225 : vector<4x128xf32> to vector<4x128xbf16>
    %227 = vector.extract_strided_slice %226 {offsets = [0, 0], sizes = [1, 128], strides = [1, 1]} : vector<4x128xbf16> to vector<1x128xbf16>
    %228 = vector.extract_strided_slice %226 {offsets = [1, 0], sizes = [1, 128], strides = [1, 1]} : vector<4x128xbf16> to vector<1x128xbf16>
    %229 = vector.extract_strided_slice %226 {offsets = [2, 0], sizes = [1, 128], strides = [1, 1]} : vector<4x128xbf16> to vector<1x128xbf16>
    %230 = vector.extract_strided_slice %226 {offsets = [3, 0], sizes = [1, 128], strides = [1, 1]} : vector<4x128xbf16> to vector<1x128xbf16>
    %231 = tpu.concatenate %227, %228, %229, %230 in 1 : vector<1x128xbf16>, vector<1x128xbf16>, vector<1x128xbf16>, vector<1x128xbf16> -> vector<1x512xbf16>
    %232 = tpu.concatenate %212, %231 in 0 : vector<1x512xbf16>, vector<1x512xbf16> -> vector<2x512xbf16>
    %c0_90 = arith.constant 0 : index
    %c0_91 = arith.constant 0 : index
    %233 = vector.load %arg11[%c0_90, %c0_91] : memref<512x128xbf16, #tpu.memory_space<vmem>>, vector<512x128xbf16>
    %cst_92 = arith.constant dense<0.000000e+00> : vector<2x128xf32>
    %234 = tpu.matmul %232, %233, %cst_92 {dimension_numbers = #tpu.dot_dimension_numbers<[1], [0], [0], [1], [0, 0, 1, 1], [], []>} : vector<2x512xbf16>, vector<512x128xbf16>, vector<2x128xf32> -> vector<2x128xf32>
    %c0_93 = arith.constant 0 : index
    %c0_94 = arith.constant 0 : index
    %235 = vector.load %arg12[%c0_93, %c0_94] : memref<1x128xf32, #tpu.memory_space<vmem>>, vector<1x128xf32>
    %236 = vector.broadcast %235 : vector<1x128xf32> to vector<2x128xf32>
    %237 = arith.mulf %234, %236 : vector<2x128xf32>
    %c0_95 = arith.constant 0 : index
    %c0_96 = arith.constant 0 : index
    %238 = vector.load %arg13[%c0_95, %c0_96] : memref<1x128xf32, #tpu.memory_space<vmem>>, vector<1x128xf32>
    %239 = vector.broadcast %238 : vector<1x128xf32> to vector<2x128xf32>
    %240 = arith.addf %237, %239 : vector<2x128xf32>
    %cst_97 = arith.constant 0.000000e+00 : f32
    %241 = vector.broadcast %cst_97 : f32 to vector<2x128xf32>
    %242 = arith.maximumf %240, %241 : vector<2x128xf32>
    %243 = arith.truncf %242 : vector<2x128xf32> to vector<2x128xbf16>
    %c0_98 = arith.constant 0 : index
    %c0_99 = arith.constant 0 : index
    %244 = vector.load %arg14[%c0_98, %c0_99] : memref<128x128xbf16, #tpu.memory_space<vmem>>, vector<128x128xbf16>
    %cst_100 = arith.constant dense<0.000000e+00> : vector<2x128xf32>
    %245 = tpu.matmul %243, %244, %cst_100 {dimension_numbers = #tpu.dot_dimension_numbers<[1], [0], [0], [1], [0, 0, 1, 1], [], []>} : vector<2x128xbf16>, vector<128x128xbf16>, vector<2x128xf32> -> vector<2x128xf32>
    %c0_101 = arith.constant 0 : index
    %c0_102 = arith.constant 0 : index
    %246 = vector.load %arg15[%c0_101, %c0_102] : memref<1x128xf32, #tpu.memory_space<vmem>>, vector<1x128xf32>
    %247 = vector.broadcast %246 : vector<1x128xf32> to vector<2x128xf32>
    %248 = arith.addf %245, %247 : vector<2x128xf32>
    %c0_103 = arith.constant 0 : index
    %c0_104 = arith.constant 0 : index
    %249 = vector.load %arg16[%c0_103, %c0_104] : memref<2x128xf32, #tpu.memory_space<vmem>>, vector<2x128xf32>
    tpu.vector_store %arg16[%c0_103, %c0_104], %248 {strides = array<i32>} : memref<2x128xf32, #tpu.memory_space<vmem>>, vector<2x128xf32>,
    return
  }
  func.func @transform_0(%arg0: i32) -> (i32, i32, i32) {
    %c0_i32 = arith.constant 0 : i32
    %c0_i32_0 = arith.constant 0 : i32
    %c0_i32_1 = arith.constant 0 : i32
    return %arg0, %c0_i32, %c0_i32_0 : i32, i32, i32
  }
  func.func @transform_1(%arg0: i32) -> (i32, i32) {
    %c0_i32 = arith.constant 0 : i32
    %c0_i32_0 = arith.constant 0 : i32
    %c0_i32_1 = arith.constant 0 : i32
    return %c0_i32, %c0_i32_0 : i32, i32
  }
  func.func @transform_2(%arg0: i32) -> (i32, i32) {
    %c0_i32 = arith.constant 0 : i32
    %c0_i32_0 = arith.constant 0 : i32
    %c0_i32_1 = arith.constant 0 : i32
    return %c0_i32, %c0_i32_0 : i32, i32
  }
  func.func @transform_3(%arg0: i32) -> (i32, i32) {
    %c0_i32 = arith.constant 0 : i32
    %c0_i32_0 = arith.constant 0 : i32
    %c0_i32_1 = arith.constant 0 : i32
    return %c0_i32, %c0_i32_0 : i32, i32
  }
  func.func @transform_4(%arg0: i32) -> (i32, i32) {
    %c0_i32 = arith.constant 0 : i32
    %c0_i32_0 = arith.constant 0 : i32
    %c0_i32_1 = arith.constant 0 : i32
    return %c0_i32, %c0_i32_0 : i32, i32
  }
  func.func @transform_5(%arg0: i32) -> (i32, i32) {
    %c0_i32 = arith.constant 0 : i32
    %c0_i32_0 = arith.constant 0 : i32
    %c0_i32_1 = arith.constant 0 : i32
    return %c0_i32, %c0_i32_0 : i32, i32
  }
  func.func @transform_6(%arg0: i32) -> (i32, i32) {
    %c0_i32 = arith.constant 0 : i32
    %c0_i32_0 = arith.constant 0 : i32
    %c0_i32_1 = arith.constant 0 : i32
    return %c0_i32, %c0_i32_0 : i32, i32
  }
  func.func @transform_7(%arg0: i32) -> (i32, i32) {
    %c0_i32 = arith.constant 0 : i32
    %c0_i32_0 = arith.constant 0 : i32
    %c0_i32_1 = arith.constant 0 : i32
    return %c0_i32, %c0_i32_0 : i32, i32
  }
  func.func @transform_8(%arg0: i32) -> (i32, i32) {
    %c0_i32 = arith.constant 0 : i32
    %c0_i32_0 = arith.constant 0 : i32
    %c0_i32_1 = arith.constant 0 : i32
    return %c0_i32, %c0_i32_0 : i32, i32
  }
  func.func @transform_9(%arg0: i32) -> (i32, i32) {
    %c0_i32 = arith.constant 0 : i32
    %c0_i32_0 = arith.constant 0 : i32
    %c0_i32_1 = arith.constant 0 : i32
    return %c0_i32, %c0_i32_0 : i32, i32
  }
  func.func @transform_10(%arg0: i32) -> (i32, i32) {
    %c0_i32 = arith.constant 0 : i32
    %c0_i32_0 = arith.constant 0 : i32
    %c0_i32_1 = arith.constant 0 : i32
    return %c0_i32, %c0_i32_0 : i32, i32
  }
  func.func @transform_11(%arg0: i32) -> (i32, i32) {
    %c0_i32 = arith.constant 0 : i32
    %c0_i32_0 = arith.constant 0 : i32
    %c0_i32_1 = arith.constant 0 : i32
    return %c0_i32, %c0_i32_0 : i32, i32
  }
  func.func @transform_12(%arg0: i32) -> (i32, i32) {
    %c0_i32 = arith.constant 0 : i32
    %c0_i32_0 = arith.constant 0 : i32
    %c0_i32_1 = arith.constant 0 : i32
    return %c0_i32, %c0_i32_0 : i32, i32
  }
  func.func @transform_13(%arg0: i32) -> (i32, i32) {
    %c0_i32 = arith.constant 0 : i32
    %c0_i32_0 = arith.constant 0 : i32
    %c0_i32_1 = arith.constant 0 : i32
    return %c0_i32, %c0_i32_0 : i32, i32
  }
  func.func @transform_14(%arg0: i32) -> (i32, i32) {
    %c0_i32 = arith.constant 0 : i32
    %c0_i32_0 = arith.constant 0 : i32
    %c0_i32_1 = arith.constant 0 : i32
    return %c0_i32, %c0_i32_0 : i32, i32
  }
  func.func @transform_15(%arg0: i32) -> (i32, i32) {
    %c0_i32 = arith.constant 0 : i32
    %c0_i32_0 = arith.constant 0 : i32
    return %arg0, %c0_i32 : i32, i32
  }
}

</mosaic_0001>

<llo_original>
// kernel: cnn_forward_impl.1
$region0: #{cnn_forward_impl.1}
  #allocation0 [shape = 'u32[]', space=smem, size = 0x4, offset = 0x4, fixed_abs, tag = 'smem constant byte address 0x4 - core index']
  #allocation1 [shape = 'u32[144,128]{1,0:T(1,128)}', space=vmem, size = 0x12000, scoped, tag = 'internal scratch']
  #allocation2 [shape = 'bf16[2,10,10,32]{3,2,1,0:T(8,128)(2,1)}', space=vmem, size = 0x14000, scoped, tag = 'scratch operand']
  #allocation3 [shape = 'bf16[2,6,6,64]{3,2,1,0:T(8,128)(2,1)}', space=vmem, size = 0x6000, scoped, tag = 'scratch operand']
  %s0 = inlined_call_operand.vmem [shape: bf16[2,256,27], index: 0, kind: input, shape index: {}]
  %s1 = inlined_call_operand.vmem [shape: bf16[27,32], index: 1, kind: input, shape index: {}]
  %s2 = inlined_call_operand.vmem [shape: f32[1,32], index: 2, kind: input, shape index: {}]
  %s3 = inlined_call_operand.vmem [shape: f32[1,32], index: 3, kind: input, shape index: {}]
  %s4 = inlined_call_operand.vmem [shape: bf16[288,64], index: 4, kind: input, shape index: {}]
  %s5 = inlined_call_operand.vmem [shape: f32[1,64], index: 5, kind: input, shape index: {}]
  %s6 = inlined_call_operand.vmem [shape: f32[1,64], index: 6, kind: input, shape index: {}]
  %s7 = inlined_call_operand.vmem [shape: bf16[576,128], index: 7, kind: input, shape index: {}]
  %s8 = inlined_call_operand.vmem [shape: f32[1,128], index: 8, kind: input, shape index: {}]
  %s9 = inlined_call_operand.vmem [shape: f32[1,128], index: 9, kind: input, shape index: {}]
  %s10 = inlined_call_operand.vmem [shape: bf16[512,128], index: 10, kind: input, shape index: {}]
  %s11 = inlined_call_operand.vmem [shape: f32[1,128], index: 11, kind: input, shape index: {}]
  %s12 = inlined_call_operand.vmem [shape: f32[1,128], index: 12, kind: input, shape index: {}]
  %s13 = inlined_call_operand.vmem [shape: bf16[128,128], index: 13, kind: input, shape index: {}]
  %s14 = inlined_call_operand.vmem [shape: f32[1,128], index: 14, kind: input, shape index: {}]
  %s15 = inlined_call_operand.hbm [shape: f32[2,128], index: 15, kind: output, shape index: {}]
  %s16 = sld [smem:[#allocation0]]
  $region70: #{cnn_forward_impl.1} parent=0
    _
  %s18 = ssub.s32 1, %s16
  %s19 = scalar_select 0, %s18, %s16
  $region1: #{cnn_forward_impl.1} parent=0
    #allocation4 [shape = 'u8[1024]{0}', space=vmem, size = 0x400, scoped, tag = 'output window, operand 0, single buffered']
    #allocation5 [shape = 's32[1]{0}', space=sflag, size = 0x4, scoped, tag = 'scoped memory for cnn_forward_impl.1']
    %20 = vsyncpa [#allocation5], 0
    // Predicated region
    $region2: #{cnn_forward_impl.1} parent=1 // pred_check
      _
    $region3: #{cnn_forward_impl.1} parent=1 // pred_check_branch
      %22 = sbr.rel (0) target = $region5
    $region4: #{cnn_forward_impl.1} parent=1 // pred_region
      _
    $region5: #{cnn_forward_impl.1} parent=1 // pred_fallthru
      _
    // Predicated region
    $region6: #{cnn_forward_impl.1} parent=1 // pred_check
      _
    $region7: #{cnn_forward_impl.1} parent=1 // pred_check_branch
      %24 = sbr.rel (0) target = $region9
    $region8: #{cnn_forward_impl.1} parent=1 // pred_region
      _
    $region9: #{cnn_forward_impl.1} parent=1 // pred_fallthru
      _
    // Predicated region
    $region10: #{cnn_forward_impl.1} parent=1 // pred_check
      _
    $region11: #{cnn_forward_impl.1} parent=1 // pred_check_branch
      %26 = sbr.rel (0) target = $region13
    $region12: #{cnn_forward_impl.1} parent=1 // pred_region
      _
    $region13: #{cnn_forward_impl.1} parent=1 // pred_fallthru
      _
    // Predicated region
    $region14: #{cnn_forward_impl.1} parent=1 // pred_check
      _
    $region15: #{cnn_forward_impl.1} parent=1 // pred_check_branch
      %28 = sbr.rel (0) target = $region17
    $region16: #{cnn_forward_impl.1} parent=1 // pred_region
      _
    $region17: #{cnn_forward_impl.1} parent=1 // pred_fallthru
      _
    // Predicated region
    $region18: #{cnn_forward_impl.1} parent=1 // pred_check
      _
    $region19: #{cnn_forward_impl.1} parent=1 // pred_check_branch
      %30 = sbr.rel (0) target = $region21
    $region20: #{cnn_forward_impl.1} parent=1 // pred_region
      _
    $region21: #{cnn_forward_impl.1} parent=1 // pred_fallthru
      _
    // Predicated region
    $region22: #{cnn_forward_impl.1} parent=1 // pred_check
      _
    $region23: #{cnn_forward_impl.1} parent=1 // pred_check_branch
      %32 = sbr.rel (0) target = $region25
    $region24: #{cnn_forward_impl.1} parent=1 // pred_region
      _
    $region25: #{cnn_forward_impl.1} parent=1 // pred_fallthru
      _
    // Predicated region
    $region26: #{cnn_forward_impl.1} parent=1 // pred_check
      _
    $region27: #{cnn_forward_impl.1} parent=1 // pred_check_branch
      %34 = sbr.rel (0) target = $region29
    $region28: #{cnn_forward_impl.1} parent=1 // pred_region
      _
    $region29: #{cnn_forward_impl.1} parent=1 // pred_fallthru
      _
    // Predicated region
    $region30: #{cnn_forward_impl.1} parent=1 // pred_check
      _
    $region31: #{cnn_forward_impl.1} parent=1 // pred_check_branch
      %36 = sbr.rel (0) target = $region33
    $region32: #{cnn_forward_impl.1} parent=1 // pred_region
      _
    $region33: #{cnn_forward_impl.1} parent=1 // pred_fallthru
      _
    // Predicated region
    $region34: #{cnn_forward_impl.1} parent=1 // pred_check
      _
    $region35: #{cnn_forward_impl.1} parent=1 // pred_check_branch
      %38 = sbr.rel (0) target = $region37
    $region36: #{cnn_forward_impl.1} parent=1 // pred_region
      _
    $region37: #{cnn_forward_impl.1} parent=1 // pred_fallthru
      _
    // Predicated region
    $region38: #{cnn_forward_impl.1} parent=1 // pred_check
      _
    $region39: #{cnn_forward_impl.1} parent=1 // pred_check_branch
      %40 = sbr.rel (0) target = $region41
    $region40: #{cnn_forward_impl.1} parent=1 // pred_region
      _
    $region41: #{cnn_forward_impl.1} parent=1 // pred_fallthru
      _
    // Predicated region
    $region42: #{cnn_forward_impl.1} parent=1 // pred_check
      _
    $region43: #{cnn_forward_impl.1} parent=1 // pred_check_branch
      %42 = sbr.rel (0) target = $region45
    $region44: #{cnn_forward_impl.1} parent=1 // pred_region
      _
    $region45: #{cnn_forward_impl.1} parent=1 // pred_fallthru
      _
    // Predicated region
    $region46: #{cnn_forward_impl.1} parent=1 // pred_check
      _
    $region47: #{cnn_forward_impl.1} parent=1 // pred_check_branch
      %44 = sbr.rel (0) target = $region49
    $region48: #{cnn_forward_impl.1} parent=1 // pred_region
      _
    $region49: #{cnn_forward_impl.1} parent=1 // pred_fallthru
      _
    // Predicated region
    $region50: #{cnn_forward_impl.1} parent=1 // pred_check
      _
    $region51: #{cnn_forward_impl.1} parent=1 // pred_check_branch
      %46 = sbr.rel (0) target = $region53
    $region52: #{cnn_forward_impl.1} parent=1 // pred_region
      _
    $region53: #{cnn_forward_impl.1} parent=1 // pred_fallthru
      _
    // Predicated region
    $region54: #{cnn_forward_impl.1} parent=1 // pred_check
      _
    $region55: #{cnn_forward_impl.1} parent=1 // pred_check_branch
      %48 = sbr.rel (0) target = $region57
    $region56: #{cnn_forward_impl.1} parent=1 // pred_region
      _
    $region57: #{cnn_forward_impl.1} parent=1 // pred_fallthru
      _
    // Predicated region
    $region58: #{cnn_forward_impl.1} parent=1 // pred_check
      _
    $region59: #{cnn_forward_impl.1} parent=1 // pred_check_branch
      %50 = sbr.rel (0) target = $region61
    $region60: #{cnn_forward_impl.1} parent=1 // pred_region
      _
    $region61: #{cnn_forward_impl.1} parent=1 // pred_fallthru
      _
    %vm52 = vcmask 257024
    %53 = vst.msk [vmem:[#allocation2] sm:$0xf] %vm52, 0
    %vm54 = vcmask 253952
    %55 = vst.msk [vmem:[#allocation2 + $0x4] sm:$0x1] %vm54, 0
    %56 = vst.msk [vmem:[#allocation2 + $0x50] sm:$0xf] %vm52, 0
    %57 = vst.msk [vmem:[#allocation2 + $0x54] sm:$0x1] %vm54, 0
    %s58 = scalar_lea.vmem [#allocation2], 72
    %59 = vst.msk [vmem:[%s58] sm:$0xf] %vm52, 0
    %60 = vst.msk [vmem:[%s58 + $0x4] sm:$0x1] %vm54, 0
    %61 = vst.msk [vmem:[%s58 + $0x50] sm:$0xf] %vm52, 0
    %62 = vst.msk [vmem:[%s58 + $0x54] sm:$0x1] %vm54, 0
    %s63 = scalar_lea.vmem [#allocation2], 8
    %vm64 = vcmask 253952
    %vm65 = vsmask.f32 256
    %vm66 = vmand %vm64, %vm65
    %v67 = vld [vmem:[%s63] sm:$0x1]
    %v68 = vsel %vm66, 0, %v67
    %69 = vst [vmem:[%s63] sm:$0x1] %v68
    %v70 = vld [vmem:[%s63 + $0x8] sm:$0x1]
    %v71 = vsel %vm66, 0, %v70
    %72 = vst [vmem:[%s63 + $0x8] sm:$0x1] %v71
    %v73 = vld [vmem:[%s63 + $0x10] sm:$0x1]
    %v74 = vsel %vm66, 0, %v73
    %75 = vst [vmem:[%s63 + $0x10] sm:$0x1] %v74
    %v76 = vld [vmem:[%s63 + $0x18] sm:$0x1]
    %v77 = vsel %vm66, 0, %v76
    %78 = vst [vmem:[%s63 + $0x18] sm:$0x1] %v77
    %v79 = vld [vmem:[%s63 + $0x20] sm:$0x1]
    %v80 = vsel %vm66, 0, %v79
    %81 = vst [vmem:[%s63 + $0x20] sm:$0x1] %v80
    %v82 = vld [vmem:[%s63 + $0x28] sm:$0x1]
    %v83 = vsel %vm66, 0, %v82
    %84 = vst [vmem:[%s63 + $0x28] sm:$0x1] %v83
    %v85 = vld [vmem:[%s63 + $0x30] sm:$0x1]
    %v86 = vsel %vm66, 0, %v85
    %87 = vst [vmem:[%s63 + $0x30] sm:$0x1] %v86
    %v88 = vld [vmem:[%s63 + $0x38] sm:$0x1]
    %v89 = vsel %vm66, 0, %v88
    %90 = vst [vmem:[%s63 + $0x38] sm:$0x1] %v89
    %v91 = vld [vmem:[%s63 + $0x50] sm:$0x1]
    %v92 = vsel %vm66, 0, %v91
    %93 = vst [vmem:[%s63 + $0x50] sm:$0x1] %v92
    %v94 = vld [vmem:[%s63 + $0x58] sm:$0x1]
    %v95 = vsel %vm66, 0, %v94
    %96 = vst [vmem:[%s63 + $0x58] sm:$0x1] %v95
    %v97 = vld [vmem:[%s63 + $0x60] sm:$0x1]
    %v98 = vsel %vm66, 0, %v97
    %99 = vst [vmem:[%s63 + $0x60] sm:$0x1] %v98
    %v100 = vld [vmem:[%s63 + $0x68] sm:$0x1]
    %v101 = vsel %vm66, 0, %v100
    %102 = vst [vmem:[%s63 + $0x68] sm:$0x1] %v101
    %v103 = vld [vmem:[%s63 + $0x70] sm:$0x1]
    %v104 = vsel %vm66, 0, %v103
    %105 = vst [vmem:[%s63 + $0x70] sm:$0x1] %v104
    %v106 = vld [vmem:[%s63 + $0x78] sm:$0x1]
    %v107 = vsel %vm66, 0, %v106
    %108 = vst [vmem:[%s63 + $0x78] sm:$0x1] %v107
    %v109 = vld [vmem:[%s63 + $0x80] sm:$0x1]
    %v110 = vsel %vm66, 0, %v109
    %111 = vst [vmem:[%s63 + $0x80] sm:$0x1] %v110
    %v112 = vld [vmem:[%s63 + $0x88] sm:$0x1]
    %v113 = vsel %vm66, 0, %v112
    %114 = vst [vmem:[%s63 + $0x88] sm:$0x1] %v113
    %vm115 = vsmask.f32 7938
    %vm116 = vmand %vm64, %vm115
    %v117 = vld [vmem:[%s63 + $0x4] sm:$0x1]
    %v118 = vsel %vm116, 0, %v117
    %119 = vst [vmem:[%s63 + $0x4] sm:$0x1] %v118
    %v120 = vld [vmem:[%s63 + $0xc] sm:$0x1]
    %v121 = vsel %vm116, 0, %v120
    %122 = vst [vmem:[%s63 + $0xc] sm:$0x1] %v121
    %v123 = vld [vmem:[%s63 + $0x14] sm:$0x1]
    %v124 = vsel %vm116, 0, %v123
    %125 = vst [vmem:[%s63 + $0x14] sm:$0x1] %v124
    %v126 = vld [vmem:[%s63 + $0x1c] sm:$0x1]
    %v127 = vsel %vm116, 0, %v126
    %128 = vst [vmem:[%s63 + $0x1c] sm:$0x1] %v127
    %v129 = vld [vmem:[%s63 + $0x24] sm:$0x1]
    %v130 = vsel %vm116, 0, %v129
    %131 = vst [vmem:[%s63 + $0x24] sm:$0x1] %v130
    %v132 = vld [vmem:[%s63 + $0x2c] sm:$0x1]
    %v133 = vsel %vm116, 0, %v132
    %134 = vst [vmem:[%s63 + $0x2c] sm:$0x1] %v133
    %v135 = vld [vmem:[%s63 + $0x34] sm:$0x1]
    %v136 = vsel %vm116, 0, %v135
    %137 = vst [vmem:[%s63 + $0x34] sm:$0x1] %v136
    %v138 = vld [vmem:[%s63 + $0x3c] sm:$0x1]
    %v139 = vsel %vm116, 0, %v138
    %140 = vst [vmem:[%s63 + $0x3c] sm:$0x1] %v139
    %v141 = vld [vmem:[%s63 + $0x54] sm:$0x1]
    %v142 = vsel %vm116, 0, %v141
    %143 = vst [vmem:[%s63 + $0x54] sm:$0x1] %v142
    %v144 = vld [vmem:[%s63 + $0x5c] sm:$0x1]
    %v145 = vsel %vm116, 0, %v144
    %146 = vst [vmem:[%s63 + $0x5c] sm:$0x1] %v145
    %v147 = vld [vmem:[%s63 + $0x64] sm:$0x1]
    %v148 = vsel %vm116, 0, %v147
    %149 = vst [vmem:[%s63 + $0x64] sm:$0x1] %v148
    %v150 = vld [vmem:[%s63 + $0x6c] sm:$0x1]
    %v151 = vsel %vm116, 0, %v150
    %152 = vst [vmem:[%s63 + $0x6c] sm:$0x1] %v151
    %v153 = vld [vmem:[%s63 + $0x74] sm:$0x1]
    %v154 = vsel %vm116, 0, %v153
    %155 = vst [vmem:[%s63 + $0x74] sm:$0x1] %v154
    %v156 = vld [vmem:[%s63 + $0x7c] sm:$0x1]
    %v157 = vsel %vm116, 0, %v156
    %158 = vst [vmem:[%s63 + $0x7c] sm:$0x1] %v157
    %v159 = vld [vmem:[%s63 + $0x84] sm:$0x1]
    %v160 = vsel %vm116, 0, %v159
    %161 = vst [vmem:[%s63 + $0x84] sm:$0x1] %v160
    %v162 = vld [vmem:[%s63 + $0x8c] sm:$0x1]
    %v163 = vsel %vm116, 0, %v162
    %164 = vst [vmem:[%s63 + $0x8c] sm:$0x1] %v163
    %vm165 = vcmask 518144
    %166 = vst.msk [vmem:[#allocation3] sm:$0x7] %vm165, 0
    %167 = vst.msk [vmem:[#allocation3 + $0x18] sm:$0x7] %vm165, 0
    %s168 = scalar_lea.vmem [#allocation3], 20
    %169 = vst.msk [vmem:[%s168] sm:$0x7] %vm165, 0
    %170 = vst.msk [vmem:[%s168 + $0x18] sm:$0x7] %vm165, 0
    %s171 = scalar_lea.vmem [#allocation3], 4
    %vm172 = vcmask 516096
    %vm173 = vmand %vm172, %vm65
    %v174 = vld [vmem:[%s171] sm:$0x1]
    %v175 = vsel %vm173, 0, %v174
    %176 = vst [vmem:[%s171] sm:$0x1] %v175
    %v177 = vld [vmem:[%s171 + $0x4] sm:$0x1]
    %v178 = vsel %vm173, 0, %v177
    %179 = vst [vmem:[%s171 + $0x4] sm:$0x1] %v178
    %v180 = vld [vmem:[%s171 + $0x8] sm:$0x1]
    %v181 = vsel %vm173, 0, %v180
    %182 = vst [vmem:[%s171 + $0x8] sm:$0x1] %v181
    %v183 = vld [vmem:[%s171 + $0xc] sm:$0x1]
    %v184 = vsel %vm173, 0, %v183
    %185 = vst [vmem:[%s171 + $0xc] sm:$0x1] %v184
    %v186 = vld [vmem:[%s171 + $0x18] sm:$0x1]
    %v187 = vsel %vm173, 0, %v186
    %188 = vst [vmem:[%s171 + $0x18] sm:$0x1] %v187
    %v189 = vld [vmem:[%s171 + $0x1c] sm:$0x1]
    %v190 = vsel %vm173, 0, %v189
    %191 = vst [vmem:[%s171 + $0x1c] sm:$0x1] %v190
    %v192 = vld [vmem:[%s171 + $0x20] sm:$0x1]
    %v193 = vsel %vm173, 0, %v192
    %194 = vst [vmem:[%s171 + $0x20] sm:$0x1] %v193
    %v195 = vld [vmem:[%s171 + $0x24] sm:$0x1]
    %v196 = vsel %vm173, 0, %v195
    %197 = vst [vmem:[%s171 + $0x24] sm:$0x1] %v196
    %vm198 = vcmask 518146
    %vm199 = vsmask.f32 7946
    %vm200 = vmand %vm198, %vm199
    %v201 = vld [vmem:[%s171] sm:$0x4]
    %v202 = vsel %vm200, 0, %v201
    %203 = vst [vmem:[%s171] sm:$0x4] %v202
    %v204 = vld [vmem:[%s171 + $0x4] sm:$0x4]
    %v205 = vsel %vm200, 0, %v204
    %206 = vst [vmem:[%s171 + $0x4] sm:$0x4] %v205
    %v207 = vld [vmem:[%s171 + $0x8] sm:$0x4]
    %v208 = vsel %vm200, 0, %v207
    %209 = vst [vmem:[%s171 + $0x8] sm:$0x4] %v208
    %v210 = vld [vmem:[%s171 + $0xc] sm:$0x4]
    %v211 = vsel %vm200, 0, %v210
    %212 = vst [vmem:[%s171 + $0xc] sm:$0x4] %v211
    %v213 = vld [vmem:[%s171 + $0x18] sm:$0x4]
    %v214 = vsel %vm200, 0, %v213
    %215 = vst [vmem:[%s171 + $0x18] sm:$0x4] %v214
    %v216 = vld [vmem:[%s171 + $0x1c] sm:$0x4]
    %v217 = vsel %vm200, 0, %v216
    %218 = vst [vmem:[%s171 + $0x1c] sm:$0x4] %v217
    %v219 = vld [vmem:[%s171 + $0x20] sm:$0x4]
    %v220 = vsel %vm200, 0, %v219
    %221 = vst [vmem:[%s171 + $0x20] sm:$0x4] %v220
    %v222 = vld [vmem:[%s171 + $0x24] sm:$0x4]
    %v223 = vsel %vm200, 0, %v222
    %224 = vst [vmem:[%s171 + $0x24] sm:$0x4] %v223
    %v225 = vld [vmem:[%s0] sm:$0xf]
    %v226 = vld [vmem:[%s0 + $0x4] sm:$0xf]
    %v227 = vld [vmem:[%s0 + $0x8] sm:$0xf]
    %v228 = vld [vmem:[%s0 + $0xc] sm:$0xf]
    %v229 = vld [vmem:[%s0 + $0x10] sm:$0xf]
    %v230 = vld [vmem:[%s0 + $0x14] sm:$0xf]
    %v231 = vld [vmem:[%s0 + $0x18] sm:$0xf]
    %v232 = vld [vmem:[%s0 + $0x1c] sm:$0xf]
    %v233 = vld [vmem:[%s0 + $0x20] sm:$0xf]
    %v234 = vld [vmem:[%s0 + $0x24] sm:$0xf]
    %v235 = vld [vmem:[%s0 + $0x28] sm:$0xf]
    %v236 = vld [vmem:[%s0 + $0x2c] sm:$0xf]
    %v237 = vld [vmem:[%s0 + $0x30] sm:$0xf]
    %v238 = vld [vmem:[%s0 + $0x34] sm:$0xf]
    %v239 = vld [vmem:[%s0 + $0x38] sm:$0xf]
    %v240 = vld [vmem:[%s0 + $0x3c] sm:$0xf]
    %v241 = vld [vmem:[%s0 + $0x40] sm:$0xf]
    %v242 = vld [vmem:[%s0 + $0x44] sm:$0xf]
    %v243 = vld [vmem:[%s0 + $0x48] sm:$0xf]
    %v244 = vld [vmem:[%s0 + $0x4c] sm:$0xf]
    %v245 = vld [vmem:[%s0 + $0x50] sm:$0xf]
    %v246 = vld [vmem:[%s0 + $0x54] sm:$0xf]
    %v247 = vld [vmem:[%s0 + $0x58] sm:$0xf]
    %v248 = vld [vmem:[%s0 + $0x5c] sm:$0xf]
    %v249 = vld [vmem:[%s0 + $0x60] sm:$0xf]
    %v250 = vld [vmem:[%s0 + $0x64] sm:$0xf]
    %v251 = vld [vmem:[%s0 + $0x68] sm:$0xf]
    %v252 = vld [vmem:[%s0 + $0x6c] sm:$0xf]
    %v253 = vld [vmem:[%s0 + $0x70] sm:$0xf]
    %v254 = vld [vmem:[%s0 + $0x74] sm:$0xf]
    %v255 = vld [vmem:[%s0 + $0x78] sm:$0xf]
    %v256 = vld [vmem:[%s0 + $0x7c] sm:$0xf]
    %v257 = vld [vmem:[%s0 + $0x80] sm:$0xf]
    %v258 = vld [vmem:[%s0 + $0x84] sm:$0xf]
    %v259 = vld [vmem:[%s0 + $0x88] sm:$0xf]
    %v260 = vld [vmem:[%s0 + $0x8c] sm:$0xf]
    %v261 = vld [vmem:[%s0 + $0x90] sm:$0xf]
    %v262 = vld [vmem:[%s0 + $0x94] sm:$0xf]
    %v263 = vld [vmem:[%s0 + $0x98] sm:$0xf]
    %v264 = vld [vmem:[%s0 + $0x9c] sm:$0xf]
    %v265 = vld [vmem:[%s0 + $0xa0] sm:$0xf]
    %v266 = vld [vmem:[%s0 + $0xa4] sm:$0xf]
    %v267 = vld [vmem:[%s0 + $0xa8] sm:$0xf]
    %v268 = vld [vmem:[%s0 + $0xac] sm:$0xf]
    %v269 = vld [vmem:[%s0 + $0xb0] sm:$0xf]
    %v270 = vld [vmem:[%s0 + $0xb4] sm:$0xf]
    %v271 = vld [vmem:[%s0 + $0xb8] sm:$0xf]
    %v272 = vld [vmem:[%s0 + $0xbc] sm:$0xf]
    %v273 = vld [vmem:[%s0 + $0xc0] sm:$0xf]
    %v274 = vld [vmem:[%s0 + $0xc4] sm:$0xf]
    %v275 = vld [vmem:[%s0 + $0xc8] sm:$0xf]
    %v276 = vld [vmem:[%s0 + $0xcc] sm:$0xf]
    %v277 = vld [vmem:[%s0 + $0xd0] sm:$0xf]
    %v278 = vld [vmem:[%s0 + $0xd4] sm:$0xf]
    %v279 = vld [vmem:[%s0 + $0xd8] sm:$0xf]
    %v280 = vld [vmem:[%s0 + $0xdc] sm:$0xf]
    %v281 = vld [vmem:[%s0 + $0xe0] sm:$0xf]
    %v282 = vld [vmem:[%s0 + $0xe4] sm:$0xf]
    %v283 = vld [vmem:[%s0 + $0xe8] sm:$0xf]
    %v284 = vld [vmem:[%s0 + $0xec] sm:$0xf]
    %v285 = vld [vmem:[%s0 + $0xf0] sm:$0xf]
    %v286 = vld [vmem:[%s0 + $0xf4] sm:$0xf]
    %v287 = vld [vmem:[%s0 + $0xf8] sm:$0xf]
    %v288 = vld [vmem:[%s0 + $0xfc] sm:$0xf]
    %v289 = vld [vmem:[%s1] sm:$0xf]
    %v290 = vld [vmem:[%s1 + $0x4] sm:$0xf]
    %v291 = vld [vmem:[%s1 + $0x8] sm:$0xf]
    %v292 = vld [vmem:[%s1 + $0xc] sm:$0x3]
    %v357 = vunpack.c.l.b16 %v225
    %v358 = vunpack.c.l.b16 %v226
    %v359 = vunpack.c.l.b16 %v227
    %v360 = vunpack.c.l.b16 %v228
    %v361 = vunpack.c.l.b16 %v229
    %v362 = vunpack.c.l.b16 %v230
    %v363 = vunpack.c.l.b16 %v231
    %v364 = vunpack.c.l.b16 %v232
    %v365 = vunpack.c.l.b16 %v233
    %v366 = vunpack.c.l.b16 %v234
    %v367 = vunpack.c.l.b16 %v235
    %v368 = vunpack.c.l.b16 %v236
    %v369 = vunpack.c.l.b16 %v237
    %v370 = vunpack.c.l.b16 %v238
    %v371 = vunpack.c.l.b16 %v239
    %v372 = vunpack.c.l.b16 %v240
    %v373 = vunpack.c.l.b16 %v241
    %v374 = vunpack.c.l.b16 %v242
    %v375 = vunpack.c.l.b16 %v243
    %v376 = vunpack.c.l.b16 %v244
    %v377 = vunpack.c.l.b16 %v245
    %v378 = vunpack.c.l.b16 %v246
    %v379 = vunpack.c.l.b16 %v247
    %v380 = vunpack.c.l.b16 %v248
    %v381 = vunpack.c.l.b16 %v249
    %v382 = vunpack.c.l.b16 %v250
    %v383 = vunpack.c.l.b16 %v251
    %v384 = vunpack.c.l.b16 %v252
    %v385 = vunpack.c.l.b16 %v253
    %v386 = vunpack.c.l.b16 %v254
    %v387 = vunpack.c.l.b16 %v255
    %v388 = vunpack.c.l.b16 %v256
    %v389 = vunpack.c.l.b16 %v257
    %v390 = vunpack.c.l.b16 %v258
    %v391 = vunpack.c.l.b16 %v259
    %v392 = vunpack.c.l.b16 %v260
    %v393 = vunpack.c.l.b16 %v261
    %v394 = vunpack.c.l.b16 %v262
    %v395 = vunpack.c.l.b16 %v263
    %v396 = vunpack.c.l.b16 %v264
    %v397 = vunpack.c.l.b16 %v265
    %v398 = vunpack.c.l.b16 %v266
    %v399 = vunpack.c.l.b16 %v267
    %v400 = vunpack.c.l.b16 %v268
    %v401 = vunpack.c.l.b16 %v269
    %v402 = vunpack.c.l.b16 %v270
    %v403 = vunpack.c.l.b16 %v271
    %v404 = vunpack.c.l.b16 %v272
    %v405 = vunpack.c.l.b16 %v273
    %v406 = vunpack.c.l.b16 %v274
    %v407 = vunpack.c.l.b16 %v275
    %v408 = vunpack.c.l.b16 %v276
    %v409 = vunpack.c.l.b16 %v277
    %v410 = vunpack.c.l.b16 %v278
    %v411 = vunpack.c.l.b16 %v279
    %v412 = vunpack.c.l.b16 %v280
    %v413 = vunpack.c.l.b16 %v281
    %v414 = vunpack.c.l.b16 %v282
    %v415 = vunpack.c.l.b16 %v283
    %v416 = vunpack.c.l.b16 %v284
    %v417 = vunpack.c.l.b16 %v285
    %v418 = vunpack.c.l.b16 %v286
    %v419 = vunpack.c.l.b16 %v287
    %v420 = vunpack.c.l.b16 %v288
    %v421 = vpack.c.b16 %v358, %v357
    %v422 = vpack.c.b16 %v360, %v359
    %v423 = vpack.c.b16 %v362, %v361
    %v424 = vpack.c.b16 %v364, %v363
    %v425 = vpack.c.b16 %v366, %v365
    %v426 = vpack.c.b16 %v368, %v367
    %v427 = vpack.c.b16 %v370, %v369
    %v428 = vpack.c.b16 %v372, %v371
    %v429 = vpack.c.b16 %v374, %v373
    %v430 = vpack.c.b16 %v376, %v375
    %v431 = vpack.c.b16 %v378, %v377
    %v432 = vpack.c.b16 %v380, %v379
    %v433 = vpack.c.b16 %v382, %v381
    %v434 = vpack.c.b16 %v384, %v383
    %v435 = vpack.c.b16 %v386, %v385
    %v436 = vpack.c.b16 %v388, %v387
    %v437 = vpack.c.b16 %v390, %v389
    %v438 = vpack.c.b16 %v392, %v391
    %v439 = vpack.c.b16 %v394, %v393
    %v440 = vpack.c.b16 %v396, %v395
    %v441 = vpack.c.b16 %v398, %v397
    %v442 = vpack.c.b16 %v400, %v399
    %v443 = vpack.c.b16 %v402, %v401
    %v444 = vpack.c.b16 %v404, %v403
    %v445 = vpack.c.b16 %v406, %v405
    %v446 = vpack.c.b16 %v408, %v407
    %v447 = vpack.c.b16 %v410, %v409
    %v448 = vpack.c.b16 %v412, %v411
    %v449 = vpack.c.b16 %v414, %v413
    %v450 = vpack.c.b16 %v416, %v415
    %v451 = vpack.c.b16 %v418, %v417
    %v452 = vpack.c.b16 %v420, %v419
    %v457 = vunpack.c.l.b16 %v289
    %v458 = vunpack.c.l.b16 %v290
    %v459 = vunpack.c.l.b16 %v291
    %v460 = vunpack.c.l.b16 %v292
    %v461 = vpack.c.b16 %v458, %v457
    %v462 = vpack.c.b16 %v460, %v459
    %vm464 = vcmask 220160
    %v466 = vsel %vm464, %v421, 0
    %v469 = vsel %vm464, %v422, 0
    %v472 = vsel %vm464, %v423, 0
    %v475 = vsel %vm464, %v424, 0
    %v478 = vsel %vm464, %v425, 0
    %v481 = vsel %vm464, %v426, 0
    %v484 = vsel %vm464, %v427, 0
    %v487 = vsel %vm464, %v428, 0
    %v490 = vsel %vm464, %v429, 0
    %v493 = vsel %vm464, %v430, 0
    %v496 = vsel %vm464, %v431, 0
    %v499 = vsel %vm464, %v432, 0
    %v502 = vsel %vm464, %v433, 0
    %v505 = vsel %vm464, %v434, 0
    %v508 = vsel %vm464, %v435, 0
    %v511 = vsel %vm464, %v436, 0
    %v514 = vsel %vm464, %v437, 0
    %v517 = vsel %vm464, %v438, 0
    %v520 = vsel %vm464, %v439, 0
    %v523 = vsel %vm464, %v440, 0
    %v526 = vsel %vm464, %v441, 0
    %v529 = vsel %vm464, %v442, 0
    %v532 = vsel %vm464, %v443, 0
    %v535 = vsel %vm464, %v444, 0
    %v538 = vsel %vm464, %v445, 0
    %v541 = vsel %vm464, %v446, 0
    %v544 = vsel %vm464, %v447, 0
    %v547 = vsel %vm464, %v448, 0
    %v550 = vsel %vm464, %v449, 0
    %v553 = vsel %vm464, %v450, 0
    %v556 = vsel %vm464, %v451, 0
    %v559 = vsel %vm464, %v452, 0
    %vm561 = vcmask 1044480
    %vm562 = vcmask 1045504
    %v563 = vsel %vm561, 4294967295, 65535
    %v564 = vsel %vm562, %v563, 0
    %v566 = vand.u32 %v462, %v564
    %568 = vmatprep.subr.bf16.mxu0 0
    %569 = vmatpush1.bf16.msra.mxu0 0
    %570 = vmatprep.subr.bf16.mxu0 0
    %571 = vmatpush1.bf16.msra.mxu0 0
    %572 = vmatprep.subr.bf16.mxu0 0
    %573 = vmatpush1.bf16.msra.mxu0 0
    %574 = vmatprep.subr.bf16.mxu0 0
    %575 = vmatpush1.bf16.msra.mxu0 0
    %576 = vmatprep.subr.bf16.mxu0 0
    %577 = vmatpush1.bf16.msra.mxu0 0
    %578 = vmatprep.subr.bf16.mxu0 0
    %579 = vmatpush1.bf16.msra.mxu0 0
    %580 = vmatprep.subr.bf16.mxu0 0
    %581 = vmatpush1.bf16.msra.mxu0 %v566
    %582 = vmatprep.subr.bf16.mxu0 0
    %583 = vmatpush1.bf16.msra.mxu0 %v461
    %584 = vmatprep.subr.bf16.mxu0 0
    %585 = vmatpush2.bf16.msra.mxu0 0
    %586 = vmatprep.subr.bf16.mxu0 0
    %587 = vmatpush2.bf16.msra.mxu0 0
    %588 = vmatprep.subr.bf16.mxu0 0
    %589 = vmatpush2.bf16.msra.mxu0 0
    %590 = vmatprep.subr.bf16.mxu0 0
    %591 = vmatpush2.bf16.msra.mxu0 0
    %592 = vmatprep.subr.bf16.mxu0 0
    %593 = vmatpush2.bf16.msra.mxu0 0
    %594 = vmatprep.subr.bf16.mxu0 0
    %595 = vmatpush2.bf16.msra.mxu0 0
    %596 = vmatprep.subr.bf16.mxu0 0
    %597 = vmatpush2.bf16.msra.mxu0 0
    %598 = vmatprep.subr.bf16.mxu0 0
    %599 = vmatpush2.bf16.msra.mxu0 0
    %600 = vmatprep.mubr.bf16.mxu0 0
    %601 = vmatmul.mubr.bf16.gmra.mxu0 %v466
    %v602 = vpop.f32.mrf.mxu0
    %v603 = vadd.f32 0.0, %v602
    %v604 = vpop.f32.mrf.mxu0
    %v605 = vpop.f32.mrf.mxu0
    %v606 = vadd.f32 0.0, %v605
    %v607 = vpop.f32.mrf.mxu0
    %608 = vmatprep.mubr.bf16.mxu0 0
    %609 = vmatmul.mubr.bf16.gmra.mxu0 %v469
    %v610 = vpop.f32.mrf.mxu0
    %v611 = vadd.f32 0.0, %v610
    %v612 = vpop.f32.mrf.mxu0
    %v613 = vpop.f32.mrf.mxu0
    %v614 = vadd.f32 0.0, %v613
    %v615 = vpop.f32.mrf.mxu0
    %616 = vmatprep.mubr.bf16.mxu0 0
    %617 = vmatmul.mubr.bf16.gmra.mxu0 %v472
    %v618 = vpop.f32.mrf.mxu0
    %v619 = vadd.f32 0.0, %v618
    %v620 = vpop.f32.mrf.mxu0
    %v621 = vpop.f32.mrf.mxu0
    %v622 = vadd.f32 0.0, %v621
    %v623 = vpop.f32.mrf.mxu0
    %624 = vmatprep.mubr.bf16.mxu0 0
    %625 = vmatmul.mubr.bf16.gmra.mxu0 %v475
    %v626 = vpop.f32.mrf.mxu0
    %v627 = vadd.f32 0.0, %v626
    %v628 = vpop.f32.mrf.mxu0
    %v629 = vpop.f32.mrf.mxu0
    %v630 = vadd.f32 0.0, %v629
    %v631 = vpop.f32.mrf.mxu0
    %632 = vmatprep.mubr.bf16.mxu0 0
    %633 = vmatmul.mubr.bf16.gmra.mxu0 %v478
    %v634 = vpop.f32.mrf.mxu0
    %v635 = vadd.f32 0.0, %v634
    %v636 = vpop.f32.mrf.mxu0
    %v637 = vpop.f32.mrf.mxu0
    %v638 = vadd.f32 0.0, %v637
    %v639 = vpop.f32.mrf.mxu0
    %640 = vmatprep.mubr.bf16.mxu0 0
    %641 = vmatmul.mubr.bf16.gmra.mxu0 %v481
    %v642 = vpop.f32.mrf.mxu0
    %v643 = vadd.f32 0.0, %v642
    %v644 = vpop.f32.mrf.mxu0
    %v645 = vpop.f32.mrf.mxu0
    %v646 = vadd.f32 0.0, %v645
    %v647 = vpop.f32.mrf.mxu0
    %648 = vmatprep.mubr.bf16.mxu0 0
    %649 = vmatmul.mubr.bf16.gmra.mxu0 %v484
    %v650 = vpop.f32.mrf.mxu0
    %v651 = vadd.f32 0.0, %v650
    %v652 = vpop.f32.mrf.mxu0
    %v653 = vpop.f32.mrf.mxu0
    %v654 = vadd.f32 0.0, %v653
    %v655 = vpop.f32.mrf.mxu0
    %656 = vmatprep.mubr.bf16.mxu0 0
    %657 = vmatmul.mubr.bf16.gmra.mxu0 %v487
    %v658 = vpop.f32.mrf.mxu0
    %v659 = vadd.f32 0.0, %v658
    %v660 = vpop.f32.mrf.mxu0
    %v661 = vpop.f32.mrf.mxu0
    %v662 = vadd.f32 0.0, %v661
    %v663 = vpop.f32.mrf.mxu0
    %664 = vmatprep.mubr.bf16.mxu0 0
    %665 = vmatmul.mubr.bf16.gmra.mxu0 %v490
    %v666 = vpop.f32.mrf.mxu0
    %v667 = vadd.f32 0.0, %v666
    %v668 = vpop.f32.mrf.mxu0
    %v669 = vpop.f32.mrf.mxu0
    %v670 = vadd.f32 0.0, %v669
    %v671 = vpop.f32.mrf.mxu0
    %672 = vmatprep.mubr.bf16.mxu0 0
    %673 = vmatmul.mubr.bf16.gmra.mxu0 %v493
    %v674 = vpop.f32.mrf.mxu0
    %v675 = vadd.f32 0.0, %v674
    %v676 = vpop.f32.mrf.mxu0
    %v677 = vpop.f32.mrf.mxu0
    %v678 = vadd.f32 0.0, %v677
    %v679 = vpop.f32.mrf.mxu0
    %680 = vmatprep.mubr.bf16.mxu0 0
    %681 = vmatmul.mubr.bf16.gmra.mxu0 %v496
    %v682 = vpop.f32.mrf.mxu0
    %v683 = vadd.f32 0.0, %v682
    %v684 = vpop.f32.mrf.mxu0
    %v685 = vpop.f32.mrf.mxu0
    %v686 = vadd.f32 0.0, %v685
    %v687 = vpop.f32.mrf.mxu0
    %688 = vmatprep.mubr.bf16.mxu0 0
    %689 = vmatmul.mubr.bf16.gmra.mxu0 %v499
    %v690 = vpop.f32.mrf.mxu0
    %v691 = vadd.f32 0.0, %v690
    %v692 = vpop.f32.mrf.mxu0
    %v693 = vpop.f32.mrf.mxu0
    %v694 = vadd.f32 0.0, %v693
    %v695 = vpop.f32.mrf.mxu0
    %696 = vmatprep.mubr.bf16.mxu0 0
    %697 = vmatmul.mubr.bf16.gmra.mxu0 %v502
    %v698 = vpop.f32.mrf.mxu0
    %v699 = vadd.f32 0.0, %v698
    %v700 = vpop.f32.mrf.mxu0
    %v701 = vpop.f32.mrf.mxu0
    %v702 = vadd.f32 0.0, %v701
    %v703 = vpop.f32.mrf.mxu0
    %704 = vmatprep.mubr.bf16.mxu0 0
    %705 = vmatmul.mubr.bf16.gmra.mxu0 %v505
    %v706 = vpop.f32.mrf.mxu0
    %v707 = vadd.f32 0.0, %v706
    %v708 = vpop.f32.mrf.mxu0
    %v709 = vpop.f32.mrf.mxu0
    %v710 = vadd.f32 0.0, %v709
    %v711 = vpop.f32.mrf.mxu0
    %712 = vmatprep.mubr.bf16.mxu0 0
    %713 = vmatmul.mubr.bf16.gmra.mxu0 %v508
    %v714 = vpop.f32.mrf.mxu0
    %v715 = vadd.f32 0.0, %v714
    %v716 = vpop.f32.mrf.mxu0
    %v717 = vpop.f32.mrf.mxu0
    %v718 = vadd.f32 0.0, %v717
    %v719 = vpop.f32.mrf.mxu0
    %720 = vmatprep.mubr.bf16.mxu0 0
    %721 = vmatmul.mubr.bf16.gmra.mxu0 %v511
    %v722 = vpop.f32.mrf.mxu0
    %v723 = vadd.f32 0.0, %v722
    %v724 = vpop.f32.mrf.mxu0
    %v725 = vpop.f32.mrf.mxu0
    %v726 = vadd.f32 0.0, %v725
    %v727 = vpop.f32.mrf.mxu0
    %728 = vmatprep.mubr.bf16.mxu0 0
    %729 = vmatmul.mubr.bf16.gmra.mxu0 %v514
    %v730 = vpop.f32.mrf.mxu0
    %v731 = vadd.f32 0.0, %v730
    %v732 = vpop.f32.mrf.mxu0
    %v733 = vpop.f32.mrf.mxu0
    %v734 = vadd.f32 0.0, %v733
    %v735 = vpop.f32.mrf.mxu0
    %736 = vmatprep.mubr.bf16.mxu0 0
    %737 = vmatmul.mubr.bf16.gmra.mxu0 %v517
    %v738 = vpop.f32.mrf.mxu0
    %v739 = vadd.f32 0.0, %v738
    %v740 = vpop.f32.mrf.mxu0
    %v741 = vpop.f32.mrf.mxu0
    %v742 = vadd.f32 0.0, %v741
    %v743 = vpop.f32.mrf.mxu0
    %744 = vmatprep.mubr.bf16.mxu0 0
    %745 = vmatmul.mubr.bf16.gmra.mxu0 %v520
    %v746 = vpop.f32.mrf.mxu0
    %v747 = vadd.f32 0.0, %v746
    %v748 = vpop.f32.mrf.mxu0
    %v749 = vpop.f32.mrf.mxu0
    %v750 = vadd.f32 0.0, %v749
    %v751 = vpop.f32.mrf.mxu0
    %752 = vmatprep.mubr.bf16.mxu0 0
    %753 = vmatmul.mubr.bf16.gmra.mxu0 %v523
    %v754 = vpop.f32.mrf.mxu0
    %v755 = vadd.f32 0.0, %v754
    %v756 = vpop.f32.mrf.mxu0
    %v757 = vpop.f32.mrf.mxu0
    %v758 = vadd.f32 0.0, %v757
    %v759 = vpop.f32.mrf.mxu0
    %760 = vmatprep.mubr.bf16.mxu0 0
    %761 = vmatmul.mubr.bf16.gmra.mxu0 %v526
    %v762 = vpop.f32.mrf.mxu0
    %v763 = vadd.f32 0.0, %v762
    %v764 = vpop.f32.mrf.mxu0
    %v765 = vpop.f32.mrf.mxu0
    %v766 = vadd.f32 0.0, %v765
    %v767 = vpop.f32.mrf.mxu0
    %768 = vmatprep.mubr.bf16.mxu0 0
    %769 = vmatmul.mubr.bf16.gmra.mxu0 %v529
    %v770 = vpop.f32.mrf.mxu0
    %v771 = vadd.f32 0.0, %v770
    %v772 = vpop.f32.mrf.mxu0
    %v773 = vpop.f32.mrf.mxu0
    %v774 = vadd.f32 0.0, %v773
    %v775 = vpop.f32.mrf.mxu0
    %776 = vmatprep.mubr.bf16.mxu0 0
    %777 = vmatmul.mubr.bf16.gmra.mxu0 %v532
    %v778 = vpop.f32.mrf.mxu0
    %v779 = vadd.f32 0.0, %v778
    %v780 = vpop.f32.mrf.mxu0
    %v781 = vpop.f32.mrf.mxu0
    %v782 = vadd.f32 0.0, %v781
    %v783 = vpop.f32.mrf.mxu0
    %784 = vmatprep.mubr.bf16.mxu0 0
    %785 = vmatmul.mubr.bf16.gmra.mxu0 %v535
    %v786 = vpop.f32.mrf.mxu0
    %v787 = vadd.f32 0.0, %v786
    %v788 = vpop.f32.mrf.mxu0
    %v789 = vpop.f32.mrf.mxu0
    %v790 = vadd.f32 0.0, %v789
    %v791 = vpop.f32.mrf.mxu0
    %792 = vmatprep.mubr.bf16.mxu0 0
    %793 = vmatmul.mubr.bf16.gmra.mxu0 %v538
    %v794 = vpop.f32.mrf.mxu0
    %v795 = vadd.f32 0.0, %v794
    %v796 = vpop.f32.mrf.mxu0
    %v797 = vpop.f32.mrf.mxu0
    %v798 = vadd.f32 0.0, %v797
    %v799 = vpop.f32.mrf.mxu0
    %800 = vmatprep.mubr.bf16.mxu0 0
    %801 = vmatmul.mubr.bf16.gmra.mxu0 %v541
    %v802 = vpop.f32.mrf.mxu0
    %v803 = vadd.f32 0.0, %v802
    %v804 = vpop.f32.mrf.mxu0
    %v805 = vpop.f32.mrf.mxu0
    %v806 = vadd.f32 0.0, %v805
    %v807 = vpop.f32.mrf.mxu0
    %808 = vmatprep.mubr.bf16.mxu0 0
    %809 = vmatmul.mubr.bf16.gmra.mxu0 %v544
    %v810 = vpop.f32.mrf.mxu0
    %v811 = vadd.f32 0.0, %v810
    %v812 = vpop.f32.mrf.mxu0
    %v813 = vpop.f32.mrf.mxu0
    %v814 = vadd.f32 0.0, %v813
    %v815 = vpop.f32.mrf.mxu0
    %816 = vmatprep.mubr.bf16.mxu0 0
    %817 = vmatmul.mubr.bf16.gmra.mxu0 %v547
    %v818 = vpop.f32.mrf.mxu0
    %v819 = vadd.f32 0.0, %v818
    %v820 = vpop.f32.mrf.mxu0
    %v821 = vpop.f32.mrf.mxu0
    %v822 = vadd.f32 0.0, %v821
    %v823 = vpop.f32.mrf.mxu0
    %824 = vmatprep.mubr.bf16.mxu0 0
    %825 = vmatmul.mubr.bf16.gmra.mxu0 %v550
    %v826 = vpop.f32.mrf.mxu0
    %v827 = vadd.f32 0.0, %v826
    %v828 = vpop.f32.mrf.mxu0
    %v829 = vpop.f32.mrf.mxu0
    %v830 = vadd.f32 0.0, %v829
    %v831 = vpop.f32.mrf.mxu0
    %832 = vmatprep.mubr.bf16.mxu0 0
    %833 = vmatmul.mubr.bf16.gmra.mxu0 %v553
    %v834 = vpop.f32.mrf.mxu0
    %v835 = vadd.f32 0.0, %v834
    %v836 = vpop.f32.mrf.mxu0
    %v837 = vpop.f32.mrf.mxu0
    %v838 = vadd.f32 0.0, %v837
    %v839 = vpop.f32.mrf.mxu0
    %840 = vmatprep.mubr.bf16.mxu0 0
    %841 = vmatmul.mubr.bf16.gmra.mxu0 %v556
    %v842 = vpop.f32.mrf.mxu0
    %v843 = vadd.f32 0.0, %v842
    %v844 = vpop.f32.mrf.mxu0
    %v845 = vpop.f32.mrf.mxu0
    %v846 = vadd.f32 0.0, %v845
    %v847 = vpop.f32.mrf.mxu0
    %848 = vmatprep.mubr.bf16.mxu0 0
    %849 = vmatmul.mubr.bf16.gmra.mxu0 %v559
    %v850 = vpop.f32.mrf.mxu0
    %v851 = vadd.f32 0.0, %v850
    %v852 = vpop.f32.mrf.mxu0
    %v853 = vpop.f32.mrf.mxu0
    %v854 = vadd.f32 0.0, %v853
    %v855 = vpop.f32.mrf.mxu0
    %856 = vdwg.mxu0
    %v857 = vld [vmem:[%s2] sm:$0x1]
    %v859 = vlaneseq
    %v860 = vshrl.u32 %v859, 7
    %v861 = vsub.s32 0, %v860
    %v862 = vrot.slane %v857, %v861
    %v864 = vmul.f32 %v603, %v862
    %v865 = vmul.f32 %v606, %v862
    %v866 = vmul.f32 %v611, %v862
    %v867 = vmul.f32 %v614, %v862
    %v868 = vmul.f32 %v619, %v862
    %v869 = vmul.f32 %v622, %v862
    %v870 = vmul.f32 %v627, %v862
    %v871 = vmul.f32 %v630, %v862
    %v872 = vmul.f32 %v635, %v862
    %v873 = vmul.f32 %v638, %v862
    %v874 = vmul.f32 %v643, %v862
    %v875 = vmul.f32 %v646, %v862
    %v876 = vmul.f32 %v651, %v862
    %v877 = vmul.f32 %v654, %v862
    %v878 = vmul.f32 %v659, %v862
    %v879 = vmul.f32 %v662, %v862
    %v880 = vmul.f32 %v667, %v862
    %v881 = vmul.f32 %v670, %v862
    %v882 = vmul.f32 %v675, %v862
    %v883 = vmul.f32 %v678, %v862
    %v884 = vmul.f32 %v683, %v862
    %v885 = vmul.f32 %v686, %v862
    %v886 = vmul.f32 %v691, %v862
    %v887 = vmul.f32 %v694, %v862
    %v888 = vmul.f32 %v699, %v862
    %v889 = vmul.f32 %v702, %v862
    %v890 = vmul.f32 %v707, %v862
    %v891 = vmul.f32 %v710, %v862
    %v892 = vmul.f32 %v715, %v862
    %v893 = vmul.f32 %v718, %v862
    %v894 = vmul.f32 %v723, %v862
    %v895 = vmul.f32 %v726, %v862
    %v896 = vmul.f32 %v731, %v862
    %v897 = vmul.f32 %v734, %v862
    %v898 = vmul.f32 %v739, %v862
    %v899 = vmul.f32 %v742, %v862
    %v900 = vmul.f32 %v747, %v862
    %v901 = vmul.f32 %v750, %v862
    %v902 = vmul.f32 %v755, %v862
    %v903 = vmul.f32 %v758, %v862
    %v904 = vmul.f32 %v763, %v862
    %v905 = vmul.f32 %v766, %v862
    %v906 = vmul.f32 %v771, %v862
    %v907 = vmul.f32 %v774, %v862
    %v908 = vmul.f32 %v779, %v862
    %v909 = vmul.f32 %v782, %v862
    %v910 = vmul.f32 %v787, %v862
    %v911 = vmul.f32 %v790, %v862
    %v912 = vmul.f32 %v795, %v862
    %v913 = vmul.f32 %v798, %v862
    %v914 = vmul.f32 %v803, %v862
    %v915 = vmul.f32 %v806, %v862
    %v916 = vmul.f32 %v811, %v862
    %v917 = vmul.f32 %v814, %v862
    %v918 = vmul.f32 %v819, %v862
    %v919 = vmul.f32 %v822, %v862
    %v920 = vmul.f32 %v827, %v862
    %v921 = vmul.f32 %v830, %v862
    %v922 = vmul.f32 %v835, %v862
    %v923 = vmul.f32 %v838, %v862
    %v924 = vmul.f32 %v843, %v862
    %v925 = vmul.f32 %v846, %v862
    %v926 = vmul.f32 %v851, %v862
    %v927 = vmul.f32 %v854, %v862
    %v928 = vld [vmem:[%s3] sm:$0x1]
    %v930 = vlaneseq
    %v931 = vshrl.u32 %v930, 7
    %v932 = vsub.s32 0, %v931
    %v933 = vrot.slane %v928, %v932
    %v935 = vadd.f32 %v864, %v933
    %v936 = vadd.f32 %v865, %v933
    %v937 = vadd.f32 %v866, %v933
    %v938 = vadd.f32 %v867, %v933
    %v939 = vadd.f32 %v868, %v933
    %v940 = vadd.f32 %v869, %v933
    %v941 = vadd.f32 %v870, %v933
    %v942 = vadd.f32 %v871, %v933
    %v943 = vadd.f32 %v872, %v933
    %v944 = vadd.f32 %v873, %v933
    %v945 = vadd.f32 %v874, %v933
    %v946 = vadd.f32 %v875, %v933
    %v947 = vadd.f32 %v876, %v933
    %v948 = vadd.f32 %v877, %v933
    %v949 = vadd.f32 %v878, %v933
    %v950 = vadd.f32 %v879, %v933
    %v951 = vadd.f32 %v880, %v933
    %v952 = vadd.f32 %v881, %v933
    %v953 = vadd.f32 %v882, %v933
    %v954 = vadd.f32 %v883, %v933
    %v955 = vadd.f32 %v884, %v933
    %v956 = vadd.f32 %v885, %v933
    %v957 = vadd.f32 %v886, %v933
    %v958 = vadd.f32 %v887, %v933
    %v959 = vadd.f32 %v888, %v933
    %v960 = vadd.f32 %v889, %v933
    %v961 = vadd.f32 %v890, %v933
    %v962 = vadd.f32 %v891, %v933
    %v963 = vadd.f32 %v892, %v933
    %v964 = vadd.f32 %v893, %v933
    %v965 = vadd.f32 %v894, %v933
    %v966 = vadd.f32 %v895, %v933
    %v967 = vadd.f32 %v896, %v933
    %v968 = vadd.f32 %v897, %v933
    %v969 = vadd.f32 %v898, %v933
    %v970 = vadd.f32 %v899, %v933
    %v971 = vadd.f32 %v900, %v933
    %v972 = vadd.f32 %v901, %v933
    %v973 = vadd.f32 %v902, %v933
    %v974 = vadd.f32 %v903, %v933
    %v975 = vadd.f32 %v904, %v933
    %v976 = vadd.f32 %v905, %v933
    %v977 = vadd.f32 %v906, %v933
    %v978 = vadd.f32 %v907, %v933
    %v979 = vadd.f32 %v908, %v933
    %v980 = vadd.f32 %v909, %v933
    %v981 = vadd.f32 %v910, %v933
    %v982 = vadd.f32 %v911, %v933
    %v983 = vadd.f32 %v912, %v933
    %v984 = vadd.f32 %v913, %v933
    %v985 = vadd.f32 %v914, %v933
    %v986 = vadd.f32 %v915, %v933
    %v987 = vadd.f32 %v916, %v933
    %v988 = vadd.f32 %v917, %v933
    %v989 = vadd.f32 %v918, %v933
    %v990 = vadd.f32 %v919, %v933
    %v991 = vadd.f32 %v920, %v933
    %v992 = vadd.f32 %v921, %v933
    %v993 = vadd.f32 %v922, %v933
    %v994 = vadd.f32 %v923, %v933
    %v995 = vadd.f32 %v924, %v933
    %v996 = vadd.f32 %v925, %v933
    %v997 = vadd.f32 %v926, %v933
    %v998 = vadd.f32 %v927, %v933
    %v999 = vmax.f32 %v935, 0.0
    %v1000 = vmax.f32 %v936, 0.0
    %v1001 = vmax.f32 %v937, 0.0
    %v1002 = vmax.f32 %v938, 0.0
    %v1003 = vmax.f32 %v939, 0.0
    %v1004 = vmax.f32 %v940, 0.0
    %v1005 = vmax.f32 %v941, 0.0
    %v1006 = vmax.f32 %v942, 0.0
    %v1007 = vmax.f32 %v943, 0.0
    %v1008 = vmax.f32 %v944, 0.0
    %v1009 = vmax.f32 %v945, 0.0
    %v1010 = vmax.f32 %v946, 0.0
    %v1011 = vmax.f32 %v947, 0.0
    %v1012 = vmax.f32 %v948, 0.0
    %v1013 = vmax.f32 %v949, 0.0
    %v1014 = vmax.f32 %v950, 0.0
    %v1015 = vmax.f32 %v951, 0.0
    %v1016 = vmax.f32 %v952, 0.0
    %v1017 = vmax.f32 %v953, 0.0
    %v1018 = vmax.f32 %v954, 0.0
    %v1019 = vmax.f32 %v955, 0.0
    %v1020 = vmax.f32 %v956, 0.0
    %v1021 = vmax.f32 %v957, 0.0
    %v1022 = vmax.f32 %v958, 0.0
    %v1023 = vmax.f32 %v959, 0.0
    %v1024 = vmax.f32 %v960, 0.0
    %v1025 = vmax.f32 %v961, 0.0
    %v1026 = vmax.f32 %v962, 0.0
    %v1027 = vmax.f32 %v963, 0.0
    %v1028 = vmax.f32 %v964, 0.0
    %v1029 = vmax.f32 %v965, 0.0
    %v1030 = vmax.f32 %v966, 0.0
    %v1031 = vmax.f32 %v967, 0.0
    %v1032 = vmax.f32 %v968, 0.0
    %v1033 = vmax.f32 %v969, 0.0
    %v1034 = vmax.f32 %v970, 0.0
    %v1035 = vmax.f32 %v971, 0.0
    %v1036 = vmax.f32 %v972, 0.0
    %v1037 = vmax.f32 %v973, 0.0
    %v1038 = vmax.f32 %v974, 0.0
    %v1039 = vmax.f32 %v975, 0.0
    %v1040 = vmax.f32 %v976, 0.0
    %v1041 = vmax.f32 %v977, 0.0
    %v1042 = vmax.f32 %v978, 0.0
    %v1043 = vmax.f32 %v979, 0.0
    %v1044 = vmax.f32 %v980, 0.0
    %v1045 = vmax.f32 %v981, 0.0
    %v1046 = vmax.f32 %v982, 0.0
    %v1047 = vmax.f32 %v983, 0.0
    %v1048 = vmax.f32 %v984, 0.0
    %v1049 = vmax.f32 %v985, 0.0
    %v1050 = vmax.f32 %v986, 0.0
    %v1051 = vmax.f32 %v987, 0.0
    %v1052 = vmax.f32 %v988, 0.0
    %v1053 = vmax.f32 %v989, 0.0
    %v1054 = vmax.f32 %v990, 0.0
    %v1055 = vmax.f32 %v991, 0.0
    %v1056 = vmax.f32 %v992, 0.0
    %v1057 = vmax.f32 %v993, 0.0
    %v1058 = vmax.f32 %v994, 0.0
    %v1059 = vmax.f32 %v995, 0.0
    %v1060 = vmax.f32 %v996, 0.0
    %v1061 = vmax.f32 %v997, 0.0
    %v1062 = vmax.f32 %v998, 0.0
    %v1095 = vcombine.high %v999, %v999
    %v1097 = vunpack.c.l.s4 1983009808
    %v1098 = vunpack.c.0.s8 %v1097
    %v1099 = vlaneseq
    %v1100 = vshrl.u32 %v1099, 7
    %v1101 = vsub.s32 %v1098, %v1100
    %v1102 = vrot.slane %v999, %v1101
    %v1104 = vunpack.c.l.s4 1983009808
    %v1105 = vunpack.c.0.s8 %v1104
    %v1106 = vlaneseq
    %v1107 = vshrl.u32 %v1106, 7
    %v1108 = vsub.s32 %v1105, %v1107
    %v1109 = vrot.slane %v1095, %v1108
    %v1110 = vcombine.high %v1102, %v1102
    %v1111 = vcombine.high %v1109, %v1109
    %v1112 = vcombine.high %v1000, %v1000
    %v1114 = vunpack.c.l.s4 1983009808
    %v1115 = vunpack.c.0.s8 %v1114
    %v1116 = vlaneseq
    %v1117 = vshrl.u32 %v1116, 7
    %v1118 = vsub.s32 %v1115, %v1117
    %v1119 = vrot.slane %v1000, %v1118
    %v1121 = vunpack.c.l.s4 1983009808
    %v1122 = vunpack.c.0.s8 %v1121
    %v1123 = vlaneseq
    %v1124 = vshrl.u32 %v1123, 7
    %v1125 = vsub.s32 %v1122, %v1124
    %v1126 = vrot.slane %v1112, %v1125
    %v1127 = vcombine.high %v1119, %v1119
    %v1128 = vcombine.high %v1126, %v1126
    %v1129 = vcombine.high %v1001, %v1001
    %v1131 = vunpack.c.l.s4 1983009808
    %v1132 = vunpack.c.0.s8 %v1131
    %v1133 = vlaneseq
    %v1134 = vshrl.u32 %v1133, 7
    %v1135 = vsub.s32 %v1132, %v1134
    %v1136 = vrot.slane %v1001, %v1135
    %v1138 = vunpack.c.l.s4 1983009808
    %v1139 = vunpack.c.0.s8 %v1138
    %v1140 = vlaneseq
    %v1141 = vshrl.u32 %v1140, 7
    %v1142 = vsub.s32 %v1139, %v1141
    %v1143 = vrot.slane %v1129, %v1142
    %v1144 = vcombine.high %v1136, %v1136
    %v1145 = vcombine.high %v1143, %v1143
    %v1146 = vcombine.high %v1002, %v1002
    %v1148 = vunpack.c.l.s4 1983009808
    %v1149 = vunpack.c.0.s8 %v1148
    %v1150 = vlaneseq
    %v1151 = vshrl.u32 %v1150, 7
    %v1152 = vsub.s32 %v1149, %v1151
    %v1153 = vrot.slane %v1002, %v1152
    %v1155 = vunpack.c.l.s4 1983009808
    %v1156 = vunpack.c.0.s8 %v1155
    %v1157 = vlaneseq
    %v1158 = vshrl.u32 %v1157, 7
    %v1159 = vsub.s32 %v1156, %v1158
    %v1160 = vrot.slane %v1146, %v1159
    %v1161 = vcombine.high %v1153, %v1153
    %v1162 = vcombine.high %v1160, %v1160
    %v1163 = vcombine.high %v1003, %v1003
    %v1165 = vunpack.c.l.s4 1983009808
    %v1166 = vunpack.c.0.s8 %v1165
    %v1167 = vlaneseq
    %v1168 = vshrl.u32 %v1167, 7
    %v1169 = vsub.s32 %v1166, %v1168
    %v1170 = vrot.slane %v1003, %v1169
    %v1172 = vunpack.c.l.s4 1983009808
    %v1173 = vunpack.c.0.s8 %v1172
    %v1174 = vlaneseq
    %v1175 = vshrl.u32 %v1174, 7
    %v1176 = vsub.s32 %v1173, %v1175
    %v1177 = vrot.slane %v1163, %v1176
    %v1178 = vcombine.high %v1170, %v1170
    %v1179 = vcombine.high %v1177, %v1177
    %v1180 = vcombine.high %v1004, %v1004
    %v1182 = vunpack.c.l.s4 1983009808
    %v1183 = vunpack.c.0.s8 %v1182
    %v1184 = vlaneseq
    %v1185 = vshrl.u32 %v1184, 7
    %v1186 = vsub.s32 %v1183, %v1185
    %v1187 = vrot.slane %v1004, %v1186
    %v1189 = vunpack.c.l.s4 1983009808
    %v1190 = vunpack.c.0.s8 %v1189
    %v1191 = vlaneseq
    %v1192 = vshrl.u32 %v1191, 7
    %v1193 = vsub.s32 %v1190, %v1192
    %v1194 = vrot.slane %v1180, %v1193
    %v1195 = vcombine.high %v1187, %v1187
    %v1196 = vcombine.high %v1194, %v1194
    %v1197 = vcombine.high %v1005, %v1005
    %v1199 = vunpack.c.l.s4 1983009808
    %v1200 = vunpack.c.0.s8 %v1199
    %v1201 = vlaneseq
    %v1202 = vshrl.u32 %v1201, 7
    %v1203 = vsub.s32 %v1200, %v1202
    %v1204 = vrot.slane %v1005, %v1203
    %v1206 = vunpack.c.l.s4 1983009808
    %v1207 = vunpack.c.0.s8 %v1206
    %v1208 = vlaneseq
    %v1209 = vshrl.u32 %v1208, 7
    %v1210 = vsub.s32 %v1207, %v1209
    %v1211 = vrot.slane %v1197, %v1210
    %v1212 = vcombine.high %v1204, %v1204
    %v1213 = vcombine.high %v1211, %v1211
    %v1214 = vcombine.high %v1006, %v1006
    %v1216 = vunpack.c.l.s4 1983009808
    %v1217 = vunpack.c.0.s8 %v1216
    %v1218 = vlaneseq
    %v1219 = vshrl.u32 %v1218, 7
    %v1220 = vsub.s32 %v1217, %v1219
    %v1221 = vrot.slane %v1006, %v1220
    %v1223 = vunpack.c.l.s4 1983009808
    %v1224 = vunpack.c.0.s8 %v1223
    %v1225 = vlaneseq
    %v1226 = vshrl.u32 %v1225, 7
    %v1227 = vsub.s32 %v1224, %v1226
    %v1228 = vrot.slane %v1214, %v1227
    %v1229 = vcombine.high %v1221, %v1221
    %v1230 = vcombine.high %v1228, %v1228
    %v1231 = vcombine.high %v1007, %v1007
    %v1233 = vunpack.c.l.s4 1983009808
    %v1234 = vunpack.c.0.s8 %v1233
    %v1235 = vlaneseq
    %v1236 = vshrl.u32 %v1235, 7
    %v1237 = vsub.s32 %v1234, %v1236
    %v1238 = vrot.slane %v1007, %v1237
    %v1240 = vunpack.c.l.s4 1983009808
    %v1241 = vunpack.c.0.s8 %v1240
    %v1242 = vlaneseq
    %v1243 = vshrl.u32 %v1242, 7
    %v1244 = vsub.s32 %v1241, %v1243
    %v1245 = vrot.slane %v1231, %v1244
    %v1246 = vcombine.high %v1238, %v1238
    %v1247 = vcombine.high %v1245, %v1245
    %v1248 = vcombine.high %v1008, %v1008
    %v1250 = vunpack.c.l.s4 1983009808
    %v1251 = vunpack.c.0.s8 %v1250
    %v1252 = vlaneseq
    %v1253 = vshrl.u32 %v1252, 7
    %v1254 = vsub.s32 %v1251, %v1253
    %v1255 = vrot.slane %v1008, %v1254
    %v1257 = vunpack.c.l.s4 1983009808
    %v1258 = vunpack.c.0.s8 %v1257
    %v1259 = vlaneseq
    %v1260 = vshrl.u32 %v1259, 7
    %v1261 = vsub.s32 %v1258, %v1260
    %v1262 = vrot.slane %v1248, %v1261
    %v1263 = vcombine.high %v1255, %v1255
    %v1264 = vcombine.high %v1262, %v1262
    %v1265 = vcombine.high %v1009, %v1009
    %v1267 = vunpack.c.l.s4 1983009808
    %v1268 = vunpack.c.0.s8 %v1267
    %v1269 = vlaneseq
    %v1270 = vshrl.u32 %v1269, 7
    %v1271 = vsub.s32 %v1268, %v1270
    %v1272 = vrot.slane %v1009, %v1271
    %v1274 = vunpack.c.l.s4 1983009808
    %v1275 = vunpack.c.0.s8 %v1274
    %v1276 = vlaneseq
    %v1277 = vshrl.u32 %v1276, 7
    %v1278 = vsub.s32 %v1275, %v1277
    %v1279 = vrot.slane %v1265, %v1278
    %v1280 = vcombine.high %v1272, %v1272
    %v1281 = vcombine.high %v1279, %v1279
    %v1282 = vcombine.high %v1010, %v1010
    %v1284 = vunpack.c.l.s4 1983009808
    %v1285 = vunpack.c.0.s8 %v1284
    %v1286 = vlaneseq
    %v1287 = vshrl.u32 %v1286, 7
    %v1288 = vsub.s32 %v1285, %v1287
    %v1289 = vrot.slane %v1010, %v1288
    %v1291 = vunpack.c.l.s4 1983009808
    %v1292 = vunpack.c.0.s8 %v1291
    %v1293 = vlaneseq
    %v1294 = vshrl.u32 %v1293, 7
    %v1295 = vsub.s32 %v1292, %v1294
    %v1296 = vrot.slane %v1282, %v1295
    %v1297 = vcombine.high %v1289, %v1289
    %v1298 = vcombine.high %v1296, %v1296
    %v1299 = vcombine.high %v1011, %v1011
    %v1301 = vunpack.c.l.s4 1983009808
    %v1302 = vunpack.c.0.s8 %v1301
    %v1303 = vlaneseq
    %v1304 = vshrl.u32 %v1303, 7
    %v1305 = vsub.s32 %v1302, %v1304
    %v1306 = vrot.slane %v1011, %v1305
    %v1308 = vunpack.c.l.s4 1983009808
    %v1309 = vunpack.c.0.s8 %v1308
    %v1310 = vlaneseq
    %v1311 = vshrl.u32 %v1310, 7
    %v1312 = vsub.s32 %v1309, %v1311
    %v1313 = vrot.slane %v1299, %v1312
    %v1314 = vcombine.high %v1306, %v1306
    %v1315 = vcombine.high %v1313, %v1313
    %v1316 = vcombine.high %v1012, %v1012
    %v1318 = vunpack.c.l.s4 1983009808
    %v1319 = vunpack.c.0.s8 %v1318
    %v1320 = vlaneseq
    %v1321 = vshrl.u32 %v1320, 7
    %v1322 = vsub.s32 %v1319, %v1321
    %v1323 = vrot.slane %v1012, %v1322
    %v1325 = vunpack.c.l.s4 1983009808
    %v1326 = vunpack.c.0.s8 %v1325
    %v1327 = vlaneseq
    %v1328 = vshrl.u32 %v1327, 7
    %v1329 = vsub.s32 %v1326, %v1328
    %v1330 = vrot.slane %v1316, %v1329
    %v1331 = vcombine.high %v1323, %v1323
    %v1332 = vcombine.high %v1330, %v1330
    %v1333 = vcombine.high %v1013, %v1013
    %v1335 = vunpack.c.l.s4 1983009808
    %v1336 = vunpack.c.0.s8 %v1335
    %v1337 = vlaneseq
    %v1338 = vshrl.u32 %v1337, 7
    %v1339 = vsub.s32 %v1336, %v1338
    %v1340 = vrot.slane %v1013, %v1339
    %v1342 = vunpack.c.l.s4 1983009808
    %v1343 = vunpack.c.0.s8 %v1342
    %v1344 = vlaneseq
    %v1345 = vshrl.u32 %v1344, 7
    %v1346 = vsub.s32 %v1343, %v1345
    %v1347 = vrot.slane %v1333, %v1346
    %v1348 = vcombine.high %v1340, %v1340
    %v1349 = vcombine.high %v1347, %v1347
    %v1350 = vcombine.high %v1014, %v1014
    %v1352 = vunpack.c.l.s4 1983009808
    %v1353 = vunpack.c.0.s8 %v1352
    %v1354 = vlaneseq
    %v1355 = vshrl.u32 %v1354, 7
    %v1356 = vsub.s32 %v1353, %v1355
    %v1357 = vrot.slane %v1014, %v1356
    %v1359 = vunpack.c.l.s4 1983009808
    %v1360 = vunpack.c.0.s8 %v1359
    %v1361 = vlaneseq
    %v1362 = vshrl.u32 %v1361, 7
    %v1363 = vsub.s32 %v1360, %v1362
    %v1364 = vrot.slane %v1350, %v1363
    %v1365 = vcombine.high %v1357, %v1357
    %v1366 = vcombine.high %v1364, %v1364
    %v1367 = vcombine.high %v1015, %v1015
    %v1369 = vunpack.c.l.s4 1983009808
    %v1370 = vunpack.c.0.s8 %v1369
    %v1371 = vlaneseq
    %v1372 = vshrl.u32 %v1371, 7
    %v1373 = vsub.s32 %v1370, %v1372
    %v1374 = vrot.slane %v1015, %v1373
    %v1376 = vunpack.c.l.s4 1983009808
    %v1377 = vunpack.c.0.s8 %v1376
    %v1378 = vlaneseq
    %v1379 = vshrl.u32 %v1378, 7
    %v1380 = vsub.s32 %v1377, %v1379
    %v1381 = vrot.slane %v1367, %v1380
    %v1382 = vcombine.high %v1374, %v1374
    %v1383 = vcombine.high %v1381, %v1381
    %v1384 = vcombine.high %v1016, %v1016
    %v1386 = vunpack.c.l.s4 1983009808
    %v1387 = vunpack.c.0.s8 %v1386
    %v1388 = vlaneseq
    %v1389 = vshrl.u32 %v1388, 7
    %v1390 = vsub.s32 %v1387, %v1389
    %v1391 = vrot.slane %v1016, %v1390
    %v1393 = vunpack.c.l.s4 1983009808
    %v1394 = vunpack.c.0.s8 %v1393
    %v1395 = vlaneseq
    %v1396 = vshrl.u32 %v1395, 7
    %v1397 = vsub.s32 %v1394, %v1396
    %v1398 = vrot.slane %v1384, %v1397
    %v1399 = vcombine.high %v1391, %v1391
    %v1400 = vcombine.high %v1398, %v1398
    %v1401 = vcombine.high %v1017, %v1017
    %v1403 = vunpack.c.l.s4 1983009808
    %v1404 = vunpack.c.0.s8 %v1403
    %v1405 = vlaneseq
    %v1406 = vshrl.u32 %v1405, 7
    %v1407 = vsub.s32 %v1404, %v1406
    %v1408 = vrot.slane %v1017, %v1407
    %v1410 = vunpack.c.l.s4 1983009808
    %v1411 = vunpack.c.0.s8 %v1410
    %v1412 = vlaneseq
    %v1413 = vshrl.u32 %v1412, 7
    %v1414 = vsub.s32 %v1411, %v1413
    %v1415 = vrot.slane %v1401, %v1414
    %v1416 = vcombine.high %v1408, %v1408
    %v1417 = vcombine.high %v1415, %v1415
    %v1418 = vcombine.high %v1018, %v1018
    %v1420 = vunpack.c.l.s4 1983009808
    %v1421 = vunpack.c.0.s8 %v1420
    %v1422 = vlaneseq
    %v1423 = vshrl.u32 %v1422, 7
    %v1424 = vsub.s32 %v1421, %v1423
    %v1425 = vrot.slane %v1018, %v1424
    %v1427 = vunpack.c.l.s4 1983009808
    %v1428 = vunpack.c.0.s8 %v1427
    %v1429 = vlaneseq
    %v1430 = vshrl.u32 %v1429, 7
    %v1431 = vsub.s32 %v1428, %v1430
    %v1432 = vrot.slane %v1418, %v1431
    %v1433 = vcombine.high %v1425, %v1425
    %v1434 = vcombine.high %v1432, %v1432
    %v1435 = vcombine.high %v1019, %v1019
    %v1437 = vunpack.c.l.s4 1983009808
    %v1438 = vunpack.c.0.s8 %v1437
    %v1439 = vlaneseq
    %v1440 = vshrl.u32 %v1439, 7
    %v1441 = vsub.s32 %v1438, %v1440
    %v1442 = vrot.slane %v1019, %v1441
    %v1444 = vunpack.c.l.s4 1983009808
    %v1445 = vunpack.c.0.s8 %v1444
    %v1446 = vlaneseq
    %v1447 = vshrl.u32 %v1446, 7
    %v1448 = vsub.s32 %v1445, %v1447
    %v1449 = vrot.slane %v1435, %v1448
    %v1450 = vcombine.high %v1442, %v1442
    %v1451 = vcombine.high %v1449, %v1449
    %v1452 = vcombine.high %v1020, %v1020
    %v1454 = vunpack.c.l.s4 1983009808
    %v1455 = vunpack.c.0.s8 %v1454
    %v1456 = vlaneseq
    %v1457 = vshrl.u32 %v1456, 7
    %v1458 = vsub.s32 %v1455, %v1457
    %v1459 = vrot.slane %v1020, %v1458
    %v1461 = vunpack.c.l.s4 1983009808
    %v1462 = vunpack.c.0.s8 %v1461
    %v1463 = vlaneseq
    %v1464 = vshrl.u32 %v1463, 7
    %v1465 = vsub.s32 %v1462, %v1464
    %v1466 = vrot.slane %v1452, %v1465
    %v1467 = vcombine.high %v1459, %v1459
    %v1468 = vcombine.high %v1466, %v1466
    %v1469 = vcombine.high %v1021, %v1021
    %v1471 = vunpack.c.l.s4 1983009808
    %v1472 = vunpack.c.0.s8 %v1471
    %v1473 = vlaneseq
    %v1474 = vshrl.u32 %v1473, 7
    %v1475 = vsub.s32 %v1472, %v1474
    %v1476 = vrot.slane %v1021, %v1475
    %v1478 = vunpack.c.l.s4 1983009808
    %v1479 = vunpack.c.0.s8 %v1478
    %v1480 = vlaneseq
    %v1481 = vshrl.u32 %v1480, 7
    %v1482 = vsub.s32 %v1479, %v1481
    %v1483 = vrot.slane %v1469, %v1482
    %v1484 = vcombine.high %v1476, %v1476
    %v1485 = vcombine.high %v1483, %v1483
    %v1486 = vcombine.high %v1022, %v1022
    %v1488 = vunpack.c.l.s4 1983009808
    %v1489 = vunpack.c.0.s8 %v1488
    %v1490 = vlaneseq
    %v1491 = vshrl.u32 %v1490, 7
    %v1492 = vsub.s32 %v1489, %v1491
    %v1493 = vrot.slane %v1022, %v1492
    %v1495 = vunpack.c.l.s4 1983009808
    %v1496 = vunpack.c.0.s8 %v1495
    %v1497 = vlaneseq
    %v1498 = vshrl.u32 %v1497, 7
    %v1499 = vsub.s32 %v1496, %v1498
    %v1500 = vrot.slane %v1486, %v1499
    %v1501 = vcombine.high %v1493, %v1493
    %v1502 = vcombine.high %v1500, %v1500
    %v1503 = vcombine.high %v1023, %v1023
    %v1505 = vunpack.c.l.s4 1983009808
    %v1506 = vunpack.c.0.s8 %v1505
    %v1507 = vlaneseq
    %v1508 = vshrl.u32 %v1507, 7
    %v1509 = vsub.s32 %v1506, %v1508
    %v1510 = vrot.slane %v1023, %v1509
    %v1512 = vunpack.c.l.s4 1983009808
    %v1513 = vunpack.c.0.s8 %v1512
    %v1514 = vlaneseq
    %v1515 = vshrl.u32 %v1514, 7
    %v1516 = vsub.s32 %v1513, %v1515
    %v1517 = vrot.slane %v1503, %v1516
    %v1518 = vcombine.high %v1510, %v1510
    %v1519 = vcombine.high %v1517, %v1517
    %v1520 = vcombine.high %v1024, %v1024
    %v1522 = vunpack.c.l.s4 1983009808
    %v1523 = vunpack.c.0.s8 %v1522
    %v1524 = vlaneseq
    %v1525 = vshrl.u32 %v1524, 7
    %v1526 = vsub.s32 %v1523, %v1525
    %v1527 = vrot.slane %v1024, %v1526
    %v1529 = vunpack.c.l.s4 1983009808
    %v1530 = vunpack.c.0.s8 %v1529
    %v1531 = vlaneseq
    %v1532 = vshrl.u32 %v1531, 7
    %v1533 = vsub.s32 %v1530, %v1532
    %v1534 = vrot.slane %v1520, %v1533
    %v1535 = vcombine.high %v1527, %v1527
    %v1536 = vcombine.high %v1534, %v1534
    %v1537 = vcombine.high %v1025, %v1025
    %v1539 = vunpack.c.l.s4 1983009808
    %v1540 = vunpack.c.0.s8 %v1539
    %v1541 = vlaneseq
    %v1542 = vshrl.u32 %v1541, 7
    %v1543 = vsub.s32 %v1540, %v1542
    %v1544 = vrot.slane %v1025, %v1543
    %v1546 = vunpack.c.l.s4 1983009808
    %v1547 = vunpack.c.0.s8 %v1546
    %v1548 = vlaneseq
    %v1549 = vshrl.u32 %v1548, 7
    %v1550 = vsub.s32 %v1547, %v1549
    %v1551 = vrot.slane %v1537, %v1550
    %v1552 = vcombine.high %v1544, %v1544
    %v1553 = vcombine.high %v1551, %v1551
    %v1554 = vcombine.high %v1026, %v1026
    %v1556 = vunpack.c.l.s4 1983009808
    %v1557 = vunpack.c.0.s8 %v1556
    %v1558 = vlaneseq
    %v1559 = vshrl.u32 %v1558, 7
    %v1560 = vsub.s32 %v1557, %v1559
    %v1561 = vrot.slane %v1026, %v1560
    %v1563 = vunpack.c.l.s4 1983009808
    %v1564 = vunpack.c.0.s8 %v1563
    %v1565 = vlaneseq
    %v1566 = vshrl.u32 %v1565, 7
    %v1567 = vsub.s32 %v1564, %v1566
    %v1568 = vrot.slane %v1554, %v1567
    %v1569 = vcombine.high %v1561, %v1561
    %v1570 = vcombine.high %v1568, %v1568
    %v1571 = vcombine.high %v1027, %v1027
    %v1573 = vunpack.c.l.s4 1983009808
    %v1574 = vunpack.c.0.s8 %v1573
    %v1575 = vlaneseq
    %v1576 = vshrl.u32 %v1575, 7
    %v1577 = vsub.s32 %v1574, %v1576
    %v1578 = vrot.slane %v1027, %v1577
    %v1580 = vunpack.c.l.s4 1983009808
    %v1581 = vunpack.c.0.s8 %v1580
    %v1582 = vlaneseq
    %v1583 = vshrl.u32 %v1582, 7
    %v1584 = vsub.s32 %v1581, %v1583
    %v1585 = vrot.slane %v1571, %v1584
    %v1586 = vcombine.high %v1578, %v1578
    %v1587 = vcombine.high %v1585, %v1585
    %v1588 = vcombine.high %v1028, %v1028
    %v1590 = vunpack.c.l.s4 1983009808
    %v1591 = vunpack.c.0.s8 %v1590
    %v1592 = vlaneseq
    %v1593 = vshrl.u32 %v1592, 7
    %v1594 = vsub.s32 %v1591, %v1593
    %v1595 = vrot.slane %v1028, %v1594
    %v1597 = vunpack.c.l.s4 1983009808
    %v1598 = vunpack.c.0.s8 %v1597
    %v1599 = vlaneseq
    %v1600 = vshrl.u32 %v1599, 7
    %v1601 = vsub.s32 %v1598, %v1600
    %v1602 = vrot.slane %v1588, %v1601
    %v1603 = vcombine.high %v1595, %v1595
    %v1604 = vcombine.high %v1602, %v1602
    %v1605 = vcombine.high %v1029, %v1029
    %v1607 = vunpack.c.l.s4 1983009808
    %v1608 = vunpack.c.0.s8 %v1607
    %v1609 = vlaneseq
    %v1610 = vshrl.u32 %v1609, 7
    %v1611 = vsub.s32 %v1608, %v1610
    %v1612 = vrot.slane %v1029, %v1611
    %v1614 = vunpack.c.l.s4 1983009808
    %v1615 = vunpack.c.0.s8 %v1614
    %v1616 = vlaneseq
    %v1617 = vshrl.u32 %v1616, 7
    %v1618 = vsub.s32 %v1615, %v1617
    %v1619 = vrot.slane %v1605, %v1618
    %v1620 = vcombine.high %v1612, %v1612
    %v1621 = vcombine.high %v1619, %v1619
    %v1622 = vcombine.high %v1030, %v1030
    %v1624 = vunpack.c.l.s4 1983009808
    %v1625 = vunpack.c.0.s8 %v1624
    %v1626 = vlaneseq
    %v1627 = vshrl.u32 %v1626, 7
    %v1628 = vsub.s32 %v1625, %v1627
    %v1629 = vrot.slane %v1030, %v1628
    %v1631 = vunpack.c.l.s4 1983009808
    %v1632 = vunpack.c.0.s8 %v1631
    %v1633 = vlaneseq
    %v1634 = vshrl.u32 %v1633, 7
    %v1635 = vsub.s32 %v1632, %v1634
    %v1636 = vrot.slane %v1622, %v1635
    %v1637 = vcombine.high %v1629, %v1629
    %v1638 = vcombine.high %v1636, %v1636
    %v1767 = vmax.f32 %v1102, %v1136
    %v1768 = vmax.f32 %v1110, %v1144
    %v1769 = vmax.f32 %v1109, %v1143
    %v1770 = vmax.f32 %v1111, %v1145
    %v1771 = vmax.f32 %v1119, %v1153
    %v1772 = vmax.f32 %v1127, %v1161
    %v1773 = vmax.f32 %v1126, %v1160
    %v1774 = vmax.f32 %v1128, %v1162
    %v1775 = vmax.f32 %v1170, %v1204
    %v1776 = vmax.f32 %v1178, %v1212
    %v1777 = vmax.f32 %v1177, %v1211
    %v1778 = vmax.f32 %v1179, %v1213
    %v1779 = vmax.f32 %v1187, %v1221
    %v1780 = vmax.f32 %v1195, %v1229
    %v1781 = vmax.f32 %v1194, %v1228
    %v1782 = vmax.f32 %v1196, %v1230
    %v1783 = vmax.f32 %v1238, %v1272
    %v1784 = vmax.f32 %v1246, %v1280
    %v1785 = vmax.f32 %v1245, %v1279
    %v1786 = vmax.f32 %v1247, %v1281
    %v1787 = vmax.f32 %v1255, %v1289
    %v1788 = vmax.f32 %v1263, %v1297
    %v1789 = vmax.f32 %v1262, %v1296
    %v1790 = vmax.f32 %v1264, %v1298
    %v1791 = vmax.f32 %v1306, %v1340
    %v1792 = vmax.f32 %v1314, %v1348
    %v1793 = vmax.f32 %v1313, %v1347
    %v1794 = vmax.f32 %v1315, %v1349
    %v1795 = vmax.f32 %v1323, %v1357
    %v1796 = vmax.f32 %v1331, %v1365
    %v1797 = vmax.f32 %v1330, %v1364
    %v1798 = vmax.f32 %v1332, %v1366
    %v1799 = vmax.f32 %v1374, %v1408
    %v1800 = vmax.f32 %v1382, %v1416
    %v1801 = vmax.f32 %v1381, %v1415
    %v1802 = vmax.f32 %v1383, %v1417
    %v1803 = vmax.f32 %v1391, %v1425
    %v1804 = vmax.f32 %v1399, %v1433
    %v1805 = vmax.f32 %v1398, %v1432
    %v1806 = vmax.f32 %v1400, %v1434
    %v1807 = vmax.f32 %v1442, %v1476
    %v1808 = vmax.f32 %v1450, %v1484
    %v1809 = vmax.f32 %v1449, %v1483
    %v1810 = vmax.f32 %v1451, %v1485
    %v1811 = vmax.f32 %v1459, %v1493
    %v1812 = vmax.f32 %v1467, %v1501
    %v1813 = vmax.f32 %v1466, %v1500
    %v1814 = vmax.f32 %v1468, %v1502
    %v1815 = vmax.f32 %v1510, %v1544
    %v1816 = vmax.f32 %v1518, %v1552
    %v1817 = vmax.f32 %v1517, %v1551
    %v1818 = vmax.f32 %v1519, %v1553
    %v1819 = vmax.f32 %v1527, %v1561
    %v1820 = vmax.f32 %v1535, %v1569
    %v1821 = vmax.f32 %v1534, %v1568
    %v1822 = vmax.f32 %v1536, %v1570
    %v1823 = vmax.f32 %v1578, %v1612
    %v1824 = vmax.f32 %v1586, %v1620
    %v1825 = vmax.f32 %v1585, %v1619
    %v1826 = vmax.f32 %v1587, %v1621
    %v1827 = vmax.f32 %v1595, %v1629
    %v1828 = vmax.f32 %v1603, %v1637
    %v1829 = vmax.f32 %v1602, %v1636
    %v1830 = vmax.f32 %v1604, %v1638
    %v1895 = vrot.slane %v1767, 7
    %v1896 = vrot.slane %v1895, 2
    %v1897 = vrot.slane %v1768, 7
    %v1898 = vrot.slane %v1897, 2
    %v1899 = vrot.slane %v1769, 7
    %v1900 = vrot.slane %v1899, 2
    %v1901 = vrot.slane %v1770, 7
    %v1902 = vrot.slane %v1901, 2
    %v1903 = vrot.slane %v1771, 7
    %v1904 = vrot.slane %v1903, 2
    %v1905 = vrot.slane %v1772, 7
    %v1906 = vrot.slane %v1905, 2
    %v1907 = vrot.slane %v1773, 7
    %v1908 = vrot.slane %v1907, 2
    %v1909 = vrot.slane %v1774, 7
    %v1910 = vrot.slane %v1909, 2
    %v1911 = vrot.slane %v1775, 7
    %v1912 = vrot.slane %v1911, 2
    %v1913 = vrot.slane %v1776, 7
    %v1914 = vrot.slane %v1913, 2
    %v1915 = vrot.slane %v1777, 7
    %v1916 = vrot.slane %v1915, 2
    %v1917 = vrot.slane %v1778, 7
    %v1918 = vrot.slane %v1917, 2
    %v1919 = vrot.slane %v1779, 7
    %v1920 = vrot.slane %v1919, 2
    %v1921 = vrot.slane %v1780, 7
    %v1922 = vrot.slane %v1921, 2
    %v1923 = vrot.slane %v1781, 7
    %v1924 = vrot.slane %v1923, 2
    %v1925 = vrot.slane %v1782, 7
    %v1926 = vrot.slane %v1925, 2
    %v1927 = vrot.slane %v1783, 7
    %v1928 = vrot.slane %v1927, 2
    %v1929 = vrot.slane %v1784, 7
    %v1930 = vrot.slane %v1929, 2
    %v1931 = vrot.slane %v1785, 7
    %v1932 = vrot.slane %v1931, 2
    %v1933 = vrot.slane %v1786, 7
    %v1934 = vrot.slane %v1933, 2
    %v1935 = vrot.slane %v1787, 7
    %v1936 = vrot.slane %v1935, 2
    %v1937 = vrot.slane %v1788, 7
    %v1938 = vrot.slane %v1937, 2
    %v1939 = vrot.slane %v1789, 7
    %v1940 = vrot.slane %v1939, 2
    %v1941 = vrot.slane %v1790, 7
    %v1942 = vrot.slane %v1941, 2
    %v1943 = vrot.slane %v1791, 7
    %v1944 = vrot.slane %v1943, 2
    %v1945 = vrot.slane %v1792, 7
    %v1946 = vrot.slane %v1945, 2
    %v1947 = vrot.slane %v1793, 7
    %v1948 = vrot.slane %v1947, 2
    %v1949 = vrot.slane %v1794, 7
    %v1950 = vrot.slane %v1949, 2
    %v1951 = vrot.slane %v1795, 7
    %v1952 = vrot.slane %v1951, 2
    %v1953 = vrot.slane %v1796, 7
    %v1954 = vrot.slane %v1953, 2
    %v1955 = vrot.slane %v1797, 7
    %v1956 = vrot.slane %v1955, 2
    %v1957 = vrot.slane %v1798, 7
    %v1958 = vrot.slane %v1957, 2
    %v1959 = vrot.slane %v1799, 7
    %v1960 = vrot.slane %v1959, 2
    %v1961 = vrot.slane %v1800, 7
    %v1962 = vrot.slane %v1961, 2
    %v1963 = vrot.slane %v1801, 7
    %v1964 = vrot.slane %v1963, 2
    %v1965 = vrot.slane %v1802, 7
    %v1966 = vrot.slane %v1965, 2
    %v1967 = vrot.slane %v1803, 7
    %v1968 = vrot.slane %v1967, 2
    %v1969 = vrot.slane %v1804, 7
    %v1970 = vrot.slane %v1969, 2
    %v1971 = vrot.slane %v1805, 7
    %v1972 = vrot.slane %v1971, 2
    %v1973 = vrot.slane %v1806, 7
    %v1974 = vrot.slane %v1973, 2
    %v1975 = vrot.slane %v1807, 7
    %v1976 = vrot.slane %v1975, 2
    %v1977 = vrot.slane %v1808, 7
    %v1978 = vrot.slane %v1977, 2
    %v1979 = vrot.slane %v1809, 7
    %v1980 = vrot.slane %v1979, 2
    %v1981 = vrot.slane %v1810, 7
    %v1982 = vrot.slane %v1981, 2
    %v1983 = vrot.slane %v1811, 7
    %v1984 = vrot.slane %v1983, 2
    %v1985 = vrot.slane %v1812, 7
    %v1986 = vrot.slane %v1985, 2
    %v1987 = vrot.slane %v1813, 7
    %v1988 = vrot.slane %v1987, 2
    %v1989 = vrot.slane %v1814, 7
    %v1990 = vrot.slane %v1989, 2
    %v1991 = vrot.slane %v1815, 7
    %v1992 = vrot.slane %v1991, 2
    %v1993 = vrot.slane %v1816, 7
    %v1994 = vrot.slane %v1993, 2
    %v1995 = vrot.slane %v1817, 7
    %v1996 = vrot.slane %v1995, 2
    %v1997 = vrot.slane %v1818, 7
    %v1998 = vrot.slane %v1997, 2
    %v1999 = vrot.slane %v1819, 7
    %v2000 = vrot.slane %v1999, 2
    %v2001 = vrot.slane %v1820, 7
    %v2002 = vrot.slane %v2001, 2
    %v2003 = vrot.slane %v1821, 7
    %v2004 = vrot.slane %v2003, 2
    %v2005 = vrot.slane %v1822, 7
    %v2006 = vrot.slane %v2005, 2
    %v2007 = vrot.slane %v1823, 7
    %v2008 = vrot.slane %v2007, 2
    %v2009 = vrot.slane %v1824, 7
    %v2010 = vrot.slane %v2009, 2
    %v2011 = vrot.slane %v1825, 7
    %v2012 = vrot.slane %v2011, 2
    %v2013 = vrot.slane %v1826, 7
    %v2014 = vrot.slane %v2013, 2
    %v2015 = vrot.slane %v1827, 7
    %v2016 = vrot.slane %v2015, 2
    %v2017 = vrot.slane %v1828, 7
    %v2018 = vrot.slane %v2017, 2
    %v2019 = vrot.slane %v1829, 7
    %v2020 = vrot.slane %v2019, 2
    %v2021 = vrot.slane %v1830, 7
    %v2022 = vrot.slane %v2021, 2
    %v2087 = vmax.f32 %v1767, %v1896
    %v2088 = vmax.f32 %v1768, %v1898
    %v2089 = vmax.f32 %v1769, %v1900
    %v2090 = vmax.f32 %v1770, %v1902
    %v2091 = vmax.f32 %v1771, %v1904
    %v2092 = vmax.f32 %v1772, %v1906
    %v2093 = vmax.f32 %v1773, %v1908
    %v2094 = vmax.f32 %v1774, %v1910
    %v2095 = vmax.f32 %v1775, %v1912
    %v2096 = vmax.f32 %v1776, %v1914
    %v2097 = vmax.f32 %v1777, %v1916
    %v2098 = vmax.f32 %v1778, %v1918
    %v2099 = vmax.f32 %v1779, %v1920
    %v2100 = vmax.f32 %v1780, %v1922
    %v2101 = vmax.f32 %v1781, %v1924
    %v2102 = vmax.f32 %v1782, %v1926
    %v2103 = vmax.f32 %v1783, %v1928
    %v2104 = vmax.f32 %v1784, %v1930
    %v2105 = vmax.f32 %v1785, %v1932
    %v2106 = vmax.f32 %v1786, %v1934
    %v2107 = vmax.f32 %v1787, %v1936
    %v2108 = vmax.f32 %v1788, %v1938
    %v2109 = vmax.f32 %v1789, %v1940
    %v2110 = vmax.f32 %v1790, %v1942
    %v2111 = vmax.f32 %v1791, %v1944
    %v2112 = vmax.f32 %v1792, %v1946
    %v2113 = vmax.f32 %v1793, %v1948
    %v2114 = vmax.f32 %v1794, %v1950
    %v2115 = vmax.f32 %v1795, %v1952
    %v2116 = vmax.f32 %v1796, %v1954
    %v2117 = vmax.f32 %v1797, %v1956
    %v2118 = vmax.f32 %v1798, %v1958
    %v2119 = vmax.f32 %v1799, %v1960
    %v2120 = vmax.f32 %v1800, %v1962
    %v2121 = vmax.f32 %v1801, %v1964
    %v2122 = vmax.f32 %v1802, %v1966
    %v2123 = vmax.f32 %v1803, %v1968
    %v2124 = vmax.f32 %v1804, %v1970
    %v2125 = vmax.f32 %v1805, %v1972
    %v2126 = vmax.f32 %v1806, %v1974
    %v2127 = vmax.f32 %v1807, %v1976
    %v2128 = vmax.f32 %v1808, %v1978
    %v2129 = vmax.f32 %v1809, %v1980
    %v2130 = vmax.f32 %v1810, %v1982
    %v2131 = vmax.f32 %v1811, %v1984
    %v2132 = vmax.f32 %v1812, %v1986
    %v2133 = vmax.f32 %v1813, %v1988
    %v2134 = vmax.f32 %v1814, %v1990
    %v2135 = vmax.f32 %v1815, %v1992
    %v2136 = vmax.f32 %v1816, %v1994
    %v2137 = vmax.f32 %v1817, %v1996
    %v2138 = vmax.f32 %v1818, %v1998
    %v2139 = vmax.f32 %v1819, %v2000
    %v2140 = vmax.f32 %v1820, %v2002
    %v2141 = vmax.f32 %v1821, %v2004
    %v2142 = vmax.f32 %v1822, %v2006
    %v2143 = vmax.f32 %v1823, %v2008
    %v2144 = vmax.f32 %v1824, %v2010
    %v2145 = vmax.f32 %v1825, %v2012
    %v2146 = vmax.f32 %v1826, %v2014
    %v2147 = vmax.f32 %v1827, %v2016
    %v2148 = vmax.f32 %v1828, %v2018
    %v2149 = vmax.f32 %v1829, %v2020
    %v2150 = vmax.f32 %v1830, %v2022
    %v2151 = vpack.c.bf16 %v2087, %v2087
    %v2152 = vpack.c.bf16 %v2088, %v2088
    %v2153 = vpack.c.bf16 %v2089, %v2089
    %v2154 = vpack.c.bf16 %v2090, %v2090
    %v2155 = vpack.c.bf16 %v2091, %v2091
    %v2156 = vpack.c.bf16 %v2092, %v2092
    %v2157 = vpack.c.bf16 %v2093, %v2093
    %v2158 = vpack.c.bf16 %v2094, %v2094
    %v2159 = vpack.c.bf16 %v2095, %v2095
    %v2160 = vpack.c.bf16 %v2096, %v2096
    %v2161 = vpack.c.bf16 %v2097, %v2097
    %v2162 = vpack.c.bf16 %v2098, %v2098
    %v2163 = vpack.c.bf16 %v2099, %v2099
    %v2164 = vpack.c.bf16 %v2100, %v2100
    %v2165 = vpack.c.bf16 %v2101, %v2101
    %v2166 = vpack.c.bf16 %v2102, %v2102
    %v2167 = vpack.c.bf16 %v2103, %v2103
    %v2168 = vpack.c.bf16 %v2104, %v2104
    %v2169 = vpack.c.bf16 %v2105, %v2105
    %v2170 = vpack.c.bf16 %v2106, %v2106
    %v2171 = vpack.c.bf16 %v2107, %v2107
    %v2172 = vpack.c.bf16 %v2108, %v2108
    %v2173 = vpack.c.bf16 %v2109, %v2109
    %v2174 = vpack.c.bf16 %v2110, %v2110
    %v2175 = vpack.c.bf16 %v2111, %v2111
    %v2176 = vpack.c.bf16 %v2112, %v2112
    %v2177 = vpack.c.bf16 %v2113, %v2113
    %v2178 = vpack.c.bf16 %v2114, %v2114
    %v2179 = vpack.c.bf16 %v2115, %v2115
    %v2180 = vpack.c.bf16 %v2116, %v2116
    %v2181 = vpack.c.bf16 %v2117, %v2117
    %v2182 = vpack.c.bf16 %v2118, %v2118
    %v2183 = vpack.c.bf16 %v2119, %v2119
    %v2184 = vpack.c.bf16 %v2120, %v2120
    %v2185 = vpack.c.bf16 %v2121, %v2121
    %v2186 = vpack.c.bf16 %v2122, %v2122
    %v2187 = vpack.c.bf16 %v2123, %v2123
    %v2188 = vpack.c.bf16 %v2124, %v2124
    %v2189 = vpack.c.bf16 %v2125, %v2125
    %v2190 = vpack.c.bf16 %v2126, %v2126
    %v2191 = vpack.c.bf16 %v2127, %v2127
    %v2192 = vpack.c.bf16 %v2128, %v2128
    %v2193 = vpack.c.bf16 %v2129, %v2129
    %v2194 = vpack.c.bf16 %v2130, %v2130
    %v2195 = vpack.c.bf16 %v2131, %v2131
    %v2196 = vpack.c.bf16 %v2132, %v2132
    %v2197 = vpack.c.bf16 %v2133, %v2133
    %v2198 = vpack.c.bf16 %v2134, %v2134
    %v2199 = vpack.c.bf16 %v2135, %v2135
    %v2200 = vpack.c.bf16 %v2136, %v2136
    %v2201 = vpack.c.bf16 %v2137, %v2137
    %v2202 = vpack.c.bf16 %v2138, %v2138
    %v2203 = vpack.c.bf16 %v2139, %v2139
    %v2204 = vpack.c.bf16 %v2140, %v2140
    %v2205 = vpack.c.bf16 %v2141, %v2141
    %v2206 = vpack.c.bf16 %v2142, %v2142
    %v2207 = vpack.c.bf16 %v2143, %v2143
    %v2208 = vpack.c.bf16 %v2144, %v2144
    %v2209 = vpack.c.bf16 %v2145, %v2145
    %v2210 = vpack.c.bf16 %v2146, %v2146
    %v2211 = vpack.c.bf16 %v2147, %v2147
    %v2212 = vpack.c.bf16 %v2148, %v2148
    %v2213 = vpack.c.bf16 %v2149, %v2149
    %v2214 = vpack.c.bf16 %v2150, %v2150
    %v2279 = vunpack.c.l.b16 %v2151
    %v2280 = vunpack.c.l.b16 %v2152
    %v2281 = vunpack.c.l.b16 %v2153
    %v2282 = vunpack.c.l.b16 %v2154
    %v2283 = vunpack.c.l.b16 %v2155
    %v2284 = vunpack.c.l.b16 %v2156
    %v2285 = vunpack.c.l.b16 %v2157
    %v2286 = vunpack.c.l.b16 %v2158
    %v2287 = vunpack.c.l.b16 %v2159
    %v2288 = vunpack.c.l.b16 %v2160
    %v2289 = vunpack.c.l.b16 %v2161
    %v2290 = vunpack.c.l.b16 %v2162
    %v2291 = vunpack.c.l.b16 %v2163
    %v2292 = vunpack.c.l.b16 %v2164
    %v2293 = vunpack.c.l.b16 %v2165
    %v2294 = vunpack.c.l.b16 %v2166
    %v2295 = vunpack.c.l.b16 %v2167
    %v2296 = vunpack.c.l.b16 %v2168
    %v2297 = vunpack.c.l.b16 %v2169
    %v2298 = vunpack.c.l.b16 %v2170
    %v2299 = vunpack.c.l.b16 %v2171
    %v2300 = vunpack.c.l.b16 %v2172
    %v2301 = vunpack.c.l.b16 %v2173
    %v2302 = vunpack.c.l.b16 %v2174
    %v2303 = vunpack.c.l.b16 %v2175
    %v2304 = vunpack.c.l.b16 %v2176
    %v2305 = vunpack.c.l.b16 %v2177
    %v2306 = vunpack.c.l.b16 %v2178
    %v2307 = vunpack.c.l.b16 %v2179
    %v2308 = vunpack.c.l.b16 %v2180
    %v2309 = vunpack.c.l.b16 %v2181
    %v2310 = vunpack.c.l.b16 %v2182
    %v2311 = vunpack.c.l.b16 %v2183
    %v2312 = vunpack.c.l.b16 %v2184
    %v2313 = vunpack.c.l.b16 %v2185
    %v2314 = vunpack.c.l.b16 %v2186
    %v2315 = vunpack.c.l.b16 %v2187
    %v2316 = vunpack.c.l.b16 %v2188
    %v2317 = vunpack.c.l.b16 %v2189
    %v2318 = vunpack.c.l.b16 %v2190
    %v2319 = vunpack.c.l.b16 %v2191
    %v2320 = vunpack.c.l.b16 %v2192
    %v2321 = vunpack.c.l.b16 %v2193
    %v2322 = vunpack.c.l.b16 %v2194
    %v2323 = vunpack.c.l.b16 %v2195
    %v2324 = vunpack.c.l.b16 %v2196
    %v2325 = vunpack.c.l.b16 %v2197
    %v2326 = vunpack.c.l.b16 %v2198
    %v2327 = vunpack.c.l.b16 %v2199
    %v2328 = vunpack.c.l.b16 %v2200
    %v2329 = vunpack.c.l.b16 %v2201
    %v2330 = vunpack.c.l.b16 %v2202
    %v2331 = vunpack.c.l.b16 %v2203
    %v2332 = vunpack.c.l.b16 %v2204
    %v2333 = vunpack.c.l.b16 %v2205
    %v2334 = vunpack.c.l.b16 %v2206
    %v2335 = vunpack.c.l.b16 %v2207
    %v2336 = vunpack.c.l.b16 %v2208
    %v2337 = vunpack.c.l.b16 %v2209
    %v2338 = vunpack.c.l.b16 %v2210
    %v2339 = vunpack.c.l.b16 %v2211
    %v2340 = vunpack.c.l.b16 %v2212
    %v2341 = vunpack.c.l.b16 %v2213
    %v2342 = vunpack.c.l.b16 %v2214
    %v2343 = vpack.c.b16 %v2279, %v2279
    %v2344 = vpack.c.b16 %v2280, %v2280
    %v2345 = vpack.c.b16 %v2281, %v2281
    %v2346 = vpack.c.b16 %v2282, %v2282
    %v2347 = vpack.c.b16 %v2283, %v2283
    %v2348 = vpack.c.b16 %v2284, %v2284
    %v2349 = vpack.c.b16 %v2285, %v2285
    %v2350 = vpack.c.b16 %v2286, %v2286
    %v2351 = vpack.c.b16 %v2287, %v2287
    %v2352 = vpack.c.b16 %v2288, %v2288
    %v2353 = vpack.c.b16 %v2289, %v2289
    %v2354 = vpack.c.b16 %v2290, %v2290
    %v2355 = vpack.c.b16 %v2291, %v2291
    %v2356 = vpack.c.b16 %v2292, %v2292
    %v2357 = vpack.c.b16 %v2293, %v2293
    %v2358 = vpack.c.b16 %v2294, %v2294
    %v2359 = vpack.c.b16 %v2295, %v2295
    %v2360 = vpack.c.b16 %v2296, %v2296
    %v2361 = vpack.c.b16 %v2297, %v2297
    %v2362 = vpack.c.b16 %v2298, %v2298
    %v2363 = vpack.c.b16 %v2299, %v2299
    %v2364 = vpack.c.b16 %v2300, %v2300
    %v2365 = vpack.c.b16 %v2301, %v2301
    %v2366 = vpack.c.b16 %v2302, %v2302
    %v2367 = vpack.c.b16 %v2303, %v2303
    %v2368 = vpack.c.b16 %v2304, %v2304
    %v2369 = vpack.c.b16 %v2305, %v2305
    %v2370 = vpack.c.b16 %v2306, %v2306
    %v2371 = vpack.c.b16 %v2307, %v2307
    %v2372 = vpack.c.b16 %v2308, %v2308
    %v2373 = vpack.c.b16 %v2309, %v2309
    %v2374 = vpack.c.b16 %v2310, %v2310
    %v2375 = vpack.c.b16 %v2311, %v2311
    %v2376 = vpack.c.b16 %v2312, %v2312
    %v2377 = vpack.c.b16 %v2313, %v2313
    %v2378 = vpack.c.b16 %v2314, %v2314
    %v2379 = vpack.c.b16 %v2315, %v2315
    %v2380 = vpack.c.b16 %v2316, %v2316
    %v2381 = vpack.c.b16 %v2317, %v2317
    %v2382 = vpack.c.b16 %v2318, %v2318
    %v2383 = vpack.c.b16 %v2319, %v2319
    %v2384 = vpack.c.b16 %v2320, %v2320
    %v2385 = vpack.c.b16 %v2321, %v2321
    %v2386 = vpack.c.b16 %v2322, %v2322
    %v2387 = vpack.c.b16 %v2323, %v2323
    %v2388 = vpack.c.b16 %v2324, %v2324
    %v2389 = vpack.c.b16 %v2325, %v2325
    %v2390 = vpack.c.b16 %v2326, %v2326
    %v2391 = vpack.c.b16 %v2327, %v2327
    %v2392 = vpack.c.b16 %v2328, %v2328
    %v2393 = vpack.c.b16 %v2329, %v2329
    %v2394 = vpack.c.b16 %v2330, %v2330
    %v2395 = vpack.c.b16 %v2331, %v2331
    %v2396 = vpack.c.b16 %v2332, %v2332
    %v2397 = vpack.c.b16 %v2333, %v2333
    %v2398 = vpack.c.b16 %v2334, %v2334
    %v2399 = vpack.c.b16 %v2335, %v2335
    %v2400 = vpack.c.b16 %v2336, %v2336
    %v2401 = vpack.c.b16 %v2337, %v2337
    %v2402 = vpack.c.b16 %v2338, %v2338
    %v2403 = vpack.c.b16 %v2339, %v2339
    %v2404 = vpack.c.b16 %v2340, %v2340
    %v2405 = vpack.c.b16 %v2341, %v2341
    %v2406 = vpack.c.b16 %v2342, %v2342
    %v2407 = vunpack.c.l.b16 %v2343
    %v2408 = vunpack.c.l.b16 %v2344
    %v2409 = vunpack.c.l.b16 %v2345
    %v2410 = vunpack.c.l.b16 %v2346
    %v2411 = vunpack.c.l.b16 %v2347
    %v2412 = vunpack.c.l.b16 %v2348
    %v2413 = vunpack.c.l.b16 %v2349
    %v2414 = vunpack.c.l.b16 %v2350
    %v2415 = vunpack.c.l.b16 %v2351
    %v2416 = vunpack.c.l.b16 %v2352
    %v2417 = vunpack.c.l.b16 %v2353
    %v2418 = vunpack.c.l.b16 %v2354
    %v2419 = vunpack.c.l.b16 %v2355
    %v2420 = vunpack.c.l.b16 %v2356
    %v2421 = vunpack.c.l.b16 %v2357
    %v2422 = vunpack.c.l.b16 %v2358
    %v2423 = vunpack.c.l.b16 %v2359
    %v2424 = vunpack.c.l.b16 %v2360
    %v2425 = vunpack.c.l.b16 %v2361
    %v2426 = vunpack.c.l.b16 %v2362
    %v2427 = vunpack.c.l.b16 %v2363
    %v2428 = vunpack.c.l.b16 %v2364
    %v2429 = vunpack.c.l.b16 %v2365
    %v2430 = vunpack.c.l.b16 %v2366
    %v2431 = vunpack.c.l.b16 %v2367
    %v2432 = vunpack.c.l.b16 %v2368
    %v2433 = vunpack.c.l.b16 %v2369
    %v2434 = vunpack.c.l.b16 %v2370
    %v2435 = vunpack.c.l.b16 %v2371
    %v2436 = vunpack.c.l.b16 %v2372
    %v2437 = vunpack.c.l.b16 %v2373
    %v2438 = vunpack.c.l.b16 %v2374
    %v2439 = vunpack.c.l.b16 %v2375
    %v2440 = vunpack.c.l.b16 %v2376
    %v2441 = vunpack.c.l.b16 %v2377
    %v2442 = vunpack.c.l.b16 %v2378
    %v2443 = vunpack.c.l.b16 %v2379
    %v2444 = vunpack.c.l.b16 %v2380
    %v2445 = vunpack.c.l.b16 %v2381
    %v2446 = vunpack.c.l.b16 %v2382
    %v2447 = vunpack.c.l.b16 %v2383
    %v2448 = vunpack.c.l.b16 %v2384
    %v2449 = vunpack.c.l.b16 %v2385
    %v2450 = vunpack.c.l.b16 %v2386
    %v2451 = vunpack.c.l.b16 %v2387
    %v2452 = vunpack.c.l.b16 %v2388
    %v2453 = vunpack.c.l.b16 %v2389
    %v2454 = vunpack.c.l.b16 %v2390
    %v2455 = vunpack.c.l.b16 %v2391
    %v2456 = vunpack.c.l.b16 %v2392
    %v2457 = vunpack.c.l.b16 %v2393
    %v2458 = vunpack.c.l.b16 %v2394
    %v2459 = vunpack.c.l.b16 %v2395
    %v2460 = vunpack.c.l.b16 %v2396
    %v2461 = vunpack.c.l.b16 %v2397
    %v2462 = vunpack.c.l.b16 %v2398
    %v2463 = vunpack.c.l.b16 %v2399
    %v2464 = vunpack.c.l.b16 %v2400
    %v2465 = vunpack.c.l.b16 %v2401
    %v2466 = vunpack.c.l.b16 %v2402
    %v2467 = vunpack.c.l.b16 %v2403
    %v2468 = vunpack.c.l.b16 %v2404
    %v2469 = vunpack.c.l.b16 %v2405
    %v2470 = vunpack.c.l.b16 %v2406
    %v2471 = vrot.slane %v2407, 7
    %v2472 = vrot.slane %v2408, 6
    %vm2473 = vcmask 1042434
    %v2474 = vsel %vm2473, %v2472, %v2471
    %v2475 = vrot.slane %v2409, 5
    %vm2476 = vcmask 1043459
    %v2477 = vsel %vm2476, %v2475, %v2474
    %v2478 = vrot.slane %v2410, 4
    %vm2479 = vcmask 1044484
    %v2480 = vsel %vm2479, %v2478, %v2477
    %v2481 = vrot.slane %v2411, 3
    %vm2482 = vcmask 1045509
    %v2483 = vsel %vm2482, %v2481, %v2480
    %v2484 = vrot.slane %v2412, 2
    %vm2485 = vcmask 1046534
    %v2486 = vsel %vm2485, %v2484, %v2483
    %v2487 = vrot.slane %v2413, 1
    %vm2488 = vcmask 1047559
    %v2489 = vsel %vm2488, %v2487, %v2486
    %v2490 = vrot.slane %v2415, 7
    %v2491 = vrot.slane %v2416, 6
    %v2492 = vsel %vm2473, %v2491, %v2490
    %v2493 = vrot.slane %v2417, 5
    %v2494 = vsel %vm2476, %v2493, %v2492
    %v2495 = vrot.slane %v2418, 4
    %v2496 = vsel %vm2479, %v2495, %v2494
    %v2497 = vrot.slane %v2419, 3
    %v2498 = vsel %vm2482, %v2497, %v2496
    %v2499 = vrot.slane %v2420, 2
    %v2500 = vsel %vm2485, %v2499, %v2498
    %v2501 = vrot.slane %v2421, 1
    %v2502 = vsel %vm2488, %v2501, %v2500
    %v2503 = vrot.slane %v2423, 7
    %v2504 = vrot.slane %v2424, 6
    %v2505 = vsel %vm2473, %v2504, %v2503
    %v2506 = vrot.slane %v2425, 5
    %v2507 = vsel %vm2476, %v2506, %v2505
    %v2508 = vrot.slane %v2426, 4
    %v2509 = vsel %vm2479, %v2508, %v2507
    %v2510 = vrot.slane %v2427, 3
    %v2511 = vsel %vm2482, %v2510, %v2509
    %v2512 = vrot.slane %v2428, 2
    %v2513 = vsel %vm2485, %v2512, %v2511
    %v2514 = vrot.slane %v2429, 1
    %v2515 = vsel %vm2488, %v2514, %v2513
    %v2516 = vrot.slane %v2431, 7
    %v2517 = vrot.slane %v2432, 6
    %v2518 = vsel %vm2473, %v2517, %v2516
    %v2519 = vrot.slane %v2433, 5
    %v2520 = vsel %vm2476, %v2519, %v2518
    %v2521 = vrot.slane %v2434, 4
    %v2522 = vsel %vm2479, %v2521, %v2520
    %v2523 = vrot.slane %v2435, 3
    %v2524 = vsel %vm2482, %v2523, %v2522
    %v2525 = vrot.slane %v2436, 2
    %v2526 = vsel %vm2485, %v2525, %v2524
    %v2527 = vrot.slane %v2437, 1
    %v2528 = vsel %vm2488, %v2527, %v2526
    %v2529 = vrot.slane %v2439, 7
    %v2530 = vrot.slane %v2440, 6
    %v2531 = vsel %vm2473, %v2530, %v2529
    %v2532 = vrot.slane %v2441, 5
    %v2533 = vsel %vm2476, %v2532, %v2531
    %v2534 = vrot.slane %v2442, 4
    %v2535 = vsel %vm2479, %v2534, %v2533
    %v2536 = vrot.slane %v2443, 3
    %v2537 = vsel %vm2482, %v2536, %v2535
    %v2538 = vrot.slane %v2444, 2
    %v2539 = vsel %vm2485, %v2538, %v2537
    %v2540 = vrot.slane %v2445, 1
    %v2541 = vsel %vm2488, %v2540, %v2539
    %v2542 = vrot.slane %v2447, 7
    %v2543 = vrot.slane %v2448, 6
    %v2544 = vsel %vm2473, %v2543, %v2542
    %v2545 = vrot.slane %v2449, 5
    %v2546 = vsel %vm2476, %v2545, %v2544
    %v2547 = vrot.slane %v2450, 4
    %v2548 = vsel %vm2479, %v2547, %v2546
    %v2549 = vrot.slane %v2451, 3
    %v2550 = vsel %vm2482, %v2549, %v2548
    %v2551 = vrot.slane %v2452, 2
    %v2552 = vsel %vm2485, %v2551, %v2550
    %v2553 = vrot.slane %v2453, 1
    %v2554 = vsel %vm2488, %v2553, %v2552
    %v2555 = vrot.slane %v2455, 7
    %v2556 = vrot.slane %v2456, 6
    %v2557 = vsel %vm2473, %v2556, %v2555
    %v2558 = vrot.slane %v2457, 5
    %v2559 = vsel %vm2476, %v2558, %v2557
    %v2560 = vrot.slane %v2458, 4
    %v2561 = vsel %vm2479, %v2560, %v2559
    %v2562 = vrot.slane %v2459, 3
    %v2563 = vsel %vm2482, %v2562, %v2561
    %v2564 = vrot.slane %v2460, 2
    %v2565 = vsel %vm2485, %v2564, %v2563
    %v2566 = vrot.slane %v2461, 1
    %v2567 = vsel %vm2488, %v2566, %v2565
    %v2568 = vrot.slane %v2463, 7
    %v2569 = vrot.slane %v2464, 6
    %v2570 = vsel %vm2473, %v2569, %v2568
    %v2571 = vrot.slane %v2465, 5
    %v2572 = vsel %vm2476, %v2571, %v2570
    %v2573 = vrot.slane %v2466, 4
    %v2574 = vsel %vm2479, %v2573, %v2572
    %v2575 = vrot.slane %v2467, 3
    %v2576 = vsel %vm2482, %v2575, %v2574
    %v2577 = vrot.slane %v2468, 2
    %v2578 = vsel %vm2485, %v2577, %v2576
    %v2579 = vrot.slane %v2469, 1
    %v2580 = vsel %vm2488, %v2579, %v2578
    %v2581 = vpack.c.b16 %v2489, %v2489
    %v2582 = vpack.c.b16 %v2414, %v2414
    %v2583 = vpack.c.b16 %v2502, %v2502
    %v2584 = vpack.c.b16 %v2422, %v2422
    %v2585 = vpack.c.b16 %v2515, %v2515
    %v2586 = vpack.c.b16 %v2430, %v2430
    %v2587 = vpack.c.b16 %v2528, %v2528
    %v2588 = vpack.c.b16 %v2438, %v2438
    %v2589 = vpack.c.b16 %v2541, %v2541
    %v2590 = vpack.c.b16 %v2446, %v2446
    %v2591 = vpack.c.b16 %v2554, %v2554
    %v2592 = vpack.c.b16 %v2454, %v2454
    %v2593 = vpack.c.b16 %v2567, %v2567
    %v2594 = vpack.c.b16 %v2462, %v2462
    %v2595 = vpack.c.b16 %v2580, %v2580
    %v2596 = vpack.c.b16 %v2470, %v2470
    %vm2613 = vcmask 257024
    %vm2614 = vmand %vm2613, %vm115
    %v2615 = vld [vmem:[%s63] sm:$0xf]
    %v2616 = vsel %vm2614, %v2581, %v2615
    %2617 = vst [vmem:[%s63] sm:$0xf] %v2616
    %v2618 = vld [vmem:[%s63 + $0x4] sm:$0x1]
    %v2619 = vsel %vm66, %v2582, %v2618
    %2620 = vst [vmem:[%s63 + $0x4] sm:$0x1] %v2619
    %v2621 = vld [vmem:[%s63 + $0x8] sm:$0xf]
    %v2622 = vsel %vm2614, %v2583, %v2621
    %2623 = vst [vmem:[%s63 + $0x8] sm:$0xf] %v2622
    %v2624 = vld [vmem:[%s63 + $0xc] sm:$0x1]
    %v2625 = vsel %vm66, %v2584, %v2624
    %2626 = vst [vmem:[%s63 + $0xc] sm:$0x1] %v2625
    %v2627 = vld [vmem:[%s63 + $0x10] sm:$0xf]
    %v2628 = vsel %vm2614, %v2585, %v2627
    %2629 = vst [vmem:[%s63 + $0x10] sm:$0xf] %v2628
    %v2630 = vld [vmem:[%s63 + $0x14] sm:$0x1]
    %v2631 = vsel %vm66, %v2586, %v2630
    %2632 = vst [vmem:[%s63 + $0x14] sm:$0x1] %v2631
    %v2633 = vld [vmem:[%s63 + $0x18] sm:$0xf]
    %v2634 = vsel %vm2614, %v2587, %v2633
    %2635 = vst [vmem:[%s63 + $0x18] sm:$0xf] %v2634
    %v2636 = vld [vmem:[%s63 + $0x1c] sm:$0x1]
    %v2637 = vsel %vm66, %v2588, %v2636
    %2638 = vst [vmem:[%s63 + $0x1c] sm:$0x1] %v2637
    %v2639 = vld [vmem:[%s63 + $0x20] sm:$0xf]
    %v2640 = vsel %vm2614, %v2589, %v2639
    %2641 = vst [vmem:[%s63 + $0x20] sm:$0xf] %v2640
    %v2642 = vld [vmem:[%s63 + $0x24] sm:$0x1]
    %v2643 = vsel %vm66, %v2590, %v2642
    %2644 = vst [vmem:[%s63 + $0x24] sm:$0x1] %v2643
    %v2645 = vld [vmem:[%s63 + $0x28] sm:$0xf]
    %v2646 = vsel %vm2614, %v2591, %v2645
    %2647 = vst [vmem:[%s63 + $0x28] sm:$0xf] %v2646
    %v2648 = vld [vmem:[%s63 + $0x2c] sm:$0x1]
    %v2649 = vsel %vm66, %v2592, %v2648
    %2650 = vst [vmem:[%s63 + $0x2c] sm:$0x1] %v2649
    %v2651 = vld [vmem:[%s63 + $0x30] sm:$0xf]
    %v2652 = vsel %vm2614, %v2593, %v2651
    %2653 = vst [vmem:[%s63 + $0x30] sm:$0xf] %v2652
    %v2654 = vld [vmem:[%s63 + $0x34] sm:$0x1]
    %v2655 = vsel %vm66, %v2594, %v2654
    %2656 = vst [vmem:[%s63 + $0x34] sm:$0x1] %v2655
    %v2657 = vld [vmem:[%s63 + $0x38] sm:$0xf]
    %v2658 = vsel %vm2614, %v2595, %v2657
    %2659 = vst [vmem:[%s63 + $0x38] sm:$0xf] %v2658
    %v2660 = vld [vmem:[%s63 + $0x3c] sm:$0x1]
    %v2661 = vsel %vm66, %v2596, %v2660
    %2662 = vst [vmem:[%s63 + $0x3c] sm:$0x1] %v2661
    %v2695 = vcombine.high %v1031, %v1031
    %v2697 = vunpack.c.l.s4 1983009808
    %v2698 = vunpack.c.0.s8 %v2697
    %v2699 = vlaneseq
    %v2700 = vshrl.u32 %v2699, 7
    %v2701 = vsub.s32 %v2698, %v2700
    %v2702 = vrot.slane %v1031, %v2701
    %v2704 = vunpack.c.l.s4 1983009808
    %v2705 = vunpack.c.0.s8 %v2704
    %v2706 = vlaneseq
    %v2707 = vshrl.u32 %v2706, 7
    %v2708 = vsub.s32 %v2705, %v2707
    %v2709 = vrot.slane %v2695, %v2708
    %v2710 = vcombine.high %v2702, %v2702
    %v2711 = vcombine.high %v2709, %v2709
    %v2712 = vcombine.high %v1032, %v1032
    %v2714 = vunpack.c.l.s4 1983009808
    %v2715 = vunpack.c.0.s8 %v2714
    %v2716 = vlaneseq
    %v2717 = vshrl.u32 %v2716, 7
    %v2718 = vsub.s32 %v2715, %v2717
    %v2719 = vrot.slane %v1032, %v2718
    %v2721 = vunpack.c.l.s4 1983009808
    %v2722 = vunpack.c.0.s8 %v2721
    %v2723 = vlaneseq
    %v2724 = vshrl.u32 %v2723, 7
    %v2725 = vsub.s32 %v2722, %v2724
    %v2726 = vrot.slane %v2712, %v2725
    %v2727 = vcombine.high %v2719, %v2719
    %v2728 = vcombine.high %v2726, %v2726
    %v2729 = vcombine.high %v1033, %v1033
    %v2731 = vunpack.c.l.s4 1983009808
    %v2732 = vunpack.c.0.s8 %v2731
    %v2733 = vlaneseq
    %v2734 = vshrl.u32 %v2733, 7
    %v2735 = vsub.s32 %v2732, %v2734
    %v2736 = vrot.slane %v1033, %v2735
    %v2738 = vunpack.c.l.s4 1983009808
    %v2739 = vunpack.c.0.s8 %v2738
    %v2740 = vlaneseq
    %v2741 = vshrl.u32 %v2740, 7
    %v2742 = vsub.s32 %v2739, %v2741
    %v2743 = vrot.slane %v2729, %v2742
    %v2744 = vcombine.high %v2736, %v2736
    %v2745 = vcombine.high %v2743, %v2743
    %v2746 = vcombine.high %v1034, %v1034
    %v2748 = vunpack.c.l.s4 1983009808
    %v2749 = vunpack.c.0.s8 %v2748
    %v2750 = vlaneseq
    %v2751 = vshrl.u32 %v2750, 7
    %v2752 = vsub.s32 %v2749, %v2751
    %v2753 = vrot.slane %v1034, %v2752
    %v2755 = vunpack.c.l.s4 1983009808
    %v2756 = vunpack.c.0.s8 %v2755
    %v2757 = vlaneseq
    %v2758 = vshrl.u32 %v2757, 7
    %v2759 = vsub.s32 %v2756, %v2758
    %v2760 = vrot.slane %v2746, %v2759
    %v2761 = vcombine.high %v2753, %v2753
    %v2762 = vcombine.high %v2760, %v2760
    %v2763 = vcombine.high %v1035, %v1035
    %v2765 = vunpack.c.l.s4 1983009808
    %v2766 = vunpack.c.0.s8 %v2765
    %v2767 = vlaneseq
    %v2768 = vshrl.u32 %v2767, 7
    %v2769 = vsub.s32 %v2766, %v2768
    %v2770 = vrot.slane %v1035, %v2769
    %v2772 = vunpack.c.l.s4 1983009808
    %v2773 = vunpack.c.0.s8 %v2772
    %v2774 = vlaneseq
    %v2775 = vshrl.u32 %v2774, 7
    %v2776 = vsub.s32 %v2773, %v2775
    %v2777 = vrot.slane %v2763, %v2776
    %v2778 = vcombine.high %v2770, %v2770
    %v2779 = vcombine.high %v2777, %v2777
    %v2780 = vcombine.high %v1036, %v1036
    %v2782 = vunpack.c.l.s4 1983009808
    %v2783 = vunpack.c.0.s8 %v2782
    %v2784 = vlaneseq
    %v2785 = vshrl.u32 %v2784, 7
    %v2786 = vsub.s32 %v2783, %v2785
    %v2787 = vrot.slane %v1036, %v2786
    %v2789 = vunpack.c.l.s4 1983009808
    %v2790 = vunpack.c.0.s8 %v2789
    %v2791 = vlaneseq
    %v2792 = vshrl.u32 %v2791, 7
    %v2793 = vsub.s32 %v2790, %v2792
    %v2794 = vrot.slane %v2780, %v2793
    %v2795 = vcombine.high %v2787, %v2787
    %v2796 = vcombine.high %v2794, %v2794
    %v2797 = vcombine.high %v1037, %v1037
    %v2799 = vunpack.c.l.s4 1983009808
    %v2800 = vunpack.c.0.s8 %v2799
    %v2801 = vlaneseq
    %v2802 = vshrl.u32 %v2801, 7
    %v2803 = vsub.s32 %v2800, %v2802
    %v2804 = vrot.slane %v1037, %v2803
    %v2806 = vunpack.c.l.s4 1983009808
    %v2807 = vunpack.c.0.s8 %v2806
    %v2808 = vlaneseq
    %v2809 = vshrl.u32 %v2808, 7
    %v2810 = vsub.s32 %v2807, %v2809
    %v2811 = vrot.slane %v2797, %v2810
    %v2812 = vcombine.high %v2804, %v2804
    %v2813 = vcombine.high %v2811, %v2811
    %v2814 = vcombine.high %v1038, %v1038
    %v2816 = vunpack.c.l.s4 1983009808
    %v2817 = vunpack.c.0.s8 %v2816
    %v2818 = vlaneseq
    %v2819 = vshrl.u32 %v2818, 7
    %v2820 = vsub.s32 %v2817, %v2819
    %v2821 = vrot.slane %v1038, %v2820
    %v2823 = vunpack.c.l.s4 1983009808
    %v2824 = vunpack.c.0.s8 %v2823
    %v2825 = vlaneseq
    %v2826 = vshrl.u32 %v2825, 7
    %v2827 = vsub.s32 %v2824, %v2826
    %v2828 = vrot.slane %v2814, %v2827
    %v2829 = vcombine.high %v2821, %v2821
    %v2830 = vcombine.high %v2828, %v2828
    %v2831 = vcombine.high %v1039, %v1039
    %v2833 = vunpack.c.l.s4 1983009808
    %v2834 = vunpack.c.0.s8 %v2833
    %v2835 = vlaneseq
    %v2836 = vshrl.u32 %v2835, 7
    %v2837 = vsub.s32 %v2834, %v2836
    %v2838 = vrot.slane %v1039, %v2837
    %v2840 = vunpack.c.l.s4 1983009808
    %v2841 = vunpack.c.0.s8 %v2840
    %v2842 = vlaneseq
    %v2843 = vshrl.u32 %v2842, 7
    %v2844 = vsub.s32 %v2841, %v2843
    %v2845 = vrot.slane %v2831, %v2844
    %v2846 = vcombine.high %v2838, %v2838
    %v2847 = vcombine.high %v2845, %v2845
    %v2848 = vcombine.high %v1040, %v1040
    %v2850 = vunpack.c.l.s4 1983009808
    %v2851 = vunpack.c.0.s8 %v2850
    %v2852 = vlaneseq
    %v2853 = vshrl.u32 %v2852, 7
    %v2854 = vsub.s32 %v2851, %v2853
    %v2855 = vrot.slane %v1040, %v2854
    %v2857 = vunpack.c.l.s4 1983009808
    %v2858 = vunpack.c.0.s8 %v2857
    %v2859 = vlaneseq
    %v2860 = vshrl.u32 %v2859, 7
    %v2861 = vsub.s32 %v2858, %v2860
    %v2862 = vrot.slane %v2848, %v2861
    %v2863 = vcombine.high %v2855, %v2855
    %v2864 = vcombine.high %v2862, %v2862
    %v2865 = vcombine.high %v1041, %v1041
    %v2867 = vunpack.c.l.s4 1983009808
    %v2868 = vunpack.c.0.s8 %v2867
    %v2869 = vlaneseq
    %v2870 = vshrl.u32 %v2869, 7
    %v2871 = vsub.s32 %v2868, %v2870
    %v2872 = vrot.slane %v1041, %v2871
    %v2874 = vunpack.c.l.s4 1983009808
    %v2875 = vunpack.c.0.s8 %v2874
    %v2876 = vlaneseq
    %v2877 = vshrl.u32 %v2876, 7
    %v2878 = vsub.s32 %v2875, %v2877
    %v2879 = vrot.slane %v2865, %v2878
    %v2880 = vcombine.high %v2872, %v2872
    %v2881 = vcombine.high %v2879, %v2879
    %v2882 = vcombine.high %v1042, %v1042
    %v2884 = vunpack.c.l.s4 1983009808
    %v2885 = vunpack.c.0.s8 %v2884
    %v2886 = vlaneseq
    %v2887 = vshrl.u32 %v2886, 7
    %v2888 = vsub.s32 %v2885, %v2887
    %v2889 = vrot.slane %v1042, %v2888
    %v2891 = vunpack.c.l.s4 1983009808
    %v2892 = vunpack.c.0.s8 %v2891
    %v2893 = vlaneseq
    %v2894 = vshrl.u32 %v2893, 7
    %v2895 = vsub.s32 %v2892, %v2894
    %v2896 = vrot.slane %v2882, %v2895
    %v2897 = vcombine.high %v2889, %v2889
    %v2898 = vcombine.high %v2896, %v2896
    %v2899 = vcombine.high %v1043, %v1043
    %v2901 = vunpack.c.l.s4 1983009808
    %v2902 = vunpack.c.0.s8 %v2901
    %v2903 = vlaneseq
    %v2904 = vshrl.u32 %v2903, 7
    %v2905 = vsub.s32 %v2902, %v2904
    %v2906 = vrot.slane %v1043, %v2905
    %v2908 = vunpack.c.l.s4 1983009808
    %v2909 = vunpack.c.0.s8 %v2908
    %v2910 = vlaneseq
    %v2911 = vshrl.u32 %v2910, 7
    %v2912 = vsub.s32 %v2909, %v2911
    %v2913 = vrot.slane %v2899, %v2912
    %v2914 = vcombine.high %v2906, %v2906
    %v2915 = vcombine.high %v2913, %v2913
    %v2916 = vcombine.high %v1044, %v1044
    %v2918 = vunpack.c.l.s4 1983009808
    %v2919 = vunpack.c.0.s8 %v2918
    %v2920 = vlaneseq
    %v2921 = vshrl.u32 %v2920, 7
    %v2922 = vsub.s32 %v2919, %v2921
    %v2923 = vrot.slane %v1044, %v2922
    %v2925 = vunpack.c.l.s4 1983009808
    %v2926 = vunpack.c.0.s8 %v2925
    %v2927 = vlaneseq
    %v2928 = vshrl.u32 %v2927, 7
    %v2929 = vsub.s32 %v2926, %v2928
    %v2930 = vrot.slane %v2916, %v2929
    %v2931 = vcombine.high %v2923, %v2923
    %v2932 = vcombine.high %v2930, %v2930
    %v2933 = vcombine.high %v1045, %v1045
    %v2935 = vunpack.c.l.s4 1983009808
    %v2936 = vunpack.c.0.s8 %v2935
    %v2937 = vlaneseq
    %v2938 = vshrl.u32 %v2937, 7
    %v2939 = vsub.s32 %v2936, %v2938
    %v2940 = vrot.slane %v1045, %v2939
    %v2942 = vunpack.c.l.s4 1983009808
    %v2943 = vunpack.c.0.s8 %v2942
    %v2944 = vlaneseq
    %v2945 = vshrl.u32 %v2944, 7
    %v2946 = vsub.s32 %v2943, %v2945
    %v2947 = vrot.slane %v2933, %v2946
    %v2948 = vcombine.high %v2940, %v2940
    %v2949 = vcombine.high %v2947, %v2947
    %v2950 = vcombine.high %v1046, %v1046
    %v2952 = vunpack.c.l.s4 1983009808
    %v2953 = vunpack.c.0.s8 %v2952
    %v2954 = vlaneseq
    %v2955 = vshrl.u32 %v2954, 7
    %v2956 = vsub.s32 %v2953, %v2955
    %v2957 = vrot.slane %v1046, %v2956
    %v2959 = vunpack.c.l.s4 1983009808
    %v2960 = vunpack.c.0.s8 %v2959
    %v2961 = vlaneseq
    %v2962 = vshrl.u32 %v2961, 7
    %v2963 = vsub.s32 %v2960, %v2962
    %v2964 = vrot.slane %v2950, %v2963
    %v2965 = vcombine.high %v2957, %v2957
    %v2966 = vcombine.high %v2964, %v2964
    %v2967 = vcombine.high %v1047, %v1047
    %v2969 = vunpack.c.l.s4 1983009808
    %v2970 = vunpack.c.0.s8 %v2969
    %v2971 = vlaneseq
    %v2972 = vshrl.u32 %v2971, 7
    %v2973 = vsub.s32 %v2970, %v2972
    %v2974 = vrot.slane %v1047, %v2973
    %v2976 = vunpack.c.l.s4 1983009808
    %v2977 = vunpack.c.0.s8 %v2976
    %v2978 = vlaneseq
    %v2979 = vshrl.u32 %v2978, 7
    %v2980 = vsub.s32 %v2977, %v2979
    %v2981 = vrot.slane %v2967, %v2980
    %v2982 = vcombine.high %v2974, %v2974
    %v2983 = vcombine.high %v2981, %v2981
    %v2984 = vcombine.high %v1048, %v1048
    %v2986 = vunpack.c.l.s4 1983009808
    %v2987 = vunpack.c.0.s8 %v2986
    %v2988 = vlaneseq
    %v2989 = vshrl.u32 %v2988, 7
    %v2990 = vsub.s32 %v2987, %v2989
    %v2991 = vrot.slane %v1048, %v2990
    %v2993 = vunpack.c.l.s4 1983009808
    %v2994 = vunpack.c.0.s8 %v2993
    %v2995 = vlaneseq
    %v2996 = vshrl.u32 %v2995, 7
    %v2997 = vsub.s32 %v2994, %v2996
    %v2998 = vrot.slane %v2984, %v2997
    %v2999 = vcombine.high %v2991, %v2991
    %v3000 = vcombine.high %v2998, %v2998
    %v3001 = vcombine.high %v1049, %v1049
    %v3003 = vunpack.c.l.s4 1983009808
    %v3004 = vunpack.c.0.s8 %v3003
    %v3005 = vlaneseq
    %v3006 = vshrl.u32 %v3005, 7
    %v3007 = vsub.s32 %v3004, %v3006
    %v3008 = vrot.slane %v1049, %v3007
    %v3010 = vunpack.c.l.s4 1983009808
    %v3011 = vunpack.c.0.s8 %v3010
    %v3012 = vlaneseq
    %v3013 = vshrl.u32 %v3012, 7
    %v3014 = vsub.s32 %v3011, %v3013
    %v3015 = vrot.slane %v3001, %v3014
    %v3016 = vcombine.high %v3008, %v3008
    %v3017 = vcombine.high %v3015, %v3015
    %v3018 = vcombine.high %v1050, %v1050
    %v3020 = vunpack.c.l.s4 1983009808
    %v3021 = vunpack.c.0.s8 %v3020
    %v3022 = vlaneseq
    %v3023 = vshrl.u32 %v3022, 7
    %v3024 = vsub.s32 %v3021, %v3023
    %v3025 = vrot.slane %v1050, %v3024
    %v3027 = vunpack.c.l.s4 1983009808
    %v3028 = vunpack.c.0.s8 %v3027
    %v3029 = vlaneseq
    %v3030 = vshrl.u32 %v3029, 7
    %v3031 = vsub.s32 %v3028, %v3030
    %v3032 = vrot.slane %v3018, %v3031
    %v3033 = vcombine.high %v3025, %v3025
    %v3034 = vcombine.high %v3032, %v3032
    %v3035 = vcombine.high %v1051, %v1051
    %v3037 = vunpack.c.l.s4 1983009808
    %v3038 = vunpack.c.0.s8 %v3037
    %v3039 = vlaneseq
    %v3040 = vshrl.u32 %v3039, 7
    %v3041 = vsub.s32 %v3038, %v3040
    %v3042 = vrot.slane %v1051, %v3041
    %v3044 = vunpack.c.l.s4 1983009808
    %v3045 = vunpack.c.0.s8 %v3044
    %v3046 = vlaneseq
    %v3047 = vshrl.u32 %v3046, 7
    %v3048 = vsub.s32 %v3045, %v3047
    %v3049 = vrot.slane %v3035, %v3048
    %v3050 = vcombine.high %v3042, %v3042
    %v3051 = vcombine.high %v3049, %v3049
    %v3052 = vcombine.high %v1052, %v1052
    %v3054 = vunpack.c.l.s4 1983009808
    %v3055 = vunpack.c.0.s8 %v3054
    %v3056 = vlaneseq
    %v3057 = vshrl.u32 %v3056, 7
    %v3058 = vsub.s32 %v3055, %v3057
    %v3059 = vrot.slane %v1052, %v3058
    %v3061 = vunpack.c.l.s4 1983009808
    %v3062 = vunpack.c.0.s8 %v3061
    %v3063 = vlaneseq
    %v3064 = vshrl.u32 %v3063, 7
    %v3065 = vsub.s32 %v3062, %v3064
    %v3066 = vrot.slane %v3052, %v3065
    %v3067 = vcombine.high %v3059, %v3059
    %v3068 = vcombine.high %v3066, %v3066
    %v3069 = vcombine.high %v1053, %v1053
    %v3071 = vunpack.c.l.s4 1983009808
    %v3072 = vunpack.c.0.s8 %v3071
    %v3073 = vlaneseq
    %v3074 = vshrl.u32 %v3073, 7
    %v3075 = vsub.s32 %v3072, %v3074
    %v3076 = vrot.slane %v1053, %v3075
    %v3078 = vunpack.c.l.s4 1983009808
    %v3079 = vunpack.c.0.s8 %v3078
    %v3080 = vlaneseq
    %v3081 = vshrl.u32 %v3080, 7
    %v3082 = vsub.s32 %v3079, %v3081
    %v3083 = vrot.slane %v3069, %v3082
    %v3084 = vcombine.high %v3076, %v3076
    %v3085 = vcombine.high %v3083, %v3083
    %v3086 = vcombine.high %v1054, %v1054
    %v3088 = vunpack.c.l.s4 1983009808
    %v3089 = vunpack.c.0.s8 %v3088
    %v3090 = vlaneseq
    %v3091 = vshrl.u32 %v3090, 7
    %v3092 = vsub.s32 %v3089, %v3091
    %v3093 = vrot.slane %v1054, %v3092
    %v3095 = vunpack.c.l.s4 1983009808
    %v3096 = vunpack.c.0.s8 %v3095
    %v3097 = vlaneseq
    %v3098 = vshrl.u32 %v3097, 7
    %v3099 = vsub.s32 %v3096, %v3098
    %v3100 = vrot.slane %v3086, %v3099
    %v3101 = vcombine.high %v3093, %v3093
    %v3102 = vcombine.high %v3100, %v3100
    %v3103 = vcombine.high %v1055, %v1055
    %v3105 = vunpack.c.l.s4 1983009808
    %v3106 = vunpack.c.0.s8 %v3105
    %v3107 = vlaneseq
    %v3108 = vshrl.u32 %v3107, 7
    %v3109 = vsub.s32 %v3106, %v3108
    %v3110 = vrot.slane %v1055, %v3109
    %v3112 = vunpack.c.l.s4 1983009808
    %v3113 = vunpack.c.0.s8 %v3112
    %v3114 = vlaneseq
    %v3115 = vshrl.u32 %v3114, 7
    %v3116 = vsub.s32 %v3113, %v3115
    %v3117 = vrot.slane %v3103, %v3116
    %v3118 = vcombine.high %v3110, %v3110
    %v3119 = vcombine.high %v3117, %v3117
    %v3120 = vcombine.high %v1056, %v1056
    %v3122 = vunpack.c.l.s4 1983009808
    %v3123 = vunpack.c.0.s8 %v3122
    %v3124 = vlaneseq
    %v3125 = vshrl.u32 %v3124, 7
    %v3126 = vsub.s32 %v3123, %v3125
    %v3127 = vrot.slane %v1056, %v3126
    %v3129 = vunpack.c.l.s4 1983009808
    %v3130 = vunpack.c.0.s8 %v3129
    %v3131 = vlaneseq
    %v3132 = vshrl.u32 %v3131, 7
    %v3133 = vsub.s32 %v3130, %v3132
    %v3134 = vrot.slane %v3120, %v3133
    %v3135 = vcombine.high %v3127, %v3127
    %v3136 = vcombine.high %v3134, %v3134
    %v3137 = vcombine.high %v1057, %v1057
    %v3139 = vunpack.c.l.s4 1983009808
    %v3140 = vunpack.c.0.s8 %v3139
    %v3141 = vlaneseq
    %v3142 = vshrl.u32 %v3141, 7
    %v3143 = vsub.s32 %v3140, %v3142
    %v3144 = vrot.slane %v1057, %v3143
    %v3146 = vunpack.c.l.s4 1983009808
    %v3147 = vunpack.c.0.s8 %v3146
    %v3148 = vlaneseq
    %v3149 = vshrl.u32 %v3148, 7
    %v3150 = vsub.s32 %v3147, %v3149
    %v3151 = vrot.slane %v3137, %v3150
    %v3152 = vcombine.high %v3144, %v3144
    %v3153 = vcombine.high %v3151, %v3151
    %v3154 = vcombine.high %v1058, %v1058
    %v3156 = vunpack.c.l.s4 1983009808
    %v3157 = vunpack.c.0.s8 %v3156
    %v3158 = vlaneseq
    %v3159 = vshrl.u32 %v3158, 7
    %v3160 = vsub.s32 %v3157, %v3159
    %v3161 = vrot.slane %v1058, %v3160
    %v3163 = vunpack.c.l.s4 1983009808
    %v3164 = vunpack.c.0.s8 %v3163
    %v3165 = vlaneseq
    %v3166 = vshrl.u32 %v3165, 7
    %v3167 = vsub.s32 %v3164, %v3166
    %v3168 = vrot.slane %v3154, %v3167
    %v3169 = vcombine.high %v3161, %v3161
    %v3170 = vcombine.high %v3168, %v3168
    %v3171 = vcombine.high %v1059, %v1059
    %v3173 = vunpack.c.l.s4 1983009808
    %v3174 = vunpack.c.0.s8 %v3173
    %v3175 = vlaneseq
    %v3176 = vshrl.u32 %v3175, 7
    %v3177 = vsub.s32 %v3174, %v3176
    %v3178 = vrot.slane %v1059, %v3177
    %v3180 = vunpack.c.l.s4 1983009808
    %v3181 = vunpack.c.0.s8 %v3180
    %v3182 = vlaneseq
    %v3183 = vshrl.u32 %v3182, 7
    %v3184 = vsub.s32 %v3181, %v3183
    %v3185 = vrot.slane %v3171, %v3184
    %v3186 = vcombine.high %v3178, %v3178
    %v3187 = vcombine.high %v3185, %v3185
    %v3188 = vcombine.high %v1060, %v1060
    %v3190 = vunpack.c.l.s4 1983009808
    %v3191 = vunpack.c.0.s8 %v3190
    %v3192 = vlaneseq
    %v3193 = vshrl.u32 %v3192, 7
    %v3194 = vsub.s32 %v3191, %v3193
    %v3195 = vrot.slane %v1060, %v3194
    %v3197 = vunpack.c.l.s4 1983009808
    %v3198 = vunpack.c.0.s8 %v3197
    %v3199 = vlaneseq
    %v3200 = vshrl.u32 %v3199, 7
    %v3201 = vsub.s32 %v3198, %v3200
    %v3202 = vrot.slane %v3188, %v3201
    %v3203 = vcombine.high %v3195, %v3195
    %v3204 = vcombine.high %v3202, %v3202
    %v3205 = vcombine.high %v1061, %v1061
    %v3207 = vunpack.c.l.s4 1983009808
    %v3208 = vunpack.c.0.s8 %v3207
    %v3209 = vlaneseq
    %v3210 = vshrl.u32 %v3209, 7
    %v3211 = vsub.s32 %v3208, %v3210
    %v3212 = vrot.slane %v1061, %v3211
    %v3214 = vunpack.c.l.s4 1983009808
    %v3215 = vunpack.c.0.s8 %v3214
    %v3216 = vlaneseq
    %v3217 = vshrl.u32 %v3216, 7
    %v3218 = vsub.s32 %v3215, %v3217
    %v3219 = vrot.slane %v3205, %v3218
    %v3220 = vcombine.high %v3212, %v3212
    %v3221 = vcombine.high %v3219, %v3219
    %v3222 = vcombine.high %v1062, %v1062
    %v3224 = vunpack.c.l.s4 1983009808
    %v3225 = vunpack.c.0.s8 %v3224
    %v3226 = vlaneseq
    %v3227 = vshrl.u32 %v3226, 7
    %v3228 = vsub.s32 %v3225, %v3227
    %v3229 = vrot.slane %v1062, %v3228
    %v3231 = vunpack.c.l.s4 1983009808
    %v3232 = vunpack.c.0.s8 %v3231
    %v3233 = vlaneseq
    %v3234 = vshrl.u32 %v3233, 7
    %v3235 = vsub.s32 %v3232, %v3234
    %v3236 = vrot.slane %v3222, %v3235
    %v3237 = vcombine.high %v3229, %v3229
    %v3238 = vcombine.high %v3236, %v3236
    %v3367 = vmax.f32 %v2702, %v2736
    %v3368 = vmax.f32 %v2710, %v2744
    %v3369 = vmax.f32 %v2709, %v2743
    %v3370 = vmax.f32 %v2711, %v2745
    %v3371 = vmax.f32 %v2719, %v2753
    %v3372 = vmax.f32 %v2727, %v2761
    %v3373 = vmax.f32 %v2726, %v2760
    %v3374 = vmax.f32 %v2728, %v2762
    %v3375 = vmax.f32 %v2770, %v2804
    %v3376 = vmax.f32 %v2778, %v2812
    %v3377 = vmax.f32 %v2777, %v2811
    %v3378 = vmax.f32 %v2779, %v2813
    %v3379 = vmax.f32 %v2787, %v2821
    %v3380 = vmax.f32 %v2795, %v2829
    %v3381 = vmax.f32 %v2794, %v2828
    %v3382 = vmax.f32 %v2796, %v2830
    %v3383 = vmax.f32 %v2838, %v2872
    %v3384 = vmax.f32 %v2846, %v2880
    %v3385 = vmax.f32 %v2845, %v2879
    %v3386 = vmax.f32 %v2847, %v2881
    %v3387 = vmax.f32 %v2855, %v2889
    %v3388 = vmax.f32 %v2863, %v2897
    %v3389 = vmax.f32 %v2862, %v2896
    %v3390 = vmax.f32 %v2864, %v2898
    %v3391 = vmax.f32 %v2906, %v2940
    %v3392 = vmax.f32 %v2914, %v2948
    %v3393 = vmax.f32 %v2913, %v2947
    %v3394 = vmax.f32 %v2915, %v2949
    %v3395 = vmax.f32 %v2923, %v2957
    %v3396 = vmax.f32 %v2931, %v2965
    %v3397 = vmax.f32 %v2930, %v2964
    %v3398 = vmax.f32 %v2932, %v2966
    %v3399 = vmax.f32 %v2974, %v3008
    %v3400 = vmax.f32 %v2982, %v3016
    %v3401 = vmax.f32 %v2981, %v3015
    %v3402 = vmax.f32 %v2983, %v3017
    %v3403 = vmax.f32 %v2991, %v3025
    %v3404 = vmax.f32 %v2999, %v3033
    %v3405 = vmax.f32 %v2998, %v3032
    %v3406 = vmax.f32 %v3000, %v3034
    %v3407 = vmax.f32 %v3042, %v3076
    %v3408 = vmax.f32 %v3050, %v3084
    %v3409 = vmax.f32 %v3049, %v3083
    %v3410 = vmax.f32 %v3051, %v3085
    %v3411 = vmax.f32 %v3059, %v3093
    %v3412 = vmax.f32 %v3067, %v3101
    %v3413 = vmax.f32 %v3066, %v3100
    %v3414 = vmax.f32 %v3068, %v3102
    %v3415 = vmax.f32 %v3110, %v3144
    %v3416 = vmax.f32 %v3118, %v3152
    %v3417 = vmax.f32 %v3117, %v3151
    %v3418 = vmax.f32 %v3119, %v3153
    %v3419 = vmax.f32 %v3127, %v3161
    %v3420 = vmax.f32 %v3135, %v3169
    %v3421 = vmax.f32 %v3134, %v3168
    %v3422 = vmax.f32 %v3136, %v3170
    %v3423 = vmax.f32 %v3178, %v3212
    %v3424 = vmax.f32 %v3186, %v3220
    %v3425 = vmax.f32 %v3185, %v3219
    %v3426 = vmax.f32 %v3187, %v3221
    %v3427 = vmax.f32 %v3195, %v3229
    %v3428 = vmax.f32 %v3203, %v3237
    %v3429 = vmax.f32 %v3202, %v3236
    %v3430 = vmax.f32 %v3204, %v3238
    %v3495 = vrot.slane %v3367, 7
    %v3496 = vrot.slane %v3495, 2
    %v3497 = vrot.slane %v3368, 7
    %v3498 = vrot.slane %v3497, 2
    %v3499 = vrot.slane %v3369, 7
    %v3500 = vrot.slane %v3499, 2
    %v3501 = vrot.slane %v3370, 7
    %v3502 = vrot.slane %v3501, 2
    %v3503 = vrot.slane %v3371, 7
    %v3504 = vrot.slane %v3503, 2
    %v3505 = vrot.slane %v3372, 7
    %v3506 = vrot.slane %v3505, 2
    %v3507 = vrot.slane %v3373, 7
    %v3508 = vrot.slane %v3507, 2
    %v3509 = vrot.slane %v3374, 7
    %v3510 = vrot.slane %v3509, 2
    %v3511 = vrot.slane %v3375, 7
    %v3512 = vrot.slane %v3511, 2
    %v3513 = vrot.slane %v3376, 7
    %v3514 = vrot.slane %v3513, 2
    %v3515 = vrot.slane %v3377, 7
    %v3516 = vrot.slane %v3515, 2
    %v3517 = vrot.slane %v3378, 7
    %v3518 = vrot.slane %v3517, 2
    %v3519 = vrot.slane %v3379, 7
    %v3520 = vrot.slane %v3519, 2
    %v3521 = vrot.slane %v3380, 7
    %v3522 = vrot.slane %v3521, 2
    %v3523 = vrot.slane %v3381, 7
    %v3524 = vrot.slane %v3523, 2
    %v3525 = vrot.slane %v3382, 7
    %v3526 = vrot.slane %v3525, 2
    %v3527 = vrot.slane %v3383, 7
    %v3528 = vrot.slane %v3527, 2
    %v3529 = vrot.slane %v3384, 7
    %v3530 = vrot.slane %v3529, 2
    %v3531 = vrot.slane %v3385, 7
    %v3532 = vrot.slane %v3531, 2
    %v3533 = vrot.slane %v3386, 7
    %v3534 = vrot.slane %v3533, 2
    %v3535 = vrot.slane %v3387, 7
    %v3536 = vrot.slane %v3535, 2
    %v3537 = vrot.slane %v3388, 7
    %v3538 = vrot.slane %v3537, 2
    %v3539 = vrot.slane %v3389, 7
    %v3540 = vrot.slane %v3539, 2
    %v3541 = vrot.slane %v3390, 7
    %v3542 = vrot.slane %v3541, 2
    %v3543 = vrot.slane %v3391, 7
    %v3544 = vrot.slane %v3543, 2
    %v3545 = vrot.slane %v3392, 7
    %v3546 = vrot.slane %v3545, 2
    %v3547 = vrot.slane %v3393, 7
    %v3548 = vrot.slane %v3547, 2
    %v3549 = vrot.slane %v3394, 7
    %v3550 = vrot.slane %v3549, 2
    %v3551 = vrot.slane %v3395, 7
    %v3552 = vrot.slane %v3551, 2
    %v3553 = vrot.slane %v3396, 7
    %v3554 = vrot.slane %v3553, 2
    %v3555 = vrot.slane %v3397, 7
    %v3556 = vrot.slane %v3555, 2
    %v3557 = vrot.slane %v3398, 7
    %v3558 = vrot.slane %v3557, 2
    %v3559 = vrot.slane %v3399, 7
    %v3560 = vrot.slane %v3559, 2
    %v3561 = vrot.slane %v3400, 7
    %v3562 = vrot.slane %v3561, 2
    %v3563 = vrot.slane %v3401, 7
    %v3564 = vrot.slane %v3563, 2
    %v3565 = vrot.slane %v3402, 7
    %v3566 = vrot.slane %v3565, 2
    %v3567 = vrot.slane %v3403, 7
    %v3568 = vrot.slane %v3567, 2
    %v3569 = vrot.slane %v3404, 7
    %v3570 = vrot.slane %v3569, 2
    %v3571 = vrot.slane %v3405, 7
    %v3572 = vrot.slane %v3571, 2
    %v3573 = vrot.slane %v3406, 7
    %v3574 = vrot.slane %v3573, 2
    %v3575 = vrot.slane %v3407, 7
    %v3576 = vrot.slane %v3575, 2
    %v3577 = vrot.slane %v3408, 7
    %v3578 = vrot.slane %v3577, 2
    %v3579 = vrot.slane %v3409, 7
    %v3580 = vrot.slane %v3579, 2
    %v3581 = vrot.slane %v3410, 7
    %v3582 = vrot.slane %v3581, 2
    %v3583 = vrot.slane %v3411, 7
    %v3584 = vrot.slane %v3583, 2
    %v3585 = vrot.slane %v3412, 7
    %v3586 = vrot.slane %v3585, 2
    %v3587 = vrot.slane %v3413, 7
    %v3588 = vrot.slane %v3587, 2
    %v3589 = vrot.slane %v3414, 7
    %v3590 = vrot.slane %v3589, 2
    %v3591 = vrot.slane %v3415, 7
    %v3592 = vrot.slane %v3591, 2
    %v3593 = vrot.slane %v3416, 7
    %v3594 = vrot.slane %v3593, 2
    %v3595 = vrot.slane %v3417, 7
    %v3596 = vrot.slane %v3595, 2
    %v3597 = vrot.slane %v3418, 7
    %v3598 = vrot.slane %v3597, 2
    %v3599 = vrot.slane %v3419, 7
    %v3600 = vrot.slane %v3599, 2
    %v3601 = vrot.slane %v3420, 7
    %v3602 = vrot.slane %v3601, 2
    %v3603 = vrot.slane %v3421, 7
    %v3604 = vrot.slane %v3603, 2
    %v3605 = vrot.slane %v3422, 7
    %v3606 = vrot.slane %v3605, 2
    %v3607 = vrot.slane %v3423, 7
    %v3608 = vrot.slane %v3607, 2
    %v3609 = vrot.slane %v3424, 7
    %v3610 = vrot.slane %v3609, 2
    %v3611 = vrot.slane %v3425, 7
    %v3612 = vrot.slane %v3611, 2
    %v3613 = vrot.slane %v3426, 7
    %v3614 = vrot.slane %v3613, 2
    %v3615 = vrot.slane %v3427, 7
    %v3616 = vrot.slane %v3615, 2
    %v3617 = vrot.slane %v3428, 7
    %v3618 = vrot.slane %v3617, 2
    %v3619 = vrot.slane %v3429, 7
    %v3620 = vrot.slane %v3619, 2
    %v3621 = vrot.slane %v3430, 7
    %v3622 = vrot.slane %v3621, 2
    %v3687 = vmax.f32 %v3367, %v3496
    %v3688 = vmax.f32 %v3368, %v3498
    %v3689 = vmax.f32 %v3369, %v3500
    %v3690 = vmax.f32 %v3370, %v3502
    %v3691 = vmax.f32 %v3371, %v3504
    %v3692 = vmax.f32 %v3372, %v3506
    %v3693 = vmax.f32 %v3373, %v3508
    %v3694 = vmax.f32 %v3374, %v3510
    %v3695 = vmax.f32 %v3375, %v3512
    %v3696 = vmax.f32 %v3376, %v3514
    %v3697 = vmax.f32 %v3377, %v3516
    %v3698 = vmax.f32 %v3378, %v3518
    %v3699 = vmax.f32 %v3379, %v3520
    %v3700 = vmax.f32 %v3380, %v3522
    %v3701 = vmax.f32 %v3381, %v3524
    %v3702 = vmax.f32 %v3382, %v3526
    %v3703 = vmax.f32 %v3383, %v3528
    %v3704 = vmax.f32 %v3384, %v3530
    %v3705 = vmax.f32 %v3385, %v3532
    %v3706 = vmax.f32 %v3386, %v3534
    %v3707 = vmax.f32 %v3387, %v3536
    %v3708 = vmax.f32 %v3388, %v3538
    %v3709 = vmax.f32 %v3389, %v3540
    %v3710 = vmax.f32 %v3390, %v3542
    %v3711 = vmax.f32 %v3391, %v3544
    %v3712 = vmax.f32 %v3392, %v3546
    %v3713 = vmax.f32 %v3393, %v3548
    %v3714 = vmax.f32 %v3394, %v3550
    %v3715 = vmax.f32 %v3395, %v3552
    %v3716 = vmax.f32 %v3396, %v3554
    %v3717 = vmax.f32 %v3397, %v3556
    %v3718 = vmax.f32 %v3398, %v3558
    %v3719 = vmax.f32 %v3399, %v3560
    %v3720 = vmax.f32 %v3400, %v3562
    %v3721 = vmax.f32 %v3401, %v3564
    %v3722 = vmax.f32 %v3402, %v3566
    %v3723 = vmax.f32 %v3403, %v3568
    %v3724 = vmax.f32 %v3404, %v3570
    %v3725 = vmax.f32 %v3405, %v3572
    %v3726 = vmax.f32 %v3406, %v3574
    %v3727 = vmax.f32 %v3407, %v3576
    %v3728 = vmax.f32 %v3408, %v3578
    %v3729 = vmax.f32 %v3409, %v3580
    %v3730 = vmax.f32 %v3410, %v3582
    %v3731 = vmax.f32 %v3411, %v3584
    %v3732 = vmax.f32 %v3412, %v3586
    %v3733 = vmax.f32 %v3413, %v3588
    %v3734 = vmax.f32 %v3414, %v3590
    %v3735 = vmax.f32 %v3415, %v3592
    %v3736 = vmax.f32 %v3416, %v3594
    %v3737 = vmax.f32 %v3417, %v3596
    %v3738 = vmax.f32 %v3418, %v3598
    %v3739 = vmax.f32 %v3419, %v3600
    %v3740 = vmax.f32 %v3420, %v3602
    %v3741 = vmax.f32 %v3421, %v3604
    %v3742 = vmax.f32 %v3422, %v3606
    %v3743 = vmax.f32 %v3423, %v3608
    %v3744 = vmax.f32 %v3424, %v3610
    %v3745 = vmax.f32 %v3425, %v3612
    %v3746 = vmax.f32 %v3426, %v3614
    %v3747 = vmax.f32 %v3427, %v3616
    %v3748 = vmax.f32 %v3428, %v3618
    %v3749 = vmax.f32 %v3429, %v3620
    %v3750 = vmax.f32 %v3430, %v3622
    %v3751 = vpack.c.bf16 %v3687, %v3687
    %v3752 = vpack.c.bf16 %v3688, %v3688
    %v3753 = vpack.c.bf16 %v3689, %v3689
    %v3754 = vpack.c.bf16 %v3690, %v3690
    %v3755 = vpack.c.bf16 %v3691, %v3691
    %v3756 = vpack.c.bf16 %v3692, %v3692
    %v3757 = vpack.c.bf16 %v3693, %v3693
    %v3758 = vpack.c.bf16 %v3694, %v3694
    %v3759 = vpack.c.bf16 %v3695, %v3695
    %v3760 = vpack.c.bf16 %v3696, %v3696
    %v3761 = vpack.c.bf16 %v3697, %v3697
    %v3762 = vpack.c.bf16 %v3698, %v3698
    %v3763 = vpack.c.bf16 %v3699, %v3699
    %v3764 = vpack.c.bf16 %v3700, %v3700
    %v3765 = vpack.c.bf16 %v3701, %v3701
    %v3766 = vpack.c.bf16 %v3702, %v3702
    %v3767 = vpack.c.bf16 %v3703, %v3703
    %v3768 = vpack.c.bf16 %v3704, %v3704
    %v3769 = vpack.c.bf16 %v3705, %v3705
    %v3770 = vpack.c.bf16 %v3706, %v3706
    %v3771 = vpack.c.bf16 %v3707, %v3707
    %v3772 = vpack.c.bf16 %v3708, %v3708
    %v3773 = vpack.c.bf16 %v3709, %v3709
    %v3774 = vpack.c.bf16 %v3710, %v3710
    %v3775 = vpack.c.bf16 %v3711, %v3711
    %v3776 = vpack.c.bf16 %v3712, %v3712
    %v3777 = vpack.c.bf16 %v3713, %v3713
    %v3778 = vpack.c.bf16 %v3714, %v3714
    %v3779 = vpack.c.bf16 %v3715, %v3715
    %v3780 = vpack.c.bf16 %v3716, %v3716
    %v3781 = vpack.c.bf16 %v3717, %v3717
    %v3782 = vpack.c.bf16 %v3718, %v3718
    %v3783 = vpack.c.bf16 %v3719, %v3719
    %v3784 = vpack.c.bf16 %v3720, %v3720
    %v3785 = vpack.c.bf16 %v3721, %v3721
    %v3786 = vpack.c.bf16 %v3722, %v3722
    %v3787 = vpack.c.bf16 %v3723, %v3723
    %v3788 = vpack.c.bf16 %v3724, %v3724
    %v3789 = vpack.c.bf16 %v3725, %v3725
    %v3790 = vpack.c.bf16 %v3726, %v3726
    %v3791 = vpack.c.bf16 %v3727, %v3727
    %v3792 = vpack.c.bf16 %v3728, %v3728
    %v3793 = vpack.c.bf16 %v3729, %v3729
    %v3794 = vpack.c.bf16 %v3730, %v3730
    %v3795 = vpack.c.bf16 %v3731, %v3731
    %v3796 = vpack.c.bf16 %v3732, %v3732
    %v3797 = vpack.c.bf16 %v3733, %v3733
    %v3798 = vpack.c.bf16 %v3734, %v3734
    %v3799 = vpack.c.bf16 %v3735, %v3735
    %v3800 = vpack.c.bf16 %v3736, %v3736
    %v3801 = vpack.c.bf16 %v3737, %v3737
    %v3802 = vpack.c.bf16 %v3738, %v3738
    %v3803 = vpack.c.bf16 %v3739, %v3739
    %v3804 = vpack.c.bf16 %v3740, %v3740
    %v3805 = vpack.c.bf16 %v3741, %v3741
    %v3806 = vpack.c.bf16 %v3742, %v3742
    %v3807 = vpack.c.bf16 %v3743, %v3743
    %v3808 = vpack.c.bf16 %v3744, %v3744
    %v3809 = vpack.c.bf16 %v3745, %v3745
    %v3810 = vpack.c.bf16 %v3746, %v3746
    %v3811 = vpack.c.bf16 %v3747, %v3747
    %v3812 = vpack.c.bf16 %v3748, %v3748
    %v3813 = vpack.c.bf16 %v3749, %v3749
    %v3814 = vpack.c.bf16 %v3750, %v3750
    %v3879 = vunpack.c.l.b16 %v3751
    %v3880 = vunpack.c.l.b16 %v3752
    %v3881 = vunpack.c.l.b16 %v3753
    %v3882 = vunpack.c.l.b16 %v3754
    %v3883 = vunpack.c.l.b16 %v3755
    %v3884 = vunpack.c.l.b16 %v3756
    %v3885 = vunpack.c.l.b16 %v3757
    %v3886 = vunpack.c.l.b16 %v3758
    %v3887 = vunpack.c.l.b16 %v3759
    %v3888 = vunpack.c.l.b16 %v3760
    %v3889 = vunpack.c.l.b16 %v3761
    %v3890 = vunpack.c.l.b16 %v3762
    %v3891 = vunpack.c.l.b16 %v3763
    %v3892 = vunpack.c.l.b16 %v3764
    %v3893 = vunpack.c.l.b16 %v3765
    %v3894 = vunpack.c.l.b16 %v3766
    %v3895 = vunpack.c.l.b16 %v3767
    %v3896 = vunpack.c.l.b16 %v3768
    %v3897 = vunpack.c.l.b16 %v3769
    %v3898 = vunpack.c.l.b16 %v3770
    %v3899 = vunpack.c.l.b16 %v3771
    %v3900 = vunpack.c.l.b16 %v3772
    %v3901 = vunpack.c.l.b16 %v3773
    %v3902 = vunpack.c.l.b16 %v3774
    %v3903 = vunpack.c.l.b16 %v3775
    %v3904 = vunpack.c.l.b16 %v3776
    %v3905 = vunpack.c.l.b16 %v3777
    %v3906 = vunpack.c.l.b16 %v3778
    %v3907 = vunpack.c.l.b16 %v3779
    %v3908 = vunpack.c.l.b16 %v3780
    %v3909 = vunpack.c.l.b16 %v3781
    %v3910 = vunpack.c.l.b16 %v3782
    %v3911 = vunpack.c.l.b16 %v3783
    %v3912 = vunpack.c.l.b16 %v3784
    %v3913 = vunpack.c.l.b16 %v3785
    %v3914 = vunpack.c.l.b16 %v3786
    %v3915 = vunpack.c.l.b16 %v3787
    %v3916 = vunpack.c.l.b16 %v3788
    %v3917 = vunpack.c.l.b16 %v3789
    %v3918 = vunpack.c.l.b16 %v3790
    %v3919 = vunpack.c.l.b16 %v3791
    %v3920 = vunpack.c.l.b16 %v3792
    %v3921 = vunpack.c.l.b16 %v3793
    %v3922 = vunpack.c.l.b16 %v3794
    %v3923 = vunpack.c.l.b16 %v3795
    %v3924 = vunpack.c.l.b16 %v3796
    %v3925 = vunpack.c.l.b16 %v3797
    %v3926 = vunpack.c.l.b16 %v3798
    %v3927 = vunpack.c.l.b16 %v3799
    %v3928 = vunpack.c.l.b16 %v3800
    %v3929 = vunpack.c.l.b16 %v3801
    %v3930 = vunpack.c.l.b16 %v3802
    %v3931 = vunpack.c.l.b16 %v3803
    %v3932 = vunpack.c.l.b16 %v3804
    %v3933 = vunpack.c.l.b16 %v3805
    %v3934 = vunpack.c.l.b16 %v3806
    %v3935 = vunpack.c.l.b16 %v3807
    %v3936 = vunpack.c.l.b16 %v3808
    %v3937 = vunpack.c.l.b16 %v3809
    %v3938 = vunpack.c.l.b16 %v3810
    %v3939 = vunpack.c.l.b16 %v3811
    %v3940 = vunpack.c.l.b16 %v3812
    %v3941 = vunpack.c.l.b16 %v3813
    %v3942 = vunpack.c.l.b16 %v3814
    %v3943 = vpack.c.b16 %v3879, %v3879
    %v3944 = vpack.c.b16 %v3880, %v3880
    %v3945 = vpack.c.b16 %v3881, %v3881
    %v3946 = vpack.c.b16 %v3882, %v3882
    %v3947 = vpack.c.b16 %v3883, %v3883
    %v3948 = vpack.c.b16 %v3884, %v3884
    %v3949 = vpack.c.b16 %v3885, %v3885
    %v3950 = vpack.c.b16 %v3886, %v3886
    %v3951 = vpack.c.b16 %v3887, %v3887
    %v3952 = vpack.c.b16 %v3888, %v3888
    %v3953 = vpack.c.b16 %v3889, %v3889
    %v3954 = vpack.c.b16 %v3890, %v3890
    %v3955 = vpack.c.b16 %v3891, %v3891
    %v3956 = vpack.c.b16 %v3892, %v3892
    %v3957 = vpack.c.b16 %v3893, %v3893
    %v3958 = vpack.c.b16 %v3894, %v3894
    %v3959 = vpack.c.b16 %v3895, %v3895
    %v3960 = vpack.c.b16 %v3896, %v3896
    %v3961 = vpack.c.b16 %v3897, %v3897
    %v3962 = vpack.c.b16 %v3898, %v3898
    %v3963 = vpack.c.b16 %v3899, %v3899
    %v3964 = vpack.c.b16 %v3900, %v3900
    %v3965 = vpack.c.b16 %v3901, %v3901
    %v3966 = vpack.c.b16 %v3902, %v3902
    %v3967 = vpack.c.b16 %v3903, %v3903
    %v3968 = vpack.c.b16 %v3904, %v3904
    %v3969 = vpack.c.b16 %v3905, %v3905
    %v3970 = vpack.c.b16 %v3906, %v3906
    %v3971 = vpack.c.b16 %v3907, %v3907
    %v3972 = vpack.c.b16 %v3908, %v3908
    %v3973 = vpack.c.b16 %v3909, %v3909
    %v3974 = vpack.c.b16 %v3910, %v3910
    %v3975 = vpack.c.b16 %v3911, %v3911
    %v3976 = vpack.c.b16 %v3912, %v3912
    %v3977 = vpack.c.b16 %v3913, %v3913
    %v3978 = vpack.c.b16 %v3914, %v3914
    %v3979 = vpack.c.b16 %v3915, %v3915
    %v3980 = vpack.c.b16 %v3916, %v3916
    %v3981 = vpack.c.b16 %v3917, %v3917
    %v3982 = vpack.c.b16 %v3918, %v3918
    %v3983 = vpack.c.b16 %v3919, %v3919
    %v3984 = vpack.c.b16 %v3920, %v3920
    %v3985 = vpack.c.b16 %v3921, %v3921
    %v3986 = vpack.c.b16 %v3922, %v3922
    %v3987 = vpack.c.b16 %v3923, %v3923
    %v3988 = vpack.c.b16 %v3924, %v3924
    %v3989 = vpack.c.b16 %v3925, %v3925
    %v3990 = vpack.c.b16 %v3926, %v3926
    %v3991 = vpack.c.b16 %v3927, %v3927
    %v3992 = vpack.c.b16 %v3928, %v3928
    %v3993 = vpack.c.b16 %v3929, %v3929
    %v3994 = vpack.c.b16 %v3930, %v3930
    %v3995 = vpack.c.b16 %v3931, %v3931
    %v3996 = vpack.c.b16 %v3932, %v3932
    %v3997 = vpack.c.b16 %v3933, %v3933
    %v3998 = vpack.c.b16 %v3934, %v3934
    %v3999 = vpack.c.b16 %v3935, %v3935
    %v4000 = vpack.c.b16 %v3936, %v3936
    %v4001 = vpack.c.b16 %v3937, %v3937
    %v4002 = vpack.c.b16 %v3938, %v3938
    %v4003 = vpack.c.b16 %v3939, %v3939
    %v4004 = vpack.c.b16 %v3940, %v3940
    %v4005 = vpack.c.b16 %v3941, %v3941
    %v4006 = vpack.c.b16 %v3942, %v3942
    %v4007 = vunpack.c.l.b16 %v3943
    %v4008 = vunpack.c.l.b16 %v3944
    %v4009 = vunpack.c.l.b16 %v3945
    %v4010 = vunpack.c.l.b16 %v3946
    %v4011 = vunpack.c.l.b16 %v3947
    %v4012 = vunpack.c.l.b16 %v3948
    %v4013 = vunpack.c.l.b16 %v3949
    %v4014 = vunpack.c.l.b16 %v3950
    %v4015 = vunpack.c.l.b16 %v3951
    %v4016 = vunpack.c.l.b16 %v3952
    %v4017 = vunpack.c.l.b16 %v3953
    %v4018 = vunpack.c.l.b16 %v3954
    %v4019 = vunpack.c.l.b16 %v3955
    %v4020 = vunpack.c.l.b16 %v3956
    %v4021 = vunpack.c.l.b16 %v3957
    %v4022 = vunpack.c.l.b16 %v3958
    %v4023 = vunpack.c.l.b16 %v3959
    %v4024 = vunpack.c.l.b16 %v3960
    %v4025 = vunpack.c.l.b16 %v3961
    %v4026 = vunpack.c.l.b16 %v3962
    %v4027 = vunpack.c.l.b16 %v3963
    %v4028 = vunpack.c.l.b16 %v3964
    %v4029 = vunpack.c.l.b16 %v3965
    %v4030 = vunpack.c.l.b16 %v3966
    %v4031 = vunpack.c.l.b16 %v3967
    %v4032 = vunpack.c.l.b16 %v3968
    %v4033 = vunpack.c.l.b16 %v3969
    %v4034 = vunpack.c.l.b16 %v3970
    %v4035 = vunpack.c.l.b16 %v3971
    %v4036 = vunpack.c.l.b16 %v3972
    %v4037 = vunpack.c.l.b16 %v3973
    %v4038 = vunpack.c.l.b16 %v3974
    %v4039 = vunpack.c.l.b16 %v3975
    %v4040 = vunpack.c.l.b16 %v3976
    %v4041 = vunpack.c.l.b16 %v3977
    %v4042 = vunpack.c.l.b16 %v3978
    %v4043 = vunpack.c.l.b16 %v3979
    %v4044 = vunpack.c.l.b16 %v3980
    %v4045 = vunpack.c.l.b16 %v3981
    %v4046 = vunpack.c.l.b16 %v3982
    %v4047 = vunpack.c.l.b16 %v3983
    %v4048 = vunpack.c.l.b16 %v3984
    %v4049 = vunpack.c.l.b16 %v3985
    %v4050 = vunpack.c.l.b16 %v3986
    %v4051 = vunpack.c.l.b16 %v3987
    %v4052 = vunpack.c.l.b16 %v3988
    %v4053 = vunpack.c.l.b16 %v3989
    %v4054 = vunpack.c.l.b16 %v3990
    %v4055 = vunpack.c.l.b16 %v3991
    %v4056 = vunpack.c.l.b16 %v3992
    %v4057 = vunpack.c.l.b16 %v3993
    %v4058 = vunpack.c.l.b16 %v3994
    %v4059 = vunpack.c.l.b16 %v3995
    %v4060 = vunpack.c.l.b16 %v3996
    %v4061 = vunpack.c.l.b16 %v3997
    %v4062 = vunpack.c.l.b16 %v3998
    %v4063 = vunpack.c.l.b16 %v3999
    %v4064 = vunpack.c.l.b16 %v4000
    %v4065 = vunpack.c.l.b16 %v4001
    %v4066 = vunpack.c.l.b16 %v4002
    %v4067 = vunpack.c.l.b16 %v4003
    %v4068 = vunpack.c.l.b16 %v4004
    %v4069 = vunpack.c.l.b16 %v4005
    %v4070 = vunpack.c.l.b16 %v4006
    %v4071 = vrot.slane %v4007, 7
    %v4072 = vrot.slane %v4008, 6
    %v4073 = vsel %vm2473, %v4072, %v4071
    %v4074 = vrot.slane %v4009, 5
    %v4075 = vsel %vm2476, %v4074, %v4073
    %v4076 = vrot.slane %v4010, 4
    %v4077 = vsel %vm2479, %v4076, %v4075
    %v4078 = vrot.slane %v4011, 3
    %v4079 = vsel %vm2482, %v4078, %v4077
    %v4080 = vrot.slane %v4012, 2
    %v4081 = vsel %vm2485, %v4080, %v4079
    %v4082 = vrot.slane %v4013, 1
    %v4083 = vsel %vm2488, %v4082, %v4081
    %v4084 = vrot.slane %v4015, 7
    %v4085 = vrot.slane %v4016, 6
    %v4086 = vsel %vm2473, %v4085, %v4084
    %v4087 = vrot.slane %v4017, 5
    %v4088 = vsel %vm2476, %v4087, %v4086
    %v4089 = vrot.slane %v4018, 4
    %v4090 = vsel %vm2479, %v4089, %v4088
    %v4091 = vrot.slane %v4019, 3
    %v4092 = vsel %vm2482, %v4091, %v4090
    %v4093 = vrot.slane %v4020, 2
    %v4094 = vsel %vm2485, %v4093, %v4092
    %v4095 = vrot.slane %v4021, 1
    %v4096 = vsel %vm2488, %v4095, %v4094
    %v4097 = vrot.slane %v4023, 7
    %v4098 = vrot.slane %v4024, 6
    %v4099 = vsel %vm2473, %v4098, %v4097
    %v4100 = vrot.slane %v4025, 5
    %v4101 = vsel %vm2476, %v4100, %v4099
    %v4102 = vrot.slane %v4026, 4
    %v4103 = vsel %vm2479, %v4102, %v4101
    %v4104 = vrot.slane %v4027, 3
    %v4105 = vsel %vm2482, %v4104, %v4103
    %v4106 = vrot.slane %v4028, 2
    %v4107 = vsel %vm2485, %v4106, %v4105
    %v4108 = vrot.slane %v4029, 1
    %v4109 = vsel %vm2488, %v4108, %v4107
    %v4110 = vrot.slane %v4031, 7
    %v4111 = vrot.slane %v4032, 6
    %v4112 = vsel %vm2473, %v4111, %v4110
    %v4113 = vrot.slane %v4033, 5
    %v4114 = vsel %vm2476, %v4113, %v4112
    %v4115 = vrot.slane %v4034, 4
    %v4116 = vsel %vm2479, %v4115, %v4114
    %v4117 = vrot.slane %v4035, 3
    %v4118 = vsel %vm2482, %v4117, %v4116
    %v4119 = vrot.slane %v4036, 2
    %v4120 = vsel %vm2485, %v4119, %v4118
    %v4121 = vrot.slane %v4037, 1
    %v4122 = vsel %vm2488, %v4121, %v4120
    %v4123 = vrot.slane %v4039, 7
    %v4124 = vrot.slane %v4040, 6
    %v4125 = vsel %vm2473, %v4124, %v4123
    %v4126 = vrot.slane %v4041, 5
    %v4127 = vsel %vm2476, %v4126, %v4125
    %v4128 = vrot.slane %v4042, 4
    %v4129 = vsel %vm2479, %v4128, %v4127
    %v4130 = vrot.slane %v4043, 3
    %v4131 = vsel %vm2482, %v4130, %v4129
    %v4132 = vrot.slane %v4044, 2
    %v4133 = vsel %vm2485, %v4132, %v4131
    %v4134 = vrot.slane %v4045, 1
    %v4135 = vsel %vm2488, %v4134, %v4133
    %v4136 = vrot.slane %v4047, 7
    %v4137 = vrot.slane %v4048, 6
    %v4138 = vsel %vm2473, %v4137, %v4136
    %v4139 = vrot.slane %v4049, 5
    %v4140 = vsel %vm2476, %v4139, %v4138
    %v4141 = vrot.slane %v4050, 4
    %v4142 = vsel %vm2479, %v4141, %v4140
    %v4143 = vrot.slane %v4051, 3
    %v4144 = vsel %vm2482, %v4143, %v4142
    %v4145 = vrot.slane %v4052, 2
    %v4146 = vsel %vm2485, %v4145, %v4144
    %v4147 = vrot.slane %v4053, 1
    %v4148 = vsel %vm2488, %v4147, %v4146
    %v4149 = vrot.slane %v4055, 7
    %v4150 = vrot.slane %v4056, 6
    %v4151 = vsel %vm2473, %v4150, %v4149
    %v4152 = vrot.slane %v4057, 5
    %v4153 = vsel %vm2476, %v4152, %v4151
    %v4154 = vrot.slane %v4058, 4
    %v4155 = vsel %vm2479, %v4154, %v4153
    %v4156 = vrot.slane %v4059, 3
    %v4157 = vsel %vm2482, %v4156, %v4155
    %v4158 = vrot.slane %v4060, 2
    %v4159 = vsel %vm2485, %v4158, %v4157
    %v4160 = vrot.slane %v4061, 1
    %v4161 = vsel %vm2488, %v4160, %v4159
    %v4162 = vrot.slane %v4063, 7
    %v4163 = vrot.slane %v4064, 6
    %v4164 = vsel %vm2473, %v4163, %v4162
    %v4165 = vrot.slane %v4065, 5
    %v4166 = vsel %vm2476, %v4165, %v4164
    %v4167 = vrot.slane %v4066, 4
    %v4168 = vsel %vm2479, %v4167, %v4166
    %v4169 = vrot.slane %v4067, 3
    %v4170 = vsel %vm2482, %v4169, %v4168
    %v4171 = vrot.slane %v4068, 2
    %v4172 = vsel %vm2485, %v4171, %v4170
    %v4173 = vrot.slane %v4069, 1
    %v4174 = vsel %vm2488, %v4173, %v4172
    %v4175 = vpack.c.b16 %v4083, %v4083
    %v4176 = vpack.c.b16 %v4014, %v4014
    %v4177 = vpack.c.b16 %v4096, %v4096
    %v4178 = vpack.c.b16 %v4022, %v4022
    %v4179 = vpack.c.b16 %v4109, %v4109
    %v4180 = vpack.c.b16 %v4030, %v4030
    %v4181 = vpack.c.b16 %v4122, %v4122
    %v4182 = vpack.c.b16 %v4038, %v4038
    %v4183 = vpack.c.b16 %v4135, %v4135
    %v4184 = vpack.c.b16 %v4046, %v4046
    %v4185 = vpack.c.b16 %v4148, %v4148
    %v4186 = vpack.c.b16 %v4054, %v4054
    %v4187 = vpack.c.b16 %v4161, %v4161
    %v4188 = vpack.c.b16 %v4062, %v4062
    %v4189 = vpack.c.b16 %v4174, %v4174
    %v4190 = vpack.c.b16 %v4070, %v4070
    %s4207 = scalar_lea.vmem [#allocation2], 88
    %v4208 = vld [vmem:[%s4207] sm:$0xf]
    %v4209 = vsel %vm2614, %v4175, %v4208
    %4210 = vst [vmem:[%s4207] sm:$0xf] %v4209
    %v4211 = vld [vmem:[%s4207 + $0x4] sm:$0x1]
    %v4212 = vsel %vm66, %v4176, %v4211
    %4213 = vst [vmem:[%s4207 + $0x4] sm:$0x1] %v4212
    %v4214 = vld [vmem:[%s4207 + $0x8] sm:$0xf]
    %v4215 = vsel %vm2614, %v4177, %v4214
    %4216 = vst [vmem:[%s4207 + $0x8] sm:$0xf] %v4215
    %v4217 = vld [vmem:[%s4207 + $0xc] sm:$0x1]
    %v4218 = vsel %vm66, %v4178, %v4217
    %4219 = vst [vmem:[%s4207 + $0xc] sm:$0x1] %v4218
    %v4220 = vld [vmem:[%s4207 + $0x10] sm:$0xf]
    %v4221 = vsel %vm2614, %v4179, %v4220
    %4222 = vst [vmem:[%s4207 + $0x10] sm:$0xf] %v4221
    %v4223 = vld [vmem:[%s4207 + $0x14] sm:$0x1]
    %v4224 = vsel %vm66, %v4180, %v4223
    %4225 = vst [vmem:[%s4207 + $0x14] sm:$0x1] %v4224
    %v4226 = vld [vmem:[%s4207 + $0x18] sm:$0xf]
    %v4227 = vsel %vm2614, %v4181, %v4226
    %4228 = vst [vmem:[%s4207 + $0x18] sm:$0xf] %v4227
    %v4229 = vld [vmem:[%s4207 + $0x1c] sm:$0x1]
    %v4230 = vsel %vm66, %v4182, %v4229
    %4231 = vst [vmem:[%s4207 + $0x1c] sm:$0x1] %v4230
    %v4232 = vld [vmem:[%s4207 + $0x20] sm:$0xf]
    %v4233 = vsel %vm2614, %v4183, %v4232
    %4234 = vst [vmem:[%s4207 + $0x20] sm:$0xf] %v4233
    %v4235 = vld [vmem:[%s4207 + $0x24] sm:$0x1]
    %v4236 = vsel %vm66, %v4184, %v4235
    %4237 = vst [vmem:[%s4207 + $0x24] sm:$0x1] %v4236
    %v4238 = vld [vmem:[%s4207 + $0x28] sm:$0xf]
    %v4239 = vsel %vm2614, %v4185, %v4238
    %4240 = vst [vmem:[%s4207 + $0x28] sm:$0xf] %v4239
    %v4241 = vld [vmem:[%s4207 + $0x2c] sm:$0x1]
    %v4242 = vsel %vm66, %v4186, %v4241
    %4243 = vst [vmem:[%s4207 + $0x2c] sm:$0x1] %v4242
    %v4244 = vld [vmem:[%s4207 + $0x30] sm:$0xf]
    %v4245 = vsel %vm2614, %v4187, %v4244
    %4246 = vst [vmem:[%s4207 + $0x30] sm:$0xf] %v4245
    %v4247 = vld [vmem:[%s4207 + $0x34] sm:$0x1]
    %v4248 = vsel %vm66, %v4188, %v4247
    %4249 = vst [vmem:[%s4207 + $0x34] sm:$0x1] %v4248
    %v4250 = vld [vmem:[%s4207 + $0x38] sm:$0xf]
    %v4251 = vsel %vm2614, %v4189, %v4250
    %4252 = vst [vmem:[%s4207 + $0x38] sm:$0xf] %v4251
    %v4253 = vld [vmem:[%s4207 + $0x3c] sm:$0x1]
    %v4254 = vsel %vm66, %v4190, %v4253
    %4255 = vst [vmem:[%s4207 + $0x3c] sm:$0x1] %v4254
    %v4256 = vld [vmem:[#allocation2] sm:$0xf]
    %v4257 = vld [vmem:[#allocation2 + $0x4] sm:$0x1]
    %v4258 = vld [vmem:[#allocation2 + $0x8] sm:$0xf]
    %v4259 = vld [vmem:[#allocation2 + $0xc] sm:$0x1]
    %v4260 = vld [vmem:[#allocation2 + $0x10] sm:$0xf]
    %v4261 = vld [vmem:[#allocation2 + $0x14] sm:$0x1]
    %v4262 = vld [vmem:[#allocation2 + $0x18] sm:$0xf]
    %v4263 = vld [vmem:[#allocation2 + $0x1c] sm:$0x1]
    %v4264 = vld [vmem:[#allocation2 + $0x20] sm:$0xf]
    %v4265 = vld [vmem:[#allocation2 + $0x24] sm:$0x1]
    %v4266 = vld [vmem:[#allocation2 + $0x28] sm:$0xf]
    %v4267 = vld [vmem:[#allocation2 + $0x2c] sm:$0x1]
    %v4268 = vld [vmem:[#allocation2 + $0x30] sm:$0xf]
    %v4269 = vld [vmem:[#allocation2 + $0x34] sm:$0x1]
    %v4270 = vld [vmem:[#allocation2 + $0x38] sm:$0xf]
    %v4271 = vld [vmem:[#allocation2 + $0x3c] sm:$0x1]
    %v4272 = vld [vmem:[#allocation2 + $0x40] sm:$0xf]
    %v4273 = vld [vmem:[#allocation2 + $0x44] sm:$0x1]
    %v4274 = vld [vmem:[#allocation2 + $0x48] sm:$0xf]
    %v4275 = vld [vmem:[#allocation2 + $0x4c] sm:$0x1]
    %vm4276 = vsmask.f32 3328
    %vm4277 = vsmask.f32 7440
    %vm4278 = vmor %vm4276, %vm4277
    %v4280 = vshrl.u32 %v4256, 16
    %v4282 = vrot.slane %v4280, 4
    %v4283 = vshll.u32 %v4256, 16
    %v4285 = vrot.slane %v4283, 5
    %v4286 = vor.u32 %v4282, %v4285
    %v4287 = vrot.slane %v4286, 4
    %v4289 = vshll.u32 %v4257, 16
    %v4291 = vrot.slane %v4289, 5
    %v4292 = vsel %vm4278, %v4287, %v4291
    %v4294 = vshrl.u32 %v4258, 16
    %v4296 = vrot.slane %v4294, 4
    %v4297 = vshll.u32 %v4258, 16
    %v4299 = vrot.slane %v4297, 5
    %v4300 = vor.u32 %v4296, %v4299
    %v4301 = vrot.slane %v4300, 4
    %v4303 = vshll.u32 %v4259, 16
    %v4305 = vrot.slane %v4303, 5
    %v4306 = vsel %vm4278, %v4301, %v4305
    %v4308 = vshrl.u32 %v4260, 16
    %v4310 = vrot.slane %v4308, 4
    %v4311 = vshll.u32 %v4260, 16
    %v4313 = vrot.slane %v4311, 5
    %v4314 = vor.u32 %v4310, %v4313
    %v4315 = vrot.slane %v4314, 4
    %v4317 = vshll.u32 %v4261, 16
    %v4319 = vrot.slane %v4317, 5
    %v4320 = vsel %vm4278, %v4315, %v4319
    %v4322 = vshrl.u32 %v4262, 16
    %v4324 = vrot.slane %v4322, 4
    %v4325 = vshll.u32 %v4262, 16
    %v4327 = vrot.slane %v4325, 5
    %v4328 = vor.u32 %v4324, %v4327
    %v4329 = vrot.slane %v4328, 4
    %v4331 = vshll.u32 %v4263, 16
    %v4333 = vrot.slane %v4331, 5
    %v4334 = vsel %vm4278, %v4329, %v4333
    %v4336 = vshrl.u32 %v4264, 16
    %v4338 = vrot.slane %v4336, 4
    %v4339 = vshll.u32 %v4264, 16
    %v4341 = vrot.slane %v4339, 5
    %v4342 = vor.u32 %v4338, %v4341
    %v4343 = vrot.slane %v4342, 4
    %v4345 = vshll.u32 %v4265, 16
    %v4347 = vrot.slane %v4345, 5
    %v4348 = vsel %vm4278, %v4343, %v4347
    %v4350 = vshrl.u32 %v4266, 16
    %v4352 = vrot.slane %v4350, 4
    %v4353 = vshll.u32 %v4266, 16
    %v4355 = vrot.slane %v4353, 5
    %v4356 = vor.u32 %v4352, %v4355
    %v4357 = vrot.slane %v4356, 4
    %v4359 = vshll.u32 %v4267, 16
    %v4361 = vrot.slane %v4359, 5
    %v4362 = vsel %vm4278, %v4357, %v4361
    %v4364 = vshrl.u32 %v4268, 16
    %v4366 = vrot.slane %v4364, 4
    %v4367 = vshll.u32 %v4268, 16
    %v4369 = vrot.slane %v4367, 5
    %v4370 = vor.u32 %v4366, %v4369
    %v4371 = vrot.slane %v4370, 4
    %v4373 = vshll.u32 %v4269, 16
    %v4375 = vrot.slane %v4373, 5
    %v4376 = vsel %vm4278, %v4371, %v4375
    %v4378 = vshrl.u32 %v4270, 16
    %v4380 = vrot.slane %v4378, 4
    %v4381 = vshll.u32 %v4270, 16
    %v4383 = vrot.slane %v4381, 5
    %v4384 = vor.u32 %v4380, %v4383
    %v4385 = vrot.slane %v4384, 4
    %v4387 = vshll.u32 %v4271, 16
    %v4389 = vrot.slane %v4387, 5
    %v4390 = vsel %vm4278, %v4385, %v4389
    %vm4407 = vcmask 1042432
    %vm4408 = vcmask 1046532
    %vm4409 = vmor %vm4407, %vm4408
    %v4410 = vrot.slane %v4256, 5
    %v4411 = vrot.slane %v4410, 4
    %v4412 = vrot.slane %v4257, 5
    %v4413 = vsel %vm4409, %v4411, %v4412
    %v4414 = vrot.slane %v4258, 5
    %v4415 = vrot.slane %v4414, 4
    %v4416 = vrot.slane %v4259, 5
    %v4417 = vsel %vm4409, %v4415, %v4416
    %v4418 = vrot.slane %v4260, 5
    %v4419 = vrot.slane %v4418, 4
    %v4420 = vrot.slane %v4261, 5
    %v4421 = vsel %vm4409, %v4419, %v4420
    %v4422 = vrot.slane %v4262, 5
    %v4423 = vrot.slane %v4422, 4
    %v4424 = vrot.slane %v4263, 5
    %v4425 = vsel %vm4409, %v4423, %v4424
    %v4426 = vrot.slane %v4264, 5
    %v4427 = vrot.slane %v4426, 4
    %v4428 = vrot.slane %v4265, 5
    %v4429 = vsel %vm4409, %v4427, %v4428
    %v4430 = vrot.slane %v4266, 5
    %v4431 = vrot.slane %v4430, 4
    %v4432 = vrot.slane %v4267, 5
    %v4433 = vsel %vm4409, %v4431, %v4432
    %v4434 = vrot.slane %v4268, 5
    %v4435 = vrot.slane %v4434, 4
    %v4436 = vrot.slane %v4269, 5
    %v4437 = vsel %vm4409, %v4435, %v4436
    %v4438 = vrot.slane %v4270, 5
    %v4439 = vrot.slane %v4438, 4
    %v4440 = vrot.slane %v4271, 5
    %v4441 = vsel %vm4409, %v4439, %v4440
    %v4443 = vshrl.u32 %v4272, 16
    %v4445 = vrot.slane %v4443, 4
    %v4446 = vshll.u32 %v4272, 16
    %v4448 = vrot.slane %v4446, 5
    %v4449 = vor.u32 %v4445, %v4448
    %v4450 = vrot.slane %v4449, 4
    %v4452 = vshll.u32 %v4273, 16
    %v4454 = vrot.slane %v4452, 5
    %v4455 = vsel %vm4278, %v4450, %v4454
    %v4458 = vrot.slane %v4272, 5
    %v4459 = vrot.slane %v4458, 4
    %v4460 = vrot.slane %v4273, 5
    %v4461 = vsel %vm4409, %v4459, %v4460
    %v4463 = vshrl.u32 %v4274, 16
    %v4465 = vrot.slane %v4463, 4
    %v4466 = vshll.u32 %v4274, 16
    %v4468 = vrot.slane %v4466, 5
    %v4469 = vor.u32 %v4465, %v4468
    %v4470 = vrot.slane %v4469, 4
    %v4472 = vshll.u32 %v4275, 16
    %v4474 = vrot.slane %v4472, 5
    %v4475 = vsel %vm4278, %v4470, %v4474
    %v4478 = vrot.slane %v4274, 5
    %v4479 = vrot.slane %v4478, 4
    %v4480 = vrot.slane %v4275, 5
    %v4481 = vsel %vm4409, %v4479, %v4480
    %v4482 = vunpack.c.l.b16 %v4256
    %v4483 = vunpack.c.l.b16 %v4258
    %v4484 = vunpack.c.l.b16 %v4260
    %v4485 = vunpack.c.l.b16 %v4262
    %v4486 = vunpack.c.l.b16 %v4264
    %v4487 = vunpack.c.l.b16 %v4266
    %v4488 = vunpack.c.l.b16 %v4268
    %v4489 = vunpack.c.l.b16 %v4270
    %v4490 = vpack.c.b16 %v4483, %v4482
    %v4491 = vpack.c.b16 %v4485, %v4484
    %v4492 = vpack.c.b16 %v4487, %v4486
    %v4493 = vpack.c.b16 %v4489, %v4488
    %v4494 = vunpack.c.l.b16 %v4292
    %v4495 = vunpack.c.l.b16 %v4306
    %v4496 = vunpack.c.l.b16 %v4320
    %v4497 = vunpack.c.l.b16 %v4334
    %v4498 = vunpack.c.l.b16 %v4348
    %v4499 = vunpack.c.l.b16 %v4362
    %v4500 = vunpack.c.l.b16 %v4376
    %v4501 = vunpack.c.l.b16 %v4390
    %v4502 = vpack.c.b16 %v4495, %v4494
    %v4503 = vpack.c.b16 %v4497, %v4496
    %v4504 = vpack.c.b16 %v4499, %v4498
    %v4505 = vpack.c.b16 %v4501, %v4500
    %4506 = vrot.lane.b32.xlu0 %v4502, 32
    %v4507 = vpop.permute.xlu0 %4506
    %4508 = vrot.lane.b32.xlu0 %v4503, 32
    %v4509 = vpop.permute.xlu0 %4508
    %4510 = vrot.lane.b32.xlu0 %v4504, 32
    %v4511 = vpop.permute.xlu0 %4510
    %4512 = vrot.lane.b32.xlu0 %v4505, 32
    %v4513 = vpop.permute.xlu0 %4512
    %v4514 = vunpack.c.l.b16 %v4413
    %v4515 = vunpack.c.l.b16 %v4417
    %v4516 = vunpack.c.l.b16 %v4421
    %v4517 = vunpack.c.l.b16 %v4425
    %v4518 = vunpack.c.l.b16 %v4429
    %v4519 = vunpack.c.l.b16 %v4433
    %v4520 = vunpack.c.l.b16 %v4437
    %v4521 = vunpack.c.l.b16 %v4441
    %v4522 = vpack.c.b16 %v4515, %v4514
    %v4523 = vpack.c.b16 %v4517, %v4516
    %v4524 = vpack.c.b16 %v4519, %v4518
    %v4525 = vpack.c.b16 %v4521, %v4520
    %4526 = vrot.lane.b32.xlu0 %v4522, 64
    %v4527 = vpop.permute.xlu0 %4526
    %4528 = vrot.lane.b32.xlu0 %v4523, 64
    %v4529 = vpop.permute.xlu0 %4528
    %4530 = vrot.lane.b32.xlu0 %v4524, 64
    %v4531 = vpop.permute.xlu0 %4530
    %4532 = vrot.lane.b32.xlu0 %v4525, 64
    %v4533 = vpop.permute.xlu0 %4532
    %v4534 = vunpack.c.l.b16 %v4272
    %v4535 = vpack.c.b16 %v4484, %v4483
    %v4536 = vpack.c.b16 %v4486, %v4485
    %v4537 = vpack.c.b16 %v4488, %v4487
    %v4538 = vpack.c.b16 %v4534, %v4489
    %4539 = vrot.lane.b32.xlu0 %v4535, 96
    %v4540 = vpop.permute.xlu0 %4539
    %4541 = vrot.lane.b32.xlu0 %v4536, 96
    %v4542 = vpop.permute.xlu0 %4541
    %4543 = vrot.lane.b32.xlu0 %v4537, 96
    %v4544 = vpop.permute.xlu0 %4543
    %4545 = vrot.lane.b32.xlu0 %v4538, 96
    %v4546 = vpop.permute.xlu0 %4545
    %v4547 = vunpack.c.l.b16 %v4455
    %v4548 = vpack.c.b16 %v4496, %v4495
    %v4549 = vpack.c.b16 %v4498, %v4497
    %v4550 = vpack.c.b16 %v4500, %v4499
    %v4551 = vpack.c.b16 %v4547, %v4501
    %v4552 = vunpack.c.l.b16 %v4461
    %v4553 = vpack.c.b16 %v4516, %v4515
    %v4554 = vpack.c.b16 %v4518, %v4517
    %v4555 = vpack.c.b16 %v4520, %v4519
    %v4556 = vpack.c.b16 %v4552, %v4521
    %4557 = vrot.lane.b32.xlu0 %v4553, 32
    %v4558 = vpop.permute.xlu0 %4557
    %4559 = vrot.lane.b32.xlu0 %v4554, 32
    %v4560 = vpop.permute.xlu0 %4559
    %4561 = vrot.lane.b32.xlu0 %v4555, 32
    %v4562 = vpop.permute.xlu0 %4561
    %4563 = vrot.lane.b32.xlu0 %v4556, 32
    %v4564 = vpop.permute.xlu0 %4563
    %v4565 = vunpack.c.l.b16 %v4274
    %v4566 = vpack.c.b16 %v4565, %v4534
    %4567 = vrot.lane.b32.xlu0 %v4491, 64
    %v4568 = vpop.permute.xlu0 %4567
    %4569 = vrot.lane.b32.xlu0 %v4492, 64
    %v4570 = vpop.permute.xlu0 %4569
    %4571 = vrot.lane.b32.xlu0 %v4493, 64
    %v4572 = vpop.permute.xlu0 %4571
    %4573 = vrot.lane.b32.xlu0 %v4566, 64
    %v4574 = vpop.permute.xlu0 %4573
    %v4575 = vunpack.c.l.b16 %v4475
    %v4576 = vpack.c.b16 %v4575, %v4547
    %4577 = vrot.lane.b32.xlu0 %v4503, 96
    %v4578 = vpop.permute.xlu0 %4577
    %4579 = vrot.lane.b32.xlu0 %v4504, 96
    %v4580 = vpop.permute.xlu0 %4579
    %4581 = vrot.lane.b32.xlu0 %v4505, 96
    %v4582 = vpop.permute.xlu0 %4581
    %4583 = vrot.lane.b32.xlu0 %v4576, 96
    %v4584 = vpop.permute.xlu0 %4583
    %v4585 = vunpack.c.l.b16 %v4481
    %v4586 = vpack.c.b16 %v4585, %v4552
    %vm4587 = vcmask 261120
    %v4590 = vsel %vm4587, %v4490, %v4507
    %v4593 = vsel %vm4587, %v4491, %v4509
    %v4596 = vsel %vm4587, %v4492, %v4511
    %v4599 = vsel %vm4587, %v4493, %v4513
    %vm4600 = vcmask 523264
    %v4602 = vsel %vm4600, %v4590, %v4527
    %v4604 = vsel %vm4600, %v4593, %v4529
    %v4606 = vsel %vm4600, %v4596, %v4531
    %v4608 = vsel %vm4600, %v4599, %v4533
    %vm4609 = vcmask 785408
    %v4611 = vsel %vm4609, %v4602, %v4540
    %v4614 = vsel %vm4609, %v4604, %v4542
    %v4617 = vsel %vm4609, %v4606, %v4544
    %v4620 = vsel %vm4609, %v4608, %v4546
    %v4624 = vsel %vm4587, %v4548, %v4558
    %v4627 = vsel %vm4587, %v4549, %v4560
    %v4630 = vsel %vm4587, %v4550, %v4562
    %v4633 = vsel %vm4587, %v4551, %v4564
    %v4635 = vsel %vm4600, %v4624, %v4568
    %v4637 = vsel %vm4600, %v4627, %v4570
    %v4639 = vsel %vm4600, %v4630, %v4572
    %v4641 = vsel %vm4600, %v4633, %v4574
    %v4643 = vsel %vm4609, %v4635, %v4578
    %v4646 = vsel %vm4609, %v4637, %v4580
    %v4649 = vsel %vm4609, %v4639, %v4582
    %v4652 = vsel %vm4609, %v4641, %v4584
    %s4654 = scalar_lea.vmem [#allocation2], 80
    %v4655 = vld [vmem:[%s4654] sm:$0xf]
    %v4656 = vld [vmem:[%s4654 + $0x4] sm:$0x1]
    %v4657 = vld [vmem:[%s4654 + $0x8] sm:$0xf]
    %v4658 = vld [vmem:[%s4654 + $0xc] sm:$0x1]
    %v4659 = vld [vmem:[%s4654 + $0x10] sm:$0xf]
    %v4660 = vld [vmem:[%s4654 + $0x14] sm:$0x1]
    %v4661 = vld [vmem:[%s4654 + $0x18] sm:$0xf]
    %v4662 = vld [vmem:[%s4654 + $0x1c] sm:$0x1]
    %v4663 = vld [vmem:[%s4654 + $0x20] sm:$0xf]
    %v4664 = vld [vmem:[%s4654 + $0x24] sm:$0x1]
    %v4665 = vld [vmem:[%s4654 + $0x28] sm:$0xf]
    %v4666 = vld [vmem:[%s4654 + $0x2c] sm:$0x1]
    %v4667 = vld [vmem:[%s4654 + $0x30] sm:$0xf]
    %v4668 = vld [vmem:[%s4654 + $0x34] sm:$0x1]
    %v4669 = vld [vmem:[%s4654 + $0x38] sm:$0xf]
    %v4670 = vld [vmem:[%s4654 + $0x3c] sm:$0x1]
    %v4671 = vld [vmem:[%s4654 + $0x40] sm:$0xf]
    %v4672 = vld [vmem:[%s4654 + $0x44] sm:$0x1]
    %v4673 = vld [vmem:[%s4654 + $0x48] sm:$0xf]
    %v4674 = vld [vmem:[%s4654 + $0x4c] sm:$0x1]
    %v4676 = vshrl.u32 %v4655, 16
    %v4678 = vrot.slane %v4676, 4
    %v4679 = vshll.u32 %v4655, 16
    %v4681 = vrot.slane %v4679, 5
    %v4682 = vor.u32 %v4678, %v4681
    %v4683 = vrot.slane %v4682, 4
    %v4685 = vshll.u32 %v4656, 16
    %v4687 = vrot.slane %v4685, 5
    %v4688 = vsel %vm4278, %v4683, %v4687
    %v4690 = vshrl.u32 %v4657, 16
    %v4692 = vrot.slane %v4690, 4
    %v4693 = vshll.u32 %v4657, 16
    %v4695 = vrot.slane %v4693, 5
    %v4696 = vor.u32 %v4692, %v4695
    %v4697 = vrot.slane %v4696, 4
    %v4699 = vshll.u32 %v4658, 16
    %v4701 = vrot.slane %v4699, 5
    %v4702 = vsel %vm4278, %v4697, %v4701
    %v4704 = vshrl.u32 %v4659, 16
    %v4706 = vrot.slane %v4704, 4
    %v4707 = vshll.u32 %v4659, 16
    %v4709 = vrot.slane %v4707, 5
    %v4710 = vor.u32 %v4706, %v4709
    %v4711 = vrot.slane %v4710, 4
    %v4713 = vshll.u32 %v4660, 16
    %v4715 = vrot.slane %v4713, 5
    %v4716 = vsel %vm4278, %v4711, %v4715
    %v4718 = vshrl.u32 %v4661, 16
    %v4720 = vrot.slane %v4718, 4
    %v4721 = vshll.u32 %v4661, 16
    %v4723 = vrot.slane %v4721, 5
    %v4724 = vor.u32 %v4720, %v4723
    %v4725 = vrot.slane %v4724, 4
    %v4727 = vshll.u32 %v4662, 16
    %v4729 = vrot.slane %v4727, 5
    %v4730 = vsel %vm4278, %v4725, %v4729
    %v4732 = vshrl.u32 %v4663, 16
    %v4734 = vrot.slane %v4732, 4
    %v4735 = vshll.u32 %v4663, 16
    %v4737 = vrot.slane %v4735, 5
    %v4738 = vor.u32 %v4734, %v4737
    %v4739 = vrot.slane %v4738, 4
    %v4741 = vshll.u32 %v4664, 16
    %v4743 = vrot.slane %v4741, 5
    %v4744 = vsel %vm4278, %v4739, %v4743
    %v4746 = vshrl.u32 %v4665, 16
    %v4748 = vrot.slane %v4746, 4
    %v4749 = vshll.u32 %v4665, 16
    %v4751 = vrot.slane %v4749, 5
    %v4752 = vor.u32 %v4748, %v4751
    %v4753 = vrot.slane %v4752, 4
    %v4755 = vshll.u32 %v4666, 16
    %v4757 = vrot.slane %v4755, 5
    %v4758 = vsel %vm4278, %v4753, %v4757
    %v4760 = vshrl.u32 %v4667, 16
    %v4762 = vrot.slane %v4760, 4
    %v4763 = vshll.u32 %v4667, 16
    %v4765 = vrot.slane %v4763, 5
    %v4766 = vor.u32 %v4762, %v4765
    %v4767 = vrot.slane %v4766, 4
    %v4769 = vshll.u32 %v4668, 16
    %v4771 = vrot.slane %v4769, 5
    %v4772 = vsel %vm4278, %v4767, %v4771
    %v4774 = vshrl.u32 %v4669, 16
    %v4776 = vrot.slane %v4774, 4
    %v4777 = vshll.u32 %v4669, 16
    %v4779 = vrot.slane %v4777, 5
    %v4780 = vor.u32 %v4776, %v4779
    %v4781 = vrot.slane %v4780, 4
    %v4783 = vshll.u32 %v4670, 16
    %v4785 = vrot.slane %v4783, 5
    %v4786 = vsel %vm4278, %v4781, %v4785
    %v4803 = vrot.slane %v4655, 5
    %v4804 = vrot.slane %v4803, 4
    %v4805 = vrot.slane %v4656, 5
    %v4806 = vsel %vm4409, %v4804, %v4805
    %v4807 = vrot.slane %v4657, 5
    %v4808 = vrot.slane %v4807, 4
    %v4809 = vrot.slane %v4658, 5
    %v4810 = vsel %vm4409, %v4808, %v4809
    %v4811 = vrot.slane %v4659, 5
    %v4812 = vrot.slane %v4811, 4
    %v4813 = vrot.slane %v4660, 5
    %v4814 = vsel %vm4409, %v4812, %v4813
    %v4815 = vrot.slane %v4661, 5
    %v4816 = vrot.slane %v4815, 4
    %v4817 = vrot.slane %v4662, 5
    %v4818 = vsel %vm4409, %v4816, %v4817
    %v4819 = vrot.slane %v4663, 5
    %v4820 = vrot.slane %v4819, 4
    %v4821 = vrot.slane %v4664, 5
    %v4822 = vsel %vm4409, %v4820, %v4821
    %v4823 = vrot.slane %v4665, 5
    %v4824 = vrot.slane %v4823, 4
    %v4825 = vrot.slane %v4666, 5
    %v4826 = vsel %vm4409, %v4824, %v4825
    %v4827 = vrot.slane %v4667, 5
    %v4828 = vrot.slane %v4827, 4
    %v4829 = vrot.slane %v4668, 5
    %v4830 = vsel %vm4409, %v4828, %v4829
    %v4831 = vrot.slane %v4669, 5
    %v4832 = vrot.slane %v4831, 4
    %v4833 = vrot.slane %v4670, 5
    %v4834 = vsel %vm4409, %v4832, %v4833
    %v4836 = vshrl.u32 %v4671, 16
    %v4838 = vrot.slane %v4836, 4
    %v4839 = vshll.u32 %v4671, 16
    %v4841 = vrot.slane %v4839, 5
    %v4842 = vor.u32 %v4838, %v4841
    %v4843 = vrot.slane %v4842, 4
    %v4845 = vshll.u32 %v4672, 16
    %v4847 = vrot.slane %v4845, 5
    %v4848 = vsel %vm4278, %v4843, %v4847
    %v4851 = vrot.slane %v4671, 5
    %v4852 = vrot.slane %v4851, 4
    %v4853 = vrot.slane %v4672, 5
    %v4854 = vsel %vm4409, %v4852, %v4853
    %v4856 = vshrl.u32 %v4673, 16
    %v4858 = vrot.slane %v4856, 4
    %v4859 = vshll.u32 %v4673, 16
    %v4861 = vrot.slane %v4859, 5
    %v4862 = vor.u32 %v4858, %v4861
    %v4863 = vrot.slane %v4862, 4
    %v4865 = vshll.u32 %v4674, 16
    %v4867 = vrot.slane %v4865, 5
    %v4868 = vsel %vm4278, %v4863, %v4867
    %v4871 = vrot.slane %v4673, 5
    %v4872 = vrot.slane %v4871, 4
    %v4873 = vrot.slane %v4674, 5
    %v4874 = vsel %vm4409, %v4872, %v4873
    %v4875 = vunpack.c.l.b16 %v4655
    %v4876 = vunpack.c.l.b16 %v4657
    %v4877 = vunpack.c.l.b16 %v4659
    %v4878 = vunpack.c.l.b16 %v4661
    %v4879 = vunpack.c.l.b16 %v4663
    %v4880 = vunpack.c.l.b16 %v4665
    %v4881 = vunpack.c.l.b16 %v4667
    %v4882 = vunpack.c.l.b16 %v4669
    %v4883 = vpack.c.b16 %v4876, %v4875
    %v4884 = vpack.c.b16 %v4878, %v4877
    %v4885 = vpack.c.b16 %v4880, %v4879
    %v4886 = vpack.c.b16 %v4882, %v4881
    %v4887 = vunpack.c.l.b16 %v4688
    %v4888 = vunpack.c.l.b16 %v4702
    %v4889 = vunpack.c.l.b16 %v4716
    %v4890 = vunpack.c.l.b16 %v4730
    %v4891 = vunpack.c.l.b16 %v4744
    %v4892 = vunpack.c.l.b16 %v4758
    %v4893 = vunpack.c.l.b16 %v4772
    %v4894 = vunpack.c.l.b16 %v4786
    %v4895 = vpack.c.b16 %v4888, %v4887
    %v4896 = vpack.c.b16 %v4890, %v4889
    %v4897 = vpack.c.b16 %v4892, %v4891
    %v4898 = vpack.c.b16 %v4894, %v4893
    %4899 = vrot.lane.b32.xlu0 %v4895, 32
    %v4900 = vpop.permute.xlu0 %4899
    %4901 = vrot.lane.b32.xlu0 %v4896, 32
    %v4902 = vpop.permute.xlu0 %4901
    %4903 = vrot.lane.b32.xlu0 %v4897, 32
    %v4904 = vpop.permute.xlu0 %4903
    %4905 = vrot.lane.b32.xlu0 %v4898, 32
    %v4906 = vpop.permute.xlu0 %4905
    %v4907 = vunpack.c.l.b16 %v4806
    %v4908 = vunpack.c.l.b16 %v4810
    %v4909 = vunpack.c.l.b16 %v4814
    %v4910 = vunpack.c.l.b16 %v4818
    %v4911 = vunpack.c.l.b16 %v4822
    %v4912 = vunpack.c.l.b16 %v4826
    %v4913 = vunpack.c.l.b16 %v4830
    %v4914 = vunpack.c.l.b16 %v4834
    %v4915 = vpack.c.b16 %v4908, %v4907
    %v4916 = vpack.c.b16 %v4910, %v4909
    %v4917 = vpack.c.b16 %v4912, %v4911
    %v4918 = vpack.c.b16 %v4914, %v4913
    %4919 = vrot.lane.b32.xlu0 %v4915, 64
    %v4920 = vpop.permute.xlu0 %4919
    %4921 = vrot.lane.b32.xlu0 %v4916, 64
    %v4922 = vpop.permute.xlu0 %4921
    %4923 = vrot.lane.b32.xlu0 %v4917, 64
    %v4924 = vpop.permute.xlu0 %4923
    %4925 = vrot.lane.b32.xlu0 %v4918, 64
    %v4926 = vpop.permute.xlu0 %4925
    %v4927 = vunpack.c.l.b16 %v4671
    %v4928 = vpack.c.b16 %v4877, %v4876
    %v4929 = vpack.c.b16 %v4879, %v4878
    %v4930 = vpack.c.b16 %v4881, %v4880
    %v4931 = vpack.c.b16 %v4927, %v4882
    %4932 = vrot.lane.b32.xlu0 %v4928, 96
    %v4933 = vpop.permute.xlu0 %4932
    %4934 = vrot.lane.b32.xlu0 %v4929, 96
    %v4935 = vpop.permute.xlu0 %4934
    %4936 = vrot.lane.b32.xlu0 %v4930, 96
    %v4937 = vpop.permute.xlu0 %4936
    %4938 = vrot.lane.b32.xlu0 %v4931, 96
    %v4939 = vpop.permute.xlu0 %4938
    %v4940 = vunpack.c.l.b16 %v4848
    %v4941 = vpack.c.b16 %v4889, %v4888
    %v4942 = vpack.c.b16 %v4891, %v4890
    %v4943 = vpack.c.b16 %v4893, %v4892
    %v4944 = vpack.c.b16 %v4940, %v4894
    %v4945 = vunpack.c.l.b16 %v4854
    %v4946 = vpack.c.b16 %v4909, %v4908
    %v4947 = vpack.c.b16 %v4911, %v4910
    %v4948 = vpack.c.b16 %v4913, %v4912
    %v4949 = vpack.c.b16 %v4945, %v4914
    %4950 = vrot.lane.b32.xlu0 %v4946, 32
    %v4951 = vpop.permute.xlu0 %4950
    %4952 = vrot.lane.b32.xlu0 %v4947, 32
    %v4953 = vpop.permute.xlu0 %4952
    %4954 = vrot.lane.b32.xlu0 %v4948, 32
    %v4955 = vpop.permute.xlu0 %4954
    %4956 = vrot.lane.b32.xlu0 %v4949, 32
    %v4957 = vpop.permute.xlu0 %4956
    %v4958 = vunpack.c.l.b16 %v4673
    %v4959 = vpack.c.b16 %v4958, %v4927
    %4960 = vrot.lane.b32.xlu0 %v4884, 64
    %v4961 = vpop.permute.xlu0 %4960
    %4962 = vrot.lane.b32.xlu0 %v4885, 64
    %v4963 = vpop.permute.xlu0 %4962
    %4964 = vrot.lane.b32.xlu0 %v4886, 64
    %v4965 = vpop.permute.xlu0 %4964
    %4966 = vrot.lane.b32.xlu0 %v4959, 64
    %v4967 = vpop.permute.xlu0 %4966
    %v4968 = vunpack.c.l.b16 %v4868
    %v4969 = vpack.c.b16 %v4968, %v4940
    %4970 = vrot.lane.b32.xlu0 %v4896, 96
    %v4971 = vpop.permute.xlu0 %4970
    %4972 = vrot.lane.b32.xlu0 %v4897, 96
    %v4973 = vpop.permute.xlu0 %4972
    %4974 = vrot.lane.b32.xlu0 %v4898, 96
    %v4975 = vpop.permute.xlu0 %4974
    %4976 = vrot.lane.b32.xlu0 %v4969, 96
    %v4977 = vpop.permute.xlu0 %4976
    %v4978 = vunpack.c.l.b16 %v4874
    %v4979 = vpack.c.b16 %v4978, %v4945
    %v4982 = vsel %vm4587, %v4883, %v4900
    %v4985 = vsel %vm4587, %v4884, %v4902
    %v4988 = vsel %vm4587, %v4885, %v4904
    %v4991 = vsel %vm4587, %v4886, %v4906
    %v4993 = vsel %vm4600, %v4982, %v4920
    %v4995 = vsel %vm4600, %v4985, %v4922
    %v4997 = vsel %vm4600, %v4988, %v4924
    %v4999 = vsel %vm4600, %v4991, %v4926
    %v5001 = vsel %vm4609, %v4993, %v4933
    %v5004 = vsel %vm4609, %v4995, %v4935
    %v5007 = vsel %vm4609, %v4997, %v4937
    %v5010 = vsel %vm4609, %v4999, %v4939
    %v5014 = vsel %vm4587, %v4941, %v4951
    %v5017 = vsel %vm4587, %v4942, %v4953
    %v5020 = vsel %vm4587, %v4943, %v4955
    %v5023 = vsel %vm4587, %v4944, %v4957
    %v5025 = vsel %vm4600, %v5014, %v4961
    %v5027 = vsel %vm4600, %v5017, %v4963
    %v5029 = vsel %vm4600, %v5020, %v4965
    %v5031 = vsel %vm4600, %v5023, %v4967
    %v5033 = vsel %vm4609, %v5025, %v4971
    %v5036 = vsel %vm4609, %v5027, %v4973
    %v5039 = vsel %vm4609, %v5029, %v4975
    %v5042 = vsel %vm4609, %v5031, %v4977
    %v5044 = vld [vmem:[%s4] sm:$0xf]
    %v5045 = vld [vmem:[%s4 + $0x4] sm:$0xf]
    %v5046 = vld [vmem:[%s4 + $0x8] sm:$0xf]
    %v5047 = vld [vmem:[%s4 + $0xc] sm:$0xf]
    %v5048 = vld [vmem:[%s4 + $0x10] sm:$0xf]
    %v5049 = vld [vmem:[%s4 + $0x14] sm:$0xf]
    %v5050 = vld [vmem:[%s4 + $0x18] sm:$0xf]
    %v5051 = vld [vmem:[%s4 + $0x1c] sm:$0xf]
    %v5052 = vld [vmem:[%s4 + $0x20] sm:$0xf]
    %v5053 = vld [vmem:[%s4 + $0x24] sm:$0xf]
    %v5054 = vld [vmem:[%s4 + $0x28] sm:$0xf]
    %v5055 = vld [vmem:[%s4 + $0x2c] sm:$0xf]
    %v5056 = vld [vmem:[%s4 + $0x30] sm:$0xf]
    %v5057 = vld [vmem:[%s4 + $0x34] sm:$0xf]
    %v5058 = vld [vmem:[%s4 + $0x38] sm:$0xf]
    %v5059 = vld [vmem:[%s4 + $0x3c] sm:$0xf]
    %v5060 = vld [vmem:[%s4 + $0x40] sm:$0xf]
    %v5061 = vld [vmem:[%s4 + $0x44] sm:$0xf]
    %v5062 = vld [vmem:[%s4 + $0x48] sm:$0xf]
    %v5063 = vld [vmem:[%s4 + $0x4c] sm:$0xf]
    %v5064 = vld [vmem:[%s4 + $0x50] sm:$0xf]
    %v5065 = vld [vmem:[%s4 + $0x54] sm:$0xf]
    %v5066 = vld [vmem:[%s4 + $0x58] sm:$0xf]
    %v5067 = vld [vmem:[%s4 + $0x5c] sm:$0xf]
    %v5068 = vld [vmem:[%s4 + $0x60] sm:$0xf]
    %v5069 = vld [vmem:[%s4 + $0x64] sm:$0xf]
    %v5070 = vld [vmem:[%s4 + $0x68] sm:$0xf]
    %v5071 = vld [vmem:[%s4 + $0x6c] sm:$0xf]
    %v5072 = vld [vmem:[%s4 + $0x70] sm:$0xf]
    %v5073 = vld [vmem:[%s4 + $0x74] sm:$0xf]
    %v5074 = vld [vmem:[%s4 + $0x78] sm:$0xf]
    %v5075 = vld [vmem:[%s4 + $0x7c] sm:$0xf]
    %v5076 = vld [vmem:[%s4 + $0x80] sm:$0xf]
    %v5077 = vld [vmem:[%s4 + $0x84] sm:$0xf]
    %v5078 = vld [vmem:[%s4 + $0x88] sm:$0xf]
    %v5079 = vld [vmem:[%s4 + $0x8c] sm:$0xf]
    %v5116 = vunpack.c.l.b16 %v5044
    %v5117 = vunpack.c.l.b16 %v5045
    %v5118 = vunpack.c.l.b16 %v5046
    %v5119 = vunpack.c.l.b16 %v5047
    %v5120 = vunpack.c.l.b16 %v5048
    %v5121 = vunpack.c.l.b16 %v5049
    %v5122 = vunpack.c.l.b16 %v5050
    %v5123 = vunpack.c.l.b16 %v5051
    %v5124 = vunpack.c.l.b16 %v5052
    %v5125 = vunpack.c.l.b16 %v5053
    %v5126 = vunpack.c.l.b16 %v5054
    %v5127 = vunpack.c.l.b16 %v5055
    %v5128 = vunpack.c.l.b16 %v5056
    %v5129 = vunpack.c.l.b16 %v5057
    %v5130 = vunpack.c.l.b16 %v5058
    %v5131 = vunpack.c.l.b16 %v5059
    %v5132 = vunpack.c.l.b16 %v5060
    %v5133 = vunpack.c.l.b16 %v5061
    %v5134 = vunpack.c.l.b16 %v5062
    %v5135 = vunpack.c.l.b16 %v5063
    %v5136 = vunpack.c.l.b16 %v5064
    %v5137 = vunpack.c.l.b16 %v5065
    %v5138 = vunpack.c.l.b16 %v5066
    %v5139 = vunpack.c.l.b16 %v5067
    %v5140 = vunpack.c.l.b16 %v5068
    %v5141 = vunpack.c.l.b16 %v5069
    %v5142 = vunpack.c.l.b16 %v5070
    %v5143 = vunpack.c.l.b16 %v5071
    %v5144 = vunpack.c.l.b16 %v5072
    %v5145 = vunpack.c.l.b16 %v5073
    %v5146 = vunpack.c.l.b16 %v5074
    %v5147 = vunpack.c.l.b16 %v5075
    %v5148 = vunpack.c.l.b16 %v5076
    %v5149 = vunpack.c.l.b16 %v5077
    %v5150 = vunpack.c.l.b16 %v5078
    %v5151 = vunpack.c.l.b16 %v5079
    %v5152 = vpack.c.b16 %v5117, %v5116
    %v5153 = vpack.c.b16 %v5119, %v5118
    %v5154 = vpack.c.b16 %v5121, %v5120
    %v5155 = vpack.c.b16 %v5123, %v5122
    %v5156 = vpack.c.b16 %v5125, %v5124
    %v5157 = vpack.c.b16 %v5127, %v5126
    %v5158 = vpack.c.b16 %v5129, %v5128
    %v5159 = vpack.c.b16 %v5131, %v5130
    %v5160 = vpack.c.b16 %v5133, %v5132
    %v5161 = vpack.c.b16 %v5135, %v5134
    %v5162 = vpack.c.b16 %v5137, %v5136
    %v5163 = vpack.c.b16 %v5139, %v5138
    %v5164 = vpack.c.b16 %v5141, %v5140
    %v5165 = vpack.c.b16 %v5143, %v5142
    %v5166 = vpack.c.b16 %v5145, %v5144
    %v5167 = vpack.c.b16 %v5147, %v5146
    %v5168 = vpack.c.b16 %v5149, %v5148
    %v5169 = vpack.c.b16 %v5151, %v5150
    %v5189 = vsel %vm4587, %v4523, 0
    %v5192 = vsel %vm4587, %v4524, 0
    %v5195 = vsel %vm4587, %v4525, 0
    %v5198 = vsel %vm4587, %v4586, 0
    %v5201 = vsel %vm4587, %v4916, 0
    %v5204 = vsel %vm4587, %v4917, 0
    %v5207 = vsel %vm4587, %v4918, 0
    %v5210 = vsel %vm4587, %v4979, 0
    %5212 = vmatprep.subr.bf16.mxu0 0
    %5213 = vmatpush1.bf16.msra.mxu0 %v5159
    %5214 = vmatprep.subr.bf16.mxu0 0
    %5215 = vmatpush1.bf16.msra.mxu0 %v5158
    %5216 = vmatprep.subr.bf16.mxu0 0
    %5217 = vmatpush1.bf16.msra.mxu0 %v5157
    %5218 = vmatprep.subr.bf16.mxu0 0
    %5219 = vmatpush1.bf16.msra.mxu0 %v5156
    %5220 = vmatprep.subr.bf16.mxu0 0
    %5221 = vmatpush1.bf16.msra.mxu0 %v5155
    %5222 = vmatprep.subr.bf16.mxu0 0
    %5223 = vmatpush1.bf16.msra.mxu0 %v5154
    %5224 = vmatprep.subr.bf16.mxu0 0
    %5225 = vmatpush1.bf16.msra.mxu0 %v5153
    %5226 = vmatprep.subr.bf16.mxu0 0
    %5227 = vmatpush1.bf16.msra.mxu0 %v5152
    %5228 = vmatprep.subr.bf16.mxu0 0
    %5229 = vmatpush2.bf16.msra.mxu0 %v5167
    %5230 = vmatprep.subr.bf16.mxu0 0
    %5231 = vmatpush2.bf16.msra.mxu0 %v5166
    %5232 = vmatprep.subr.bf16.mxu0 0
    %5233 = vmatpush2.bf16.msra.mxu0 %v5165
    %5234 = vmatprep.subr.bf16.mxu0 0
    %5235 = vmatpush2.bf16.msra.mxu0 %v5164
    %5236 = vmatprep.subr.bf16.mxu0 0
    %5237 = vmatpush2.bf16.msra.mxu0 %v5163
    %5238 = vmatprep.subr.bf16.mxu0 0
    %5239 = vmatpush2.bf16.msra.mxu0 %v5162
    %5240 = vmatprep.subr.bf16.mxu0 0
    %5241 = vmatpush2.bf16.msra.mxu0 %v5161
    %5242 = vmatprep.subr.bf16.mxu0 0
    %5243 = vmatpush2.bf16.msra.mxu0 %v5160
    %5244 = vmatprep.mubr.bf16.mxu0 %v4643
    %5245 = vmatmul.mubr.bf16.gmra.mxu0 %v4611
    %v5246 = vpop.f32.mrf.mxu0
    %v5247 = vadd.f32 0.0, %v5246
    %v5248 = vpop.f32.mrf.mxu0
    %v5249 = vpop.f32.mrf.mxu0
    %v5250 = vadd.f32 0.0, %v5249
    %v5251 = vpop.f32.mrf.mxu0
    %5252 = vmatprep.mubr.bf16.mxu0 %v4646
    %5253 = vmatmul.mubr.bf16.gmra.mxu0 %v4614
    %v5254 = vpop.f32.mrf.mxu0
    %v5255 = vadd.f32 0.0, %v5254
    %v5256 = vpop.f32.mrf.mxu0
    %v5257 = vpop.f32.mrf.mxu0
    %v5258 = vadd.f32 0.0, %v5257
    %v5259 = vpop.f32.mrf.mxu0
    %5260 = vmatprep.mubr.bf16.mxu0 %v4649
    %5261 = vmatmul.mubr.bf16.gmra.mxu0 %v4617
    %v5262 = vpop.f32.mrf.mxu0
    %v5263 = vadd.f32 0.0, %v5262
    %v5264 = vpop.f32.mrf.mxu0
    %v5265 = vpop.f32.mrf.mxu0
    %v5266 = vadd.f32 0.0, %v5265
    %v5267 = vpop.f32.mrf.mxu0
    %5268 = vmatprep.mubr.bf16.mxu0 %v4652
    %5269 = vmatmul.mubr.bf16.gmra.mxu0 %v4620
    %v5270 = vpop.f32.mrf.mxu0
    %v5271 = vadd.f32 0.0, %v5270
    %v5272 = vpop.f32.mrf.mxu0
    %v5273 = vpop.f32.mrf.mxu0
    %v5274 = vadd.f32 0.0, %v5273
    %v5275 = vpop.f32.mrf.mxu0
    %5276 = vmatprep.mubr.bf16.mxu0 %v5033
    %5277 = vmatmul.mubr.bf16.gmra.mxu0 %v5001
    %v5278 = vpop.f32.mrf.mxu0
    %v5279 = vadd.f32 0.0, %v5278
    %v5280 = vpop.f32.mrf.mxu0
    %v5281 = vpop.f32.mrf.mxu0
    %v5282 = vadd.f32 0.0, %v5281
    %v5283 = vpop.f32.mrf.mxu0
    %5284 = vmatprep.mubr.bf16.mxu0 %v5036
    %5285 = vmatmul.mubr.bf16.gmra.mxu0 %v5004
    %v5286 = vpop.f32.mrf.mxu0
    %v5287 = vadd.f32 0.0, %v5286
    %v5288 = vpop.f32.mrf.mxu0
    %v5289 = vpop.f32.mrf.mxu0
    %v5290 = vadd.f32 0.0, %v5289
    %v5291 = vpop.f32.mrf.mxu0
    %5292 = vmatprep.mubr.bf16.mxu0 %v5039
    %5293 = vmatmul.mubr.bf16.gmra.mxu0 %v5007
    %v5294 = vpop.f32.mrf.mxu0
    %v5295 = vadd.f32 0.0, %v5294
    %v5296 = vpop.f32.mrf.mxu0
    %v5297 = vpop.f32.mrf.mxu0
    %v5298 = vadd.f32 0.0, %v5297
    %v5299 = vpop.f32.mrf.mxu0
    %5300 = vmatprep.mubr.bf16.mxu0 %v5042
    %5301 = vmatmul.mubr.bf16.gmra.mxu0 %v5010
    %v5302 = vpop.f32.mrf.mxu0
    %v5303 = vadd.f32 0.0, %v5302
    %v5304 = vpop.f32.mrf.mxu0
    %v5305 = vpop.f32.mrf.mxu0
    %v5306 = vadd.f32 0.0, %v5305
    %v5307 = vpop.f32.mrf.mxu0
    %5308 = vdwg.mxu0
    %5309 = vmatprep.subr.bf16.mxu0 0
    %5310 = vmatpush1.bf16.msra.mxu0 0
    %5311 = vmatprep.subr.bf16.mxu0 0
    %5312 = vmatpush1.bf16.msra.mxu0 0
    %5313 = vmatprep.subr.bf16.mxu0 0
    %5314 = vmatpush1.bf16.msra.mxu0 0
    %5315 = vmatprep.subr.bf16.mxu0 0
    %5316 = vmatpush1.bf16.msra.mxu0 0
    %5317 = vmatprep.subr.bf16.mxu0 0
    %5318 = vmatpush1.bf16.msra.mxu0 0
    %5319 = vmatprep.subr.bf16.mxu0 0
    %5320 = vmatpush1.bf16.msra.mxu0 0
    %5321 = vmatprep.subr.bf16.mxu0 0
    %5322 = vmatpush1.bf16.msra.mxu0 %v5169
    %5323 = vmatprep.subr.bf16.mxu0 0
    %5324 = vmatpush1.bf16.msra.mxu0 %v5168
    %5325 = vmatprep.subr.bf16.mxu0 0
    %5326 = vmatpush2.bf16.msra.mxu0 0
    %5327 = vmatprep.subr.bf16.mxu0 0
    %5328 = vmatpush2.bf16.msra.mxu0 0
    %5329 = vmatprep.subr.bf16.mxu0 0
    %5330 = vmatpush2.bf16.msra.mxu0 0
    %5331 = vmatprep.subr.bf16.mxu0 0
    %5332 = vmatpush2.bf16.msra.mxu0 0
    %5333 = vmatprep.subr.bf16.mxu0 0
    %5334 = vmatpush2.bf16.msra.mxu0 0
    %5335 = vmatprep.subr.bf16.mxu0 0
    %5336 = vmatpush2.bf16.msra.mxu0 0
    %5337 = vmatprep.subr.bf16.mxu0 0
    %5338 = vmatpush2.bf16.msra.mxu0 0
    %5339 = vmatprep.subr.bf16.mxu0 0
    %5340 = vmatpush2.bf16.msra.mxu0 0
    %5341 = vmatprep.mubr.bf16.mxu0 0
    %5342 = vmatmul.mubr.bf16.gmra.mxu0 %v5189
    %v5343 = vpop.f32.mrf.mxu0
    %v5344 = vadd.f32 %v5247, %v5343
    %v5345 = vpop.f32.mrf.mxu0
    %v5346 = vpop.f32.mrf.mxu0
    %v5347 = vadd.f32 %v5250, %v5346
    %v5348 = vpop.f32.mrf.mxu0
    %5349 = vmatprep.mubr.bf16.mxu0 0
    %5350 = vmatmul.mubr.bf16.gmra.mxu0 %v5192
    %v5351 = vpop.f32.mrf.mxu0
    %v5352 = vadd.f32 %v5255, %v5351
    %v5353 = vpop.f32.mrf.mxu0
    %v5354 = vpop.f32.mrf.mxu0
    %v5355 = vadd.f32 %v5258, %v5354
    %v5356 = vpop.f32.mrf.mxu0
    %5357 = vmatprep.mubr.bf16.mxu0 0
    %5358 = vmatmul.mubr.bf16.gmra.mxu0 %v5195
    %v5359 = vpop.f32.mrf.mxu0
    %v5360 = vadd.f32 %v5263, %v5359
    %v5361 = vpop.f32.mrf.mxu0
    %v5362 = vpop.f32.mrf.mxu0
    %v5363 = vadd.f32 %v5266, %v5362
    %v5364 = vpop.f32.mrf.mxu0
    %5365 = vmatprep.mubr.bf16.mxu0 0
    %5366 = vmatmul.mubr.bf16.gmra.mxu0 %v5198
    %v5367 = vpop.f32.mrf.mxu0
    %v5368 = vadd.f32 %v5271, %v5367
    %v5369 = vpop.f32.mrf.mxu0
    %v5370 = vpop.f32.mrf.mxu0
    %v5371 = vadd.f32 %v5274, %v5370
    %v5372 = vpop.f32.mrf.mxu0
    %5373 = vmatprep.mubr.bf16.mxu0 0
    %5374 = vmatmul.mubr.bf16.gmra.mxu0 %v5201
    %v5375 = vpop.f32.mrf.mxu0
    %v5376 = vadd.f32 %v5279, %v5375
    %v5377 = vpop.f32.mrf.mxu0
    %v5378 = vpop.f32.mrf.mxu0
    %v5379 = vadd.f32 %v5282, %v5378
    %v5380 = vpop.f32.mrf.mxu0
    %5381 = vmatprep.mubr.bf16.mxu0 0
    %5382 = vmatmul.mubr.bf16.gmra.mxu0 %v5204
    %v5383 = vpop.f32.mrf.mxu0
    %v5384 = vadd.f32 %v5287, %v5383
    %v5385 = vpop.f32.mrf.mxu0
    %v5386 = vpop.f32.mrf.mxu0
    %v5387 = vadd.f32 %v5290, %v5386
    %v5388 = vpop.f32.mrf.mxu0
    %5389 = vmatprep.mubr.bf16.mxu0 0
    %5390 = vmatmul.mubr.bf16.gmra.mxu0 %v5207
    %v5391 = vpop.f32.mrf.mxu0
    %v5392 = vadd.f32 %v5295, %v5391
    %v5393 = vpop.f32.mrf.mxu0
    %v5394 = vpop.f32.mrf.mxu0
    %v5395 = vadd.f32 %v5298, %v5394
    %v5396 = vpop.f32.mrf.mxu0
    %5397 = vmatprep.mubr.bf16.mxu0 0
    %5398 = vmatmul.mubr.bf16.gmra.mxu0 %v5210
    %v5399 = vpop.f32.mrf.mxu0
    %v5400 = vadd.f32 %v5303, %v5399
    %v5401 = vpop.f32.mrf.mxu0
    %v5402 = vpop.f32.mrf.mxu0
    %v5403 = vadd.f32 %v5306, %v5402
    %v5404 = vpop.f32.mrf.mxu0
    %5405 = vdwg.mxu0
    %v5406 = vld [vmem:[%s5] sm:$0x1]
    %v5408 = vlaneseq
    %v5409 = vshrl.u32 %v5408, 7
    %v5410 = vsub.s32 0, %v5409
    %v5411 = vrot.slane %v5406, %v5410
    %v5413 = vmul.f32 %v5344, %v5411
    %v5414 = vmul.f32 %v5347, %v5411
    %v5415 = vmul.f32 %v5352, %v5411
    %v5416 = vmul.f32 %v5355, %v5411
    %v5417 = vmul.f32 %v5360, %v5411
    %v5418 = vmul.f32 %v5363, %v5411
    %v5419 = vmul.f32 %v5368, %v5411
    %v5420 = vmul.f32 %v5371, %v5411
    %v5421 = vmul.f32 %v5376, %v5411
    %v5422 = vmul.f32 %v5379, %v5411
    %v5423 = vmul.f32 %v5384, %v5411
    %v5424 = vmul.f32 %v5387, %v5411
    %v5425 = vmul.f32 %v5392, %v5411
    %v5426 = vmul.f32 %v5395, %v5411
    %v5427 = vmul.f32 %v5400, %v5411
    %v5428 = vmul.f32 %v5403, %v5411
    %v5429 = vld [vmem:[%s6] sm:$0x1]
    %v5431 = vlaneseq
    %v5432 = vshrl.u32 %v5431, 7
    %v5433 = vsub.s32 0, %v5432
    %v5434 = vrot.slane %v5429, %v5433
    %v5436 = vadd.f32 %v5413, %v5434
    %v5437 = vadd.f32 %v5414, %v5434
    %v5438 = vadd.f32 %v5415, %v5434
    %v5439 = vadd.f32 %v5416, %v5434
    %v5440 = vadd.f32 %v5417, %v5434
    %v5441 = vadd.f32 %v5418, %v5434
    %v5442 = vadd.f32 %v5419, %v5434
    %v5443 = vadd.f32 %v5420, %v5434
    %v5444 = vadd.f32 %v5421, %v5434
    %v5445 = vadd.f32 %v5422, %v5434
    %v5446 = vadd.f32 %v5423, %v5434
    %v5447 = vadd.f32 %v5424, %v5434
    %v5448 = vadd.f32 %v5425, %v5434
    %v5449 = vadd.f32 %v5426, %v5434
    %v5450 = vadd.f32 %v5427, %v5434
    %v5451 = vadd.f32 %v5428, %v5434
    %v5452 = vmax.f32 %v5436, 0.0
    %v5453 = vmax.f32 %v5437, 0.0
    %v5454 = vmax.f32 %v5438, 0.0
    %v5455 = vmax.f32 %v5439, 0.0
    %v5456 = vmax.f32 %v5440, 0.0
    %v5457 = vmax.f32 %v5441, 0.0
    %v5458 = vmax.f32 %v5442, 0.0
    %v5459 = vmax.f32 %v5443, 0.0
    %v5460 = vmax.f32 %v5444, 0.0
    %v5461 = vmax.f32 %v5445, 0.0
    %v5462 = vmax.f32 %v5446, 0.0
    %v5463 = vmax.f32 %v5447, 0.0
    %v5464 = vmax.f32 %v5448, 0.0
    %v5465 = vmax.f32 %v5449, 0.0
    %v5466 = vmax.f32 %v5450, 0.0
    %v5467 = vmax.f32 %v5451, 0.0
    %v5476 = vcombine.high %v5452, %v5452
    %v5478 = vunpack.c.l.s4 1983009808
    %v5479 = vunpack.c.0.s8 %v5478
    %v5480 = vlaneseq
    %v5481 = vshrl.u32 %v5480, 7
    %v5482 = vsub.s32 %v5479, %v5481
    %v5483 = vrot.slane %v5452, %v5482
    %v5485 = vunpack.c.l.s4 1983009808
    %v5486 = vunpack.c.0.s8 %v5485
    %v5487 = vlaneseq
    %v5488 = vshrl.u32 %v5487, 7
    %v5489 = vsub.s32 %v5486, %v5488
    %v5490 = vrot.slane %v5476, %v5489
    %v5491 = vcombine.high %v5483, %v5483
    %v5492 = vcombine.high %v5490, %v5490
    %v5493 = vcombine.high %v5453, %v5453
    %v5495 = vunpack.c.l.s4 1983009808
    %v5496 = vunpack.c.0.s8 %v5495
    %v5497 = vlaneseq
    %v5498 = vshrl.u32 %v5497, 7
    %v5499 = vsub.s32 %v5496, %v5498
    %v5500 = vrot.slane %v5453, %v5499
    %v5502 = vunpack.c.l.s4 1983009808
    %v5503 = vunpack.c.0.s8 %v5502
    %v5504 = vlaneseq
    %v5505 = vshrl.u32 %v5504, 7
    %v5506 = vsub.s32 %v5503, %v5505
    %v5507 = vrot.slane %v5493, %v5506
    %v5508 = vcombine.high %v5500, %v5500
    %v5509 = vcombine.high %v5507, %v5507
    %v5510 = vcombine.high %v5454, %v5454
    %v5512 = vunpack.c.l.s4 1983009808
    %v5513 = vunpack.c.0.s8 %v5512
    %v5514 = vlaneseq
    %v5515 = vshrl.u32 %v5514, 7
    %v5516 = vsub.s32 %v5513, %v5515
    %v5517 = vrot.slane %v5454, %v5516
    %v5519 = vunpack.c.l.s4 1983009808
    %v5520 = vunpack.c.0.s8 %v5519
    %v5521 = vlaneseq
    %v5522 = vshrl.u32 %v5521, 7
    %v5523 = vsub.s32 %v5520, %v5522
    %v5524 = vrot.slane %v5510, %v5523
    %v5525 = vcombine.high %v5517, %v5517
    %v5526 = vcombine.high %v5524, %v5524
    %v5527 = vcombine.high %v5455, %v5455
    %v5529 = vunpack.c.l.s4 1983009808
    %v5530 = vunpack.c.0.s8 %v5529
    %v5531 = vlaneseq
    %v5532 = vshrl.u32 %v5531, 7
    %v5533 = vsub.s32 %v5530, %v5532
    %v5534 = vrot.slane %v5455, %v5533
    %v5536 = vunpack.c.l.s4 1983009808
    %v5537 = vunpack.c.0.s8 %v5536
    %v5538 = vlaneseq
    %v5539 = vshrl.u32 %v5538, 7
    %v5540 = vsub.s32 %v5537, %v5539
    %v5541 = vrot.slane %v5527, %v5540
    %v5542 = vcombine.high %v5534, %v5534
    %v5543 = vcombine.high %v5541, %v5541
    %v5544 = vcombine.high %v5456, %v5456
    %v5546 = vunpack.c.l.s4 1983009808
    %v5547 = vunpack.c.0.s8 %v5546
    %v5548 = vlaneseq
    %v5549 = vshrl.u32 %v5548, 7
    %v5550 = vsub.s32 %v5547, %v5549
    %v5551 = vrot.slane %v5456, %v5550
    %v5553 = vunpack.c.l.s4 1983009808
    %v5554 = vunpack.c.0.s8 %v5553
    %v5555 = vlaneseq
    %v5556 = vshrl.u32 %v5555, 7
    %v5557 = vsub.s32 %v5554, %v5556
    %v5558 = vrot.slane %v5544, %v5557
    %v5559 = vcombine.high %v5551, %v5551
    %v5560 = vcombine.high %v5558, %v5558
    %v5561 = vcombine.high %v5457, %v5457
    %v5563 = vunpack.c.l.s4 1983009808
    %v5564 = vunpack.c.0.s8 %v5563
    %v5565 = vlaneseq
    %v5566 = vshrl.u32 %v5565, 7
    %v5567 = vsub.s32 %v5564, %v5566
    %v5568 = vrot.slane %v5457, %v5567
    %v5570 = vunpack.c.l.s4 1983009808
    %v5571 = vunpack.c.0.s8 %v5570
    %v5572 = vlaneseq
    %v5573 = vshrl.u32 %v5572, 7
    %v5574 = vsub.s32 %v5571, %v5573
    %v5575 = vrot.slane %v5561, %v5574
    %v5576 = vcombine.high %v5568, %v5568
    %v5577 = vcombine.high %v5575, %v5575
    %v5578 = vcombine.high %v5458, %v5458
    %v5580 = vunpack.c.l.s4 1983009808
    %v5581 = vunpack.c.0.s8 %v5580
    %v5582 = vlaneseq
    %v5583 = vshrl.u32 %v5582, 7
    %v5584 = vsub.s32 %v5581, %v5583
    %v5585 = vrot.slane %v5458, %v5584
    %v5587 = vunpack.c.l.s4 1983009808
    %v5588 = vunpack.c.0.s8 %v5587
    %v5589 = vlaneseq
    %v5590 = vshrl.u32 %v5589, 7
    %v5591 = vsub.s32 %v5588, %v5590
    %v5592 = vrot.slane %v5578, %v5591
    %v5593 = vcombine.high %v5585, %v5585
    %v5594 = vcombine.high %v5592, %v5592
    %v5595 = vcombine.high %v5459, %v5459
    %v5597 = vunpack.c.l.s4 1983009808
    %v5598 = vunpack.c.0.s8 %v5597
    %v5599 = vlaneseq
    %v5600 = vshrl.u32 %v5599, 7
    %v5601 = vsub.s32 %v5598, %v5600
    %v5602 = vrot.slane %v5459, %v5601
    %v5604 = vunpack.c.l.s4 1983009808
    %v5605 = vunpack.c.0.s8 %v5604
    %v5606 = vlaneseq
    %v5607 = vshrl.u32 %v5606, 7
    %v5608 = vsub.s32 %v5605, %v5607
    %v5609 = vrot.slane %v5595, %v5608
    %v5610 = vcombine.high %v5602, %v5602
    %v5611 = vcombine.high %v5609, %v5609
    %v5644 = vmax.f32 %v5483, %v5500
    %v5645 = vmax.f32 %v5491, %v5508
    %v5646 = vmax.f32 %v5490, %v5507
    %v5647 = vmax.f32 %v5492, %v5509
    %v5648 = vmax.f32 %v5517, %v5534
    %v5649 = vmax.f32 %v5525, %v5542
    %v5650 = vmax.f32 %v5524, %v5541
    %v5651 = vmax.f32 %v5526, %v5543
    %v5652 = vmax.f32 %v5551, %v5568
    %v5653 = vmax.f32 %v5559, %v5576
    %v5654 = vmax.f32 %v5558, %v5575
    %v5655 = vmax.f32 %v5560, %v5577
    %v5656 = vmax.f32 %v5585, %v5602
    %v5657 = vmax.f32 %v5593, %v5610
    %v5658 = vmax.f32 %v5592, %v5609
    %v5659 = vmax.f32 %v5594, %v5611
    %v5676 = vrot.slane %v5644, 7
    %v5677 = vrot.slane %v5676, 2
    %v5678 = vrot.slane %v5645, 7
    %v5679 = vrot.slane %v5678, 2
    %v5680 = vrot.slane %v5646, 7
    %v5681 = vrot.slane %v5680, 2
    %v5682 = vrot.slane %v5647, 7
    %v5683 = vrot.slane %v5682, 2
    %v5684 = vrot.slane %v5648, 7
    %v5685 = vrot.slane %v5684, 2
    %v5686 = vrot.slane %v5649, 7
    %v5687 = vrot.slane %v5686, 2
    %v5688 = vrot.slane %v5650, 7
    %v5689 = vrot.slane %v5688, 2
    %v5690 = vrot.slane %v5651, 7
    %v5691 = vrot.slane %v5690, 2
    %v5692 = vrot.slane %v5652, 7
    %v5693 = vrot.slane %v5692, 2
    %v5694 = vrot.slane %v5653, 7
    %v5695 = vrot.slane %v5694, 2
    %v5696 = vrot.slane %v5654, 7
    %v5697 = vrot.slane %v5696, 2
    %v5698 = vrot.slane %v5655, 7
    %v5699 = vrot.slane %v5698, 2
    %v5700 = vrot.slane %v5656, 7
    %v5701 = vrot.slane %v5700, 2
    %v5702 = vrot.slane %v5657, 7
    %v5703 = vrot.slane %v5702, 2
    %v5704 = vrot.slane %v5658, 7
    %v5705 = vrot.slane %v5704, 2
    %v5706 = vrot.slane %v5659, 7
    %v5707 = vrot.slane %v5706, 2
    %v5724 = vmax.f32 %v5644, %v5677
    %v5725 = vmax.f32 %v5645, %v5679
    %v5726 = vmax.f32 %v5646, %v5681
    %v5727 = vmax.f32 %v5647, %v5683
    %v5728 = vmax.f32 %v5648, %v5685
    %v5729 = vmax.f32 %v5649, %v5687
    %v5730 = vmax.f32 %v5650, %v5689
    %v5731 = vmax.f32 %v5651, %v5691
    %v5732 = vmax.f32 %v5652, %v5693
    %v5733 = vmax.f32 %v5653, %v5695
    %v5734 = vmax.f32 %v5654, %v5697
    %v5735 = vmax.f32 %v5655, %v5699
    %v5736 = vmax.f32 %v5656, %v5701
    %v5737 = vmax.f32 %v5657, %v5703
    %v5738 = vmax.f32 %v5658, %v5705
    %v5739 = vmax.f32 %v5659, %v5707
    %v5740 = vpack.c.bf16 %v5724, %v5724
    %v5741 = vpack.c.bf16 %v5725, %v5725
    %v5742 = vpack.c.bf16 %v5726, %v5726
    %v5743 = vpack.c.bf16 %v5727, %v5727
    %v5744 = vpack.c.bf16 %v5728, %v5728
    %v5745 = vpack.c.bf16 %v5729, %v5729
    %v5746 = vpack.c.bf16 %v5730, %v5730
    %v5747 = vpack.c.bf16 %v5731, %v5731
    %v5748 = vpack.c.bf16 %v5732, %v5732
    %v5749 = vpack.c.bf16 %v5733, %v5733
    %v5750 = vpack.c.bf16 %v5734, %v5734
    %v5751 = vpack.c.bf16 %v5735, %v5735
    %v5752 = vpack.c.bf16 %v5736, %v5736
    %v5753 = vpack.c.bf16 %v5737, %v5737
    %v5754 = vpack.c.bf16 %v5738, %v5738
    %v5755 = vpack.c.bf16 %v5739, %v5739
    %v5772 = vunpack.c.l.b16 %v5740
    %v5773 = vunpack.c.l.b16 %v5741
    %v5774 = vunpack.c.l.b16 %v5742
    %v5775 = vunpack.c.l.b16 %v5743
    %v5776 = vunpack.c.l.b16 %v5744
    %v5777 = vunpack.c.l.b16 %v5745
    %v5778 = vunpack.c.l.b16 %v5746
    %v5779 = vunpack.c.l.b16 %v5747
    %v5780 = vunpack.c.l.b16 %v5748
    %v5781 = vunpack.c.l.b16 %v5749
    %v5782 = vunpack.c.l.b16 %v5750
    %v5783 = vunpack.c.l.b16 %v5751
    %v5784 = vunpack.c.l.b16 %v5752
    %v5785 = vunpack.c.l.b16 %v5753
    %v5786 = vunpack.c.l.b16 %v5754
    %v5787 = vunpack.c.l.b16 %v5755
    %v5788 = vpack.c.b16 %v5772, %v5772
    %v5789 = vpack.c.b16 %v5773, %v5773
    %v5790 = vpack.c.b16 %v5774, %v5774
    %v5791 = vpack.c.b16 %v5775, %v5775
    %v5792 = vpack.c.b16 %v5776, %v5776
    %v5793 = vpack.c.b16 %v5777, %v5777
    %v5794 = vpack.c.b16 %v5778, %v5778
    %v5795 = vpack.c.b16 %v5779, %v5779
    %v5796 = vpack.c.b16 %v5780, %v5780
    %v5797 = vpack.c.b16 %v5781, %v5781
    %v5798 = vpack.c.b16 %v5782, %v5782
    %v5799 = vpack.c.b16 %v5783, %v5783
    %v5800 = vpack.c.b16 %v5784, %v5784
    %v5801 = vpack.c.b16 %v5785, %v5785
    %v5802 = vpack.c.b16 %v5786, %v5786
    %v5803 = vpack.c.b16 %v5787, %v5787
    %v5804 = vunpack.c.l.b16 %v5788
    %v5805 = vunpack.c.l.b16 %v5789
    %v5806 = vunpack.c.l.b16 %v5790
    %v5807 = vunpack.c.l.b16 %v5791
    %v5808 = vunpack.c.l.b16 %v5792
    %v5809 = vunpack.c.l.b16 %v5793
    %v5810 = vunpack.c.l.b16 %v5794
    %v5811 = vunpack.c.l.b16 %v5795
    %v5812 = vunpack.c.l.b16 %v5796
    %v5813 = vunpack.c.l.b16 %v5797
    %v5814 = vunpack.c.l.b16 %v5798
    %v5815 = vunpack.c.l.b16 %v5799
    %v5816 = vunpack.c.l.b16 %v5800
    %v5817 = vunpack.c.l.b16 %v5801
    %v5818 = vunpack.c.l.b16 %v5802
    %v5819 = vunpack.c.l.b16 %v5803
    %v5820 = vrot.slane %v5804, 7
    %v5821 = vrot.slane %v5805, 6
    %v5822 = vsel %vm2473, %v5821, %v5820
    %v5823 = vrot.slane %v5806, 5
    %v5824 = vsel %vm2476, %v5823, %v5822
    %v5825 = vrot.slane %v5807, 4
    %v5826 = vsel %vm2479, %v5825, %v5824
    %v5827 = vrot.slane %v5808, 7
    %v5828 = vrot.slane %v5809, 6
    %v5829 = vsel %vm2473, %v5828, %v5827
    %v5830 = vrot.slane %v5810, 5
    %v5831 = vsel %vm2476, %v5830, %v5829
    %v5832 = vrot.slane %v5811, 4
    %v5833 = vsel %vm2479, %v5832, %v5831
    %v5834 = vrot.slane %v5812, 7
    %v5835 = vrot.slane %v5813, 6
    %v5836 = vsel %vm2473, %v5835, %v5834
    %v5837 = vrot.slane %v5814, 5
    %v5838 = vsel %vm2476, %v5837, %v5836
    %v5839 = vrot.slane %v5815, 4
    %v5840 = vsel %vm2479, %v5839, %v5838
    %v5841 = vrot.slane %v5816, 7
    %v5842 = vrot.slane %v5817, 6
    %v5843 = vsel %vm2473, %v5842, %v5841
    %v5844 = vrot.slane %v5818, 5
    %v5845 = vsel %vm2476, %v5844, %v5843
    %v5846 = vrot.slane %v5819, 4
    %v5847 = vsel %vm2479, %v5846, %v5845
    %v5848 = vpack.c.b16 %v5826, %v5826
    %v5849 = vpack.c.b16 %v5833, %v5833
    %v5850 = vpack.c.b16 %v5840, %v5840
    %v5851 = vpack.c.b16 %v5847, %v5847
    %vm5856 = vcmask 518144
    %vm5857 = vsmask.f32 2306
    %vm5858 = vmand %vm5856, %vm5857
    %v5859 = vld [vmem:[%s171] sm:$0x7]
    %v5860 = vsel %vm5858, %v5848, %v5859
    %5861 = vst [vmem:[%s171] sm:$0x7] %v5860
    %v5862 = vld [vmem:[%s171 + $0x4] sm:$0x7]
    %v5863 = vsel %vm5858, %v5849, %v5862
    %5864 = vst [vmem:[%s171 + $0x4] sm:$0x7] %v5863
    %v5865 = vld [vmem:[%s171 + $0x8] sm:$0x7]
    %v5866 = vsel %vm5858, %v5850, %v5865
    %5867 = vst [vmem:[%s171 + $0x8] sm:$0x7] %v5866
    %v5868 = vld [vmem:[%s171 + $0xc] sm:$0x7]
    %v5869 = vsel %vm5858, %v5851, %v5868
    %5870 = vst [vmem:[%s171 + $0xc] sm:$0x7] %v5869
    %v5879 = vcombine.high %v5460, %v5460
    %v5881 = vunpack.c.l.s4 1983009808
    %v5882 = vunpack.c.0.s8 %v5881
    %v5883 = vlaneseq
    %v5884 = vshrl.u32 %v5883, 7
    %v5885 = vsub.s32 %v5882, %v5884
    %v5886 = vrot.slane %v5460, %v5885
    %v5888 = vunpack.c.l.s4 1983009808
    %v5889 = vunpack.c.0.s8 %v5888
    %v5890 = vlaneseq
    %v5891 = vshrl.u32 %v5890, 7
    %v5892 = vsub.s32 %v5889, %v5891
    %v5893 = vrot.slane %v5879, %v5892
    %v5894 = vcombine.high %v5886, %v5886
    %v5895 = vcombine.high %v5893, %v5893
    %v5896 = vcombine.high %v5461, %v5461
    %v5898 = vunpack.c.l.s4 1983009808
    %v5899 = vunpack.c.0.s8 %v5898
    %v5900 = vlaneseq
    %v5901 = vshrl.u32 %v5900, 7
    %v5902 = vsub.s32 %v5899, %v5901
    %v5903 = vrot.slane %v5461, %v5902
    %v5905 = vunpack.c.l.s4 1983009808
    %v5906 = vunpack.c.0.s8 %v5905
    %v5907 = vlaneseq
    %v5908 = vshrl.u32 %v5907, 7
    %v5909 = vsub.s32 %v5906, %v5908
    %v5910 = vrot.slane %v5896, %v5909
    %v5911 = vcombine.high %v5903, %v5903
    %v5912 = vcombine.high %v5910, %v5910
    %v5913 = vcombine.high %v5462, %v5462
    %v5915 = vunpack.c.l.s4 1983009808
    %v5916 = vunpack.c.0.s8 %v5915
    %v5917 = vlaneseq
    %v5918 = vshrl.u32 %v5917, 7
    %v5919 = vsub.s32 %v5916, %v5918
    %v5920 = vrot.slane %v5462, %v5919
    %v5922 = vunpack.c.l.s4 1983009808
    %v5923 = vunpack.c.0.s8 %v5922
    %v5924 = vlaneseq
    %v5925 = vshrl.u32 %v5924, 7
    %v5926 = vsub.s32 %v5923, %v5925
    %v5927 = vrot.slane %v5913, %v5926
    %v5928 = vcombine.high %v5920, %v5920
    %v5929 = vcombine.high %v5927, %v5927
    %v5930 = vcombine.high %v5463, %v5463
    %v5932 = vunpack.c.l.s4 1983009808
    %v5933 = vunpack.c.0.s8 %v5932
    %v5934 = vlaneseq
    %v5935 = vshrl.u32 %v5934, 7
    %v5936 = vsub.s32 %v5933, %v5935
    %v5937 = vrot.slane %v5463, %v5936
    %v5939 = vunpack.c.l.s4 1983009808
    %v5940 = vunpack.c.0.s8 %v5939
    %v5941 = vlaneseq
    %v5942 = vshrl.u32 %v5941, 7
    %v5943 = vsub.s32 %v5940, %v5942
    %v5944 = vrot.slane %v5930, %v5943
    %v5945 = vcombine.high %v5937, %v5937
    %v5946 = vcombine.high %v5944, %v5944
    %v5947 = vcombine.high %v5464, %v5464
    %v5949 = vunpack.c.l.s4 1983009808
    %v5950 = vunpack.c.0.s8 %v5949
    %v5951 = vlaneseq
    %v5952 = vshrl.u32 %v5951, 7
    %v5953 = vsub.s32 %v5950, %v5952
    %v5954 = vrot.slane %v5464, %v5953
    %v5956 = vunpack.c.l.s4 1983009808
    %v5957 = vunpack.c.0.s8 %v5956
    %v5958 = vlaneseq
    %v5959 = vshrl.u32 %v5958, 7
    %v5960 = vsub.s32 %v5957, %v5959
    %v5961 = vrot.slane %v5947, %v5960
    %v5962 = vcombine.high %v5954, %v5954
    %v5963 = vcombine.high %v5961, %v5961
    %v5964 = vcombine.high %v5465, %v5465
    %v5966 = vunpack.c.l.s4 1983009808
    %v5967 = vunpack.c.0.s8 %v5966
    %v5968 = vlaneseq
    %v5969 = vshrl.u32 %v5968, 7
    %v5970 = vsub.s32 %v5967, %v5969
    %v5971 = vrot.slane %v5465, %v5970
    %v5973 = vunpack.c.l.s4 1983009808
    %v5974 = vunpack.c.0.s8 %v5973
    %v5975 = vlaneseq
    %v5976 = vshrl.u32 %v5975, 7
    %v5977 = vsub.s32 %v5974, %v5976
    %v5978 = vrot.slane %v5964, %v5977
    %v5979 = vcombine.high %v5971, %v5971
    %v5980 = vcombine.high %v5978, %v5978
    %v5981 = vcombine.high %v5466, %v5466
    %v5983 = vunpack.c.l.s4 1983009808
    %v5984 = vunpack.c.0.s8 %v5983
    %v5985 = vlaneseq
    %v5986 = vshrl.u32 %v5985, 7
    %v5987 = vsub.s32 %v5984, %v5986
    %v5988 = vrot.slane %v5466, %v5987
    %v5990 = vunpack.c.l.s4 1983009808
    %v5991 = vunpack.c.0.s8 %v5990
    %v5992 = vlaneseq
    %v5993 = vshrl.u32 %v5992, 7
    %v5994 = vsub.s32 %v5991, %v5993
    %v5995 = vrot.slane %v5981, %v5994
    %v5996 = vcombine.high %v5988, %v5988
    %v5997 = vcombine.high %v5995, %v5995
    %v5998 = vcombine.high %v5467, %v5467
    %v6000 = vunpack.c.l.s4 1983009808
    %v6001 = vunpack.c.0.s8 %v6000
    %v6002 = vlaneseq
    %v6003 = vshrl.u32 %v6002, 7
    %v6004 = vsub.s32 %v6001, %v6003
    %v6005 = vrot.slane %v5467, %v6004
    %v6007 = vunpack.c.l.s4 1983009808
    %v6008 = vunpack.c.0.s8 %v6007
    %v6009 = vlaneseq
    %v6010 = vshrl.u32 %v6009, 7
    %v6011 = vsub.s32 %v6008, %v6010
    %v6012 = vrot.slane %v5998, %v6011
    %v6013 = vcombine.high %v6005, %v6005
    %v6014 = vcombine.high %v6012, %v6012
    %v6047 = vmax.f32 %v5886, %v5903
    %v6048 = vmax.f32 %v5894, %v5911
    %v6049 = vmax.f32 %v5893, %v5910
    %v6050 = vmax.f32 %v5895, %v5912
    %v6051 = vmax.f32 %v5920, %v5937
    %v6052 = vmax.f32 %v5928, %v5945
    %v6053 = vmax.f32 %v5927, %v5944
    %v6054 = vmax.f32 %v5929, %v5946
    %v6055 = vmax.f32 %v5954, %v5971
    %v6056 = vmax.f32 %v5962, %v5979
    %v6057 = vmax.f32 %v5961, %v5978
    %v6058 = vmax.f32 %v5963, %v5980
    %v6059 = vmax.f32 %v5988, %v6005
    %v6060 = vmax.f32 %v5996, %v6013
    %v6061 = vmax.f32 %v5995, %v6012
    %v6062 = vmax.f32 %v5997, %v6014
    %v6079 = vrot.slane %v6047, 7
    %v6080 = vrot.slane %v6079, 2
    %v6081 = vrot.slane %v6048, 7
    %v6082 = vrot.slane %v6081, 2
    %v6083 = vrot.slane %v6049, 7
    %v6084 = vrot.slane %v6083, 2
    %v6085 = vrot.slane %v6050, 7
    %v6086 = vrot.slane %v6085, 2
    %v6087 = vrot.slane %v6051, 7
    %v6088 = vrot.slane %v6087, 2
    %v6089 = vrot.slane %v6052, 7
    %v6090 = vrot.slane %v6089, 2
    %v6091 = vrot.slane %v6053, 7
    %v6092 = vrot.slane %v6091, 2
    %v6093 = vrot.slane %v6054, 7
    %v6094 = vrot.slane %v6093, 2
    %v6095 = vrot.slane %v6055, 7
    %v6096 = vrot.slane %v6095, 2
    %v6097 = vrot.slane %v6056, 7
    %v6098 = vrot.slane %v6097, 2
    %v6099 = vrot.slane %v6057, 7
    %v6100 = vrot.slane %v6099, 2
    %v6101 = vrot.slane %v6058, 7
    %v6102 = vrot.slane %v6101, 2
    %v6103 = vrot.slane %v6059, 7
    %v6104 = vrot.slane %v6103, 2
    %v6105 = vrot.slane %v6060, 7
    %v6106 = vrot.slane %v6105, 2
    %v6107 = vrot.slane %v6061, 7
    %v6108 = vrot.slane %v6107, 2
    %v6109 = vrot.slane %v6062, 7
    %v6110 = vrot.slane %v6109, 2
    %v6127 = vmax.f32 %v6047, %v6080
    %v6128 = vmax.f32 %v6048, %v6082
    %v6129 = vmax.f32 %v6049, %v6084
    %v6130 = vmax.f32 %v6050, %v6086
    %v6131 = vmax.f32 %v6051, %v6088
    %v6132 = vmax.f32 %v6052, %v6090
    %v6133 = vmax.f32 %v6053, %v6092
    %v6134 = vmax.f32 %v6054, %v6094
    %v6135 = vmax.f32 %v6055, %v6096
    %v6136 = vmax.f32 %v6056, %v6098
    %v6137 = vmax.f32 %v6057, %v6100
    %v6138 = vmax.f32 %v6058, %v6102
    %v6139 = vmax.f32 %v6059, %v6104
    %v6140 = vmax.f32 %v6060, %v6106
    %v6141 = vmax.f32 %v6061, %v6108
    %v6142 = vmax.f32 %v6062, %v6110
    %v6143 = vpack.c.bf16 %v6127, %v6127
    %v6144 = vpack.c.bf16 %v6128, %v6128
    %v6145 = vpack.c.bf16 %v6129, %v6129
    %v6146 = vpack.c.bf16 %v6130, %v6130
    %v6147 = vpack.c.bf16 %v6131, %v6131
    %v6148 = vpack.c.bf16 %v6132, %v6132
    %v6149 = vpack.c.bf16 %v6133, %v6133
    %v6150 = vpack.c.bf16 %v6134, %v6134
    %v6151 = vpack.c.bf16 %v6135, %v6135
    %v6152 = vpack.c.bf16 %v6136, %v6136
    %v6153 = vpack.c.bf16 %v6137, %v6137
    %v6154 = vpack.c.bf16 %v6138, %v6138
    %v6155 = vpack.c.bf16 %v6139, %v6139
    %v6156 = vpack.c.bf16 %v6140, %v6140
    %v6157 = vpack.c.bf16 %v6141, %v6141
    %v6158 = vpack.c.bf16 %v6142, %v6142
    %v6175 = vunpack.c.l.b16 %v6143
    %v6176 = vunpack.c.l.b16 %v6144
    %v6177 = vunpack.c.l.b16 %v6145
    %v6178 = vunpack.c.l.b16 %v6146
    %v6179 = vunpack.c.l.b16 %v6147
    %v6180 = vunpack.c.l.b16 %v6148
    %v6181 = vunpack.c.l.b16 %v6149
    %v6182 = vunpack.c.l.b16 %v6150
    %v6183 = vunpack.c.l.b16 %v6151
    %v6184 = vunpack.c.l.b16 %v6152
    %v6185 = vunpack.c.l.b16 %v6153
    %v6186 = vunpack.c.l.b16 %v6154
    %v6187 = vunpack.c.l.b16 %v6155
    %v6188 = vunpack.c.l.b16 %v6156
    %v6189 = vunpack.c.l.b16 %v6157
    %v6190 = vunpack.c.l.b16 %v6158
    %v6191 = vpack.c.b16 %v6175, %v6175
    %v6192 = vpack.c.b16 %v6176, %v6176
    %v6193 = vpack.c.b16 %v6177, %v6177
    %v6194 = vpack.c.b16 %v6178, %v6178
    %v6195 = vpack.c.b16 %v6179, %v6179
    %v6196 = vpack.c.b16 %v6180, %v6180
    %v6197 = vpack.c.b16 %v6181, %v6181
    %v6198 = vpack.c.b16 %v6182, %v6182
    %v6199 = vpack.c.b16 %v6183, %v6183
    %v6200 = vpack.c.b16 %v6184, %v6184
    %v6201 = vpack.c.b16 %v6185, %v6185
    %v6202 = vpack.c.b16 %v6186, %v6186
    %v6203 = vpack.c.b16 %v6187, %v6187
    %v6204 = vpack.c.b16 %v6188, %v6188
    %v6205 = vpack.c.b16 %v6189, %v6189
    %v6206 = vpack.c.b16 %v6190, %v6190
    %v6207 = vunpack.c.l.b16 %v6191
    %v6208 = vunpack.c.l.b16 %v6192
    %v6209 = vunpack.c.l.b16 %v6193
    %v6210 = vunpack.c.l.b16 %v6194
    %v6211 = vunpack.c.l.b16 %v6195
    %v6212 = vunpack.c.l.b16 %v6196
    %v6213 = vunpack.c.l.b16 %v6197
    %v6214 = vunpack.c.l.b16 %v6198
    %v6215 = vunpack.c.l.b16 %v6199
    %v6216 = vunpack.c.l.b16 %v6200
    %v6217 = vunpack.c.l.b16 %v6201
    %v6218 = vunpack.c.l.b16 %v6202
    %v6219 = vunpack.c.l.b16 %v6203
    %v6220 = vunpack.c.l.b16 %v6204
    %v6221 = vunpack.c.l.b16 %v6205
    %v6222 = vunpack.c.l.b16 %v6206
    %v6223 = vrot.slane %v6207, 7
    %v6224 = vrot.slane %v6208, 6
    %v6225 = vsel %vm2473, %v6224, %v6223
    %v6226 = vrot.slane %v6209, 5
    %v6227 = vsel %vm2476, %v6226, %v6225
    %v6228 = vrot.slane %v6210, 4
    %v6229 = vsel %vm2479, %v6228, %v6227
    %v6230 = vrot.slane %v6211, 7
    %v6231 = vrot.slane %v6212, 6
    %v6232 = vsel %vm2473, %v6231, %v6230
    %v6233 = vrot.slane %v6213, 5
    %v6234 = vsel %vm2476, %v6233, %v6232
    %v6235 = vrot.slane %v6214, 4
    %v6236 = vsel %vm2479, %v6235, %v6234
    %v6237 = vrot.slane %v6215, 7
    %v6238 = vrot.slane %v6216, 6
    %v6239 = vsel %vm2473, %v6238, %v6237
    %v6240 = vrot.slane %v6217, 5
    %v6241 = vsel %vm2476, %v6240, %v6239
    %v6242 = vrot.slane %v6218, 4
    %v6243 = vsel %vm2479, %v6242, %v6241
    %v6244 = vrot.slane %v6219, 7
    %v6245 = vrot.slane %v6220, 6
    %v6246 = vsel %vm2473, %v6245, %v6244
    %v6247 = vrot.slane %v6221, 5
    %v6248 = vsel %vm2476, %v6247, %v6246
    %v6249 = vrot.slane %v6222, 4
    %v6250 = vsel %vm2479, %v6249, %v6248
    %v6251 = vpack.c.b16 %v6229, %v6229
    %v6252 = vpack.c.b16 %v6236, %v6236
    %v6253 = vpack.c.b16 %v6243, %v6243
    %v6254 = vpack.c.b16 %v6250, %v6250
    %s6259 = scalar_lea.vmem [#allocation3], 28
    %v6260 = vld [vmem:[%s6259] sm:$0x7]
    %v6261 = vsel %vm5858, %v6251, %v6260
    %6262 = vst [vmem:[%s6259] sm:$0x7] %v6261
    %v6263 = vld [vmem:[%s6259 + $0x4] sm:$0x7]
    %v6264 = vsel %vm5858, %v6252, %v6263
    %6265 = vst [vmem:[%s6259 + $0x4] sm:$0x7] %v6264
    %v6266 = vld [vmem:[%s6259 + $0x8] sm:$0x7]
    %v6267 = vsel %vm5858, %v6253, %v6266
    %6268 = vst [vmem:[%s6259 + $0x8] sm:$0x7] %v6267
    %v6269 = vld [vmem:[%s6259 + $0xc] sm:$0x7]
    %v6270 = vsel %vm5858, %v6254, %v6269
    %6271 = vst [vmem:[%s6259 + $0xc] sm:$0x7] %v6270
    %v6272 = vld [vmem:[#allocation3] sm:$0x7]
    %v6273 = vld [vmem:[#allocation3 + $0x4] sm:$0x7]
    %v6274 = vld [vmem:[#allocation3 + $0x8] sm:$0x7]
    %v6275 = vld [vmem:[#allocation3 + $0xc] sm:$0x7]
    %v6276 = vld [vmem:[#allocation3 + $0x10] sm:$0x7]
    %v6277 = vld [vmem:[#allocation3 + $0x14] sm:$0x7]
    %v6283 = vunpack.c.l.s4 1983009808
    %v6284 = vunpack.c.0.s8 %v6283
    %v6285 = vlaneseq
    %v6286 = vshrl.u32 %v6285, 7
    %v6287 = vsub.s32 %v6284, %v6286
    %v6288 = vrot.slane %v6272, %v6287
    %v6289 = vcombine.high %v6288, %v6288
    %v6291 = vunpack.c.l.s4 1983009808
    %v6292 = vunpack.c.0.s8 %v6291
    %v6293 = vlaneseq
    %v6294 = vshrl.u32 %v6293, 7
    %v6295 = vsub.s32 %v6292, %v6294
    %v6296 = vrot.slane %v6273, %v6295
    %v6297 = vcombine.high %v6296, %v6296
    %v6299 = vunpack.c.l.s4 1983009808
    %v6300 = vunpack.c.0.s8 %v6299
    %v6301 = vlaneseq
    %v6302 = vshrl.u32 %v6301, 7
    %v6303 = vsub.s32 %v6300, %v6302
    %v6304 = vrot.slane %v6274, %v6303
    %v6305 = vcombine.high %v6304, %v6304
    %v6307 = vunpack.c.l.s4 1983009808
    %v6308 = vunpack.c.0.s8 %v6307
    %v6309 = vlaneseq
    %v6310 = vshrl.u32 %v6309, 7
    %v6311 = vsub.s32 %v6308, %v6310
    %v6312 = vrot.slane %v6275, %v6311
    %v6313 = vcombine.high %v6312, %v6312
    %vm6314 = vsmask.f32 1280
    %vm6315 = vsmask.f32 3336
    %vm6316 = vmor %vm6314, %vm6315
    %vm6317 = vsmask.f32 5392
    %vm6318 = vmor %vm6316, %vm6317
    %vm6319 = vsmask.f32 7448
    %vm6320 = vmor %vm6318, %vm6319
    %v6322 = vshrl.u32 %v6288, 16
    %v6324 = vrot.slane %v6322, 6
    %v6325 = vshll.u32 %v6288, 16
    %v6327 = vrot.slane %v6325, 7
    %v6328 = vor.u32 %v6324, %v6327
    %v6329 = vrot.slane %v6328, 2
    %v6331 = vshll.u32 %v6289, 16
    %v6333 = vrot.slane %v6331, 7
    %v6334 = vsel %vm6320, %v6329, %v6333
    %v6336 = vshrl.u32 %v6296, 16
    %v6338 = vrot.slane %v6336, 6
    %v6339 = vshll.u32 %v6296, 16
    %v6341 = vrot.slane %v6339, 7
    %v6342 = vor.u32 %v6338, %v6341
    %v6343 = vrot.slane %v6342, 2
    %v6345 = vshll.u32 %v6297, 16
    %v6347 = vrot.slane %v6345, 7
    %v6348 = vsel %vm6320, %v6343, %v6347
    %v6350 = vshrl.u32 %v6304, 16
    %v6352 = vrot.slane %v6350, 6
    %v6353 = vshll.u32 %v6304, 16
    %v6355 = vrot.slane %v6353, 7
    %v6356 = vor.u32 %v6352, %v6355
    %v6357 = vrot.slane %v6356, 2
    %v6359 = vshll.u32 %v6305, 16
    %v6361 = vrot.slane %v6359, 7
    %v6362 = vsel %vm6320, %v6357, %v6361
    %v6364 = vshrl.u32 %v6312, 16
    %v6366 = vrot.slane %v6364, 6
    %v6367 = vshll.u32 %v6312, 16
    %v6369 = vrot.slane %v6367, 7
    %v6370 = vor.u32 %v6366, %v6369
    %v6371 = vrot.slane %v6370, 2
    %v6373 = vshll.u32 %v6313, 16
    %v6375 = vrot.slane %v6373, 7
    %v6376 = vsel %vm6320, %v6371, %v6375
    %vm6377 = vcmask 1040384
    %vm6378 = vcmask 1042434
    %vm6379 = vmor %vm6377, %vm6378
    %vm6380 = vcmask 1044484
    %vm6381 = vmor %vm6379, %vm6380
    %vm6382 = vcmask 1046534
    %vm6383 = vmor %vm6381, %vm6382
    %v6384 = vrot.slane %v6288, 7
    %v6385 = vrot.slane %v6384, 2
    %v6386 = vrot.slane %v6289, 7
    %v6387 = vsel %vm6383, %v6385, %v6386
    %v6388 = vrot.slane %v6296, 7
    %v6389 = vrot.slane %v6388, 2
    %v6390 = vrot.slane %v6297, 7
    %v6391 = vsel %vm6383, %v6389, %v6390
    %v6392 = vrot.slane %v6304, 7
    %v6393 = vrot.slane %v6392, 2
    %v6394 = vrot.slane %v6305, 7
    %v6395 = vsel %vm6383, %v6393, %v6394
    %v6396 = vrot.slane %v6312, 7
    %v6397 = vrot.slane %v6396, 2
    %v6398 = vrot.slane %v6313, 7
    %v6399 = vsel %vm6383, %v6397, %v6398
    %v6402 = vunpack.c.l.s4 1983009808
    %v6403 = vunpack.c.0.s8 %v6402
    %v6404 = vlaneseq
    %v6405 = vshrl.u32 %v6404, 7
    %v6406 = vsub.s32 %v6403, %v6405
    %v6407 = vrot.slane %v6276, %v6406
    %v6408 = vcombine.high %v6407, %v6407
    %v6410 = vshrl.u32 %v6407, 16
    %v6412 = vrot.slane %v6410, 6
    %v6413 = vshll.u32 %v6407, 16
    %v6415 = vrot.slane %v6413, 7
    %v6416 = vor.u32 %v6412, %v6415
    %v6417 = vrot.slane %v6416, 2
    %v6419 = vshll.u32 %v6408, 16
    %v6421 = vrot.slane %v6419, 7
    %v6422 = vsel %vm6320, %v6417, %v6421
    %v6423 = vrot.slane %v6407, 7
    %v6424 = vrot.slane %v6423, 2
    %v6425 = vrot.slane %v6408, 7
    %v6426 = vsel %vm6383, %v6424, %v6425
    %v6429 = vunpack.c.l.s4 1983009808
    %v6430 = vunpack.c.0.s8 %v6429
    %v6431 = vlaneseq
    %v6432 = vshrl.u32 %v6431, 7
    %v6433 = vsub.s32 %v6430, %v6432
    %v6434 = vrot.slane %v6277, %v6433
    %v6435 = vcombine.high %v6434, %v6434
    %v6437 = vshrl.u32 %v6434, 16
    %v6439 = vrot.slane %v6437, 6
    %v6440 = vshll.u32 %v6434, 16
    %v6442 = vrot.slane %v6440, 7
    %v6443 = vor.u32 %v6439, %v6442
    %v6444 = vrot.slane %v6443, 2
    %v6446 = vshll.u32 %v6435, 16
    %v6448 = vrot.slane %v6446, 7
    %v6449 = vsel %vm6320, %v6444, %v6448
    %v6450 = vrot.slane %v6434, 7
    %v6451 = vrot.slane %v6450, 2
    %v6452 = vrot.slane %v6435, 7
    %v6453 = vsel %vm6383, %v6451, %v6452
    %v6454 = vcombine.low %v6272, %v6273
    %v6455 = vcombine.low %v6274, %v6275
    %v6457 = vunpack.c.l.s4 1983009808
    %v6458 = vunpack.c.0.s8 %v6457
    %v6459 = vlaneseq
    %v6460 = vshrl.u32 %v6459, 7
    %v6461 = vsub.s32 %v6458, %v6460
    %v6462 = vrot.slane %v6454, %v6461
    %v6464 = vunpack.c.l.s4 1983009808
    %v6465 = vunpack.c.0.s8 %v6464
    %v6466 = vlaneseq
    %v6467 = vshrl.u32 %v6466, 7
    %v6468 = vsub.s32 %v6465, %v6467
    %v6469 = vrot.slane %v6455, %v6468
    %v6470 = vcombine.low %v6462, %v6469
    %v6471 = vcombine.low %v6334, %v6348
    %v6472 = vcombine.low %v6362, %v6376
    %v6474 = vunpack.c.l.s4 1983009808
    %v6475 = vunpack.c.0.s8 %v6474
    %v6476 = vlaneseq
    %v6477 = vshrl.u32 %v6476, 7
    %v6478 = vsub.s32 %v6475, %v6477
    %v6479 = vrot.slane %v6471, %v6478
    %v6481 = vunpack.c.l.s4 1983009808
    %v6482 = vunpack.c.0.s8 %v6481
    %v6483 = vlaneseq
    %v6484 = vshrl.u32 %v6483, 7
    %v6485 = vsub.s32 %v6482, %v6484
    %v6486 = vrot.slane %v6472, %v6485
    %v6487 = vcombine.low %v6479, %v6486
    %6488 = vrot.lane.b32.xlu0 %v6487, 64
    %v6489 = vpop.permute.xlu0 %6488
    %v6490 = vcombine.low %v6387, %v6391
    %v6491 = vcombine.low %v6395, %v6399
    %v6493 = vunpack.c.l.s4 1983009808
    %v6494 = vunpack.c.0.s8 %v6493
    %v6495 = vlaneseq
    %v6496 = vshrl.u32 %v6495, 7
    %v6497 = vsub.s32 %v6494, %v6496
    %v6498 = vrot.slane %v6490, %v6497
    %v6500 = vunpack.c.l.s4 1983009808
    %v6501 = vunpack.c.0.s8 %v6500
    %v6502 = vlaneseq
    %v6503 = vshrl.u32 %v6502, 7
    %v6504 = vsub.s32 %v6501, %v6503
    %v6505 = vrot.slane %v6491, %v6504
    %v6506 = vcombine.low %v6498, %v6505
    %v6507 = vcombine.low %v6273, %v6274
    %v6508 = vcombine.low %v6275, %v6276
    %v6510 = vunpack.c.l.s4 1983009808
    %v6511 = vunpack.c.0.s8 %v6510
    %v6512 = vlaneseq
    %v6513 = vshrl.u32 %v6512, 7
    %v6514 = vsub.s32 %v6511, %v6513
    %v6515 = vrot.slane %v6507, %v6514
    %v6517 = vunpack.c.l.s4 1983009808
    %v6518 = vunpack.c.0.s8 %v6517
    %v6519 = vlaneseq
    %v6520 = vshrl.u32 %v6519, 7
    %v6521 = vsub.s32 %v6518, %v6520
    %v6522 = vrot.slane %v6508, %v6521
    %v6523 = vcombine.low %v6515, %v6522
    %6524 = vrot.lane.b32.xlu0 %v6523, 64
    %v6525 = vpop.permute.xlu0 %6524
    %v6526 = vcombine.low %v6348, %v6362
    %v6527 = vcombine.low %v6376, %v6422
    %v6529 = vunpack.c.l.s4 1983009808
    %v6530 = vunpack.c.0.s8 %v6529
    %v6531 = vlaneseq
    %v6532 = vshrl.u32 %v6531, 7
    %v6533 = vsub.s32 %v6530, %v6532
    %v6534 = vrot.slane %v6526, %v6533
    %v6536 = vunpack.c.l.s4 1983009808
    %v6537 = vunpack.c.0.s8 %v6536
    %v6538 = vlaneseq
    %v6539 = vshrl.u32 %v6538, 7
    %v6540 = vsub.s32 %v6537, %v6539
    %v6541 = vrot.slane %v6527, %v6540
    %v6542 = vcombine.low %v6534, %v6541
    %v6543 = vcombine.low %v6391, %v6395
    %v6544 = vcombine.low %v6399, %v6426
    %v6546 = vunpack.c.l.s4 1983009808
    %v6547 = vunpack.c.0.s8 %v6546
    %v6548 = vlaneseq
    %v6549 = vshrl.u32 %v6548, 7
    %v6550 = vsub.s32 %v6547, %v6549
    %v6551 = vrot.slane %v6543, %v6550
    %v6553 = vunpack.c.l.s4 1983009808
    %v6554 = vunpack.c.0.s8 %v6553
    %v6555 = vlaneseq
    %v6556 = vshrl.u32 %v6555, 7
    %v6557 = vsub.s32 %v6554, %v6556
    %v6558 = vrot.slane %v6544, %v6557
    %v6559 = vcombine.low %v6551, %v6558
    %6560 = vrot.lane.b32.xlu0 %v6559, 64
    %v6561 = vpop.permute.xlu0 %6560
    %v6562 = vcombine.low %v6276, %v6277
    %v6564 = vunpack.c.l.s4 1983009808
    %v6565 = vunpack.c.0.s8 %v6564
    %v6566 = vlaneseq
    %v6567 = vshrl.u32 %v6566, 7
    %v6568 = vsub.s32 %v6565, %v6567
    %v6569 = vrot.slane %v6562, %v6568
    %v6570 = vcombine.low %v6469, %v6569
    %v6571 = vcombine.low %v6422, %v6449
    %v6573 = vunpack.c.l.s4 1983009808
    %v6574 = vunpack.c.0.s8 %v6573
    %v6575 = vlaneseq
    %v6576 = vshrl.u32 %v6575, 7
    %v6577 = vsub.s32 %v6574, %v6576
    %v6578 = vrot.slane %v6571, %v6577
    %v6579 = vcombine.low %v6486, %v6578
    %6580 = vrot.lane.b32.xlu0 %v6579, 64
    %v6581 = vpop.permute.xlu0 %6580
    %v6582 = vcombine.low %v6426, %v6453
    %v6584 = vunpack.c.l.s4 1983009808
    %v6585 = vunpack.c.0.s8 %v6584
    %v6586 = vlaneseq
    %v6587 = vshrl.u32 %v6586, 7
    %v6588 = vsub.s32 %v6585, %v6587
    %v6589 = vrot.slane %v6582, %v6588
    %v6590 = vcombine.low %v6505, %v6589
    %v6593 = vsel %vm4600, %v6470, %v6489
    %v6597 = vsel %vm4600, %v6506, %v6525
    %v6601 = vsel %vm4600, %v6542, %v6561
    %v6605 = vsel %vm4600, %v6570, %v6581
    %s6607 = scalar_lea.vmem [#allocation3], 24
    %v6608 = vld [vmem:[%s6607] sm:$0x7]
    %v6609 = vld [vmem:[%s6607 + $0x4] sm:$0x7]
    %v6610 = vld [vmem:[%s6607 + $0x8] sm:$0x7]
    %v6611 = vld [vmem:[%s6607 + $0xc] sm:$0x7]
    %v6612 = vld [vmem:[%s6607 + $0x10] sm:$0x7]
    %v6613 = vld [vmem:[%s6607 + $0x14] sm:$0x7]
    %v6619 = vunpack.c.l.s4 1983009808
    %v6620 = vunpack.c.0.s8 %v6619
    %v6621 = vlaneseq
    %v6622 = vshrl.u32 %v6621, 7
    %v6623 = vsub.s32 %v6620, %v6622
    %v6624 = vrot.slane %v6608, %v6623
    %v6625 = vcombine.high %v6624, %v6624
    %v6627 = vunpack.c.l.s4 1983009808
    %v6628 = vunpack.c.0.s8 %v6627
    %v6629 = vlaneseq
    %v6630 = vshrl.u32 %v6629, 7
    %v6631 = vsub.s32 %v6628, %v6630
    %v6632 = vrot.slane %v6609, %v6631
    %v6633 = vcombine.high %v6632, %v6632
    %v6635 = vunpack.c.l.s4 1983009808
    %v6636 = vunpack.c.0.s8 %v6635
    %v6637 = vlaneseq
    %v6638 = vshrl.u32 %v6637, 7
    %v6639 = vsub.s32 %v6636, %v6638
    %v6640 = vrot.slane %v6610, %v6639
    %v6641 = vcombine.high %v6640, %v6640
    %v6643 = vunpack.c.l.s4 1983009808
    %v6644 = vunpack.c.0.s8 %v6643
    %v6645 = vlaneseq
    %v6646 = vshrl.u32 %v6645, 7
    %v6647 = vsub.s32 %v6644, %v6646
    %v6648 = vrot.slane %v6611, %v6647
    %v6649 = vcombine.high %v6648, %v6648
    %v6651 = vshrl.u32 %v6624, 16
    %v6653 = vrot.slane %v6651, 6
    %v6654 = vshll.u32 %v6624, 16
    %v6656 = vrot.slane %v6654, 7
    %v6657 = vor.u32 %v6653, %v6656
    %v6658 = vrot.slane %v6657, 2
    %v6660 = vshll.u32 %v6625, 16
    %v6662 = vrot.slane %v6660, 7
    %v6663 = vsel %vm6320, %v6658, %v6662
    %v6665 = vshrl.u32 %v6632, 16
    %v6667 = vrot.slane %v6665, 6
    %v6668 = vshll.u32 %v6632, 16
    %v6670 = vrot.slane %v6668, 7
    %v6671 = vor.u32 %v6667, %v6670
    %v6672 = vrot.slane %v6671, 2
    %v6674 = vshll.u32 %v6633, 16
    %v6676 = vrot.slane %v6674, 7
    %v6677 = vsel %vm6320, %v6672, %v6676
    %v6679 = vshrl.u32 %v6640, 16
    %v6681 = vrot.slane %v6679, 6
    %v6682 = vshll.u32 %v6640, 16
    %v6684 = vrot.slane %v6682, 7
    %v6685 = vor.u32 %v6681, %v6684
    %v6686 = vrot.slane %v6685, 2
    %v6688 = vshll.u32 %v6641, 16
    %v6690 = vrot.slane %v6688, 7
    %v6691 = vsel %vm6320, %v6686, %v6690
    %v6693 = vshrl.u32 %v6648, 16
    %v6695 = vrot.slane %v6693, 6
    %v6696 = vshll.u32 %v6648, 16
    %v6698 = vrot.slane %v6696, 7
    %v6699 = vor.u32 %v6695, %v6698
    %v6700 = vrot.slane %v6699, 2
    %v6702 = vshll.u32 %v6649, 16
    %v6704 = vrot.slane %v6702, 7
    %v6705 = vsel %vm6320, %v6700, %v6704
    %v6706 = vrot.slane %v6624, 7
    %v6707 = vrot.slane %v6706, 2
    %v6708 = vrot.slane %v6625, 7
    %v6709 = vsel %vm6383, %v6707, %v6708
    %v6710 = vrot.slane %v6632, 7
    %v6711 = vrot.slane %v6710, 2
    %v6712 = vrot.slane %v6633, 7
    %v6713 = vsel %vm6383, %v6711, %v6712
    %v6714 = vrot.slane %v6640, 7
    %v6715 = vrot.slane %v6714, 2
    %v6716 = vrot.slane %v6641, 7
    %v6717 = vsel %vm6383, %v6715, %v6716
    %v6718 = vrot.slane %v6648, 7
    %v6719 = vrot.slane %v6718, 2
    %v6720 = vrot.slane %v6649, 7
    %v6721 = vsel %vm6383, %v6719, %v6720
    %v6724 = vunpack.c.l.s4 1983009808
    %v6725 = vunpack.c.0.s8 %v6724
    %v6726 = vlaneseq
    %v6727 = vshrl.u32 %v6726, 7
    %v6728 = vsub.s32 %v6725, %v6727
    %v6729 = vrot.slane %v6612, %v6728
    %v6730 = vcombine.high %v6729, %v6729
    %v6732 = vshrl.u32 %v6729, 16
    %v6734 = vrot.slane %v6732, 6
    %v6735 = vshll.u32 %v6729, 16
    %v6737 = vrot.slane %v6735, 7
    %v6738 = vor.u32 %v6734, %v6737
    %v6739 = vrot.slane %v6738, 2
    %v6741 = vshll.u32 %v6730, 16
    %v6743 = vrot.slane %v6741, 7
    %v6744 = vsel %vm6320, %v6739, %v6743
    %v6745 = vrot.slane %v6729, 7
    %v6746 = vrot.slane %v6745, 2
    %v6747 = vrot.slane %v6730, 7
    %v6748 = vsel %vm6383, %v6746, %v6747
    %v6751 = vunpack.c.l.s4 1983009808
    %v6752 = vunpack.c.0.s8 %v6751
    %v6753 = vlaneseq
    %v6754 = vshrl.u32 %v6753, 7
    %v6755 = vsub.s32 %v6752, %v6754
    %v6756 = vrot.slane %v6613, %v6755
    %v6757 = vcombine.high %v6756, %v6756
    %v6759 = vshrl.u32 %v6756, 16
    %v6761 = vrot.slane %v6759, 6
    %v6762 = vshll.u32 %v6756, 16
    %v6764 = vrot.slane %v6762, 7
    %v6765 = vor.u32 %v6761, %v6764
    %v6766 = vrot.slane %v6765, 2
    %v6768 = vshll.u32 %v6757, 16
    %v6770 = vrot.slane %v6768, 7
    %v6771 = vsel %vm6320, %v6766, %v6770
    %v6772 = vrot.slane %v6756, 7
    %v6773 = vrot.slane %v6772, 2
    %v6774 = vrot.slane %v6757, 7
    %v6775 = vsel %vm6383, %v6773, %v6774
    %v6776 = vcombine.low %v6608, %v6609
    %v6777 = vcombine.low %v6610, %v6611
    %v6779 = vunpack.c.l.s4 1983009808
    %v6780 = vunpack.c.0.s8 %v6779
    %v6781 = vlaneseq
    %v6782 = vshrl.u32 %v6781, 7
    %v6783 = vsub.s32 %v6780, %v6782
    %v6784 = vrot.slane %v6776, %v6783
    %v6786 = vunpack.c.l.s4 1983009808
    %v6787 = vunpack.c.0.s8 %v6786
    %v6788 = vlaneseq
    %v6789 = vshrl.u32 %v6788, 7
    %v6790 = vsub.s32 %v6787, %v6789
    %v6791 = vrot.slane %v6777, %v6790
    %v6792 = vcombine.low %v6784, %v6791
    %v6793 = vcombine.low %v6663, %v6677
    %v6794 = vcombine.low %v6691, %v6705
    %v6796 = vunpack.c.l.s4 1983009808
    %v6797 = vunpack.c.0.s8 %v6796
    %v6798 = vlaneseq
    %v6799 = vshrl.u32 %v6798, 7
    %v6800 = vsub.s32 %v6797, %v6799
    %v6801 = vrot.slane %v6793, %v6800
    %v6803 = vunpack.c.l.s4 1983009808
    %v6804 = vunpack.c.0.s8 %v6803
    %v6805 = vlaneseq
    %v6806 = vshrl.u32 %v6805, 7
    %v6807 = vsub.s32 %v6804, %v6806
    %v6808 = vrot.slane %v6794, %v6807
    %v6809 = vcombine.low %v6801, %v6808
    %6810 = vrot.lane.b32.xlu0 %v6809, 64
    %v6811 = vpop.permute.xlu0 %6810
    %v6812 = vcombine.low %v6709, %v6713
    %v6813 = vcombine.low %v6717, %v6721
    %v6815 = vunpack.c.l.s4 1983009808
    %v6816 = vunpack.c.0.s8 %v6815
    %v6817 = vlaneseq
    %v6818 = vshrl.u32 %v6817, 7
    %v6819 = vsub.s32 %v6816, %v6818
    %v6820 = vrot.slane %v6812, %v6819
    %v6822 = vunpack.c.l.s4 1983009808
    %v6823 = vunpack.c.0.s8 %v6822
    %v6824 = vlaneseq
    %v6825 = vshrl.u32 %v6824, 7
    %v6826 = vsub.s32 %v6823, %v6825
    %v6827 = vrot.slane %v6813, %v6826
    %v6828 = vcombine.low %v6820, %v6827
    %v6829 = vcombine.low %v6609, %v6610
    %v6830 = vcombine.low %v6611, %v6612
    %v6832 = vunpack.c.l.s4 1983009808
    %v6833 = vunpack.c.0.s8 %v6832
    %v6834 = vlaneseq
    %v6835 = vshrl.u32 %v6834, 7
    %v6836 = vsub.s32 %v6833, %v6835
    %v6837 = vrot.slane %v6829, %v6836
    %v6839 = vunpack.c.l.s4 1983009808
    %v6840 = vunpack.c.0.s8 %v6839
    %v6841 = vlaneseq
    %v6842 = vshrl.u32 %v6841, 7
    %v6843 = vsub.s32 %v6840, %v6842
    %v6844 = vrot.slane %v6830, %v6843
    %v6845 = vcombine.low %v6837, %v6844
    %6846 = vrot.lane.b32.xlu0 %v6845, 64
    %v6847 = vpop.permute.xlu0 %6846
    %v6848 = vcombine.low %v6677, %v6691
    %v6849 = vcombine.low %v6705, %v6744
    %v6851 = vunpack.c.l.s4 1983009808
    %v6852 = vunpack.c.0.s8 %v6851
    %v6853 = vlaneseq
    %v6854 = vshrl.u32 %v6853, 7
    %v6855 = vsub.s32 %v6852, %v6854
    %v6856 = vrot.slane %v6848, %v6855
    %v6858 = vunpack.c.l.s4 1983009808
    %v6859 = vunpack.c.0.s8 %v6858
    %v6860 = vlaneseq
    %v6861 = vshrl.u32 %v6860, 7
    %v6862 = vsub.s32 %v6859, %v6861
    %v6863 = vrot.slane %v6849, %v6862
    %v6864 = vcombine.low %v6856, %v6863
    %v6865 = vcombine.low %v6713, %v6717
    %v6866 = vcombine.low %v6721, %v6748
    %v6868 = vunpack.c.l.s4 1983009808
    %v6869 = vunpack.c.0.s8 %v6868
    %v6870 = vlaneseq
    %v6871 = vshrl.u32 %v6870, 7
    %v6872 = vsub.s32 %v6869, %v6871
    %v6873 = vrot.slane %v6865, %v6872
    %v6875 = vunpack.c.l.s4 1983009808
    %v6876 = vunpack.c.0.s8 %v6875
    %v6877 = vlaneseq
    %v6878 = vshrl.u32 %v6877, 7
    %v6879 = vsub.s32 %v6876, %v6878
    %v6880 = vrot.slane %v6866, %v6879
    %v6881 = vcombine.low %v6873, %v6880
    %6882 = vrot.lane.b32.xlu0 %v6881, 64
    %v6883 = vpop.permute.xlu0 %6882
    %v6884 = vcombine.low %v6612, %v6613
    %v6886 = vunpack.c.l.s4 1983009808
    %v6887 = vunpack.c.0.s8 %v6886
    %v6888 = vlaneseq
    %v6889 = vshrl.u32 %v6888, 7
    %v6890 = vsub.s32 %v6887, %v6889
    %v6891 = vrot.slane %v6884, %v6890
    %v6892 = vcombine.low %v6791, %v6891
    %v6893 = vcombine.low %v6744, %v6771
    %v6895 = vunpack.c.l.s4 1983009808
    %v6896 = vunpack.c.0.s8 %v6895
    %v6897 = vlaneseq
    %v6898 = vshrl.u32 %v6897, 7
    %v6899 = vsub.s32 %v6896, %v6898
    %v6900 = vrot.slane %v6893, %v6899
    %v6901 = vcombine.low %v6808, %v6900
    %6902 = vrot.lane.b32.xlu0 %v6901, 64
    %v6903 = vpop.permute.xlu0 %6902
    %v6904 = vcombine.low %v6748, %v6775
    %v6906 = vunpack.c.l.s4 1983009808
    %v6907 = vunpack.c.0.s8 %v6906
    %v6908 = vlaneseq
    %v6909 = vshrl.u32 %v6908, 7
    %v6910 = vsub.s32 %v6907, %v6909
    %v6911 = vrot.slane %v6904, %v6910
    %v6912 = vcombine.low %v6827, %v6911
    %v6915 = vsel %vm4600, %v6792, %v6811
    %v6919 = vsel %vm4600, %v6828, %v6847
    %v6923 = vsel %vm4600, %v6864, %v6883
    %v6927 = vsel %vm4600, %v6892, %v6903
    %v6929 = vld [vmem:[%s7] sm:$0xf]
    %v6930 = vld [vmem:[%s7 + $0x4] sm:$0xf]
    %v6931 = vld [vmem:[%s7 + $0x8] sm:$0xf]
    %v6932 = vld [vmem:[%s7 + $0xc] sm:$0xf]
    %v6933 = vld [vmem:[%s7 + $0x10] sm:$0xf]
    %v6934 = vld [vmem:[%s7 + $0x14] sm:$0xf]
    %v6935 = vld [vmem:[%s7 + $0x18] sm:$0xf]
    %v6936 = vld [vmem:[%s7 + $0x1c] sm:$0xf]
    %v6937 = vld [vmem:[%s7 + $0x20] sm:$0xf]
    %v6938 = vld [vmem:[%s7 + $0x24] sm:$0xf]
    %v6939 = vld [vmem:[%s7 + $0x28] sm:$0xf]
    %v6940 = vld [vmem:[%s7 + $0x2c] sm:$0xf]
    %v6941 = vld [vmem:[%s7 + $0x30] sm:$0xf]
    %v6942 = vld [vmem:[%s7 + $0x34] sm:$0xf]
    %v6943 = vld [vmem:[%s7 + $0x38] sm:$0xf]
    %v6944 = vld [vmem:[%s7 + $0x3c] sm:$0xf]
    %v6945 = vld [vmem:[%s7 + $0x40] sm:$0xf]
    %v6946 = vld [vmem:[%s7 + $0x44] sm:$0xf]
    %v6947 = vld [vmem:[%s7 + $0x48] sm:$0xf]
    %v6948 = vld [vmem:[%s7 + $0x4c] sm:$0xf]
    %v6949 = vld [vmem:[%s7 + $0x50] sm:$0xf]
    %v6950 = vld [vmem:[%s7 + $0x54] sm:$0xf]
    %v6951 = vld [vmem:[%s7 + $0x58] sm:$0xf]
    %v6952 = vld [vmem:[%s7 + $0x5c] sm:$0xf]
    %v6953 = vld [vmem:[%s7 + $0x60] sm:$0xf]
    %v6954 = vld [vmem:[%s7 + $0x64] sm:$0xf]
    %v6955 = vld [vmem:[%s7 + $0x68] sm:$0xf]
    %v6956 = vld [vmem:[%s7 + $0x6c] sm:$0xf]
    %v6957 = vld [vmem:[%s7 + $0x70] sm:$0xf]
    %v6958 = vld [vmem:[%s7 + $0x74] sm:$0xf]
    %v6959 = vld [vmem:[%s7 + $0x78] sm:$0xf]
    %v6960 = vld [vmem:[%s7 + $0x7c] sm:$0xf]
    %v6961 = vld [vmem:[%s7 + $0x80] sm:$0xf]
    %v6962 = vld [vmem:[%s7 + $0x84] sm:$0xf]
    %v6963 = vld [vmem:[%s7 + $0x88] sm:$0xf]
    %v6964 = vld [vmem:[%s7 + $0x8c] sm:$0xf]
    %v6965 = vld [vmem:[%s7 + $0x90] sm:$0xf]
    %v6966 = vld [vmem:[%s7 + $0x94] sm:$0xf]
    %v6967 = vld [vmem:[%s7 + $0x98] sm:$0xf]
    %v6968 = vld [vmem:[%s7 + $0x9c] sm:$0xf]
    %v6969 = vld [vmem:[%s7 + $0xa0] sm:$0xf]
    %v6970 = vld [vmem:[%s7 + $0xa4] sm:$0xf]
    %v6971 = vld [vmem:[%s7 + $0xa8] sm:$0xf]
    %v6972 = vld [vmem:[%s7 + $0xac] sm:$0xf]
    %v6973 = vld [vmem:[%s7 + $0xb0] sm:$0xf]
    %v6974 = vld [vmem:[%s7 + $0xb4] sm:$0xf]
    %v6975 = vld [vmem:[%s7 + $0xb8] sm:$0xf]
    %v6976 = vld [vmem:[%s7 + $0xbc] sm:$0xf]
    %v6977 = vld [vmem:[%s7 + $0xc0] sm:$0xf]
    %v6978 = vld [vmem:[%s7 + $0xc4] sm:$0xf]
    %v6979 = vld [vmem:[%s7 + $0xc8] sm:$0xf]
    %v6980 = vld [vmem:[%s7 + $0xcc] sm:$0xf]
    %v6981 = vld [vmem:[%s7 + $0xd0] sm:$0xf]
    %v6982 = vld [vmem:[%s7 + $0xd4] sm:$0xf]
    %v6983 = vld [vmem:[%s7 + $0xd8] sm:$0xf]
    %v6984 = vld [vmem:[%s7 + $0xdc] sm:$0xf]
    %v6985 = vld [vmem:[%s7 + $0xe0] sm:$0xf]
    %v6986 = vld [vmem:[%s7 + $0xe4] sm:$0xf]
    %v6987 = vld [vmem:[%s7 + $0xe8] sm:$0xf]
    %v6988 = vld [vmem:[%s7 + $0xec] sm:$0xf]
    %v6989 = vld [vmem:[%s7 + $0xf0] sm:$0xf]
    %v6990 = vld [vmem:[%s7 + $0xf4] sm:$0xf]
    %v6991 = vld [vmem:[%s7 + $0xf8] sm:$0xf]
    %v6992 = vld [vmem:[%s7 + $0xfc] sm:$0xf]
    %v6993 = vld [vmem:[%s7 + $0x100] sm:$0xf]
    %v6994 = vld [vmem:[%s7 + $0x104] sm:$0xf]
    %v6995 = vld [vmem:[%s7 + $0x108] sm:$0xf]
    %v6996 = vld [vmem:[%s7 + $0x10c] sm:$0xf]
    %v6997 = vld [vmem:[%s7 + $0x110] sm:$0xf]
    %v6998 = vld [vmem:[%s7 + $0x114] sm:$0xf]
    %v6999 = vld [vmem:[%s7 + $0x118] sm:$0xf]
    %v7000 = vld [vmem:[%s7 + $0x11c] sm:$0xf]
    %v7073 = vunpack.c.l.b16 %v6929
    %v7074 = vunpack.c.l.b16 %v6930
    %v7075 = vunpack.c.l.b16 %v6931
    %v7076 = vunpack.c.l.b16 %v6932
    %v7077 = vunpack.c.l.b16 %v6933
    %v7078 = vunpack.c.l.b16 %v6934
    %v7079 = vunpack.c.l.b16 %v6935
    %v7080 = vunpack.c.l.b16 %v6936
    %v7081 = vunpack.c.l.b16 %v6937
    %v7082 = vunpack.c.l.b16 %v6938
    %v7083 = vunpack.c.l.b16 %v6939
    %v7084 = vunpack.c.l.b16 %v6940
    %v7085 = vunpack.c.l.b16 %v6941
    %v7086 = vunpack.c.l.b16 %v6942
    %v7087 = vunpack.c.l.b16 %v6943
    %v7088 = vunpack.c.l.b16 %v6944
    %v7089 = vunpack.c.l.b16 %v6945
    %v7090 = vunpack.c.l.b16 %v6946
    %v7091 = vunpack.c.l.b16 %v6947
    %v7092 = vunpack.c.l.b16 %v6948
    %v7093 = vunpack.c.l.b16 %v6949
    %v7094 = vunpack.c.l.b16 %v6950
    %v7095 = vunpack.c.l.b16 %v6951
    %v7096 = vunpack.c.l.b16 %v6952
    %v7097 = vunpack.c.l.b16 %v6953
    %v7098 = vunpack.c.l.b16 %v6954
    %v7099 = vunpack.c.l.b16 %v6955
    %v7100 = vunpack.c.l.b16 %v6956
    %v7101 = vunpack.c.l.b16 %v6957
    %v7102 = vunpack.c.l.b16 %v6958
    %v7103 = vunpack.c.l.b16 %v6959
    %v7104 = vunpack.c.l.b16 %v6960
    %v7105 = vunpack.c.l.b16 %v6961
    %v7106 = vunpack.c.l.b16 %v6962
    %v7107 = vunpack.c.l.b16 %v6963
    %v7108 = vunpack.c.l.b16 %v6964
    %v7109 = vunpack.c.l.b16 %v6965
    %v7110 = vunpack.c.l.b16 %v6966
    %v7111 = vunpack.c.l.b16 %v6967
    %v7112 = vunpack.c.l.b16 %v6968
    %v7113 = vunpack.c.l.b16 %v6969
    %v7114 = vunpack.c.l.b16 %v6970
    %v7115 = vunpack.c.l.b16 %v6971
    %v7116 = vunpack.c.l.b16 %v6972
    %v7117 = vunpack.c.l.b16 %v6973
    %v7118 = vunpack.c.l.b16 %v6974
    %v7119 = vunpack.c.l.b16 %v6975
    %v7120 = vunpack.c.l.b16 %v6976
    %v7121 = vunpack.c.l.b16 %v6977
    %v7122 = vunpack.c.l.b16 %v6978
    %v7123 = vunpack.c.l.b16 %v6979
    %v7124 = vunpack.c.l.b16 %v6980
    %v7125 = vunpack.c.l.b16 %v6981
    %v7126 = vunpack.c.l.b16 %v6982
    %v7127 = vunpack.c.l.b16 %v6983
    %v7128 = vunpack.c.l.b16 %v6984
    %v7129 = vunpack.c.l.b16 %v6985
    %v7130 = vunpack.c.l.b16 %v6986
    %v7131 = vunpack.c.l.b16 %v6987
    %v7132 = vunpack.c.l.b16 %v6988
    %v7133 = vunpack.c.l.b16 %v6989
    %v7134 = vunpack.c.l.b16 %v6990
    %v7135 = vunpack.c.l.b16 %v6991
    %v7136 = vunpack.c.l.b16 %v6992
    %v7137 = vunpack.c.l.b16 %v6993
    %v7138 = vunpack.c.l.b16 %v6994
    %v7139 = vunpack.c.l.b16 %v6995
    %v7140 = vunpack.c.l.b16 %v6996
    %v7141 = vunpack.c.l.b16 %v6997
    %v7142 = vunpack.c.l.b16 %v6998
    %v7143 = vunpack.c.l.b16 %v6999
    %v7144 = vunpack.c.l.b16 %v7000
    %v7145 = vpack.c.b16 %v7074, %v7073
    %v7146 = vpack.c.b16 %v7076, %v7075
    %v7147 = vpack.c.b16 %v7078, %v7077
    %v7148 = vpack.c.b16 %v7080, %v7079
    %v7149 = vpack.c.b16 %v7082, %v7081
    %v7150 = vpack.c.b16 %v7084, %v7083
    %v7151 = vpack.c.b16 %v7086, %v7085
    %v7152 = vpack.c.b16 %v7088, %v7087
    %v7153 = vpack.c.b16 %v7090, %v7089
    %v7154 = vpack.c.b16 %v7092, %v7091
    %v7155 = vpack.c.b16 %v7094, %v7093
    %v7156 = vpack.c.b16 %v7096, %v7095
    %v7157 = vpack.c.b16 %v7098, %v7097
    %v7158 = vpack.c.b16 %v7100, %v7099
    %v7159 = vpack.c.b16 %v7102, %v7101
    %v7160 = vpack.c.b16 %v7104, %v7103
    %v7161 = vpack.c.b16 %v7106, %v7105
    %v7162 = vpack.c.b16 %v7108, %v7107
    %v7163 = vpack.c.b16 %v7110, %v7109
    %v7164 = vpack.c.b16 %v7112, %v7111
    %v7165 = vpack.c.b16 %v7114, %v7113
    %v7166 = vpack.c.b16 %v7116, %v7115
    %v7167 = vpack.c.b16 %v7118, %v7117
    %v7168 = vpack.c.b16 %v7120, %v7119
    %v7169 = vpack.c.b16 %v7122, %v7121
    %v7170 = vpack.c.b16 %v7124, %v7123
    %v7171 = vpack.c.b16 %v7126, %v7125
    %v7172 = vpack.c.b16 %v7128, %v7127
    %v7173 = vpack.c.b16 %v7130, %v7129
    %v7174 = vpack.c.b16 %v7132, %v7131
    %v7175 = vpack.c.b16 %v7134, %v7133
    %v7176 = vpack.c.b16 %v7136, %v7135
    %v7177 = vpack.c.b16 %v7138, %v7137
    %v7178 = vpack.c.b16 %v7140, %v7139
    %v7179 = vpack.c.b16 %v7142, %v7141
    %v7180 = vpack.c.b16 %v7144, %v7143
    %v7218 = vsel %vm4600, %v6590, 0
    %v7221 = vsel %vm4600, %v6912, 0
    %7223 = vmatprep.subr.bf16.mxu0 0
    %7224 = vmatpush1.bf16.msra.mxu0 %v7152
    %7225 = vmatprep.subr.bf16.mxu0 0
    %7226 = vmatpush1.bf16.msra.mxu0 %v7151
    %7227 = vmatprep.subr.bf16.mxu0 0
    %7228 = vmatpush1.bf16.msra.mxu0 %v7150
    %7229 = vmatprep.subr.bf16.mxu0 0
    %7230 = vmatpush1.bf16.msra.mxu0 %v7149
    %7231 = vmatprep.subr.bf16.mxu0 0
    %7232 = vmatpush1.bf16.msra.mxu0 %v7148
    %7233 = vmatprep.subr.bf16.mxu0 0
    %7234 = vmatpush1.bf16.msra.mxu0 %v7147
    %7235 = vmatprep.subr.bf16.mxu0 0
    %7236 = vmatpush1.bf16.msra.mxu0 %v7146
    %7237 = vmatprep.subr.bf16.mxu0 0
    %7238 = vmatpush1.bf16.msra.mxu0 %v7145
    %7239 = vmatprep.subr.bf16.mxu0 0
    %7240 = vmatpush2.bf16.msra.mxu0 %v7160
    %7241 = vmatprep.subr.bf16.mxu0 0
    %7242 = vmatpush2.bf16.msra.mxu0 %v7159
    %7243 = vmatprep.subr.bf16.mxu0 0
    %7244 = vmatpush2.bf16.msra.mxu0 %v7158
    %7245 = vmatprep.subr.bf16.mxu0 0
    %7246 = vmatpush2.bf16.msra.mxu0 %v7157
    %7247 = vmatprep.subr.bf16.mxu0 0
    %7248 = vmatpush2.bf16.msra.mxu0 %v7156
    %7249 = vmatprep.subr.bf16.mxu0 0
    %7250 = vmatpush2.bf16.msra.mxu0 %v7155
    %7251 = vmatprep.subr.bf16.mxu0 0
    %7252 = vmatpush2.bf16.msra.mxu0 %v7154
    %7253 = vmatprep.subr.bf16.mxu0 0
    %7254 = vmatpush2.bf16.msra.mxu0 %v7153
    %7255 = vmatprep.mubr.bf16.mxu0 %v6597
    %7256 = vmatmul.mubr.bf16.gmra.mxu0 %v6593
    %v7257 = vpop.f32.mrf.mxu0
    %v7258 = vadd.f32 0.0, %v7257
    %v7259 = vpop.f32.mrf.mxu0
    %v7260 = vpop.f32.mrf.mxu0
    %v7261 = vadd.f32 0.0, %v7260
    %v7262 = vpop.f32.mrf.mxu0
    %7263 = vmatprep.mubr.bf16.mxu0 %v6919
    %7264 = vmatmul.mubr.bf16.gmra.mxu0 %v6915
    %v7265 = vpop.f32.mrf.mxu0
    %v7266 = vadd.f32 0.0, %v7265
    %v7267 = vpop.f32.mrf.mxu0
    %v7268 = vpop.f32.mrf.mxu0
    %v7269 = vadd.f32 0.0, %v7268
    %v7270 = vpop.f32.mrf.mxu0
    %7271 = vdwg.mxu0
    %7272 = vmatprep.subr.bf16.mxu0 0
    %7273 = vmatpush1.bf16.msra.mxu0 %v7168
    %7274 = vmatprep.subr.bf16.mxu0 0
    %7275 = vmatpush1.bf16.msra.mxu0 %v7167
    %7276 = vmatprep.subr.bf16.mxu0 0
    %7277 = vmatpush1.bf16.msra.mxu0 %v7166
    %7278 = vmatprep.subr.bf16.mxu0 0
    %7279 = vmatpush1.bf16.msra.mxu0 %v7165
    %7280 = vmatprep.subr.bf16.mxu0 0
    %7281 = vmatpush1.bf16.msra.mxu0 %v7164
    %7282 = vmatprep.subr.bf16.mxu0 0
    %7283 = vmatpush1.bf16.msra.mxu0 %v7163
    %7284 = vmatprep.subr.bf16.mxu0 0
    %7285 = vmatpush1.bf16.msra.mxu0 %v7162
    %7286 = vmatprep.subr.bf16.mxu0 0
    %7287 = vmatpush1.bf16.msra.mxu0 %v7161
    %7288 = vmatprep.subr.bf16.mxu0 0
    %7289 = vmatpush2.bf16.msra.mxu0 %v7176
    %7290 = vmatprep.subr.bf16.mxu0 0
    %7291 = vmatpush2.bf16.msra.mxu0 %v7175
    %7292 = vmatprep.subr.bf16.mxu0 0
    %7293 = vmatpush2.bf16.msra.mxu0 %v7174
    %7294 = vmatprep.subr.bf16.mxu0 0
    %7295 = vmatpush2.bf16.msra.mxu0 %v7173
    %7296 = vmatprep.subr.bf16.mxu0 0
    %7297 = vmatpush2.bf16.msra.mxu0 %v7172
    %7298 = vmatprep.subr.bf16.mxu0 0
    %7299 = vmatpush2.bf16.msra.mxu0 %v7171
    %7300 = vmatprep.subr.bf16.mxu0 0
    %7301 = vmatpush2.bf16.msra.mxu0 %v7170
    %7302 = vmatprep.subr.bf16.mxu0 0
    %7303 = vmatpush2.bf16.msra.mxu0 %v7169
    %7304 = vmatprep.mubr.bf16.mxu0 %v6605
    %7305 = vmatmul.mubr.bf16.gmra.mxu0 %v6601
    %v7306 = vpop.f32.mrf.mxu0
    %v7307 = vadd.f32 %v7258, %v7306
    %v7308 = vpop.f32.mrf.mxu0
    %v7309 = vpop.f32.mrf.mxu0
    %v7310 = vadd.f32 %v7261, %v7309
    %v7311 = vpop.f32.mrf.mxu0
    %7312 = vmatprep.mubr.bf16.mxu0 %v6927
    %7313 = vmatmul.mubr.bf16.gmra.mxu0 %v6923
    %v7314 = vpop.f32.mrf.mxu0
    %v7315 = vadd.f32 %v7266, %v7314
    %v7316 = vpop.f32.mrf.mxu0
    %v7317 = vpop.f32.mrf.mxu0
    %v7318 = vadd.f32 %v7269, %v7317
    %v7319 = vpop.f32.mrf.mxu0
    %7320 = vdwg.mxu0
    %7321 = vmatprep.subr.bf16.mxu0 0
    %7322 = vmatpush1.bf16.msra.mxu0 0
    %7323 = vmatprep.subr.bf16.mxu0 0
    %7324 = vmatpush1.bf16.msra.mxu0 0
    %7325 = vmatprep.subr.bf16.mxu0 0
    %7326 = vmatpush1.bf16.msra.mxu0 0
    %7327 = vmatprep.subr.bf16.mxu0 0
    %7328 = vmatpush1.bf16.msra.mxu0 0
    %7329 = vmatprep.subr.bf16.mxu0 0
    %7330 = vmatpush1.bf16.msra.mxu0 %v7180
    %7331 = vmatprep.subr.bf16.mxu0 0
    %7332 = vmatpush1.bf16.msra.mxu0 %v7179
    %7333 = vmatprep.subr.bf16.mxu0 0
    %7334 = vmatpush1.bf16.msra.mxu0 %v7178
    %7335 = vmatprep.subr.bf16.mxu0 0
    %7336 = vmatpush1.bf16.msra.mxu0 %v7177
    %7337 = vmatprep.subr.bf16.mxu0 0
    %7338 = vmatpush2.bf16.msra.mxu0 0
    %7339 = vmatprep.subr.bf16.mxu0 0
    %7340 = vmatpush2.bf16.msra.mxu0 0
    %7341 = vmatprep.subr.bf16.mxu0 0
    %7342 = vmatpush2.bf16.msra.mxu0 0
    %7343 = vmatprep.subr.bf16.mxu0 0
    %7344 = vmatpush2.bf16.msra.mxu0 0
    %7345 = vmatprep.subr.bf16.mxu0 0
    %7346 = vmatpush2.bf16.msra.mxu0 0
    %7347 = vmatprep.subr.bf16.mxu0 0
    %7348 = vmatpush2.bf16.msra.mxu0 0
    %7349 = vmatprep.subr.bf16.mxu0 0
    %7350 = vmatpush2.bf16.msra.mxu0 0
    %7351 = vmatprep.subr.bf16.mxu0 0
    %7352 = vmatpush2.bf16.msra.mxu0 0
    %7353 = vmatprep.mubr.bf16.mxu0 0
    %7354 = vmatmul.mubr.bf16.gmra.mxu0 %v7218
    %v7355 = vpop.f32.mrf.mxu0
    %v7356 = vadd.f32 %v7307, %v7355
    %v7357 = vpop.f32.mrf.mxu0
    %v7358 = vpop.f32.mrf.mxu0
    %v7359 = vadd.f32 %v7310, %v7358
    %v7360 = vpop.f32.mrf.mxu0
    %7361 = vmatprep.mubr.bf16.mxu0 0
    %7362 = vmatmul.mubr.bf16.gmra.mxu0 %v7221
    %v7363 = vpop.f32.mrf.mxu0
    %v7364 = vadd.f32 %v7315, %v7363
    %v7365 = vpop.f32.mrf.mxu0
    %v7366 = vpop.f32.mrf.mxu0
    %v7367 = vadd.f32 %v7318, %v7366
    %v7368 = vpop.f32.mrf.mxu0
    %7369 = vdwg.mxu0
    %v7370 = vld [vmem:[%s8] sm:$0x1]
    %v7372 = vlaneseq
    %v7373 = vshrl.u32 %v7372, 7
    %v7374 = vsub.s32 0, %v7373
    %v7375 = vrot.slane %v7370, %v7374
    %v7377 = vmul.f32 %v7356, %v7375
    %v7378 = vmul.f32 %v7359, %v7375
    %v7379 = vmul.f32 %v7364, %v7375
    %v7380 = vmul.f32 %v7367, %v7375
    %v7381 = vld [vmem:[%s9] sm:$0x1]
    %v7383 = vlaneseq
    %v7384 = vshrl.u32 %v7383, 7
    %v7385 = vsub.s32 0, %v7384
    %v7386 = vrot.slane %v7381, %v7385
    %v7388 = vadd.f32 %v7377, %v7386
    %v7389 = vadd.f32 %v7378, %v7386
    %v7390 = vadd.f32 %v7379, %v7386
    %v7391 = vadd.f32 %v7380, %v7386
    %v7392 = vmax.f32 %v7388, 0.0
    %v7393 = vmax.f32 %v7389, 0.0
    %v7394 = vmax.f32 %v7390, 0.0
    %v7395 = vmax.f32 %v7391, 0.0
    %v7398 = vcombine.high %v7392, %v7392
    %v7400 = vunpack.c.l.s4 1983009808
    %v7401 = vunpack.c.0.s8 %v7400
    %v7402 = vlaneseq
    %v7403 = vshrl.u32 %v7402, 7
    %v7404 = vsub.s32 %v7401, %v7403
    %v7405 = vrot.slane %v7392, %v7404
    %v7407 = vunpack.c.l.s4 1983009808
    %v7408 = vunpack.c.0.s8 %v7407
    %v7409 = vlaneseq
    %v7410 = vshrl.u32 %v7409, 7
    %v7411 = vsub.s32 %v7408, %v7410
    %v7412 = vrot.slane %v7398, %v7411
    %v7413 = vcombine.high %v7405, %v7405
    %v7414 = vcombine.high %v7412, %v7412
    %v7415 = vcombine.high %v7393, %v7393
    %v7417 = vunpack.c.l.s4 1983009808
    %v7418 = vunpack.c.0.s8 %v7417
    %v7419 = vlaneseq
    %v7420 = vshrl.u32 %v7419, 7
    %v7421 = vsub.s32 %v7418, %v7420
    %v7422 = vrot.slane %v7393, %v7421
    %v7424 = vunpack.c.l.s4 1983009808
    %v7425 = vunpack.c.0.s8 %v7424
    %v7426 = vlaneseq
    %v7427 = vshrl.u32 %v7426, 7
    %v7428 = vsub.s32 %v7425, %v7427
    %v7429 = vrot.slane %v7415, %v7428
    %v7430 = vcombine.high %v7422, %v7422
    %v7431 = vcombine.high %v7429, %v7429
    %v7440 = vmax.f32 %v7405, %v7412
    %v7441 = vmax.f32 %v7413, %v7414
    %v7442 = vmax.f32 %v7422, %v7429
    %v7443 = vmax.f32 %v7430, %v7431
    %v7448 = vrot.slane %v7440, 7
    %v7449 = vrot.slane %v7448, 2
    %v7450 = vrot.slane %v7441, 7
    %v7451 = vrot.slane %v7450, 2
    %v7452 = vrot.slane %v7442, 7
    %v7453 = vrot.slane %v7452, 2
    %v7454 = vrot.slane %v7443, 7
    %v7455 = vrot.slane %v7454, 2
    %v7460 = vmax.f32 %v7440, %v7449
    %v7461 = vmax.f32 %v7441, %v7451
    %v7462 = vmax.f32 %v7442, %v7453
    %v7463 = vmax.f32 %v7443, %v7455
    %v7464 = vpack.c.bf16 %v7460, %v7460
    %v7465 = vpack.c.bf16 %v7461, %v7461
    %v7466 = vpack.c.bf16 %v7462, %v7462
    %v7467 = vpack.c.bf16 %v7463, %v7463
    %v7470 = vcombine.high %v7394, %v7394
    %v7472 = vunpack.c.l.s4 1983009808
    %v7473 = vunpack.c.0.s8 %v7472
    %v7474 = vlaneseq
    %v7475 = vshrl.u32 %v7474, 7
    %v7476 = vsub.s32 %v7473, %v7475
    %v7477 = vrot.slane %v7394, %v7476
    %v7479 = vunpack.c.l.s4 1983009808
    %v7480 = vunpack.c.0.s8 %v7479
    %v7481 = vlaneseq
    %v7482 = vshrl.u32 %v7481, 7
    %v7483 = vsub.s32 %v7480, %v7482
    %v7484 = vrot.slane %v7470, %v7483
    %v7485 = vcombine.high %v7477, %v7477
    %v7486 = vcombine.high %v7484, %v7484
    %v7487 = vcombine.high %v7395, %v7395
    %v7489 = vunpack.c.l.s4 1983009808
    %v7490 = vunpack.c.0.s8 %v7489
    %v7491 = vlaneseq
    %v7492 = vshrl.u32 %v7491, 7
    %v7493 = vsub.s32 %v7490, %v7492
    %v7494 = vrot.slane %v7395, %v7493
    %v7496 = vunpack.c.l.s4 1983009808
    %v7497 = vunpack.c.0.s8 %v7496
    %v7498 = vlaneseq
    %v7499 = vshrl.u32 %v7498, 7
    %v7500 = vsub.s32 %v7497, %v7499
    %v7501 = vrot.slane %v7487, %v7500
    %v7502 = vcombine.high %v7494, %v7494
    %v7503 = vcombine.high %v7501, %v7501
    %v7512 = vmax.f32 %v7477, %v7484
    %v7513 = vmax.f32 %v7485, %v7486
    %v7514 = vmax.f32 %v7494, %v7501
    %v7515 = vmax.f32 %v7502, %v7503
    %v7520 = vrot.slane %v7512, 7
    %v7521 = vrot.slane %v7520, 2
    %v7522 = vrot.slane %v7513, 7
    %v7523 = vrot.slane %v7522, 2
    %v7524 = vrot.slane %v7514, 7
    %v7525 = vrot.slane %v7524, 2
    %v7526 = vrot.slane %v7515, 7
    %v7527 = vrot.slane %v7526, 2
    %v7532 = vmax.f32 %v7512, %v7521
    %v7533 = vmax.f32 %v7513, %v7523
    %v7534 = vmax.f32 %v7514, %v7525
    %v7535 = vmax.f32 %v7515, %v7527
    %v7536 = vpack.c.bf16 %v7532, %v7532
    %v7537 = vpack.c.bf16 %v7533, %v7533
    %v7538 = vpack.c.bf16 %v7534, %v7534
    %v7539 = vpack.c.bf16 %v7535, %v7535
    %v7541 = vshll.u32 %v7536, 16
    %v7544 = vshll.u32 %v7537, 16
    %v7547 = vshll.u32 %v7538, 16
    %v7550 = vshll.u32 %v7539, 16
    %vm7556 = vmand %vm6377, %vm65
    %v7557 = vsel %vm7556, %v7464, %v7541
    %v7558 = vsel %vm7556, %v7465, %v7544
    %v7559 = vsel %vm7556, %v7466, %v7547
    %v7560 = vsel %vm7556, %v7467, %v7550
    %v7561 = vld [vmem:[%s10] sm:$0xf]
    %v7562 = vld [vmem:[%s10 + $0x4] sm:$0xf]
    %v7563 = vld [vmem:[%s10 + $0x8] sm:$0xf]
    %v7564 = vld [vmem:[%s10 + $0xc] sm:$0xf]
    %v7565 = vld [vmem:[%s10 + $0x10] sm:$0xf]
    %v7566 = vld [vmem:[%s10 + $0x14] sm:$0xf]
    %v7567 = vld [vmem:[%s10 + $0x18] sm:$0xf]
    %v7568 = vld [vmem:[%s10 + $0x1c] sm:$0xf]
    %v7569 = vld [vmem:[%s10 + $0x20] sm:$0xf]
    %v7570 = vld [vmem:[%s10 + $0x24] sm:$0xf]
    %v7571 = vld [vmem:[%s10 + $0x28] sm:$0xf]
    %v7572 = vld [vmem:[%s10 + $0x2c] sm:$0xf]
    %v7573 = vld [vmem:[%s10 + $0x30] sm:$0xf]
    %v7574 = vld [vmem:[%s10 + $0x34] sm:$0xf]
    %v7575 = vld [vmem:[%s10 + $0x38] sm:$0xf]
    %v7576 = vld [vmem:[%s10 + $0x3c] sm:$0xf]
    %v7577 = vld [vmem:[%s10 + $0x40] sm:$0xf]
    %v7578 = vld [vmem:[%s10 + $0x44] sm:$0xf]
    %v7579 = vld [vmem:[%s10 + $0x48] sm:$0xf]
    %v7580 = vld [vmem:[%s10 + $0x4c] sm:$0xf]
    %v7581 = vld [vmem:[%s10 + $0x50] sm:$0xf]
    %v7582 = vld [vmem:[%s10 + $0x54] sm:$0xf]
    %v7583 = vld [vmem:[%s10 + $0x58] sm:$0xf]
    %v7584 = vld [vmem:[%s10 + $0x5c] sm:$0xf]
    %v7585 = vld [vmem:[%s10 + $0x60] sm:$0xf]
    %v7586 = vld [vmem:[%s10 + $0x64] sm:$0xf]
    %v7587 = vld [vmem:[%s10 + $0x68] sm:$0xf]
    %v7588 = vld [vmem:[%s10 + $0x6c] sm:$0xf]
    %v7589 = vld [vmem:[%s10 + $0x70] sm:$0xf]
    %v7590 = vld [vmem:[%s10 + $0x74] sm:$0xf]
    %v7591 = vld [vmem:[%s10 + $0x78] sm:$0xf]
    %v7592 = vld [vmem:[%s10 + $0x7c] sm:$0xf]
    %v7593 = vld [vmem:[%s10 + $0x80] sm:$0xf]
    %v7594 = vld [vmem:[%s10 + $0x84] sm:$0xf]
    %v7595 = vld [vmem:[%s10 + $0x88] sm:$0xf]
    %v7596 = vld [vmem:[%s10 + $0x8c] sm:$0xf]
    %v7597 = vld [vmem:[%s10 + $0x90] sm:$0xf]
    %v7598 = vld [vmem:[%s10 + $0x94] sm:$0xf]
    %v7599 = vld [vmem:[%s10 + $0x98] sm:$0xf]
    %v7600 = vld [vmem:[%s10 + $0x9c] sm:$0xf]
    %v7601 = vld [vmem:[%s10 + $0xa0] sm:$0xf]
    %v7602 = vld [vmem:[%s10 + $0xa4] sm:$0xf]
    %v7603 = vld [vmem:[%s10 + $0xa8] sm:$0xf]
    %v7604 = vld [vmem:[%s10 + $0xac] sm:$0xf]
    %v7605 = vld [vmem:[%s10 + $0xb0] sm:$0xf]
    %v7606 = vld [vmem:[%s10 + $0xb4] sm:$0xf]
    %v7607 = vld [vmem:[%s10 + $0xb8] sm:$0xf]
    %v7608 = vld [vmem:[%s10 + $0xbc] sm:$0xf]
    %v7609 = vld [vmem:[%s10 + $0xc0] sm:$0xf]
    %v7610 = vld [vmem:[%s10 + $0xc4] sm:$0xf]
    %v7611 = vld [vmem:[%s10 + $0xc8] sm:$0xf]
    %v7612 = vld [vmem:[%s10 + $0xcc] sm:$0xf]
    %v7613 = vld [vmem:[%s10 + $0xd0] sm:$0xf]
    %v7614 = vld [vmem:[%s10 + $0xd4] sm:$0xf]
    %v7615 = vld [vmem:[%s10 + $0xd8] sm:$0xf]
    %v7616 = vld [vmem:[%s10 + $0xdc] sm:$0xf]
    %v7617 = vld [vmem:[%s10 + $0xe0] sm:$0xf]
    %v7618 = vld [vmem:[%s10 + $0xe4] sm:$0xf]
    %v7619 = vld [vmem:[%s10 + $0xe8] sm:$0xf]
    %v7620 = vld [vmem:[%s10 + $0xec] sm:$0xf]
    %v7621 = vld [vmem:[%s10 + $0xf0] sm:$0xf]
    %v7622 = vld [vmem:[%s10 + $0xf4] sm:$0xf]
    %v7623 = vld [vmem:[%s10 + $0xf8] sm:$0xf]
    %v7624 = vld [vmem:[%s10 + $0xfc] sm:$0xf]
    %v7689 = vunpack.c.l.b16 %v7561
    %v7690 = vunpack.c.l.b16 %v7562
    %v7691 = vunpack.c.l.b16 %v7563
    %v7692 = vunpack.c.l.b16 %v7564
    %v7693 = vunpack.c.l.b16 %v7565
    %v7694 = vunpack.c.l.b16 %v7566
    %v7695 = vunpack.c.l.b16 %v7567
    %v7696 = vunpack.c.l.b16 %v7568
    %v7697 = vunpack.c.l.b16 %v7569
    %v7698 = vunpack.c.l.b16 %v7570
    %v7699 = vunpack.c.l.b16 %v7571
    %v7700 = vunpack.c.l.b16 %v7572
    %v7701 = vunpack.c.l.b16 %v7573
    %v7702 = vunpack.c.l.b16 %v7574
    %v7703 = vunpack.c.l.b16 %v7575
    %v7704 = vunpack.c.l.b16 %v7576
    %v7705 = vunpack.c.l.b16 %v7577
    %v7706 = vunpack.c.l.b16 %v7578
    %v7707 = vunpack.c.l.b16 %v7579
    %v7708 = vunpack.c.l.b16 %v7580
    %v7709 = vunpack.c.l.b16 %v7581
    %v7710 = vunpack.c.l.b16 %v7582
    %v7711 = vunpack.c.l.b16 %v7583
    %v7712 = vunpack.c.l.b16 %v7584
    %v7713 = vunpack.c.l.b16 %v7585
    %v7714 = vunpack.c.l.b16 %v7586
    %v7715 = vunpack.c.l.b16 %v7587
    %v7716 = vunpack.c.l.b16 %v7588
    %v7717 = vunpack.c.l.b16 %v7589
    %v7718 = vunpack.c.l.b16 %v7590
    %v7719 = vunpack.c.l.b16 %v7591
    %v7720 = vunpack.c.l.b16 %v7592
    %v7721 = vunpack.c.l.b16 %v7593
    %v7722 = vunpack.c.l.b16 %v7594
    %v7723 = vunpack.c.l.b16 %v7595
    %v7724 = vunpack.c.l.b16 %v7596
    %v7725 = vunpack.c.l.b16 %v7597
    %v7726 = vunpack.c.l.b16 %v7598
    %v7727 = vunpack.c.l.b16 %v7599
    %v7728 = vunpack.c.l.b16 %v7600
    %v7729 = vunpack.c.l.b16 %v7601
    %v7730 = vunpack.c.l.b16 %v7602
    %v7731 = vunpack.c.l.b16 %v7603
    %v7732 = vunpack.c.l.b16 %v7604
    %v7733 = vunpack.c.l.b16 %v7605
    %v7734 = vunpack.c.l.b16 %v7606
    %v7735 = vunpack.c.l.b16 %v7607
    %v7736 = vunpack.c.l.b16 %v7608
    %v7737 = vunpack.c.l.b16 %v7609
    %v7738 = vunpack.c.l.b16 %v7610
    %v7739 = vunpack.c.l.b16 %v7611
    %v7740 = vunpack.c.l.b16 %v7612
    %v7741 = vunpack.c.l.b16 %v7613
    %v7742 = vunpack.c.l.b16 %v7614
    %v7743 = vunpack.c.l.b16 %v7615
    %v7744 = vunpack.c.l.b16 %v7616
    %v7745 = vunpack.c.l.b16 %v7617
    %v7746 = vunpack.c.l.b16 %v7618
    %v7747 = vunpack.c.l.b16 %v7619
    %v7748 = vunpack.c.l.b16 %v7620
    %v7749 = vunpack.c.l.b16 %v7621
    %v7750 = vunpack.c.l.b16 %v7622
    %v7751 = vunpack.c.l.b16 %v7623
    %v7752 = vunpack.c.l.b16 %v7624
    %v7753 = vpack.c.b16 %v7690, %v7689
    %v7754 = vpack.c.b16 %v7692, %v7691
    %v7755 = vpack.c.b16 %v7694, %v7693
    %v7756 = vpack.c.b16 %v7696, %v7695
    %v7757 = vpack.c.b16 %v7698, %v7697
    %v7758 = vpack.c.b16 %v7700, %v7699
    %v7759 = vpack.c.b16 %v7702, %v7701
    %v7760 = vpack.c.b16 %v7704, %v7703
    %v7761 = vpack.c.b16 %v7706, %v7705
    %v7762 = vpack.c.b16 %v7708, %v7707
    %v7763 = vpack.c.b16 %v7710, %v7709
    %v7764 = vpack.c.b16 %v7712, %v7711
    %v7765 = vpack.c.b16 %v7714, %v7713
    %v7766 = vpack.c.b16 %v7716, %v7715
    %v7767 = vpack.c.b16 %v7718, %v7717
    %v7768 = vpack.c.b16 %v7720, %v7719
    %v7769 = vpack.c.b16 %v7722, %v7721
    %v7770 = vpack.c.b16 %v7724, %v7723
    %v7771 = vpack.c.b16 %v7726, %v7725
    %v7772 = vpack.c.b16 %v7728, %v7727
    %v7773 = vpack.c.b16 %v7730, %v7729
    %v7774 = vpack.c.b16 %v7732, %v7731
    %v7775 = vpack.c.b16 %v7734, %v7733
    %v7776 = vpack.c.b16 %v7736, %v7735
    %v7777 = vpack.c.b16 %v7738, %v7737
    %v7778 = vpack.c.b16 %v7740, %v7739
    %v7779 = vpack.c.b16 %v7742, %v7741
    %v7780 = vpack.c.b16 %v7744, %v7743
    %v7781 = vpack.c.b16 %v7746, %v7745
    %v7782 = vpack.c.b16 %v7748, %v7747
    %v7783 = vpack.c.b16 %v7750, %v7749
    %v7784 = vpack.c.b16 %v7752, %v7751
    %7817 = vmatprep.subr.bf16.mxu0 0
    %7818 = vmatpush1.bf16.msra.mxu0 %v7760
    %7819 = vmatprep.subr.bf16.mxu0 0
    %7820 = vmatpush1.bf16.msra.mxu0 %v7759
    %7821 = vmatprep.subr.bf16.mxu0 0
    %7822 = vmatpush1.bf16.msra.mxu0 %v7758
    %7823 = vmatprep.subr.bf16.mxu0 0
    %7824 = vmatpush1.bf16.msra.mxu0 %v7757
    %7825 = vmatprep.subr.bf16.mxu0 0
    %7826 = vmatpush1.bf16.msra.mxu0 %v7756
    %7827 = vmatprep.subr.bf16.mxu0 0
    %7828 = vmatpush1.bf16.msra.mxu0 %v7755
    %7829 = vmatprep.subr.bf16.mxu0 0
    %7830 = vmatpush1.bf16.msra.mxu0 %v7754
    %7831 = vmatprep.subr.bf16.mxu0 0
    %7832 = vmatpush1.bf16.msra.mxu0 %v7753
    %7833 = vmatprep.subr.bf16.mxu0 0
    %7834 = vmatpush2.bf16.msra.mxu0 %v7768
    %7835 = vmatprep.subr.bf16.mxu0 0
    %7836 = vmatpush2.bf16.msra.mxu0 %v7767
    %7837 = vmatprep.subr.bf16.mxu0 0
    %7838 = vmatpush2.bf16.msra.mxu0 %v7766
    %7839 = vmatprep.subr.bf16.mxu0 0
    %7840 = vmatpush2.bf16.msra.mxu0 %v7765
    %7841 = vmatprep.subr.bf16.mxu0 0
    %7842 = vmatpush2.bf16.msra.mxu0 %v7764
    %7843 = vmatprep.subr.bf16.mxu0 0
    %7844 = vmatpush2.bf16.msra.mxu0 %v7763
    %7845 = vmatprep.subr.bf16.mxu0 0
    %7846 = vmatpush2.bf16.msra.mxu0 %v7762
    %7847 = vmatprep.subr.bf16.mxu0 0
    %7848 = vmatpush2.bf16.msra.mxu0 %v7761
    %7849 = vmatprep.mubr.bf16.mxu0 %v7558
    %7850 = vmatmul.mubr.bf16.gmra.mxu0 %v7557
    %v7851 = vpop.f32.mrf.mxu0
    %v7852 = vadd.f32 0.0, %v7851
    %v7853 = vpop.f32.mrf.mxu0
    %v7854 = vpop.f32.mrf.mxu0
    %v7855 = vpop.f32.mrf.mxu0
    %7856 = vdwg.mxu0
    %7857 = vmatprep.subr.bf16.mxu0 0
    %7858 = vmatpush1.bf16.msra.mxu0 %v7776
    %7859 = vmatprep.subr.bf16.mxu0 0
    %7860 = vmatpush1.bf16.msra.mxu0 %v7775
    %7861 = vmatprep.subr.bf16.mxu0 0
    %7862 = vmatpush1.bf16.msra.mxu0 %v7774
    %7863 = vmatprep.subr.bf16.mxu0 0
    %7864 = vmatpush1.bf16.msra.mxu0 %v7773
    %7865 = vmatprep.subr.bf16.mxu0 0
    %7866 = vmatpush1.bf16.msra.mxu0 %v7772
    %7867 = vmatprep.subr.bf16.mxu0 0
    %7868 = vmatpush1.bf16.msra.mxu0 %v7771
    %7869 = vmatprep.subr.bf16.mxu0 0
    %7870 = vmatpush1.bf16.msra.mxu0 %v7770
    %7871 = vmatprep.subr.bf16.mxu0 0
    %7872 = vmatpush1.bf16.msra.mxu0 %v7769
    %7873 = vmatprep.subr.bf16.mxu0 0
    %7874 = vmatpush2.bf16.msra.mxu0 %v7784
    %7875 = vmatprep.subr.bf16.mxu0 0
    %7876 = vmatpush2.bf16.msra.mxu0 %v7783
    %7877 = vmatprep.subr.bf16.mxu0 0
    %7878 = vmatpush2.bf16.msra.mxu0 %v7782
    %7879 = vmatprep.subr.bf16.mxu0 0
    %7880 = vmatpush2.bf16.msra.mxu0 %v7781
    %7881 = vmatprep.subr.bf16.mxu0 0
    %7882 = vmatpush2.bf16.msra.mxu0 %v7780
    %7883 = vmatprep.subr.bf16.mxu0 0
    %7884 = vmatpush2.bf16.msra.mxu0 %v7779
    %7885 = vmatprep.subr.bf16.mxu0 0
    %7886 = vmatpush2.bf16.msra.mxu0 %v7778
    %7887 = vmatprep.subr.bf16.mxu0 0
    %7888 = vmatpush2.bf16.msra.mxu0 %v7777
    %7889 = vmatprep.mubr.bf16.mxu0 %v7560
    %7890 = vmatmul.mubr.bf16.gmra.mxu0 %v7559
    %v7891 = vpop.f32.mrf.mxu0
    %v7892 = vadd.f32 %v7852, %v7891
    %v7893 = vpop.f32.mrf.mxu0
    %v7894 = vpop.f32.mrf.mxu0
    %v7895 = vpop.f32.mrf.mxu0
    %7896 = vdwg.mxu0
    %v7897 = vld [vmem:[%s11] sm:$0x1]
    %v7899 = vlaneseq
    %v7900 = vshrl.u32 %v7899, 7
    %v7901 = vsub.s32 0, %v7900
    %v7902 = vrot.slane %v7897, %v7901
    %v7904 = vmul.f32 %v7892, %v7902
    %v7905 = vld [vmem:[%s12] sm:$0x1]
    %v7907 = vlaneseq
    %v7908 = vshrl.u32 %v7907, 7
    %v7909 = vsub.s32 0, %v7908
    %v7910 = vrot.slane %v7905, %v7909
    %v7912 = vadd.f32 %v7904, %v7910
    %v7913 = vmax.f32 %v7912, 0.0
    %v7914 = vpack.c.bf16 %v7913, %v7913
    %v7915 = vld [vmem:[%s13] sm:$0xf]
    %v7916 = vld [vmem:[%s13 + $0x4] sm:$0xf]
    %v7917 = vld [vmem:[%s13 + $0x8] sm:$0xf]
    %v7918 = vld [vmem:[%s13 + $0xc] sm:$0xf]
    %v7919 = vld [vmem:[%s13 + $0x10] sm:$0xf]
    %v7920 = vld [vmem:[%s13 + $0x14] sm:$0xf]
    %v7921 = vld [vmem:[%s13 + $0x18] sm:$0xf]
    %v7922 = vld [vmem:[%s13 + $0x1c] sm:$0xf]
    %v7923 = vld [vmem:[%s13 + $0x20] sm:$0xf]
    %v7924 = vld [vmem:[%s13 + $0x24] sm:$0xf]
    %v7925 = vld [vmem:[%s13 + $0x28] sm:$0xf]
    %v7926 = vld [vmem:[%s13 + $0x2c] sm:$0xf]
    %v7927 = vld [vmem:[%s13 + $0x30] sm:$0xf]
    %v7928 = vld [vmem:[%s13 + $0x34] sm:$0xf]
    %v7929 = vld [vmem:[%s13 + $0x38] sm:$0xf]
    %v7930 = vld [vmem:[%s13 + $0x3c] sm:$0xf]
    %v7931 = vld [vmem:[%s14] sm:$0x1]
    %v7933 = vlaneseq
    %v7934 = vshrl.u32 %v7933, 7
    %v7935 = vsub.s32 0, %v7934
    %v7936 = vrot.slane %v7931, %v7935
    %v7954 = vunpack.c.l.b16 %v7915
    %v7955 = vunpack.c.l.b16 %v7916
    %v7956 = vunpack.c.l.b16 %v7917
    %v7957 = vunpack.c.l.b16 %v7918
    %v7958 = vunpack.c.l.b16 %v7919
    %v7959 = vunpack.c.l.b16 %v7920
    %v7960 = vunpack.c.l.b16 %v7921
    %v7961 = vunpack.c.l.b16 %v7922
    %v7962 = vunpack.c.l.b16 %v7923
    %v7963 = vunpack.c.l.b16 %v7924
    %v7964 = vunpack.c.l.b16 %v7925
    %v7965 = vunpack.c.l.b16 %v7926
    %v7966 = vunpack.c.l.b16 %v7927
    %v7967 = vunpack.c.l.b16 %v7928
    %v7968 = vunpack.c.l.b16 %v7929
    %v7969 = vunpack.c.l.b16 %v7930
    %v7970 = vpack.c.b16 %v7955, %v7954
    %v7971 = vpack.c.b16 %v7957, %v7956
    %v7972 = vpack.c.b16 %v7959, %v7958
    %v7973 = vpack.c.b16 %v7961, %v7960
    %v7974 = vpack.c.b16 %v7963, %v7962
    %v7975 = vpack.c.b16 %v7965, %v7964
    %v7976 = vpack.c.b16 %v7967, %v7966
    %v7977 = vpack.c.b16 %v7969, %v7968
    %7986 = vmatprep.subr.bf16.mxu0 0
    %7987 = vmatpush1.bf16.msra.mxu0 %v7977
    %7988 = vmatprep.subr.bf16.mxu0 0
    %7989 = vmatpush1.bf16.msra.mxu0 %v7976
    %7990 = vmatprep.subr.bf16.mxu0 0
    %7991 = vmatpush1.bf16.msra.mxu0 %v7975
    %7992 = vmatprep.subr.bf16.mxu0 0
    %7993 = vmatpush1.bf16.msra.mxu0 %v7974
    %7994 = vmatprep.subr.bf16.mxu0 0
    %7995 = vmatpush1.bf16.msra.mxu0 %v7973
    %7996 = vmatprep.subr.bf16.mxu0 0
    %7997 = vmatpush1.bf16.msra.mxu0 %v7972
    %7998 = vmatprep.subr.bf16.mxu0 0
    %7999 = vmatpush1.bf16.msra.mxu0 %v7971
    %8000 = vmatprep.subr.bf16.mxu0 0
    %8001 = vmatpush1.bf16.msra.mxu0 %v7970
    %8002 = vmatprep.subr.bf16.mxu0 0
    %8003 = vmatpush2.bf16.msra.mxu0 0
    %8004 = vmatprep.subr.bf16.mxu0 0
    %8005 = vmatpush2.bf16.msra.mxu0 0
    %8006 = vmatprep.subr.bf16.mxu0 0
    %8007 = vmatpush2.bf16.msra.mxu0 0
    %8008 = vmatprep.subr.bf16.mxu0 0
    %8009 = vmatpush2.bf16.msra.mxu0 0
    %8010 = vmatprep.subr.bf16.mxu0 0
    %8011 = vmatpush2.bf16.msra.mxu0 0
    %8012 = vmatprep.subr.bf16.mxu0 0
    %8013 = vmatpush2.bf16.msra.mxu0 0
    %8014 = vmatprep.subr.bf16.mxu0 0
    %8015 = vmatpush2.bf16.msra.mxu0 0
    %8016 = vmatprep.subr.bf16.mxu0 0
    %8017 = vmatpush2.bf16.msra.mxu0 0
    %8018 = vmatprep.mubr.bf16.mxu0 0
    %8019 = vmatmul.mubr.bf16.gmra.mxu0 %v7914
    %v8020 = vpop.f32.mrf.mxu0
    %v8021 = vadd.f32 %v7936, %v8020
    %v8022 = vpop.f32.mrf.mxu0
    %v8023 = vpop.f32.mrf.mxu0
    %v8024 = vpop.f32.mrf.mxu0
    %8025 = vdwg.mxu0
    %8026 = vst [vmem:[#allocation4] sm:$0x3] %v8021
    // Predicated region
    $region62: #{cnn_forward_impl.1} parent=1 // pred_check
      _
    $region63: #{cnn_forward_impl.1} parent=1 // pred_check_branch
      %8028 = sbr.rel (0) target = $region65
    $region64: #{cnn_forward_impl.1} parent=1 // pred_region
      %s8030 = ssub.s32 32, 32
      %8031 = vsyncadd [#allocation5], %s8030
      %s8033 = sshll.u32 [#allocation4], 4
      %s8034 = int_to_ptr.vmem [resolvable:$true] %s8033
      %8036 = dma.vmem_to_hbm [thread:$0]  %s8034, 32, %s15, [#allocation5]
    $region65: #{cnn_forward_impl.1} parent=1 // pred_fallthru
      _
    // Predicated region
    $region66: #{cnn_forward_impl.1} parent=1 // pred_check
      _
    $region67: #{cnn_forward_impl.1} parent=1 // pred_check_branch
      %8038 = sbr.rel (0) target = $region69
    $region68: #{cnn_forward_impl.1} parent=1 // pred_region
      %8039 = dma.done [#allocation5], 32
    $region69: #{cnn_forward_impl.1} parent=1 // pred_fallthru
      _
    %8040 = vsyncpa [#allocation5], 1

</llo_original>
